<compile_context>
chip_gen: v6e
topology: v6e:2x2x1
jax: 0.10.0
libtpu: 0.0.40
codegen_flags: <defaults>
</compile_context>

<pallas_src>
import functools

import jax
import jax.numpy as jnp
import numpy as np
from jax.experimental import pallas as pl
from jax.experimental.pallas import tpu as pltpu

_LANE = 128  # lane width; classifier output is padded to this many labels


def _pair_head_kernel(x_ref, wht_ref, bh_ref, wc_ref, bc_ref, out_ref,
                      h_s, t_s, *, batch, n):
    d = bh_ref.shape[-1]
    # Fused head/tail projection for all B*N sentence rows in one MXU pass.
    ht = jnp.dot(x_ref[...], wht_ref[...], preferred_element_type=jnp.float32)
    h_s[...] = ht[:, :d] + bh_ref[...]          # fold bias_h once (B*N rows)
    t_s[...] = ht[:, d:]
    wc = wc_ref[...]                            # (D, 128)  zero-padded labels
    bc = bc_ref[...]                            # (1, 128)  -1e30 on pad labels
    for b in range(batch):
        t_blk = t_s[b * n:(b + 1) * n, :]       # (N, D) tail block, batch b
        for i in range(n):
            r = b * n + i
            pair = h_s[r][None, :] + t_blk      # (N, D) ~24 KB, never (N,N,D)
            pair = jnp.where(pair >= 0, pair, 0.01 * pair)   # leaky_relu
            # classifier dropout is identity at inference time
            logits = jnp.dot(pair, wc,
                             preferred_element_type=jnp.float32) + bc  # (N,128)
            m = jnp.max(logits, axis=-1, keepdims=True)
            e = jnp.exp(logits - m)             # padded labels -> exp == 0
            s = jnp.sum(e, axis=-1, keepdims=True)
            out_ref[r * n:(r + 1) * n, :] = e * pl.reciprocal(s, approx=True)


def sentence_pair_head(x_gcn, w_head, w_tail, bias_h, w_cls, b_cls):
    """x_gcn: (B, N, D) f32 -> predict_prob (B, N, N, L) f32."""
    B, N, D = x_gcn.shape
    L = w_cls.shape[1]
    BN = B * N

    # bf16 activations / projection weights: halves the dominant weight DMA
    # and uses the native bf16 MXU path; accumulation stays f32 in-kernel.
    x2 = x_gcn.reshape(BN, D).astype(jnp.bfloat16)
    w_ht = jnp.concatenate([w_head, w_tail], axis=1).astype(jnp.bfloat16)

    # Lane-dense classifier: pad labels L -> 128 (zero weights, -1e30 bias)
    # so every kernel store is a full-vreg unmasked vst; softmax unaffected.
    wc_pad = jnp.zeros((D, _LANE), jnp.float32).at[:, :L].set(w_cls)
    bc_pad = jnp.full((1, _LANE), -1e30, jnp.float32).at[0, :L].set(b_cls)

    out = pl.pallas_call(
        functools.partial(_pair_head_kernel, batch=B, n=N),
        out_shape=jax.ShapeDtypeStruct((BN * N, _LANE), jnp.float32),
        grid_spec=pltpu.PrefetchScalarGridSpec(
            num_scalar_prefetch=0,
            grid=(1,),  # batch collapsed: single step, weights pushed once
            in_specs=[
                pl.BlockSpec((BN, D), lambda i: (0, 0)),
                pl.BlockSpec((D, 2 * D), lambda i: (0, 0)),
                pl.BlockSpec((1, D), lambda i: (0, 0)),
                pl.BlockSpec((D, _LANE), lambda i: (0, 0)),
                pl.BlockSpec((1, _LANE), lambda i: (0, 0)),
            ],
            out_specs=pl.BlockSpec((BN * N, _LANE), lambda i: (0, 0)),
            scratch_shapes=[pltpu.VMEM((BN, D), jnp.float32),
                            pltpu.VMEM((BN, D), jnp.float32)],
        ),
        compiler_params=pltpu.CompilerParams(
            dimension_semantics=("arbitrary",)),
    )(x2, w_ht, bias_h.reshape(1, D), wc_pad, bc_pad)

    return out[:, :L].reshape(B, N, N, L)


def bert_glcn_forward(params, input_ids, attention_mask, token_type_ids,
                      sentence_embeding_idx, sentence_pair_relation, labels):
    # TODO(synk): BertModel.from_pretrained (full transformer) has no clean
    # in-script Pallas equivalent; deterministic embedding-table stub instead.
    text_embedding = params["embed_table"][input_ids]                    # (B, T, D)

    # gather sentence representations: x_gcn[b, n] = text_embedding[b, idx[b, n]]
    idx = sentence_embeding_idx[..., None]                               # (B, N, 1)
    x_gcn = jnp.take_along_axis(text_embedding, idx, axis=1)             # (B, N, D)

    B, N, _ = x_gcn.shape
    init_adj = jnp.ones((B, N, N), jnp.float32)
    # TODO(synk): GLCN module source is not provided; stubbed as an identity
    # graph layer (x_gcn passthrough, uniform soft adjacency, zero gl_loss).
    soft_adj = init_adj / N
    gl_loss = jnp.float32(0.0)
    adj = soft_adj * init_adj  # computed (mirrors reference) but unused downstream
    del adj, gl_loss, attention_mask, token_type_ids, sentence_pair_relation

    # Pallas hot path: sentence-pair embedding -> classifier -> softmax
    probs = sentence_pair_head(x_gcn, params["w_head"], params["w_tail"],
                               params["bias_h"], params["w_cls"], params["b_cls"])

    L = probs.shape[-1]
    predict_prob = probs.reshape(-1, L)                                  # (B*N*N, L)
    labels_flat = labels.reshape(-1).astype(jnp.int32)
    # Reference applies CrossEntropyLoss on the already-softmaxed probs
    # (i.e. a second log_softmax) — reproduce that exactly.
    logp = jax.nn.log_softmax(predict_prob, axis=-1)
    loss = -jnp.mean(jnp.take_along_axis(logp, labels_flat[:, None], axis=1))
    return loss, predict_prob


def _reference_head(x_gcn, w_head, w_tail, bias_h, w_cls, b_cls):
    h = jnp.einsum('bnd,dk->bnk', x_gcn, w_head)
    t = jnp.einsum('bnd,dk->bnk', x_gcn, w_tail)
    pair = h[:, :, None, :] + t[:, None, :, :] + bias_h
    pair = jnp.where(pair >= 0, pair, 0.01 * pair)
    logits = jnp.einsum('bijd,dl->bijl', pair, w_cls) + b_cls
    return jax.nn.softmax(logits, axis=-1)


if __name__ == "__main__":
    B, T, N, D, L, VOCAB = 2, 16, 8, 768, 5, 50

    key = jax.random.PRNGKey(0)
    k_emb, k_wh, k_wt, k_bh, k_wc, k_ids, k_sidx, k_rel, k_lab = jax.random.split(key, 9)

    params = {
        "embed_table": jax.random.normal(k_emb, (VOCAB, D), jnp.float32) * 0.02,
        "w_head": jax.random.normal(k_wh, (D, D), jnp.float32) * 0.02,
        "w_tail": jax.random.normal(k_wt, (D, D), jnp.float32) * 0.02,
        "bias_h": jax.random.normal(k_bh, (D,), jnp.float32) * 0.02,
        "w_cls": jax.random.normal(k_wc, (D, L), jnp.float32) * 0.02,
        "b_cls": jnp.zeros((L,), jnp.float32),
    }

    input_ids = jax.random.randint(k_ids, (B, T), 0, VOCAB)
    attention_mask = jnp.ones((B, T), jnp.int32)
    token_type_ids = jnp.zeros((B, T), jnp.int32)
    sentence_embeding_idx = jax.random.randint(k_sidx, (B, N), 0, T)
    sentence_pair_relation = jax.random.randint(k_rel, (B, N, N), 0, 5)
    labels = jax.random.randint(k_lab, (B, N, N), 0, L)

    loss, predict_prob = bert_glcn_forward(
        params, input_ids, attention_mask, token_type_ids,
        sentence_embeding_idx, sentence_pair_relation, labels)
    jax.block_until_ready((loss, predict_prob))

    # sanity check against a pure-JAX f32 reference of the Pallas hot path
    text_embedding = params["embed_table"][input_ids]
    x_gcn = jnp.take_along_axis(text_embedding, sentence_embeding_idx[..., None], axis=1)
    ref = _reference_head(x_gcn, params["w_head"], params["w_tail"],
                          params["bias_h"], params["w_cls"], params["b_cls"])
    np.testing.assert_allclose(np.asarray(predict_prob).reshape(B, N, N, L),
                               np.asarray(ref), rtol=2e-2, atol=2e-3)

    print("KERNEL_OK")
</pallas_src>

<mosaic_0001>
module attributes {stable_mosaic.version = 11 : i64} {
  func.func @_pair_head_kernel(%arg0: i32, %arg1: memref<16x768xbf16, #tpu.memory_space<vmem>>, %arg2: memref<768x1536xbf16, #tpu.memory_space<vmem>>, %arg3: memref<1x768xf32, #tpu.memory_space<vmem>>, %arg4: memref<768x128xf32, #tpu.memory_space<vmem>>, %arg5: memref<1x128xf32, #tpu.memory_space<vmem>>, %arg6: memref<128x128xf32, #tpu.memory_space<vmem>>, %arg7: memref<16x768xf32, #tpu.memory_space<vmem>>, %arg8: memref<16x768xf32, #tpu.memory_space<vmem>>) attributes {dimension_semantics = [#tpu.dimension_semantics<arbitrary>], iteration_bounds = array<i64: 1>, scalar_prefetch = 0 : i64, scratch_operands = 2 : i64, tpu.core_type = #tpu.core_type<tc>, window_params = [{pipeline_mode = #tpu.pipeline_mode<synchronous>, transform_indices = @transform_0, window_bounds = array<i64: 16, 768>}, {pipeline_mode = #tpu.pipeline_mode<synchronous>, transform_indices = @transform_1, window_bounds = array<i64: 768, 1536>}, {pipeline_mode = #tpu.pipeline_mode<synchronous>, transform_indices = @transform_2, window_bounds = array<i64: 1, 768>}, {pipeline_mode = #tpu.pipeline_mode<synchronous>, transform_indices = @transform_3, window_bounds = array<i64: 768, 128>}, {pipeline_mode = #tpu.pipeline_mode<synchronous>, transform_indices = @transform_4, window_bounds = array<i64: 1, 128>}, {pipeline_mode = #tpu.pipeline_mode<synchronous>, transform_indices = @transform_5, window_bounds = array<i64: 128, 128>}]} {
    %c0 = arith.constant 0 : index
    %c0_0 = arith.constant 0 : index
    %0 = vector.load %arg1[%c0, %c0_0] : memref<16x768xbf16, #tpu.memory_space<vmem>>, vector<16x768xbf16>
    %c0_1 = arith.constant 0 : index
    %c0_2 = arith.constant 0 : index
    %1 = vector.load %arg2[%c0_1, %c0_2] : memref<768x1536xbf16, #tpu.memory_space<vmem>>, vector<768x1536xbf16>
    %cst = arith.constant dense<0.000000e+00> : vector<16x1536xf32>
    %2 = tpu.matmul %0, %1, %cst {dimension_numbers = #tpu.dot_dimension_numbers<[1], [0], [0], [1], [0, 0, 1, 1], [], []>} : vector<16x768xbf16>, vector<768x1536xbf16>, vector<16x1536xf32> -> vector<16x1536xf32>
    %3 = vector.extract_strided_slice %2 {offsets = [0, 0], sizes = [16, 768], strides = [1, 1]} : vector<16x1536xf32> to vector<16x768xf32>
    %c0_3 = arith.constant 0 : index
    %c0_4 = arith.constant 0 : index
    %4 = vector.load %arg3[%c0_3, %c0_4] : memref<1x768xf32, #tpu.memory_space<vmem>>, vector<1x768xf32>
    %5 = vector.broadcast %4 : vector<1x768xf32> to vector<16x768xf32>
    %6 = arith.addf %3, %5 : vector<16x768xf32>
    %c0_5 = arith.constant 0 : index
    %c0_6 = arith.constant 0 : index
    %7 = vector.load %arg7[%c0_5, %c0_6] : memref<16x768xf32, #tpu.memory_space<vmem>>, vector<16x768xf32>
    tpu.vector_store %arg7[%c0_5, %c0_6], %6 {strides = array<i32>} : memref<16x768xf32, #tpu.memory_space<vmem>>, vector<16x768xf32>,
    %8 = vector.extract_strided_slice %2 {offsets = [0, 768], sizes = [16, 768], strides = [1, 1]} : vector<16x1536xf32> to vector<16x768xf32>
    %c0_7 = arith.constant 0 : index
    %c0_8 = arith.constant 0 : index
    %9 = vector.load %arg8[%c0_7, %c0_8] : memref<16x768xf32, #tpu.memory_space<vmem>>, vector<16x768xf32>
    tpu.vector_store %arg8[%c0_7, %c0_8], %8 {strides = array<i32>} : memref<16x768xf32, #tpu.memory_space<vmem>>, vector<16x768xf32>,
    %c0_9 = arith.constant 0 : index
    %c0_10 = arith.constant 0 : index
    %10 = vector.load %arg4[%c0_9, %c0_10] : memref<768x128xf32, #tpu.memory_space<vmem>>, vector<768x128xf32>
    %c0_11 = arith.constant 0 : index
    %c0_12 = arith.constant 0 : index
    %11 = vector.load %arg5[%c0_11, %c0_12] : memref<1x128xf32, #tpu.memory_space<vmem>>, vector<1x128xf32>
    %c0_13 = arith.constant 0 : index
    %c0_14 = arith.constant 0 : index
    %12 = vector.load %arg8[%c0_13, %c0_14] : memref<16x768xf32, #tpu.memory_space<vmem>>, vector<8x768xf32>
    %c0_15 = arith.constant 0 : index
    %c0_16 = arith.constant 0 : index
    %13 = vector.load %arg7[%c0_15, %c0_16] : memref<16x768xf32, #tpu.memory_space<vmem>>, vector<1x768xf32>
    %14 = vector.shape_cast %13 : vector<1x768xf32> to vector<768xf32>
    %15 = vector.shape_cast %14 : vector<768xf32> to vector<1x768xf32>
    %16 = vector.broadcast %15 : vector<1x768xf32> to vector<8x768xf32>
    %17 = arith.addf %16, %12 : vector<8x768xf32>
    %cst_17 = arith.constant 0.000000e+00 : f32
    %18 = vector.broadcast %cst_17 : f32 to vector<8x768xf32>
    %19 = arith.cmpf oge, %17, %18 : vector<8x768xf32>
    %cst_18 = arith.constant 0.00999999977 : f32
    %20 = vector.broadcast %cst_18 : f32 to vector<8x768xf32>
    %21 = arith.mulf %20, %17 : vector<8x768xf32>
    %22 = arith.select %19, %17, %21 : vector<8x768xi1>, vector<8x768xf32>
    %cst_19 = arith.constant dense<0.000000e+00> : vector<8x128xf32>
    %23 = tpu.matmul %22, %10, %cst_19 {dimension_numbers = #tpu.dot_dimension_numbers<[1], [0], [0], [1], [0, 0, 1, 1], [], []>} : vector<8x768xf32>, vector<768x128xf32>, vector<8x128xf32> -> vector<8x128xf32>
    %24 = vector.broadcast %11 : vector<1x128xf32> to vector<8x128xf32>
    %25 = arith.addf %23, %24 : vector<8x128xf32>
    %cst_20 = arith.constant dense<0xFF800000> : vector<8xf32>
    %26 = vector.multi_reduction <maximumf>, %25, %cst_20 [1] : vector<8x128xf32> to vector<8xf32>
    %27 = vector.shape_cast %26 : vector<8xf32> to vector<8x1xf32>
    %28 = vector.broadcast %27 : vector<8x1xf32> to vector<8x128xf32>
    %29 = arith.subf %25, %28 : vector<8x128xf32>
    %30 = math.exp %29 : vector<8x128xf32>
    %cst_21 = arith.constant dense<0.000000e+00> : vector<8xf32>
    %31 = vector.multi_reduction <add>, %30, %cst_21 [1] : vector<8x128xf32> to vector<8xf32>
    %32 = vector.shape_cast %31 : vector<8xf32> to vector<8x1xf32>
    %33 = tpu.reciprocal %32 {approx = true} : vector<8x1xf32> -> vector<8x1xf32>
    %34 = vector.broadcast %33 : vector<8x1xf32> to vector<8x128xf32>
    %35 = arith.mulf %30, %34 : vector<8x128xf32>
    %c0_22 = arith.constant 0 : index
    %c0_23 = arith.constant 0 : index
    %36 = vector.load %arg6[%c0_22, %c0_23] : memref<128x128xf32, #tpu.memory_space<vmem>>, vector<8x128xf32>
    tpu.vector_store %arg6[%c0_22, %c0_23], %35 {strides = array<i32>} : memref<128x128xf32, #tpu.memory_space<vmem>>, vector<8x128xf32>,
    %c1 = arith.constant 1 : index
    %c0_24 = arith.constant 0 : index
    %37 = vector.load %arg7[%c1, %c0_24] : memref<16x768xf32, #tpu.memory_space<vmem>>, vector<1x768xf32>
    %38 = vector.shape_cast %37 : vector<1x768xf32> to vector<768xf32>
    %39 = vector.shape_cast %38 : vector<768xf32> to vector<1x768xf32>
    %40 = vector.broadcast %39 : vector<1x768xf32> to vector<8x768xf32>
    %41 = arith.addf %40, %12 : vector<8x768xf32>
    %cst_25 = arith.constant 0.000000e+00 : f32
    %42 = vector.broadcast %cst_25 : f32 to vector<8x768xf32>
    %43 = arith.cmpf oge, %41, %42 : vector<8x768xf32>
    %cst_26 = arith.constant 0.00999999977 : f32
    %44 = vector.broadcast %cst_26 : f32 to vector<8x768xf32>
    %45 = arith.mulf %44, %41 : vector<8x768xf32>
    %46 = arith.select %43, %41, %45 : vector<8x768xi1>, vector<8x768xf32>
    %cst_27 = arith.constant dense<0.000000e+00> : vector<8x128xf32>
    %47 = tpu.matmul %46, %10, %cst_27 {dimension_numbers = #tpu.dot_dimension_numbers<[1], [0], [0], [1], [0, 0, 1, 1], [], []>} : vector<8x768xf32>, vector<768x128xf32>, vector<8x128xf32> -> vector<8x128xf32>
    %48 = vector.broadcast %11 : vector<1x128xf32> to vector<8x128xf32>
    %49 = arith.addf %47, %48 : vector<8x128xf32>
    %cst_28 = arith.constant dense<0xFF800000> : vector<8xf32>
    %50 = vector.multi_reduction <maximumf>, %49, %cst_28 [1] : vector<8x128xf32> to vector<8xf32>
    %51 = vector.shape_cast %50 : vector<8xf32> to vector<8x1xf32>
    %52 = vector.broadcast %51 : vector<8x1xf32> to vector<8x128xf32>
    %53 = arith.subf %49, %52 : vector<8x128xf32>
    %54 = math.exp %53 : vector<8x128xf32>
    %cst_29 = arith.constant dense<0.000000e+00> : vector<8xf32>
    %55 = vector.multi_reduction <add>, %54, %cst_29 [1] : vector<8x128xf32> to vector<8xf32>
    %56 = vector.shape_cast %55 : vector<8xf32> to vector<8x1xf32>
    %57 = tpu.reciprocal %56 {approx = true} : vector<8x1xf32> -> vector<8x1xf32>
    %58 = vector.broadcast %57 : vector<8x1xf32> to vector<8x128xf32>
    %59 = arith.mulf %54, %58 : vector<8x128xf32>
    %c8 = arith.constant 8 : index
    %c0_30 = arith.constant 0 : index
    %60 = vector.load %arg6[%c8, %c0_30] : memref<128x128xf32, #tpu.memory_space<vmem>>, vector<8x128xf32>
    tpu.vector_store %arg6[%c8, %c0_30], %59 {strides = array<i32>} : memref<128x128xf32, #tpu.memory_space<vmem>>, vector<8x128xf32>,
    %c2 = arith.constant 2 : index
    %c0_31 = arith.constant 0 : index
    %61 = vector.load %arg7[%c2, %c0_31] : memref<16x768xf32, #tpu.memory_space<vmem>>, vector<1x768xf32>
    %62 = vector.shape_cast %61 : vector<1x768xf32> to vector<768xf32>
    %63 = vector.shape_cast %62 : vector<768xf32> to vector<1x768xf32>
    %64 = vector.broadcast %63 : vector<1x768xf32> to vector<8x768xf32>
    %65 = arith.addf %64, %12 : vector<8x768xf32>
    %cst_32 = arith.constant 0.000000e+00 : f32
    %66 = vector.broadcast %cst_32 : f32 to vector<8x768xf32>
    %67 = arith.cmpf oge, %65, %66 : vector<8x768xf32>
    %cst_33 = arith.constant 0.00999999977 : f32
    %68 = vector.broadcast %cst_33 : f32 to vector<8x768xf32>
    %69 = arith.mulf %68, %65 : vector<8x768xf32>
    %70 = arith.select %67, %65, %69 : vector<8x768xi1>, vector<8x768xf32>
    %cst_34 = arith.constant dense<0.000000e+00> : vector<8x128xf32>
    %71 = tpu.matmul %70, %10, %cst_34 {dimension_numbers = #tpu.dot_dimension_numbers<[1], [0], [0], [1], [0, 0, 1, 1], [], []>} : vector<8x768xf32>, vector<768x128xf32>, vector<8x128xf32> -> vector<8x128xf32>
    %72 = vector.broadcast %11 : vector<1x128xf32> to vector<8x128xf32>
    %73 = arith.addf %71, %72 : vector<8x128xf32>
    %cst_35 = arith.constant dense<0xFF800000> : vector<8xf32>
    %74 = vector.multi_reduction <maximumf>, %73, %cst_35 [1] : vector<8x128xf32> to vector<8xf32>
    %75 = vector.shape_cast %74 : vector<8xf32> to vector<8x1xf32>
    %76 = vector.broadcast %75 : vector<8x1xf32> to vector<8x128xf32>
    %77 = arith.subf %73, %76 : vector<8x128xf32>
    %78 = math.exp %77 : vector<8x128xf32>
    %cst_36 = arith.constant dense<0.000000e+00> : vector<8xf32>
    %79 = vector.multi_reduction <add>, %78, %cst_36 [1] : vector<8x128xf32> to vector<8xf32>
    %80 = vector.shape_cast %79 : vector<8xf32> to vector<8x1xf32>
    %81 = tpu.reciprocal %80 {approx = true} : vector<8x1xf32> -> vector<8x1xf32>
    %82 = vector.broadcast %81 : vector<8x1xf32> to vector<8x128xf32>
    %83 = arith.mulf %78, %82 : vector<8x128xf32>
    %c16 = arith.constant 16 : index
    %c0_37 = arith.constant 0 : index
    %84 = vector.load %arg6[%c16, %c0_37] : memref<128x128xf32, #tpu.memory_space<vmem>>, vector<8x128xf32>
    tpu.vector_store %arg6[%c16, %c0_37], %83 {strides = array<i32>} : memref<128x128xf32, #tpu.memory_space<vmem>>, vector<8x128xf32>,
    %c3 = arith.constant 3 : index
    %c0_38 = arith.constant 0 : index
    %85 = vector.load %arg7[%c3, %c0_38] : memref<16x768xf32, #tpu.memory_space<vmem>>, vector<1x768xf32>
    %86 = vector.shape_cast %85 : vector<1x768xf32> to vector<768xf32>
    %87 = vector.shape_cast %86 : vector<768xf32> to vector<1x768xf32>
    %88 = vector.broadcast %87 : vector<1x768xf32> to vector<8x768xf32>
    %89 = arith.addf %88, %12 : vector<8x768xf32>
    %cst_39 = arith.constant 0.000000e+00 : f32
    %90 = vector.broadcast %cst_39 : f32 to vector<8x768xf32>
    %91 = arith.cmpf oge, %89, %90 : vector<8x768xf32>
    %cst_40 = arith.constant 0.00999999977 : f32
    %92 = vector.broadcast %cst_40 : f32 to vector<8x768xf32>
    %93 = arith.mulf %92, %89 : vector<8x768xf32>
    %94 = arith.select %91, %89, %93 : vector<8x768xi1>, vector<8x768xf32>
    %cst_41 = arith.constant dense<0.000000e+00> : vector<8x128xf32>
    %95 = tpu.matmul %94, %10, %cst_41 {dimension_numbers = #tpu.dot_dimension_numbers<[1], [0], [0], [1], [0, 0, 1, 1], [], []>} : vector<8x768xf32>, vector<768x128xf32>, vector<8x128xf32> -> vector<8x128xf32>
    %96 = vector.broadcast %11 : vector<1x128xf32> to vector<8x128xf32>
    %97 = arith.addf %95, %96 : vector<8x128xf32>
    %cst_42 = arith.constant dense<0xFF800000> : vector<8xf32>
    %98 = vector.multi_reduction <maximumf>, %97, %cst_42 [1] : vector<8x128xf32> to vector<8xf32>
    %99 = vector.shape_cast %98 : vector<8xf32> to vector<8x1xf32>
    %100 = vector.broadcast %99 : vector<8x1xf32> to vector<8x128xf32>
    %101 = arith.subf %97, %100 : vector<8x128xf32>
    %102 = math.exp %101 : vector<8x128xf32>
    %cst_43 = arith.constant dense<0.000000e+00> : vector<8xf32>
    %103 = vector.multi_reduction <add>, %102, %cst_43 [1] : vector<8x128xf32> to vector<8xf32>
    %104 = vector.shape_cast %103 : vector<8xf32> to vector<8x1xf32>
    %105 = tpu.reciprocal %104 {approx = true} : vector<8x1xf32> -> vector<8x1xf32>
    %106 = vector.broadcast %105 : vector<8x1xf32> to vector<8x128xf32>
    %107 = arith.mulf %102, %106 : vector<8x128xf32>
    %c24 = arith.constant 24 : index
    %c0_44 = arith.constant 0 : index
    %108 = vector.load %arg6[%c24, %c0_44] : memref<128x128xf32, #tpu.memory_space<vmem>>, vector<8x128xf32>
    tpu.vector_store %arg6[%c24, %c0_44], %107 {strides = array<i32>} : memref<128x128xf32, #tpu.memory_space<vmem>>, vector<8x128xf32>,
    %c4 = arith.constant 4 : index
    %c0_45 = arith.constant 0 : index
    %109 = vector.load %arg7[%c4, %c0_45] : memref<16x768xf32, #tpu.memory_space<vmem>>, vector<1x768xf32>
    %110 = vector.shape_cast %109 : vector<1x768xf32> to vector<768xf32>
    %111 = vector.shape_cast %110 : vector<768xf32> to vector<1x768xf32>
    %112 = vector.broadcast %111 : vector<1x768xf32> to vector<8x768xf32>
    %113 = arith.addf %112, %12 : vector<8x768xf32>
    %cst_46 = arith.constant 0.000000e+00 : f32
    %114 = vector.broadcast %cst_46 : f32 to vector<8x768xf32>
    %115 = arith.cmpf oge, %113, %114 : vector<8x768xf32>
    %cst_47 = arith.constant 0.00999999977 : f32
    %116 = vector.broadcast %cst_47 : f32 to vector<8x768xf32>
    %117 = arith.mulf %116, %113 : vector<8x768xf32>
    %118 = arith.select %115, %113, %117 : vector<8x768xi1>, vector<8x768xf32>
    %cst_48 = arith.constant dense<0.000000e+00> : vector<8x128xf32>
    %119 = tpu.matmul %118, %10, %cst_48 {dimension_numbers = #tpu.dot_dimension_numbers<[1], [0], [0], [1], [0, 0, 1, 1], [], []>} : vector<8x768xf32>, vector<768x128xf32>, vector<8x128xf32> -> vector<8x128xf32>
    %120 = vector.broadcast %11 : vector<1x128xf32> to vector<8x128xf32>
    %121 = arith.addf %119, %120 : vector<8x128xf32>
    %cst_49 = arith.constant dense<0xFF800000> : vector<8xf32>
    %122 = vector.multi_reduction <maximumf>, %121, %cst_49 [1] : vector<8x128xf32> to vector<8xf32>
    %123 = vector.shape_cast %122 : vector<8xf32> to vector<8x1xf32>
    %124 = vector.broadcast %123 : vector<8x1xf32> to vector<8x128xf32>
    %125 = arith.subf %121, %124 : vector<8x128xf32>
    %126 = math.exp %125 : vector<8x128xf32>
    %cst_50 = arith.constant dense<0.000000e+00> : vector<8xf32>
    %127 = vector.multi_reduction <add>, %126, %cst_50 [1] : vector<8x128xf32> to vector<8xf32>
    %128 = vector.shape_cast %127 : vector<8xf32> to vector<8x1xf32>
    %129 = tpu.reciprocal %128 {approx = true} : vector<8x1xf32> -> vector<8x1xf32>
    %130 = vector.broadcast %129 : vector<8x1xf32> to vector<8x128xf32>
    %131 = arith.mulf %126, %130 : vector<8x128xf32>
    %c32 = arith.constant 32 : index
    %c0_51 = arith.constant 0 : index
    %132 = vector.load %arg6[%c32, %c0_51] : memref<128x128xf32, #tpu.memory_space<vmem>>, vector<8x128xf32>
    tpu.vector_store %arg6[%c32, %c0_51], %131 {strides = array<i32>} : memref<128x128xf32, #tpu.memory_space<vmem>>, vector<8x128xf32>,
    %c5 = arith.constant 5 : index
    %c0_52 = arith.constant 0 : index
    %133 = vector.load %arg7[%c5, %c0_52] : memref<16x768xf32, #tpu.memory_space<vmem>>, vector<1x768xf32>
    %134 = vector.shape_cast %133 : vector<1x768xf32> to vector<768xf32>
    %135 = vector.shape_cast %134 : vector<768xf32> to vector<1x768xf32>
    %136 = vector.broadcast %135 : vector<1x768xf32> to vector<8x768xf32>
    %137 = arith.addf %136, %12 : vector<8x768xf32>
    %cst_53 = arith.constant 0.000000e+00 : f32
    %138 = vector.broadcast %cst_53 : f32 to vector<8x768xf32>
    %139 = arith.cmpf oge, %137, %138 : vector<8x768xf32>
    %cst_54 = arith.constant 0.00999999977 : f32
    %140 = vector.broadcast %cst_54 : f32 to vector<8x768xf32>
    %141 = arith.mulf %140, %137 : vector<8x768xf32>
    %142 = arith.select %139, %137, %141 : vector<8x768xi1>, vector<8x768xf32>
    %cst_55 = arith.constant dense<0.000000e+00> : vector<8x128xf32>
    %143 = tpu.matmul %142, %10, %cst_55 {dimension_numbers = #tpu.dot_dimension_numbers<[1], [0], [0], [1], [0, 0, 1, 1], [], []>} : vector<8x768xf32>, vector<768x128xf32>, vector<8x128xf32> -> vector<8x128xf32>
    %144 = vector.broadcast %11 : vector<1x128xf32> to vector<8x128xf32>
    %145 = arith.addf %143, %144 : vector<8x128xf32>
    %cst_56 = arith.constant dense<0xFF800000> : vector<8xf32>
    %146 = vector.multi_reduction <maximumf>, %145, %cst_56 [1] : vector<8x128xf32> to vector<8xf32>
    %147 = vector.shape_cast %146 : vector<8xf32> to vector<8x1xf32>
    %148 = vector.broadcast %147 : vector<8x1xf32> to vector<8x128xf32>
    %149 = arith.subf %145, %148 : vector<8x128xf32>
    %150 = math.exp %149 : vector<8x128xf32>
    %cst_57 = arith.constant dense<0.000000e+00> : vector<8xf32>
    %151 = vector.multi_reduction <add>, %150, %cst_57 [1] : vector<8x128xf32> to vector<8xf32>
    %152 = vector.shape_cast %151 : vector<8xf32> to vector<8x1xf32>
    %153 = tpu.reciprocal %152 {approx = true} : vector<8x1xf32> -> vector<8x1xf32>
    %154 = vector.broadcast %153 : vector<8x1xf32> to vector<8x128xf32>
    %155 = arith.mulf %150, %154 : vector<8x128xf32>
    %c40 = arith.constant 40 : index
    %c0_58 = arith.constant 0 : index
    %156 = vector.load %arg6[%c40, %c0_58] : memref<128x128xf32, #tpu.memory_space<vmem>>, vector<8x128xf32>
    tpu.vector_store %arg6[%c40, %c0_58], %155 {strides = array<i32>} : memref<128x128xf32, #tpu.memory_space<vmem>>, vector<8x128xf32>,
    %c6 = arith.constant 6 : index
    %c0_59 = arith.constant 0 : index
    %157 = vector.load %arg7[%c6, %c0_59] : memref<16x768xf32, #tpu.memory_space<vmem>>, vector<1x768xf32>
    %158 = vector.shape_cast %157 : vector<1x768xf32> to vector<768xf32>
    %159 = vector.shape_cast %158 : vector<768xf32> to vector<1x768xf32>
    %160 = vector.broadcast %159 : vector<1x768xf32> to vector<8x768xf32>
    %161 = arith.addf %160, %12 : vector<8x768xf32>
    %cst_60 = arith.constant 0.000000e+00 : f32
    %162 = vector.broadcast %cst_60 : f32 to vector<8x768xf32>
    %163 = arith.cmpf oge, %161, %162 : vector<8x768xf32>
    %cst_61 = arith.constant 0.00999999977 : f32
    %164 = vector.broadcast %cst_61 : f32 to vector<8x768xf32>
    %165 = arith.mulf %164, %161 : vector<8x768xf32>
    %166 = arith.select %163, %161, %165 : vector<8x768xi1>, vector<8x768xf32>
    %cst_62 = arith.constant dense<0.000000e+00> : vector<8x128xf32>
    %167 = tpu.matmul %166, %10, %cst_62 {dimension_numbers = #tpu.dot_dimension_numbers<[1], [0], [0], [1], [0, 0, 1, 1], [], []>} : vector<8x768xf32>, vector<768x128xf32>, vector<8x128xf32> -> vector<8x128xf32>
    %168 = vector.broadcast %11 : vector<1x128xf32> to vector<8x128xf32>
    %169 = arith.addf %167, %168 : vector<8x128xf32>
    %cst_63 = arith.constant dense<0xFF800000> : vector<8xf32>
    %170 = vector.multi_reduction <maximumf>, %169, %cst_63 [1] : vector<8x128xf32> to vector<8xf32>
    %171 = vector.shape_cast %170 : vector<8xf32> to vector<8x1xf32>
    %172 = vector.broadcast %171 : vector<8x1xf32> to vector<8x128xf32>
    %173 = arith.subf %169, %172 : vector<8x128xf32>
    %174 = math.exp %173 : vector<8x128xf32>
    %cst_64 = arith.constant dense<0.000000e+00> : vector<8xf32>
    %175 = vector.multi_reduction <add>, %174, %cst_64 [1] : vector<8x128xf32> to vector<8xf32>
    %176 = vector.shape_cast %175 : vector<8xf32> to vector<8x1xf32>
    %177 = tpu.reciprocal %176 {approx = true} : vector<8x1xf32> -> vector<8x1xf32>
    %178 = vector.broadcast %177 : vector<8x1xf32> to vector<8x128xf32>
    %179 = arith.mulf %174, %178 : vector<8x128xf32>
    %c48 = arith.constant 48 : index
    %c0_65 = arith.constant 0 : index
    %180 = vector.load %arg6[%c48, %c0_65] : memref<128x128xf32, #tpu.memory_space<vmem>>, vector<8x128xf32>
    tpu.vector_store %arg6[%c48, %c0_65], %179 {strides = array<i32>} : memref<128x128xf32, #tpu.memory_space<vmem>>, vector<8x128xf32>,
    %c7 = arith.constant 7 : index
    %c0_66 = arith.constant 0 : index
    %181 = vector.load %arg7[%c7, %c0_66] : memref<16x768xf32, #tpu.memory_space<vmem>>, vector<1x768xf32>
    %182 = vector.shape_cast %181 : vector<1x768xf32> to vector<768xf32>
    %183 = vector.shape_cast %182 : vector<768xf32> to vector<1x768xf32>
    %184 = vector.broadcast %183 : vector<1x768xf32> to vector<8x768xf32>
    %185 = arith.addf %184, %12 : vector<8x768xf32>
    %cst_67 = arith.constant 0.000000e+00 : f32
    %186 = vector.broadcast %cst_67 : f32 to vector<8x768xf32>
    %187 = arith.cmpf oge, %185, %186 : vector<8x768xf32>
    %cst_68 = arith.constant 0.00999999977 : f32
    %188 = vector.broadcast %cst_68 : f32 to vector<8x768xf32>
    %189 = arith.mulf %188, %185 : vector<8x768xf32>
    %190 = arith.select %187, %185, %189 : vector<8x768xi1>, vector<8x768xf32>
    %cst_69 = arith.constant dense<0.000000e+00> : vector<8x128xf32>
    %191 = tpu.matmul %190, %10, %cst_69 {dimension_numbers = #tpu.dot_dimension_numbers<[1], [0], [0], [1], [0, 0, 1, 1], [], []>} : vector<8x768xf32>, vector<768x128xf32>, vector<8x128xf32> -> vector<8x128xf32>
    %192 = vector.broadcast %11 : vector<1x128xf32> to vector<8x128xf32>
    %193 = arith.addf %191, %192 : vector<8x128xf32>
    %cst_70 = arith.constant dense<0xFF800000> : vector<8xf32>
    %194 = vector.multi_reduction <maximumf>, %193, %cst_70 [1] : vector<8x128xf32> to vector<8xf32>
    %195 = vector.shape_cast %194 : vector<8xf32> to vector<8x1xf32>
    %196 = vector.broadcast %195 : vector<8x1xf32> to vector<8x128xf32>
    %197 = arith.subf %193, %196 : vector<8x128xf32>
    %198 = math.exp %197 : vector<8x128xf32>
    %cst_71 = arith.constant dense<0.000000e+00> : vector<8xf32>
    %199 = vector.multi_reduction <add>, %198, %cst_71 [1] : vector<8x128xf32> to vector<8xf32>
    %200 = vector.shape_cast %199 : vector<8xf32> to vector<8x1xf32>
    %201 = tpu.reciprocal %200 {approx = true} : vector<8x1xf32> -> vector<8x1xf32>
    %202 = vector.broadcast %201 : vector<8x1xf32> to vector<8x128xf32>
    %203 = arith.mulf %198, %202 : vector<8x128xf32>
    %c56 = arith.constant 56 : index
    %c0_72 = arith.constant 0 : index
    %204 = vector.load %arg6[%c56, %c0_72] : memref<128x128xf32, #tpu.memory_space<vmem>>, vector<8x128xf32>
    tpu.vector_store %arg6[%c56, %c0_72], %203 {strides = array<i32>} : memref<128x128xf32, #tpu.memory_space<vmem>>, vector<8x128xf32>,
    %c8_73 = arith.constant 8 : index
    %c0_74 = arith.constant 0 : index
    %205 = vector.load %arg8[%c8_73, %c0_74] : memref<16x768xf32, #tpu.memory_space<vmem>>, vector<8x768xf32>
    %c8_75 = arith.constant 8 : index
    %c0_76 = arith.constant 0 : index
    %206 = vector.load %arg7[%c8_75, %c0_76] : memref<16x768xf32, #tpu.memory_space<vmem>>, vector<1x768xf32>
    %207 = vector.shape_cast %206 : vector<1x768xf32> to vector<768xf32>
    %208 = vector.shape_cast %207 : vector<768xf32> to vector<1x768xf32>
    %209 = vector.broadcast %208 : vector<1x768xf32> to vector<8x768xf32>
    %210 = arith.addf %209, %205 : vector<8x768xf32>
    %cst_77 = arith.constant 0.000000e+00 : f32
    %211 = vector.broadcast %cst_77 : f32 to vector<8x768xf32>
    %212 = arith.cmpf oge, %210, %211 : vector<8x768xf32>
    %cst_78 = arith.constant 0.00999999977 : f32
    %213 = vector.broadcast %cst_78 : f32 to vector<8x768xf32>
    %214 = arith.mulf %213, %210 : vector<8x768xf32>
    %215 = arith.select %212, %210, %214 : vector<8x768xi1>, vector<8x768xf32>
    %cst_79 = arith.constant dense<0.000000e+00> : vector<8x128xf32>
    %216 = tpu.matmul %215, %10, %cst_79 {dimension_numbers = #tpu.dot_dimension_numbers<[1], [0], [0], [1], [0, 0, 1, 1], [], []>} : vector<8x768xf32>, vector<768x128xf32>, vector<8x128xf32> -> vector<8x128xf32>
    %217 = vector.broadcast %11 : vector<1x128xf32> to vector<8x128xf32>
    %218 = arith.addf %216, %217 : vector<8x128xf32>
    %cst_80 = arith.constant dense<0xFF800000> : vector<8xf32>
    %219 = vector.multi_reduction <maximumf>, %218, %cst_80 [1] : vector<8x128xf32> to vector<8xf32>
    %220 = vector.shape_cast %219 : vector<8xf32> to vector<8x1xf32>
    %221 = vector.broadcast %220 : vector<8x1xf32> to vector<8x128xf32>
    %222 = arith.subf %218, %221 : vector<8x128xf32>
    %223 = math.exp %222 : vector<8x128xf32>
    %cst_81 = arith.constant dense<0.000000e+00> : vector<8xf32>
    %224 = vector.multi_reduction <add>, %223, %cst_81 [1] : vector<8x128xf32> to vector<8xf32>
    %225 = vector.shape_cast %224 : vector<8xf32> to vector<8x1xf32>
    %226 = tpu.reciprocal %225 {approx = true} : vector<8x1xf32> -> vector<8x1xf32>
    %227 = vector.broadcast %226 : vector<8x1xf32> to vector<8x128xf32>
    %228 = arith.mulf %223, %227 : vector<8x128xf32>
    %c64 = arith.constant 64 : index
    %c0_82 = arith.constant 0 : index
    %229 = vector.load %arg6[%c64, %c0_82] : memref<128x128xf32, #tpu.memory_space<vmem>>, vector<8x128xf32>
    tpu.vector_store %arg6[%c64, %c0_82], %228 {strides = array<i32>} : memref<128x128xf32, #tpu.memory_space<vmem>>, vector<8x128xf32>,
    %c9 = arith.constant 9 : index
    %c0_83 = arith.constant 0 : index
    %230 = vector.load %arg7[%c9, %c0_83] : memref<16x768xf32, #tpu.memory_space<vmem>>, vector<1x768xf32>
    %231 = vector.shape_cast %230 : vector<1x768xf32> to vector<768xf32>
    %232 = vector.shape_cast %231 : vector<768xf32> to vector<1x768xf32>
    %233 = vector.broadcast %232 : vector<1x768xf32> to vector<8x768xf32>
    %234 = arith.addf %233, %205 : vector<8x768xf32>
    %cst_84 = arith.constant 0.000000e+00 : f32
    %235 = vector.broadcast %cst_84 : f32 to vector<8x768xf32>
    %236 = arith.cmpf oge, %234, %235 : vector<8x768xf32>
    %cst_85 = arith.constant 0.00999999977 : f32
    %237 = vector.broadcast %cst_85 : f32 to vector<8x768xf32>
    %238 = arith.mulf %237, %234 : vector<8x768xf32>
    %239 = arith.select %236, %234, %238 : vector<8x768xi1>, vector<8x768xf32>
    %cst_86 = arith.constant dense<0.000000e+00> : vector<8x128xf32>
    %240 = tpu.matmul %239, %10, %cst_86 {dimension_numbers = #tpu.dot_dimension_numbers<[1], [0], [0], [1], [0, 0, 1, 1], [], []>} : vector<8x768xf32>, vector<768x128xf32>, vector<8x128xf32> -> vector<8x128xf32>
    %241 = vector.broadcast %11 : vector<1x128xf32> to vector<8x128xf32>
    %242 = arith.addf %240, %241 : vector<8x128xf32>
    %cst_87 = arith.constant dense<0xFF800000> : vector<8xf32>
    %243 = vector.multi_reduction <maximumf>, %242, %cst_87 [1] : vector<8x128xf32> to vector<8xf32>
    %244 = vector.shape_cast %243 : vector<8xf32> to vector<8x1xf32>
    %245 = vector.broadcast %244 : vector<8x1xf32> to vector<8x128xf32>
    %246 = arith.subf %242, %245 : vector<8x128xf32>
    %247 = math.exp %246 : vector<8x128xf32>
    %cst_88 = arith.constant dense<0.000000e+00> : vector<8xf32>
    %248 = vector.multi_reduction <add>, %247, %cst_88 [1] : vector<8x128xf32> to vector<8xf32>
    %249 = vector.shape_cast %248 : vector<8xf32> to vector<8x1xf32>
    %250 = tpu.reciprocal %249 {approx = true} : vector<8x1xf32> -> vector<8x1xf32>
    %251 = vector.broadcast %250 : vector<8x1xf32> to vector<8x128xf32>
    %252 = arith.mulf %247, %251 : vector<8x128xf32>
    %c72 = arith.constant 72 : index
    %c0_89 = arith.constant 0 : index
    %253 = vector.load %arg6[%c72, %c0_89] : memref<128x128xf32, #tpu.memory_space<vmem>>, vector<8x128xf32>
    tpu.vector_store %arg6[%c72, %c0_89], %252 {strides = array<i32>} : memref<128x128xf32, #tpu.memory_space<vmem>>, vector<8x128xf32>,
    %c10 = arith.constant 10 : index
    %c0_90 = arith.constant 0 : index
    %254 = vector.load %arg7[%c10, %c0_90] : memref<16x768xf32, #tpu.memory_space<vmem>>, vector<1x768xf32>
    %255 = vector.shape_cast %254 : vector<1x768xf32> to vector<768xf32>
    %256 = vector.shape_cast %255 : vector<768xf32> to vector<1x768xf32>
    %257 = vector.broadcast %256 : vector<1x768xf32> to vector<8x768xf32>
    %258 = arith.addf %257, %205 : vector<8x768xf32>
    %cst_91 = arith.constant 0.000000e+00 : f32
    %259 = vector.broadcast %cst_91 : f32 to vector<8x768xf32>
    %260 = arith.cmpf oge, %258, %259 : vector<8x768xf32>
    %cst_92 = arith.constant 0.00999999977 : f32
    %261 = vector.broadcast %cst_92 : f32 to vector<8x768xf32>
    %262 = arith.mulf %261, %258 : vector<8x768xf32>
    %263 = arith.select %260, %258, %262 : vector<8x768xi1>, vector<8x768xf32>
    %cst_93 = arith.constant dense<0.000000e+00> : vector<8x128xf32>
    %264 = tpu.matmul %263, %10, %cst_93 {dimension_numbers = #tpu.dot_dimension_numbers<[1], [0], [0], [1], [0, 0, 1, 1], [], []>} : vector<8x768xf32>, vector<768x128xf32>, vector<8x128xf32> -> vector<8x128xf32>
    %265 = vector.broadcast %11 : vector<1x128xf32> to vector<8x128xf32>
    %266 = arith.addf %264, %265 : vector<8x128xf32>
    %cst_94 = arith.constant dense<0xFF800000> : vector<8xf32>
    %267 = vector.multi_reduction <maximumf>, %266, %cst_94 [1] : vector<8x128xf32> to vector<8xf32>
    %268 = vector.shape_cast %267 : vector<8xf32> to vector<8x1xf32>
    %269 = vector.broadcast %268 : vector<8x1xf32> to vector<8x128xf32>
    %270 = arith.subf %266, %269 : vector<8x128xf32>
    %271 = math.exp %270 : vector<8x128xf32>
    %cst_95 = arith.constant dense<0.000000e+00> : vector<8xf32>
    %272 = vector.multi_reduction <add>, %271, %cst_95 [1] : vector<8x128xf32> to vector<8xf32>
    %273 = vector.shape_cast %272 : vector<8xf32> to vector<8x1xf32>
    %274 = tpu.reciprocal %273 {approx = true} : vector<8x1xf32> -> vector<8x1xf32>
    %275 = vector.broadcast %274 : vector<8x1xf32> to vector<8x128xf32>
    %276 = arith.mulf %271, %275 : vector<8x128xf32>
    %c80 = arith.constant 80 : index
    %c0_96 = arith.constant 0 : index
    %277 = vector.load %arg6[%c80, %c0_96] : memref<128x128xf32, #tpu.memory_space<vmem>>, vector<8x128xf32>
    tpu.vector_store %arg6[%c80, %c0_96], %276 {strides = array<i32>} : memref<128x128xf32, #tpu.memory_space<vmem>>, vector<8x128xf32>,
    %c11 = arith.constant 11 : index
    %c0_97 = arith.constant 0 : index
    %278 = vector.load %arg7[%c11, %c0_97] : memref<16x768xf32, #tpu.memory_space<vmem>>, vector<1x768xf32>
    %279 = vector.shape_cast %278 : vector<1x768xf32> to vector<768xf32>
    %280 = vector.shape_cast %279 : vector<768xf32> to vector<1x768xf32>
    %281 = vector.broadcast %280 : vector<1x768xf32> to vector<8x768xf32>
    %282 = arith.addf %281, %205 : vector<8x768xf32>
    %cst_98 = arith.constant 0.000000e+00 : f32
    %283 = vector.broadcast %cst_98 : f32 to vector<8x768xf32>
    %284 = arith.cmpf oge, %282, %283 : vector<8x768xf32>
    %cst_99 = arith.constant 0.00999999977 : f32
    %285 = vector.broadcast %cst_99 : f32 to vector<8x768xf32>
    %286 = arith.mulf %285, %282 : vector<8x768xf32>
    %287 = arith.select %284, %282, %286 : vector<8x768xi1>, vector<8x768xf32>
    %cst_100 = arith.constant dense<0.000000e+00> : vector<8x128xf32>
    %288 = tpu.matmul %287, %10, %cst_100 {dimension_numbers = #tpu.dot_dimension_numbers<[1], [0], [0], [1], [0, 0, 1, 1], [], []>} : vector<8x768xf32>, vector<768x128xf32>, vector<8x128xf32> -> vector<8x128xf32>
    %289 = vector.broadcast %11 : vector<1x128xf32> to vector<8x128xf32>
    %290 = arith.addf %288, %289 : vector<8x128xf32>
    %cst_101 = arith.constant dense<0xFF800000> : vector<8xf32>
    %291 = vector.multi_reduction <maximumf>, %290, %cst_101 [1] : vector<8x128xf32> to vector<8xf32>
    %292 = vector.shape_cast %291 : vector<8xf32> to vector<8x1xf32>
    %293 = vector.broadcast %292 : vector<8x1xf32> to vector<8x128xf32>
    %294 = arith.subf %290, %293 : vector<8x128xf32>
    %295 = math.exp %294 : vector<8x128xf32>
    %cst_102 = arith.constant dense<0.000000e+00> : vector<8xf32>
    %296 = vector.multi_reduction <add>, %295, %cst_102 [1] : vector<8x128xf32> to vector<8xf32>
    %297 = vector.shape_cast %296 : vector<8xf32> to vector<8x1xf32>
    %298 = tpu.reciprocal %297 {approx = true} : vector<8x1xf32> -> vector<8x1xf32>
    %299 = vector.broadcast %298 : vector<8x1xf32> to vector<8x128xf32>
    %300 = arith.mulf %295, %299 : vector<8x128xf32>
    %c88 = arith.constant 88 : index
    %c0_103 = arith.constant 0 : index
    %301 = vector.load %arg6[%c88, %c0_103] : memref<128x128xf32, #tpu.memory_space<vmem>>, vector<8x128xf32>
    tpu.vector_store %arg6[%c88, %c0_103], %300 {strides = array<i32>} : memref<128x128xf32, #tpu.memory_space<vmem>>, vector<8x128xf32>,
    %c12 = arith.constant 12 : index
    %c0_104 = arith.constant 0 : index
    %302 = vector.load %arg7[%c12, %c0_104] : memref<16x768xf32, #tpu.memory_space<vmem>>, vector<1x768xf32>
    %303 = vector.shape_cast %302 : vector<1x768xf32> to vector<768xf32>
    %304 = vector.shape_cast %303 : vector<768xf32> to vector<1x768xf32>
    %305 = vector.broadcast %304 : vector<1x768xf32> to vector<8x768xf32>
    %306 = arith.addf %305, %205 : vector<8x768xf32>
    %cst_105 = arith.constant 0.000000e+00 : f32
    %307 = vector.broadcast %cst_105 : f32 to vector<8x768xf32>
    %308 = arith.cmpf oge, %306, %307 : vector<8x768xf32>
    %cst_106 = arith.constant 0.00999999977 : f32
    %309 = vector.broadcast %cst_106 : f32 to vector<8x768xf32>
    %310 = arith.mulf %309, %306 : vector<8x768xf32>
    %311 = arith.select %308, %306, %310 : vector<8x768xi1>, vector<8x768xf32>
    %cst_107 = arith.constant dense<0.000000e+00> : vector<8x128xf32>
    %312 = tpu.matmul %311, %10, %cst_107 {dimension_numbers = #tpu.dot_dimension_numbers<[1], [0], [0], [1], [0, 0, 1, 1], [], []>} : vector<8x768xf32>, vector<768x128xf32>, vector<8x128xf32> -> vector<8x128xf32>
    %313 = vector.broadcast %11 : vector<1x128xf32> to vector<8x128xf32>
    %314 = arith.addf %312, %313 : vector<8x128xf32>
    %cst_108 = arith.constant dense<0xFF800000> : vector<8xf32>
    %315 = vector.multi_reduction <maximumf>, %314, %cst_108 [1] : vector<8x128xf32> to vector<8xf32>
    %316 = vector.shape_cast %315 : vector<8xf32> to vector<8x1xf32>
    %317 = vector.broadcast %316 : vector<8x1xf32> to vector<8x128xf32>
    %318 = arith.subf %314, %317 : vector<8x128xf32>
    %319 = math.exp %318 : vector<8x128xf32>
    %cst_109 = arith.constant dense<0.000000e+00> : vector<8xf32>
    %320 = vector.multi_reduction <add>, %319, %cst_109 [1] : vector<8x128xf32> to vector<8xf32>
    %321 = vector.shape_cast %320 : vector<8xf32> to vector<8x1xf32>
    %322 = tpu.reciprocal %321 {approx = true} : vector<8x1xf32> -> vector<8x1xf32>
    %323 = vector.broadcast %322 : vector<8x1xf32> to vector<8x128xf32>
    %324 = arith.mulf %319, %323 : vector<8x128xf32>
    %c96 = arith.constant 96 : index
    %c0_110 = arith.constant 0 : index
    %325 = vector.load %arg6[%c96, %c0_110] : memref<128x128xf32, #tpu.memory_space<vmem>>, vector<8x128xf32>
    tpu.vector_store %arg6[%c96, %c0_110], %324 {strides = array<i32>} : memref<128x128xf32, #tpu.memory_space<vmem>>, vector<8x128xf32>,
    %c13 = arith.constant 13 : index
    %c0_111 = arith.constant 0 : index
    %326 = vector.load %arg7[%c13, %c0_111] : memref<16x768xf32, #tpu.memory_space<vmem>>, vector<1x768xf32>
    %327 = vector.shape_cast %326 : vector<1x768xf32> to vector<768xf32>
    %328 = vector.shape_cast %327 : vector<768xf32> to vector<1x768xf32>
    %329 = vector.broadcast %328 : vector<1x768xf32> to vector<8x768xf32>
    %330 = arith.addf %329, %205 : vector<8x768xf32>
    %cst_112 = arith.constant 0.000000e+00 : f32
    %331 = vector.broadcast %cst_112 : f32 to vector<8x768xf32>
    %332 = arith.cmpf oge, %330, %331 : vector<8x768xf32>
    %cst_113 = arith.constant 0.00999999977 : f32
    %333 = vector.broadcast %cst_113 : f32 to vector<8x768xf32>
    %334 = arith.mulf %333, %330 : vector<8x768xf32>
    %335 = arith.select %332, %330, %334 : vector<8x768xi1>, vector<8x768xf32>
    %cst_114 = arith.constant dense<0.000000e+00> : vector<8x128xf32>
    %336 = tpu.matmul %335, %10, %cst_114 {dimension_numbers = #tpu.dot_dimension_numbers<[1], [0], [0], [1], [0, 0, 1, 1], [], []>} : vector<8x768xf32>, vector<768x128xf32>, vector<8x128xf32> -> vector<8x128xf32>
    %337 = vector.broadcast %11 : vector<1x128xf32> to vector<8x128xf32>
    %338 = arith.addf %336, %337 : vector<8x128xf32>
    %cst_115 = arith.constant dense<0xFF800000> : vector<8xf32>
    %339 = vector.multi_reduction <maximumf>, %338, %cst_115 [1] : vector<8x128xf32> to vector<8xf32>
    %340 = vector.shape_cast %339 : vector<8xf32> to vector<8x1xf32>
    %341 = vector.broadcast %340 : vector<8x1xf32> to vector<8x128xf32>
    %342 = arith.subf %338, %341 : vector<8x128xf32>
    %343 = math.exp %342 : vector<8x128xf32>
    %cst_116 = arith.constant dense<0.000000e+00> : vector<8xf32>
    %344 = vector.multi_reduction <add>, %343, %cst_116 [1] : vector<8x128xf32> to vector<8xf32>
    %345 = vector.shape_cast %344 : vector<8xf32> to vector<8x1xf32>
    %346 = tpu.reciprocal %345 {approx = true} : vector<8x1xf32> -> vector<8x1xf32>
    %347 = vector.broadcast %346 : vector<8x1xf32> to vector<8x128xf32>
    %348 = arith.mulf %343, %347 : vector<8x128xf32>
    %c104 = arith.constant 104 : index
    %c0_117 = arith.constant 0 : index
    %349 = vector.load %arg6[%c104, %c0_117] : memref<128x128xf32, #tpu.memory_space<vmem>>, vector<8x128xf32>
    tpu.vector_store %arg6[%c104, %c0_117], %348 {strides = array<i32>} : memref<128x128xf32, #tpu.memory_space<vmem>>, vector<8x128xf32>,
    %c14 = arith.constant 14 : index
    %c0_118 = arith.constant 0 : index
    %350 = vector.load %arg7[%c14, %c0_118] : memref<16x768xf32, #tpu.memory_space<vmem>>, vector<1x768xf32>
    %351 = vector.shape_cast %350 : vector<1x768xf32> to vector<768xf32>
    %352 = vector.shape_cast %351 : vector<768xf32> to vector<1x768xf32>
    %353 = vector.broadcast %352 : vector<1x768xf32> to vector<8x768xf32>
    %354 = arith.addf %353, %205 : vector<8x768xf32>
    %cst_119 = arith.constant 0.000000e+00 : f32
    %355 = vector.broadcast %cst_119 : f32 to vector<8x768xf32>
    %356 = arith.cmpf oge, %354, %355 : vector<8x768xf32>
    %cst_120 = arith.constant 0.00999999977 : f32
    %357 = vector.broadcast %cst_120 : f32 to vector<8x768xf32>
    %358 = arith.mulf %357, %354 : vector<8x768xf32>
    %359 = arith.select %356, %354, %358 : vector<8x768xi1>, vector<8x768xf32>
    %cst_121 = arith.constant dense<0.000000e+00> : vector<8x128xf32>
    %360 = tpu.matmul %359, %10, %cst_121 {dimension_numbers = #tpu.dot_dimension_numbers<[1], [0], [0], [1], [0, 0, 1, 1], [], []>} : vector<8x768xf32>, vector<768x128xf32>, vector<8x128xf32> -> vector<8x128xf32>
    %361 = vector.broadcast %11 : vector<1x128xf32> to vector<8x128xf32>
    %362 = arith.addf %360, %361 : vector<8x128xf32>
    %cst_122 = arith.constant dense<0xFF800000> : vector<8xf32>
    %363 = vector.multi_reduction <maximumf>, %362, %cst_122 [1] : vector<8x128xf32> to vector<8xf32>
    %364 = vector.shape_cast %363 : vector<8xf32> to vector<8x1xf32>
    %365 = vector.broadcast %364 : vector<8x1xf32> to vector<8x128xf32>
    %366 = arith.subf %362, %365 : vector<8x128xf32>
    %367 = math.exp %366 : vector<8x128xf32>
    %cst_123 = arith.constant dense<0.000000e+00> : vector<8xf32>
    %368 = vector.multi_reduction <add>, %367, %cst_123 [1] : vector<8x128xf32> to vector<8xf32>
    %369 = vector.shape_cast %368 : vector<8xf32> to vector<8x1xf32>
    %370 = tpu.reciprocal %369 {approx = true} : vector<8x1xf32> -> vector<8x1xf32>
    %371 = vector.broadcast %370 : vector<8x1xf32> to vector<8x128xf32>
    %372 = arith.mulf %367, %371 : vector<8x128xf32>
    %c112 = arith.constant 112 : index
    %c0_124 = arith.constant 0 : index
    %373 = vector.load %arg6[%c112, %c0_124] : memref<128x128xf32, #tpu.memory_space<vmem>>, vector<8x128xf32>
    tpu.vector_store %arg6[%c112, %c0_124], %372 {strides = array<i32>} : memref<128x128xf32, #tpu.memory_space<vmem>>, vector<8x128xf32>,
    %c15 = arith.constant 15 : index
    %c0_125 = arith.constant 0 : index
    %374 = vector.load %arg7[%c15, %c0_125] : memref<16x768xf32, #tpu.memory_space<vmem>>, vector<1x768xf32>
    %375 = vector.shape_cast %374 : vector<1x768xf32> to vector<768xf32>
    %376 = vector.shape_cast %375 : vector<768xf32> to vector<1x768xf32>
    %377 = vector.broadcast %376 : vector<1x768xf32> to vector<8x768xf32>
    %378 = arith.addf %377, %205 : vector<8x768xf32>
    %cst_126 = arith.constant 0.000000e+00 : f32
    %379 = vector.broadcast %cst_126 : f32 to vector<8x768xf32>
    %380 = arith.cmpf oge, %378, %379 : vector<8x768xf32>
    %cst_127 = arith.constant 0.00999999977 : f32
    %381 = vector.broadcast %cst_127 : f32 to vector<8x768xf32>
    %382 = arith.mulf %381, %378 : vector<8x768xf32>
    %383 = arith.select %380, %378, %382 : vector<8x768xi1>, vector<8x768xf32>
    %cst_128 = arith.constant dense<0.000000e+00> : vector<8x128xf32>
    %384 = tpu.matmul %383, %10, %cst_128 {dimension_numbers = #tpu.dot_dimension_numbers<[1], [0], [0], [1], [0, 0, 1, 1], [], []>} : vector<8x768xf32>, vector<768x128xf32>, vector<8x128xf32> -> vector<8x128xf32>
    %385 = vector.broadcast %11 : vector<1x128xf32> to vector<8x128xf32>
    %386 = arith.addf %384, %385 : vector<8x128xf32>
    %cst_129 = arith.constant dense<0xFF800000> : vector<8xf32>
    %387 = vector.multi_reduction <maximumf>, %386, %cst_129 [1] : vector<8x128xf32> to vector<8xf32>
    %388 = vector.shape_cast %387 : vector<8xf32> to vector<8x1xf32>
    %389 = vector.broadcast %388 : vector<8x1xf32> to vector<8x128xf32>
    %390 = arith.subf %386, %389 : vector<8x128xf32>
    %391 = math.exp %390 : vector<8x128xf32>
    %cst_130 = arith.constant dense<0.000000e+00> : vector<8xf32>
    %392 = vector.multi_reduction <add>, %391, %cst_130 [1] : vector<8x128xf32> to vector<8xf32>
    %393 = vector.shape_cast %392 : vector<8xf32> to vector<8x1xf32>
    %394 = tpu.reciprocal %393 {approx = true} : vector<8x1xf32> -> vector<8x1xf32>
    %395 = vector.broadcast %394 : vector<8x1xf32> to vector<8x128xf32>
    %396 = arith.mulf %391, %395 : vector<8x128xf32>
    %c120 = arith.constant 120 : index
    %c0_131 = arith.constant 0 : index
    %397 = vector.load %arg6[%c120, %c0_131] : memref<128x128xf32, #tpu.memory_space<vmem>>, vector<8x128xf32>
    tpu.vector_store %arg6[%c120, %c0_131], %396 {strides = array<i32>} : memref<128x128xf32, #tpu.memory_space<vmem>>, vector<8x128xf32>,
    return
  }
  func.func @transform_0(%arg0: i32) -> (i32, i32) {
    %c0_i32 = arith.constant 0 : i32
    %c0_i32_0 = arith.constant 0 : i32
    %c0_i32_1 = arith.constant 0 : i32
    return %c0_i32, %c0_i32_0 : i32, i32
  }
  func.func @transform_1(%arg0: i32) -> (i32, i32) {
    %c0_i32 = arith.constant 0 : i32
    %c0_i32_0 = arith.constant 0 : i32
    %c0_i32_1 = arith.constant 0 : i32
    return %c0_i32, %c0_i32_0 : i32, i32
  }
  func.func @transform_2(%arg0: i32) -> (i32, i32) {
    %c0_i32 = arith.constant 0 : i32
    %c0_i32_0 = arith.constant 0 : i32
    %c0_i32_1 = arith.constant 0 : i32
    return %c0_i32, %c0_i32_0 : i32, i32
  }
  func.func @transform_3(%arg0: i32) -> (i32, i32) {
    %c0_i32 = arith.constant 0 : i32
    %c0_i32_0 = arith.constant 0 : i32
    %c0_i32_1 = arith.constant 0 : i32
    return %c0_i32, %c0_i32_0 : i32, i32
  }
  func.func @transform_4(%arg0: i32) -> (i32, i32) {
    %c0_i32 = arith.constant 0 : i32
    %c0_i32_0 = arith.constant 0 : i32
    %c0_i32_1 = arith.constant 0 : i32
    return %c0_i32, %c0_i32_0 : i32, i32
  }
  func.func @transform_5(%arg0: i32) -> (i32, i32) {
    %c0_i32 = arith.constant 0 : i32
    %c0_i32_0 = arith.constant 0 : i32
    %c0_i32_1 = arith.constant 0 : i32
    return %c0_i32, %c0_i32_0 : i32, i32
  }
}

</mosaic_0001>

<llo_original>
// kernel: tpu_custom_call.1
$region0: #{tpu_custom_call.1}
  #allocation0 [shape = 'u32[]', space=smem, size = 0x4, offset = 0x4, fixed_abs, tag = 'smem constant byte address 0x4 - core index']
  #allocation1 [shape = 'u32[144,128]{1,0:T(1,128)}', space=vmem, size = 0x12000, scoped, tag = 'internal scratch']
  #allocation2 [shape = 'f32[16,768]{1,0:T(8,128)}', space=vmem, size = 0xc000, scoped, tag = 'scratch operand']
  #allocation3 [shape = 'f32[16,768]{1,0:T(8,128)}', space=vmem, size = 0xc000, scoped, tag = 'scratch operand']
  %s0 = inlined_call_operand.hbm [shape: bf16[16,768], index: 0, kind: input, shape index: {}]
  %s1 = inlined_call_operand.hbm [shape: bf16[768,1536], index: 1, kind: input, shape index: {}]
  %s2 = inlined_call_operand.hbm [shape: f32[1,768], index: 2, kind: input, shape index: {}]
  %s3 = inlined_call_operand.hbm [shape: f32[768,128], index: 3, kind: input, shape index: {}]
  %s4 = inlined_call_operand.hbm [shape: f32[1,128], index: 4, kind: input, shape index: {}]
  %s5 = inlined_call_operand.hbm [shape: f32[128,128], index: 5, kind: output, shape index: {}]
  %s6 = sld [smem:[#allocation0]]
  $region50: #{tpu_custom_call.1} parent=0
    _
  %s8 = ssub.s32 1, %s6
  %s9 = scalar_select 0, %s8, %s6
  $region1: #{tpu_custom_call.1} parent=0
    #allocation4 [shape = 'u8[24576]{0}', space=vmem, size = 0x6000, scoped, tag = 'input window, operand 0, single buffered']
    #allocation5 [shape = 's32[1]{0}', space=sflag, size = 0x4, scoped, tag = 'scoped memory for tpu_custom_call.1']
    #allocation6 [shape = 's32[1]{0}', space=sflag, size = 0x4, scoped, tag = 'scoped memory for tpu_custom_call.1']
    #allocation7 [shape = 'u8[2359296]{0}', space=vmem, size = 0x240000, scoped, tag = 'input window, operand 1, single buffered']
    #allocation8 [shape = 's32[1]{0}', space=sflag, size = 0x4, scoped, tag = 'scoped memory for tpu_custom_call.1']
    #allocation9 [shape = 'u8[3072]{0}', space=vmem, size = 0xc00, scoped, tag = 'input window, operand 2, single buffered']
    #allocation10 [shape = 'u8[393216]{0}', space=vmem, size = 0x60000, scoped, tag = 'input window, operand 3, single buffered']
    #allocation11 [shape = 's32[1]{0}', space=sflag, size = 0x4, scoped, tag = 'scoped memory for tpu_custom_call.1']
    #allocation12 [shape = 'u8[512]{0}', space=vmem, size = 0x400, scoped, tag = 'input window, operand 4, single buffered']
    #allocation13 [shape = 'u8[65536]{0}', space=vmem, size = 0x10000, scoped, tag = 'output window, operand 0, single buffered']
    %10 = vsyncpa [#allocation5], 0
    %11 = vsyncpa [#allocation8], 0
    %12 = vsyncpa [#allocation11], 0
    %13 = vsyncpa [#allocation6], 0
    // Predicated region
    $region2: #{tpu_custom_call.1} parent=1 // pred_check
      _
    $region3: #{tpu_custom_call.1} parent=1 // pred_check_branch
      %15 = sbr.rel (0) target = $region5
    $region4: #{tpu_custom_call.1} parent=1 // pred_region
      %s17 = ssub.s32 768, 768
      %18 = vsyncadd [#allocation5], %s17
      %s19 = sshll.u32 [#allocation4], 4
      %s20 = int_to_ptr.vmem [resolvable:$true] %s19
      %25 = dma.hbm_to_vmem [thread:$0]  %s0, 768, %s20, [#allocation5], 384, 384, 24
    $region5: #{tpu_custom_call.1} parent=1 // pred_fallthru
      _
    // Predicated region
    $region6: #{tpu_custom_call.1} parent=1 // pred_check
      _
    $region7: #{tpu_custom_call.1} parent=1 // pred_check_branch
      %27 = sbr.rel (0) target = $region9
    $region8: #{tpu_custom_call.1} parent=1 // pred_region
      %s29 = ssub.s32 73728, 73728
      %30 = vsyncadd [#allocation8], %s29
      %s31 = sshll.u32 [#allocation7], 4
      %s32 = int_to_ptr.vmem [resolvable:$true] %s31
      %37 = dma.hbm_to_vmem [thread:$0]  %s1, 73728, %s32, [#allocation8], 768, 768, 48
    $region9: #{tpu_custom_call.1} parent=1 // pred_fallthru
      _
    // Predicated region
    $region10: #{tpu_custom_call.1} parent=1 // pred_check
      _
    $region11: #{tpu_custom_call.1} parent=1 // pred_check_branch
      %39 = sbr.rel (0) target = $region13
    $region12: #{tpu_custom_call.1} parent=1 // pred_region
      %s41 = ssub.s32 96, 96
      %42 = vsyncadd [#allocation8], %s41
      %s44 = sshll.u32 [#allocation9], 4
      %s45 = int_to_ptr.vmem [resolvable:$true] %s44
      %47 = dma.hbm_to_vmem [thread:$0]  %s2, 96, %s45, [#allocation8]
    $region13: #{tpu_custom_call.1} parent=1 // pred_fallthru
      _
    // Predicated region
    $region14: #{tpu_custom_call.1} parent=1 // pred_check
      _
    $region15: #{tpu_custom_call.1} parent=1 // pred_check_branch
      %49 = sbr.rel (0) target = $region17
    $region16: #{tpu_custom_call.1} parent=1 // pred_region
      %s51 = ssub.s32 12288, 12288
      %52 = vsyncadd [#allocation11], %s51
      %s53 = sshll.u32 [#allocation10], 4
      %s54 = int_to_ptr.vmem [resolvable:$true] %s53
      %59 = dma.hbm_to_vmem [thread:$0]  %s3, 12288, %s54, [#allocation11], 128, 128, 8
    $region17: #{tpu_custom_call.1} parent=1 // pred_fallthru
      _
    // Predicated region
    $region18: #{tpu_custom_call.1} parent=1 // pred_check
      _
    $region19: #{tpu_custom_call.1} parent=1 // pred_check_branch
      %61 = sbr.rel (0) target = $region21
    $region20: #{tpu_custom_call.1} parent=1 // pred_region
      %s63 = ssub.s32 16, 16
      %64 = vsyncadd [#allocation11], %s63
      %s66 = sshll.u32 [#allocation12], 4
      %s67 = int_to_ptr.vmem [resolvable:$true] %s66
      %69 = dma.hbm_to_vmem [thread:$0]  %s4, 16, %s67, [#allocation11]
    $region21: #{tpu_custom_call.1} parent=1 // pred_fallthru
      _
    // Predicated region
    $region22: #{tpu_custom_call.1} parent=1 // pred_check
      _
    $region23: #{tpu_custom_call.1} parent=1 // pred_check_branch
      %71 = sbr.rel (0) target = $region25
    $region24: #{tpu_custom_call.1} parent=1 // pred_region
      %72 = dma.done [#allocation5], 768
    $region25: #{tpu_custom_call.1} parent=1 // pred_fallthru
      _
    // Predicated region
    $region26: #{tpu_custom_call.1} parent=1 // pred_check
      _
    $region27: #{tpu_custom_call.1} parent=1 // pred_check_branch
      %74 = sbr.rel (0) target = $region29
    $region28: #{tpu_custom_call.1} parent=1 // pred_region
      %75 = dma.done [#allocation8], 73728
    $region29: #{tpu_custom_call.1} parent=1 // pred_fallthru
      _
    // Predicated region
    $region30: #{tpu_custom_call.1} parent=1 // pred_check
      _
    $region31: #{tpu_custom_call.1} parent=1 // pred_check_branch
      %77 = sbr.rel (0) target = $region33
    $region32: #{tpu_custom_call.1} parent=1 // pred_region
      %78 = dma.done [#allocation8], 96
    $region33: #{tpu_custom_call.1} parent=1 // pred_fallthru
      _
    // Predicated region
    $region34: #{tpu_custom_call.1} parent=1 // pred_check
      _
    $region35: #{tpu_custom_call.1} parent=1 // pred_check_branch
      %80 = sbr.rel (0) target = $region37
    $region36: #{tpu_custom_call.1} parent=1 // pred_region
      %81 = dma.done [#allocation11], 12288
    $region37: #{tpu_custom_call.1} parent=1 // pred_fallthru
      _
    // Predicated region
    $region38: #{tpu_custom_call.1} parent=1 // pred_check
      _
    $region39: #{tpu_custom_call.1} parent=1 // pred_check_branch
      %83 = sbr.rel (0) target = $region41
    $region40: #{tpu_custom_call.1} parent=1 // pred_region
      %84 = dma.done [#allocation11], 16
    $region41: #{tpu_custom_call.1} parent=1 // pred_fallthru
      _
    %v85 = vld [vmem:[#allocation4] sm:$0xff]
    %v86 = vld [vmem:[#allocation4 + $0x8] sm:$0xff]
    %v87 = vld [vmem:[#allocation4 + $0x10] sm:$0xff]
    %v88 = vld [vmem:[#allocation4 + $0x18] sm:$0xff]
    %v89 = vld [vmem:[#allocation4 + $0x20] sm:$0xff]
    %v90 = vld [vmem:[#allocation4 + $0x28] sm:$0xff]
    %v91 = vld [vmem:[#allocation7] sm:$0xff]
    %v92 = vld [vmem:[#allocation7 + $0x8] sm:$0xff]
    %v93 = vld [vmem:[#allocation7 + $0x10] sm:$0xff]
    %v94 = vld [vmem:[#allocation7 + $0x18] sm:$0xff]
    %v95 = vld [vmem:[#allocation7 + $0x20] sm:$0xff]
    %v96 = vld [vmem:[#allocation7 + $0x28] sm:$0xff]
    %v97 = vld [vmem:[#allocation7 + $0x30] sm:$0xff]
    %v98 = vld [vmem:[#allocation7 + $0x38] sm:$0xff]
    %v99 = vld [vmem:[#allocation7 + $0x40] sm:$0xff]
    %v100 = vld [vmem:[#allocation7 + $0x48] sm:$0xff]
    %v101 = vld [vmem:[#allocation7 + $0x50] sm:$0xff]
    %v102 = vld [vmem:[#allocation7 + $0x58] sm:$0xff]
    %v103 = vld [vmem:[#allocation7 + $0x60] sm:$0xff]
    %v104 = vld [vmem:[#allocation7 + $0x68] sm:$0xff]
    %v105 = vld [vmem:[#allocation7 + $0x70] sm:$0xff]
    %v106 = vld [vmem:[#allocation7 + $0x78] sm:$0xff]
    %v107 = vld [vmem:[#allocation7 + $0x80] sm:$0xff]
    %v108 = vld [vmem:[#allocation7 + $0x88] sm:$0xff]
    %v109 = vld [vmem:[#allocation7 + $0x90] sm:$0xff]
    %v110 = vld [vmem:[#allocation7 + $0x98] sm:$0xff]
    %v111 = vld [vmem:[#allocation7 + $0xa0] sm:$0xff]
    %v112 = vld [vmem:[#allocation7 + $0xa8] sm:$0xff]
    %v113 = vld [vmem:[#allocation7 + $0xb0] sm:$0xff]
    %v114 = vld [vmem:[#allocation7 + $0xb8] sm:$0xff]
    %v115 = vld [vmem:[#allocation7 + $0xc0] sm:$0xff]
    %v116 = vld [vmem:[#allocation7 + $0xc8] sm:$0xff]
    %v117 = vld [vmem:[#allocation7 + $0xd0] sm:$0xff]
    %v118 = vld [vmem:[#allocation7 + $0xd8] sm:$0xff]
    %v119 = vld [vmem:[#allocation7 + $0xe0] sm:$0xff]
    %v120 = vld [vmem:[#allocation7 + $0xe8] sm:$0xff]
    %v121 = vld [vmem:[#allocation7 + $0xf0] sm:$0xff]
    %v122 = vld [vmem:[#allocation7 + $0xf8] sm:$0xff]
    %v123 = vld [vmem:[#allocation7 + $0x100] sm:$0xff]
    %v124 = vld [vmem:[#allocation7 + $0x108] sm:$0xff]
    %v125 = vld [vmem:[#allocation7 + $0x110] sm:$0xff]
    %v126 = vld [vmem:[#allocation7 + $0x118] sm:$0xff]
    %v127 = vld [vmem:[#allocation7 + $0x120] sm:$0xff]
    %v128 = vld [vmem:[#allocation7 + $0x128] sm:$0xff]
    %v129 = vld [vmem:[#allocation7 + $0x130] sm:$0xff]
    %v130 = vld [vmem:[#allocation7 + $0x138] sm:$0xff]
    %v131 = vld [vmem:[#allocation7 + $0x140] sm:$0xff]
    %v132 = vld [vmem:[#allocation7 + $0x148] sm:$0xff]
    %v133 = vld [vmem:[#allocation7 + $0x150] sm:$0xff]
    %v134 = vld [vmem:[#allocation7 + $0x158] sm:$0xff]
    %v135 = vld [vmem:[#allocation7 + $0x160] sm:$0xff]
    %v136 = vld [vmem:[#allocation7 + $0x168] sm:$0xff]
    %v137 = vld [vmem:[#allocation7 + $0x170] sm:$0xff]
    %v138 = vld [vmem:[#allocation7 + $0x178] sm:$0xff]
    %v139 = vld [vmem:[#allocation7 + $0x180] sm:$0xff]
    %v140 = vld [vmem:[#allocation7 + $0x188] sm:$0xff]
    %v141 = vld [vmem:[#allocation7 + $0x190] sm:$0xff]
    %v142 = vld [vmem:[#allocation7 + $0x198] sm:$0xff]
    %v143 = vld [vmem:[#allocation7 + $0x1a0] sm:$0xff]
    %v144 = vld [vmem:[#allocation7 + $0x1a8] sm:$0xff]
    %v145 = vld [vmem:[#allocation7 + $0x1b0] sm:$0xff]
    %v146 = vld [vmem:[#allocation7 + $0x1b8] sm:$0xff]
    %v147 = vld [vmem:[#allocation7 + $0x1c0] sm:$0xff]
    %v148 = vld [vmem:[#allocation7 + $0x1c8] sm:$0xff]
    %v149 = vld [vmem:[#allocation7 + $0x1d0] sm:$0xff]
    %v150 = vld [vmem:[#allocation7 + $0x1d8] sm:$0xff]
    %v151 = vld [vmem:[#allocation7 + $0x1e0] sm:$0xff]
    %v152 = vld [vmem:[#allocation7 + $0x1e8] sm:$0xff]
    %v153 = vld [vmem:[#allocation7 + $0x1f0] sm:$0xff]
    %v154 = vld [vmem:[#allocation7 + $0x1f8] sm:$0xff]
    %v155 = vld [vmem:[#allocation7 + $0x200] sm:$0xff]
    %v156 = vld [vmem:[#allocation7 + $0x208] sm:$0xff]
    %v157 = vld [vmem:[#allocation7 + $0x210] sm:$0xff]
    %v158 = vld [vmem:[#allocation7 + $0x218] sm:$0xff]
    %v159 = vld [vmem:[#allocation7 + $0x220] sm:$0xff]
    %v160 = vld [vmem:[#allocation7 + $0x228] sm:$0xff]
    %v161 = vld [vmem:[#allocation7 + $0x230] sm:$0xff]
    %v162 = vld [vmem:[#allocation7 + $0x238] sm:$0xff]
    %v163 = vld [vmem:[#allocation7 + $0x240] sm:$0xff]
    %v164 = vld [vmem:[#allocation7 + $0x248] sm:$0xff]
    %v165 = vld [vmem:[#allocation7 + $0x250] sm:$0xff]
    %v166 = vld [vmem:[#allocation7 + $0x258] sm:$0xff]
    %v167 = vld [vmem:[#allocation7 + $0x260] sm:$0xff]
    %v168 = vld [vmem:[#allocation7 + $0x268] sm:$0xff]
    %v169 = vld [vmem:[#allocation7 + $0x270] sm:$0xff]
    %v170 = vld [vmem:[#allocation7 + $0x278] sm:$0xff]
    %v171 = vld [vmem:[#allocation7 + $0x280] sm:$0xff]
    %v172 = vld [vmem:[#allocation7 + $0x288] sm:$0xff]
    %v173 = vld [vmem:[#allocation7 + $0x290] sm:$0xff]
    %v174 = vld [vmem:[#allocation7 + $0x298] sm:$0xff]
    %v175 = vld [vmem:[#allocation7 + $0x2a0] sm:$0xff]
    %v176 = vld [vmem:[#allocation7 + $0x2a8] sm:$0xff]
    %v177 = vld [vmem:[#allocation7 + $0x2b0] sm:$0xff]
    %v178 = vld [vmem:[#allocation7 + $0x2b8] sm:$0xff]
    %v179 = vld [vmem:[#allocation7 + $0x2c0] sm:$0xff]
    %v180 = vld [vmem:[#allocation7 + $0x2c8] sm:$0xff]
    %v181 = vld [vmem:[#allocation7 + $0x2d0] sm:$0xff]
    %v182 = vld [vmem:[#allocation7 + $0x2d8] sm:$0xff]
    %v183 = vld [vmem:[#allocation7 + $0x2e0] sm:$0xff]
    %v184 = vld [vmem:[#allocation7 + $0x2e8] sm:$0xff]
    %v185 = vld [vmem:[#allocation7 + $0x2f0] sm:$0xff]
    %v186 = vld [vmem:[#allocation7 + $0x2f8] sm:$0xff]
    %v187 = vld [vmem:[#allocation7 + $0x300] sm:$0xff]
    %v188 = vld [vmem:[#allocation7 + $0x308] sm:$0xff]
    %v189 = vld [vmem:[#allocation7 + $0x310] sm:$0xff]
    %v190 = vld [vmem:[#allocation7 + $0x318] sm:$0xff]
    %v191 = vld [vmem:[#allocation7 + $0x320] sm:$0xff]
    %v192 = vld [vmem:[#allocation7 + $0x328] sm:$0xff]
    %v193 = vld [vmem:[#allocation7 + $0x330] sm:$0xff]
    %v194 = vld [vmem:[#allocation7 + $0x338] sm:$0xff]
    %v195 = vld [vmem:[#allocation7 + $0x340] sm:$0xff]
    %v196 = vld [vmem:[#allocation7 + $0x348] sm:$0xff]
    %v197 = vld [vmem:[#allocation7 + $0x350] sm:$0xff]
    %v198 = vld [vmem:[#allocation7 + $0x358] sm:$0xff]
    %v199 = vld [vmem:[#allocation7 + $0x360] sm:$0xff]
    %v200 = vld [vmem:[#allocation7 + $0x368] sm:$0xff]
    %v201 = vld [vmem:[#allocation7 + $0x370] sm:$0xff]
    %v202 = vld [vmem:[#allocation7 + $0x378] sm:$0xff]
    %v203 = vld [vmem:[#allocation7 + $0x380] sm:$0xff]
    %v204 = vld [vmem:[#allocation7 + $0x388] sm:$0xff]
    %v205 = vld [vmem:[#allocation7 + $0x390] sm:$0xff]
    %v206 = vld [vmem:[#allocation7 + $0x398] sm:$0xff]
    %v207 = vld [vmem:[#allocation7 + $0x3a0] sm:$0xff]
    %v208 = vld [vmem:[#allocation7 + $0x3a8] sm:$0xff]
    %v209 = vld [vmem:[#allocation7 + $0x3b0] sm:$0xff]
    %v210 = vld [vmem:[#allocation7 + $0x3b8] sm:$0xff]
    %v211 = vld [vmem:[#allocation7 + $0x3c0] sm:$0xff]
    %v212 = vld [vmem:[#allocation7 + $0x3c8] sm:$0xff]
    %v213 = vld [vmem:[#allocation7 + $0x3d0] sm:$0xff]
    %v214 = vld [vmem:[#allocation7 + $0x3d8] sm:$0xff]
    %v215 = vld [vmem:[#allocation7 + $0x3e0] sm:$0xff]
    %v216 = vld [vmem:[#allocation7 + $0x3e8] sm:$0xff]
    %v217 = vld [vmem:[#allocation7 + $0x3f0] sm:$0xff]
    %v218 = vld [vmem:[#allocation7 + $0x3f8] sm:$0xff]
    %v219 = vld [vmem:[#allocation7 + $0x400] sm:$0xff]
    %v220 = vld [vmem:[#allocation7 + $0x408] sm:$0xff]
    %v221 = vld [vmem:[#allocation7 + $0x410] sm:$0xff]
    %v222 = vld [vmem:[#allocation7 + $0x418] sm:$0xff]
    %v223 = vld [vmem:[#allocation7 + $0x420] sm:$0xff]
    %v224 = vld [vmem:[#allocation7 + $0x428] sm:$0xff]
    %v225 = vld [vmem:[#allocation7 + $0x430] sm:$0xff]
    %v226 = vld [vmem:[#allocation7 + $0x438] sm:$0xff]
    %v227 = vld [vmem:[#allocation7 + $0x440] sm:$0xff]
    %v228 = vld [vmem:[#allocation7 + $0x448] sm:$0xff]
    %v229 = vld [vmem:[#allocation7 + $0x450] sm:$0xff]
    %v230 = vld [vmem:[#allocation7 + $0x458] sm:$0xff]
    %v231 = vld [vmem:[#allocation7 + $0x460] sm:$0xff]
    %v232 = vld [vmem:[#allocation7 + $0x468] sm:$0xff]
    %v233 = vld [vmem:[#allocation7 + $0x470] sm:$0xff]
    %v234 = vld [vmem:[#allocation7 + $0x478] sm:$0xff]
    %v235 = vld [vmem:[#allocation7 + $0x480] sm:$0xff]
    %v236 = vld [vmem:[#allocation7 + $0x488] sm:$0xff]
    %v237 = vld [vmem:[#allocation7 + $0x490] sm:$0xff]
    %v238 = vld [vmem:[#allocation7 + $0x498] sm:$0xff]
    %v239 = vld [vmem:[#allocation7 + $0x4a0] sm:$0xff]
    %v240 = vld [vmem:[#allocation7 + $0x4a8] sm:$0xff]
    %v241 = vld [vmem:[#allocation7 + $0x4b0] sm:$0xff]
    %v242 = vld [vmem:[#allocation7 + $0x4b8] sm:$0xff]
    %v243 = vld [vmem:[#allocation7 + $0x4c0] sm:$0xff]
    %v244 = vld [vmem:[#allocation7 + $0x4c8] sm:$0xff]
    %v245 = vld [vmem:[#allocation7 + $0x4d0] sm:$0xff]
    %v246 = vld [vmem:[#allocation7 + $0x4d8] sm:$0xff]
    %v247 = vld [vmem:[#allocation7 + $0x4e0] sm:$0xff]
    %v248 = vld [vmem:[#allocation7 + $0x4e8] sm:$0xff]
    %v249 = vld [vmem:[#allocation7 + $0x4f0] sm:$0xff]
    %v250 = vld [vmem:[#allocation7 + $0x4f8] sm:$0xff]
    %v251 = vld [vmem:[#allocation7 + $0x500] sm:$0xff]
    %v252 = vld [vmem:[#allocation7 + $0x508] sm:$0xff]
    %v253 = vld [vmem:[#allocation7 + $0x510] sm:$0xff]
    %v254 = vld [vmem:[#allocation7 + $0x518] sm:$0xff]
    %v255 = vld [vmem:[#allocation7 + $0x520] sm:$0xff]
    %v256 = vld [vmem:[#allocation7 + $0x528] sm:$0xff]
    %v257 = vld [vmem:[#allocation7 + $0x530] sm:$0xff]
    %v258 = vld [vmem:[#allocation7 + $0x538] sm:$0xff]
    %v259 = vld [vmem:[#allocation7 + $0x540] sm:$0xff]
    %v260 = vld [vmem:[#allocation7 + $0x548] sm:$0xff]
    %v261 = vld [vmem:[#allocation7 + $0x550] sm:$0xff]
    %v262 = vld [vmem:[#allocation7 + $0x558] sm:$0xff]
    %v263 = vld [vmem:[#allocation7 + $0x560] sm:$0xff]
    %v264 = vld [vmem:[#allocation7 + $0x568] sm:$0xff]
    %v265 = vld [vmem:[#allocation7 + $0x570] sm:$0xff]
    %v266 = vld [vmem:[#allocation7 + $0x578] sm:$0xff]
    %v267 = vld [vmem:[#allocation7 + $0x580] sm:$0xff]
    %v268 = vld [vmem:[#allocation7 + $0x588] sm:$0xff]
    %v269 = vld [vmem:[#allocation7 + $0x590] sm:$0xff]
    %v270 = vld [vmem:[#allocation7 + $0x598] sm:$0xff]
    %v271 = vld [vmem:[#allocation7 + $0x5a0] sm:$0xff]
    %v272 = vld [vmem:[#allocation7 + $0x5a8] sm:$0xff]
    %v273 = vld [vmem:[#allocation7 + $0x5b0] sm:$0xff]
    %v274 = vld [vmem:[#allocation7 + $0x5b8] sm:$0xff]
    %v275 = vld [vmem:[#allocation7 + $0x5c0] sm:$0xff]
    %v276 = vld [vmem:[#allocation7 + $0x5c8] sm:$0xff]
    %v277 = vld [vmem:[#allocation7 + $0x5d0] sm:$0xff]
    %v278 = vld [vmem:[#allocation7 + $0x5d8] sm:$0xff]
    %v279 = vld [vmem:[#allocation7 + $0x5e0] sm:$0xff]
    %v280 = vld [vmem:[#allocation7 + $0x5e8] sm:$0xff]
    %v281 = vld [vmem:[#allocation7 + $0x5f0] sm:$0xff]
    %v282 = vld [vmem:[#allocation7 + $0x5f8] sm:$0xff]
    %v283 = vld [vmem:[#allocation7 + $0x600] sm:$0xff]
    %v284 = vld [vmem:[#allocation7 + $0x608] sm:$0xff]
    %v285 = vld [vmem:[#allocation7 + $0x610] sm:$0xff]
    %v286 = vld [vmem:[#allocation7 + $0x618] sm:$0xff]
    %v287 = vld [vmem:[#allocation7 + $0x620] sm:$0xff]
    %v288 = vld [vmem:[#allocation7 + $0x628] sm:$0xff]
    %v289 = vld [vmem:[#allocation7 + $0x630] sm:$0xff]
    %v290 = vld [vmem:[#allocation7 + $0x638] sm:$0xff]
    %v291 = vld [vmem:[#allocation7 + $0x640] sm:$0xff]
    %v292 = vld [vmem:[#allocation7 + $0x648] sm:$0xff]
    %v293 = vld [vmem:[#allocation7 + $0x650] sm:$0xff]
    %v294 = vld [vmem:[#allocation7 + $0x658] sm:$0xff]
    %v295 = vld [vmem:[#allocation7 + $0x660] sm:$0xff]
    %v296 = vld [vmem:[#allocation7 + $0x668] sm:$0xff]
    %v297 = vld [vmem:[#allocation7 + $0x670] sm:$0xff]
    %v298 = vld [vmem:[#allocation7 + $0x678] sm:$0xff]
    %v299 = vld [vmem:[#allocation7 + $0x680] sm:$0xff]
    %v300 = vld [vmem:[#allocation7 + $0x688] sm:$0xff]
    %v301 = vld [vmem:[#allocation7 + $0x690] sm:$0xff]
    %v302 = vld [vmem:[#allocation7 + $0x698] sm:$0xff]
    %v303 = vld [vmem:[#allocation7 + $0x6a0] sm:$0xff]
    %v304 = vld [vmem:[#allocation7 + $0x6a8] sm:$0xff]
    %v305 = vld [vmem:[#allocation7 + $0x6b0] sm:$0xff]
    %v306 = vld [vmem:[#allocation7 + $0x6b8] sm:$0xff]
    %v307 = vld [vmem:[#allocation7 + $0x6c0] sm:$0xff]
    %v308 = vld [vmem:[#allocation7 + $0x6c8] sm:$0xff]
    %v309 = vld [vmem:[#allocation7 + $0x6d0] sm:$0xff]
    %v310 = vld [vmem:[#allocation7 + $0x6d8] sm:$0xff]
    %v311 = vld [vmem:[#allocation7 + $0x6e0] sm:$0xff]
    %v312 = vld [vmem:[#allocation7 + $0x6e8] sm:$0xff]
    %v313 = vld [vmem:[#allocation7 + $0x6f0] sm:$0xff]
    %v314 = vld [vmem:[#allocation7 + $0x6f8] sm:$0xff]
    %v315 = vld [vmem:[#allocation7 + $0x700] sm:$0xff]
    %v316 = vld [vmem:[#allocation7 + $0x708] sm:$0xff]
    %v317 = vld [vmem:[#allocation7 + $0x710] sm:$0xff]
    %v318 = vld [vmem:[#allocation7 + $0x718] sm:$0xff]
    %v319 = vld [vmem:[#allocation7 + $0x720] sm:$0xff]
    %v320 = vld [vmem:[#allocation7 + $0x728] sm:$0xff]
    %v321 = vld [vmem:[#allocation7 + $0x730] sm:$0xff]
    %v322 = vld [vmem:[#allocation7 + $0x738] sm:$0xff]
    %v323 = vld [vmem:[#allocation7 + $0x740] sm:$0xff]
    %v324 = vld [vmem:[#allocation7 + $0x748] sm:$0xff]
    %v325 = vld [vmem:[#allocation7 + $0x750] sm:$0xff]
    %v326 = vld [vmem:[#allocation7 + $0x758] sm:$0xff]
    %v327 = vld [vmem:[#allocation7 + $0x760] sm:$0xff]
    %v328 = vld [vmem:[#allocation7 + $0x768] sm:$0xff]
    %v329 = vld [vmem:[#allocation7 + $0x770] sm:$0xff]
    %v330 = vld [vmem:[#allocation7 + $0x778] sm:$0xff]
    %v331 = vld [vmem:[#allocation7 + $0x780] sm:$0xff]
    %v332 = vld [vmem:[#allocation7 + $0x788] sm:$0xff]
    %v333 = vld [vmem:[#allocation7 + $0x790] sm:$0xff]
    %v334 = vld [vmem:[#allocation7 + $0x798] sm:$0xff]
    %v335 = vld [vmem:[#allocation7 + $0x7a0] sm:$0xff]
    %v336 = vld [vmem:[#allocation7 + $0x7a8] sm:$0xff]
    %v337 = vld [vmem:[#allocation7 + $0x7b0] sm:$0xff]
    %v338 = vld [vmem:[#allocation7 + $0x7b8] sm:$0xff]
    %v339 = vld [vmem:[#allocation7 + $0x7c0] sm:$0xff]
    %v340 = vld [vmem:[#allocation7 + $0x7c8] sm:$0xff]
    %v341 = vld [vmem:[#allocation7 + $0x7d0] sm:$0xff]
    %v342 = vld [vmem:[#allocation7 + $0x7d8] sm:$0xff]
    %v343 = vld [vmem:[#allocation7 + $0x7e0] sm:$0xff]
    %v344 = vld [vmem:[#allocation7 + $0x7e8] sm:$0xff]
    %v345 = vld [vmem:[#allocation7 + $0x7f0] sm:$0xff]
    %v346 = vld [vmem:[#allocation7 + $0x7f8] sm:$0xff]
    %v347 = vld [vmem:[#allocation7 + $0x800] sm:$0xff]
    %v348 = vld [vmem:[#allocation7 + $0x808] sm:$0xff]
    %v349 = vld [vmem:[#allocation7 + $0x810] sm:$0xff]
    %v350 = vld [vmem:[#allocation7 + $0x818] sm:$0xff]
    %v351 = vld [vmem:[#allocation7 + $0x820] sm:$0xff]
    %v352 = vld [vmem:[#allocation7 + $0x828] sm:$0xff]
    %v353 = vld [vmem:[#allocation7 + $0x830] sm:$0xff]
    %v354 = vld [vmem:[#allocation7 + $0x838] sm:$0xff]
    %v355 = vld [vmem:[#allocation7 + $0x840] sm:$0xff]
    %v356 = vld [vmem:[#allocation7 + $0x848] sm:$0xff]
    %v357 = vld [vmem:[#allocation7 + $0x850] sm:$0xff]
    %v358 = vld [vmem:[#allocation7 + $0x858] sm:$0xff]
    %v359 = vld [vmem:[#allocation7 + $0x860] sm:$0xff]
    %v360 = vld [vmem:[#allocation7 + $0x868] sm:$0xff]
    %v361 = vld [vmem:[#allocation7 + $0x870] sm:$0xff]
    %v362 = vld [vmem:[#allocation7 + $0x878] sm:$0xff]
    %v363 = vld [vmem:[#allocation7 + $0x880] sm:$0xff]
    %v364 = vld [vmem:[#allocation7 + $0x888] sm:$0xff]
    %v365 = vld [vmem:[#allocation7 + $0x890] sm:$0xff]
    %v366 = vld [vmem:[#allocation7 + $0x898] sm:$0xff]
    %v367 = vld [vmem:[#allocation7 + $0x8a0] sm:$0xff]
    %v368 = vld [vmem:[#allocation7 + $0x8a8] sm:$0xff]
    %v369 = vld [vmem:[#allocation7 + $0x8b0] sm:$0xff]
    %v370 = vld [vmem:[#allocation7 + $0x8b8] sm:$0xff]
    %v371 = vld [vmem:[#allocation7 + $0x8c0] sm:$0xff]
    %v372 = vld [vmem:[#allocation7 + $0x8c8] sm:$0xff]
    %v373 = vld [vmem:[#allocation7 + $0x8d0] sm:$0xff]
    %v374 = vld [vmem:[#allocation7 + $0x8d8] sm:$0xff]
    %v375 = vld [vmem:[#allocation7 + $0x8e0] sm:$0xff]
    %v376 = vld [vmem:[#allocation7 + $0x8e8] sm:$0xff]
    %v377 = vld [vmem:[#allocation7 + $0x8f0] sm:$0xff]
    %v378 = vld [vmem:[#allocation7 + $0x8f8] sm:$0xff]
    %v379 = vld [vmem:[#allocation7 + $0x900] sm:$0xff]
    %v380 = vld [vmem:[#allocation7 + $0x908] sm:$0xff]
    %v381 = vld [vmem:[#allocation7 + $0x910] sm:$0xff]
    %v382 = vld [vmem:[#allocation7 + $0x918] sm:$0xff]
    %v383 = vld [vmem:[#allocation7 + $0x920] sm:$0xff]
    %v384 = vld [vmem:[#allocation7 + $0x928] sm:$0xff]
    %v385 = vld [vmem:[#allocation7 + $0x930] sm:$0xff]
    %v386 = vld [vmem:[#allocation7 + $0x938] sm:$0xff]
    %v387 = vld [vmem:[#allocation7 + $0x940] sm:$0xff]
    %v388 = vld [vmem:[#allocation7 + $0x948] sm:$0xff]
    %v389 = vld [vmem:[#allocation7 + $0x950] sm:$0xff]
    %v390 = vld [vmem:[#allocation7 + $0x958] sm:$0xff]
    %v391 = vld [vmem:[#allocation7 + $0x960] sm:$0xff]
    %v392 = vld [vmem:[#allocation7 + $0x968] sm:$0xff]
    %v393 = vld [vmem:[#allocation7 + $0x970] sm:$0xff]
    %v394 = vld [vmem:[#allocation7 + $0x978] sm:$0xff]
    %v395 = vld [vmem:[#allocation7 + $0x980] sm:$0xff]
    %v396 = vld [vmem:[#allocation7 + $0x988] sm:$0xff]
    %v397 = vld [vmem:[#allocation7 + $0x990] sm:$0xff]
    %v398 = vld [vmem:[#allocation7 + $0x998] sm:$0xff]
    %v399 = vld [vmem:[#allocation7 + $0x9a0] sm:$0xff]
    %v400 = vld [vmem:[#allocation7 + $0x9a8] sm:$0xff]
    %v401 = vld [vmem:[#allocation7 + $0x9b0] sm:$0xff]
    %v402 = vld [vmem:[#allocation7 + $0x9b8] sm:$0xff]
    %v403 = vld [vmem:[#allocation7 + $0x9c0] sm:$0xff]
    %v404 = vld [vmem:[#allocation7 + $0x9c8] sm:$0xff]
    %v405 = vld [vmem:[#allocation7 + $0x9d0] sm:$0xff]
    %v406 = vld [vmem:[#allocation7 + $0x9d8] sm:$0xff]
    %v407 = vld [vmem:[#allocation7 + $0x9e0] sm:$0xff]
    %v408 = vld [vmem:[#allocation7 + $0x9e8] sm:$0xff]
    %v409 = vld [vmem:[#allocation7 + $0x9f0] sm:$0xff]
    %v410 = vld [vmem:[#allocation7 + $0x9f8] sm:$0xff]
    %v411 = vld [vmem:[#allocation7 + $0xa00] sm:$0xff]
    %v412 = vld [vmem:[#allocation7 + $0xa08] sm:$0xff]
    %v413 = vld [vmem:[#allocation7 + $0xa10] sm:$0xff]
    %v414 = vld [vmem:[#allocation7 + $0xa18] sm:$0xff]
    %v415 = vld [vmem:[#allocation7 + $0xa20] sm:$0xff]
    %v416 = vld [vmem:[#allocation7 + $0xa28] sm:$0xff]
    %v417 = vld [vmem:[#allocation7 + $0xa30] sm:$0xff]
    %v418 = vld [vmem:[#allocation7 + $0xa38] sm:$0xff]
    %v419 = vld [vmem:[#allocation7 + $0xa40] sm:$0xff]
    %v420 = vld [vmem:[#allocation7 + $0xa48] sm:$0xff]
    %v421 = vld [vmem:[#allocation7 + $0xa50] sm:$0xff]
    %v422 = vld [vmem:[#allocation7 + $0xa58] sm:$0xff]
    %v423 = vld [vmem:[#allocation7 + $0xa60] sm:$0xff]
    %v424 = vld [vmem:[#allocation7 + $0xa68] sm:$0xff]
    %v425 = vld [vmem:[#allocation7 + $0xa70] sm:$0xff]
    %v426 = vld [vmem:[#allocation7 + $0xa78] sm:$0xff]
    %v427 = vld [vmem:[#allocation7 + $0xa80] sm:$0xff]
    %v428 = vld [vmem:[#allocation7 + $0xa88] sm:$0xff]
    %v429 = vld [vmem:[#allocation7 + $0xa90] sm:$0xff]
    %v430 = vld [vmem:[#allocation7 + $0xa98] sm:$0xff]
    %v431 = vld [vmem:[#allocation7 + $0xaa0] sm:$0xff]
    %v432 = vld [vmem:[#allocation7 + $0xaa8] sm:$0xff]
    %v433 = vld [vmem:[#allocation7 + $0xab0] sm:$0xff]
    %v434 = vld [vmem:[#allocation7 + $0xab8] sm:$0xff]
    %v435 = vld [vmem:[#allocation7 + $0xac0] sm:$0xff]
    %v436 = vld [vmem:[#allocation7 + $0xac8] sm:$0xff]
    %v437 = vld [vmem:[#allocation7 + $0xad0] sm:$0xff]
    %v438 = vld [vmem:[#allocation7 + $0xad8] sm:$0xff]
    %v439 = vld [vmem:[#allocation7 + $0xae0] sm:$0xff]
    %v440 = vld [vmem:[#allocation7 + $0xae8] sm:$0xff]
    %v441 = vld [vmem:[#allocation7 + $0xaf0] sm:$0xff]
    %v442 = vld [vmem:[#allocation7 + $0xaf8] sm:$0xff]
    %v443 = vld [vmem:[#allocation7 + $0xb00] sm:$0xff]
    %v444 = vld [vmem:[#allocation7 + $0xb08] sm:$0xff]
    %v445 = vld [vmem:[#allocation7 + $0xb10] sm:$0xff]
    %v446 = vld [vmem:[#allocation7 + $0xb18] sm:$0xff]
    %v447 = vld [vmem:[#allocation7 + $0xb20] sm:$0xff]
    %v448 = vld [vmem:[#allocation7 + $0xb28] sm:$0xff]
    %v449 = vld [vmem:[#allocation7 + $0xb30] sm:$0xff]
    %v450 = vld [vmem:[#allocation7 + $0xb38] sm:$0xff]
    %v451 = vld [vmem:[#allocation7 + $0xb40] sm:$0xff]
    %v452 = vld [vmem:[#allocation7 + $0xb48] sm:$0xff]
    %v453 = vld [vmem:[#allocation7 + $0xb50] sm:$0xff]
    %v454 = vld [vmem:[#allocation7 + $0xb58] sm:$0xff]
    %v455 = vld [vmem:[#allocation7 + $0xb60] sm:$0xff]
    %v456 = vld [vmem:[#allocation7 + $0xb68] sm:$0xff]
    %v457 = vld [vmem:[#allocation7 + $0xb70] sm:$0xff]
    %v458 = vld [vmem:[#allocation7 + $0xb78] sm:$0xff]
    %v459 = vld [vmem:[#allocation7 + $0xb80] sm:$0xff]
    %v460 = vld [vmem:[#allocation7 + $0xb88] sm:$0xff]
    %v461 = vld [vmem:[#allocation7 + $0xb90] sm:$0xff]
    %v462 = vld [vmem:[#allocation7 + $0xb98] sm:$0xff]
    %v463 = vld [vmem:[#allocation7 + $0xba0] sm:$0xff]
    %v464 = vld [vmem:[#allocation7 + $0xba8] sm:$0xff]
    %v465 = vld [vmem:[#allocation7 + $0xbb0] sm:$0xff]
    %v466 = vld [vmem:[#allocation7 + $0xbb8] sm:$0xff]
    %v467 = vld [vmem:[#allocation7 + $0xbc0] sm:$0xff]
    %v468 = vld [vmem:[#allocation7 + $0xbc8] sm:$0xff]
    %v469 = vld [vmem:[#allocation7 + $0xbd0] sm:$0xff]
    %v470 = vld [vmem:[#allocation7 + $0xbd8] sm:$0xff]
    %v471 = vld [vmem:[#allocation7 + $0xbe0] sm:$0xff]
    %v472 = vld [vmem:[#allocation7 + $0xbe8] sm:$0xff]
    %v473 = vld [vmem:[#allocation7 + $0xbf0] sm:$0xff]
    %v474 = vld [vmem:[#allocation7 + $0xbf8] sm:$0xff]
    %v475 = vld [vmem:[#allocation7 + $0xc00] sm:$0xff]
    %v476 = vld [vmem:[#allocation7 + $0xc08] sm:$0xff]
    %v477 = vld [vmem:[#allocation7 + $0xc10] sm:$0xff]
    %v478 = vld [vmem:[#allocation7 + $0xc18] sm:$0xff]
    %v479 = vld [vmem:[#allocation7 + $0xc20] sm:$0xff]
    %v480 = vld [vmem:[#allocation7 + $0xc28] sm:$0xff]
    %v481 = vld [vmem:[#allocation7 + $0xc30] sm:$0xff]
    %v482 = vld [vmem:[#allocation7 + $0xc38] sm:$0xff]
    %v483 = vld [vmem:[#allocation7 + $0xc40] sm:$0xff]
    %v484 = vld [vmem:[#allocation7 + $0xc48] sm:$0xff]
    %v485 = vld [vmem:[#allocation7 + $0xc50] sm:$0xff]
    %v486 = vld [vmem:[#allocation7 + $0xc58] sm:$0xff]
    %v487 = vld [vmem:[#allocation7 + $0xc60] sm:$0xff]
    %v488 = vld [vmem:[#allocation7 + $0xc68] sm:$0xff]
    %v489 = vld [vmem:[#allocation7 + $0xc70] sm:$0xff]
    %v490 = vld [vmem:[#allocation7 + $0xc78] sm:$0xff]
    %v491 = vld [vmem:[#allocation7 + $0xc80] sm:$0xff]
    %v492 = vld [vmem:[#allocation7 + $0xc88] sm:$0xff]
    %v493 = vld [vmem:[#allocation7 + $0xc90] sm:$0xff]
    %v494 = vld [vmem:[#allocation7 + $0xc98] sm:$0xff]
    %v495 = vld [vmem:[#allocation7 + $0xca0] sm:$0xff]
    %v496 = vld [vmem:[#allocation7 + $0xca8] sm:$0xff]
    %v497 = vld [vmem:[#allocation7 + $0xcb0] sm:$0xff]
    %v498 = vld [vmem:[#allocation7 + $0xcb8] sm:$0xff]
    %v499 = vld [vmem:[#allocation7 + $0xcc0] sm:$0xff]
    %v500 = vld [vmem:[#allocation7 + $0xcc8] sm:$0xff]
    %v501 = vld [vmem:[#allocation7 + $0xcd0] sm:$0xff]
    %v502 = vld [vmem:[#allocation7 + $0xcd8] sm:$0xff]
    %v503 = vld [vmem:[#allocation7 + $0xce0] sm:$0xff]
    %v504 = vld [vmem:[#allocation7 + $0xce8] sm:$0xff]
    %v505 = vld [vmem:[#allocation7 + $0xcf0] sm:$0xff]
    %v506 = vld [vmem:[#allocation7 + $0xcf8] sm:$0xff]
    %v507 = vld [vmem:[#allocation7 + $0xd00] sm:$0xff]
    %v508 = vld [vmem:[#allocation7 + $0xd08] sm:$0xff]
    %v509 = vld [vmem:[#allocation7 + $0xd10] sm:$0xff]
    %v510 = vld [vmem:[#allocation7 + $0xd18] sm:$0xff]
    %v511 = vld [vmem:[#allocation7 + $0xd20] sm:$0xff]
    %v512 = vld [vmem:[#allocation7 + $0xd28] sm:$0xff]
    %v513 = vld [vmem:[#allocation7 + $0xd30] sm:$0xff]
    %v514 = vld [vmem:[#allocation7 + $0xd38] sm:$0xff]
    %v515 = vld [vmem:[#allocation7 + $0xd40] sm:$0xff]
    %v516 = vld [vmem:[#allocation7 + $0xd48] sm:$0xff]
    %v517 = vld [vmem:[#allocation7 + $0xd50] sm:$0xff]
    %v518 = vld [vmem:[#allocation7 + $0xd58] sm:$0xff]
    %v519 = vld [vmem:[#allocation7 + $0xd60] sm:$0xff]
    %v520 = vld [vmem:[#allocation7 + $0xd68] sm:$0xff]
    %v521 = vld [vmem:[#allocation7 + $0xd70] sm:$0xff]
    %v522 = vld [vmem:[#allocation7 + $0xd78] sm:$0xff]
    %v523 = vld [vmem:[#allocation7 + $0xd80] sm:$0xff]
    %v524 = vld [vmem:[#allocation7 + $0xd88] sm:$0xff]
    %v525 = vld [vmem:[#allocation7 + $0xd90] sm:$0xff]
    %v526 = vld [vmem:[#allocation7 + $0xd98] sm:$0xff]
    %v527 = vld [vmem:[#allocation7 + $0xda0] sm:$0xff]
    %v528 = vld [vmem:[#allocation7 + $0xda8] sm:$0xff]
    %v529 = vld [vmem:[#allocation7 + $0xdb0] sm:$0xff]
    %v530 = vld [vmem:[#allocation7 + $0xdb8] sm:$0xff]
    %v531 = vld [vmem:[#allocation7 + $0xdc0] sm:$0xff]
    %v532 = vld [vmem:[#allocation7 + $0xdc8] sm:$0xff]
    %v533 = vld [vmem:[#allocation7 + $0xdd0] sm:$0xff]
    %v534 = vld [vmem:[#allocation7 + $0xdd8] sm:$0xff]
    %v535 = vld [vmem:[#allocation7 + $0xde0] sm:$0xff]
    %v536 = vld [vmem:[#allocation7 + $0xde8] sm:$0xff]
    %v537 = vld [vmem:[#allocation7 + $0xdf0] sm:$0xff]
    %v538 = vld [vmem:[#allocation7 + $0xdf8] sm:$0xff]
    %v539 = vld [vmem:[#allocation7 + $0xe00] sm:$0xff]
    %v540 = vld [vmem:[#allocation7 + $0xe08] sm:$0xff]
    %v541 = vld [vmem:[#allocation7 + $0xe10] sm:$0xff]
    %v542 = vld [vmem:[#allocation7 + $0xe18] sm:$0xff]
    %v543 = vld [vmem:[#allocation7 + $0xe20] sm:$0xff]
    %v544 = vld [vmem:[#allocation7 + $0xe28] sm:$0xff]
    %v545 = vld [vmem:[#allocation7 + $0xe30] sm:$0xff]
    %v546 = vld [vmem:[#allocation7 + $0xe38] sm:$0xff]
    %v547 = vld [vmem:[#allocation7 + $0xe40] sm:$0xff]
    %v548 = vld [vmem:[#allocation7 + $0xe48] sm:$0xff]
    %v549 = vld [vmem:[#allocation7 + $0xe50] sm:$0xff]
    %v550 = vld [vmem:[#allocation7 + $0xe58] sm:$0xff]
    %v551 = vld [vmem:[#allocation7 + $0xe60] sm:$0xff]
    %v552 = vld [vmem:[#allocation7 + $0xe68] sm:$0xff]
    %v553 = vld [vmem:[#allocation7 + $0xe70] sm:$0xff]
    %v554 = vld [vmem:[#allocation7 + $0xe78] sm:$0xff]
    %v555 = vld [vmem:[#allocation7 + $0xe80] sm:$0xff]
    %v556 = vld [vmem:[#allocation7 + $0xe88] sm:$0xff]
    %v557 = vld [vmem:[#allocation7 + $0xe90] sm:$0xff]
    %v558 = vld [vmem:[#allocation7 + $0xe98] sm:$0xff]
    %v559 = vld [vmem:[#allocation7 + $0xea0] sm:$0xff]
    %v560 = vld [vmem:[#allocation7 + $0xea8] sm:$0xff]
    %v561 = vld [vmem:[#allocation7 + $0xeb0] sm:$0xff]
    %v562 = vld [vmem:[#allocation7 + $0xeb8] sm:$0xff]
    %v563 = vld [vmem:[#allocation7 + $0xec0] sm:$0xff]
    %v564 = vld [vmem:[#allocation7 + $0xec8] sm:$0xff]
    %v565 = vld [vmem:[#allocation7 + $0xed0] sm:$0xff]
    %v566 = vld [vmem:[#allocation7 + $0xed8] sm:$0xff]
    %v567 = vld [vmem:[#allocation7 + $0xee0] sm:$0xff]
    %v568 = vld [vmem:[#allocation7 + $0xee8] sm:$0xff]
    %v569 = vld [vmem:[#allocation7 + $0xef0] sm:$0xff]
    %v570 = vld [vmem:[#allocation7 + $0xef8] sm:$0xff]
    %v571 = vld [vmem:[#allocation7 + $0xf00] sm:$0xff]
    %v572 = vld [vmem:[#allocation7 + $0xf08] sm:$0xff]
    %v573 = vld [vmem:[#allocation7 + $0xf10] sm:$0xff]
    %v574 = vld [vmem:[#allocation7 + $0xf18] sm:$0xff]
    %v575 = vld [vmem:[#allocation7 + $0xf20] sm:$0xff]
    %v576 = vld [vmem:[#allocation7 + $0xf28] sm:$0xff]
    %v577 = vld [vmem:[#allocation7 + $0xf30] sm:$0xff]
    %v578 = vld [vmem:[#allocation7 + $0xf38] sm:$0xff]
    %v579 = vld [vmem:[#allocation7 + $0xf40] sm:$0xff]
    %v580 = vld [vmem:[#allocation7 + $0xf48] sm:$0xff]
    %v581 = vld [vmem:[#allocation7 + $0xf50] sm:$0xff]
    %v582 = vld [vmem:[#allocation7 + $0xf58] sm:$0xff]
    %v583 = vld [vmem:[#allocation7 + $0xf60] sm:$0xff]
    %v584 = vld [vmem:[#allocation7 + $0xf68] sm:$0xff]
    %v585 = vld [vmem:[#allocation7 + $0xf70] sm:$0xff]
    %v586 = vld [vmem:[#allocation7 + $0xf78] sm:$0xff]
    %v587 = vld [vmem:[#allocation7 + $0xf80] sm:$0xff]
    %v588 = vld [vmem:[#allocation7 + $0xf88] sm:$0xff]
    %v589 = vld [vmem:[#allocation7 + $0xf90] sm:$0xff]
    %v590 = vld [vmem:[#allocation7 + $0xf98] sm:$0xff]
    %v591 = vld [vmem:[#allocation7 + $0xfa0] sm:$0xff]
    %v592 = vld [vmem:[#allocation7 + $0xfa8] sm:$0xff]
    %v593 = vld [vmem:[#allocation7 + $0xfb0] sm:$0xff]
    %v594 = vld [vmem:[#allocation7 + $0xfb8] sm:$0xff]
    %v595 = vld [vmem:[#allocation7 + $0xfc0] sm:$0xff]
    %v596 = vld [vmem:[#allocation7 + $0xfc8] sm:$0xff]
    %v597 = vld [vmem:[#allocation7 + $0xfd0] sm:$0xff]
    %v598 = vld [vmem:[#allocation7 + $0xfd8] sm:$0xff]
    %v599 = vld [vmem:[#allocation7 + $0xfe0] sm:$0xff]
    %v600 = vld [vmem:[#allocation7 + $0xfe8] sm:$0xff]
    %v601 = vld [vmem:[#allocation7 + $0xff0] sm:$0xff]
    %v602 = vld [vmem:[#allocation7 + $0xff8] sm:$0xff]
    %v603 = vld [vmem:[#allocation7 + $0x1000] sm:$0xff]
    %v604 = vld [vmem:[#allocation7 + $0x1008] sm:$0xff]
    %v605 = vld [vmem:[#allocation7 + $0x1010] sm:$0xff]
    %v606 = vld [vmem:[#allocation7 + $0x1018] sm:$0xff]
    %v607 = vld [vmem:[#allocation7 + $0x1020] sm:$0xff]
    %v608 = vld [vmem:[#allocation7 + $0x1028] sm:$0xff]
    %v609 = vld [vmem:[#allocation7 + $0x1030] sm:$0xff]
    %v610 = vld [vmem:[#allocation7 + $0x1038] sm:$0xff]
    %v611 = vld [vmem:[#allocation7 + $0x1040] sm:$0xff]
    %v612 = vld [vmem:[#allocation7 + $0x1048] sm:$0xff]
    %v613 = vld [vmem:[#allocation7 + $0x1050] sm:$0xff]
    %v614 = vld [vmem:[#allocation7 + $0x1058] sm:$0xff]
    %v615 = vld [vmem:[#allocation7 + $0x1060] sm:$0xff]
    %v616 = vld [vmem:[#allocation7 + $0x1068] sm:$0xff]
    %v617 = vld [vmem:[#allocation7 + $0x1070] sm:$0xff]
    %v618 = vld [vmem:[#allocation7 + $0x1078] sm:$0xff]
    %v619 = vld [vmem:[#allocation7 + $0x1080] sm:$0xff]
    %v620 = vld [vmem:[#allocation7 + $0x1088] sm:$0xff]
    %v621 = vld [vmem:[#allocation7 + $0x1090] sm:$0xff]
    %v622 = vld [vmem:[#allocation7 + $0x1098] sm:$0xff]
    %v623 = vld [vmem:[#allocation7 + $0x10a0] sm:$0xff]
    %v624 = vld [vmem:[#allocation7 + $0x10a8] sm:$0xff]
    %v625 = vld [vmem:[#allocation7 + $0x10b0] sm:$0xff]
    %v626 = vld [vmem:[#allocation7 + $0x10b8] sm:$0xff]
    %v627 = vld [vmem:[#allocation7 + $0x10c0] sm:$0xff]
    %v628 = vld [vmem:[#allocation7 + $0x10c8] sm:$0xff]
    %v629 = vld [vmem:[#allocation7 + $0x10d0] sm:$0xff]
    %v630 = vld [vmem:[#allocation7 + $0x10d8] sm:$0xff]
    %v631 = vld [vmem:[#allocation7 + $0x10e0] sm:$0xff]
    %v632 = vld [vmem:[#allocation7 + $0x10e8] sm:$0xff]
    %v633 = vld [vmem:[#allocation7 + $0x10f0] sm:$0xff]
    %v634 = vld [vmem:[#allocation7 + $0x10f8] sm:$0xff]
    %v635 = vld [vmem:[#allocation7 + $0x1100] sm:$0xff]
    %v636 = vld [vmem:[#allocation7 + $0x1108] sm:$0xff]
    %v637 = vld [vmem:[#allocation7 + $0x1110] sm:$0xff]
    %v638 = vld [vmem:[#allocation7 + $0x1118] sm:$0xff]
    %v639 = vld [vmem:[#allocation7 + $0x1120] sm:$0xff]
    %v640 = vld [vmem:[#allocation7 + $0x1128] sm:$0xff]
    %v641 = vld [vmem:[#allocation7 + $0x1130] sm:$0xff]
    %v642 = vld [vmem:[#allocation7 + $0x1138] sm:$0xff]
    %v643 = vld [vmem:[#allocation7 + $0x1140] sm:$0xff]
    %v644 = vld [vmem:[#allocation7 + $0x1148] sm:$0xff]
    %v645 = vld [vmem:[#allocation7 + $0x1150] sm:$0xff]
    %v646 = vld [vmem:[#allocation7 + $0x1158] sm:$0xff]
    %v647 = vld [vmem:[#allocation7 + $0x1160] sm:$0xff]
    %v648 = vld [vmem:[#allocation7 + $0x1168] sm:$0xff]
    %v649 = vld [vmem:[#allocation7 + $0x1170] sm:$0xff]
    %v650 = vld [vmem:[#allocation7 + $0x1178] sm:$0xff]
    %v651 = vld [vmem:[#allocation7 + $0x1180] sm:$0xff]
    %v652 = vld [vmem:[#allocation7 + $0x1188] sm:$0xff]
    %v653 = vld [vmem:[#allocation7 + $0x1190] sm:$0xff]
    %v654 = vld [vmem:[#allocation7 + $0x1198] sm:$0xff]
    %v655 = vld [vmem:[#allocation7 + $0x11a0] sm:$0xff]
    %v656 = vld [vmem:[#allocation7 + $0x11a8] sm:$0xff]
    %v657 = vld [vmem:[#allocation7 + $0x11b0] sm:$0xff]
    %v658 = vld [vmem:[#allocation7 + $0x11b8] sm:$0xff]
    %v659 = vld [vmem:[#allocation7 + $0x11c0] sm:$0xff]
    %v660 = vld [vmem:[#allocation7 + $0x11c8] sm:$0xff]
    %v661 = vld [vmem:[#allocation7 + $0x11d0] sm:$0xff]
    %v662 = vld [vmem:[#allocation7 + $0x11d8] sm:$0xff]
    %v663 = vld [vmem:[#allocation7 + $0x11e0] sm:$0xff]
    %v664 = vld [vmem:[#allocation7 + $0x11e8] sm:$0xff]
    %v665 = vld [vmem:[#allocation7 + $0x11f0] sm:$0xff]
    %v666 = vld [vmem:[#allocation7 + $0x11f8] sm:$0xff]
    %v673 = vunpack.c.l.b16 %v85
    %v674 = vunpack.c.h.b16 %v85
    %v675 = vunpack.c.l.b16 %v86
    %v676 = vunpack.c.h.b16 %v86
    %v677 = vunpack.c.l.b16 %v87
    %v678 = vunpack.c.h.b16 %v87
    %v679 = vunpack.c.l.b16 %v88
    %v680 = vunpack.c.h.b16 %v88
    %v681 = vunpack.c.l.b16 %v89
    %v682 = vunpack.c.h.b16 %v89
    %v683 = vunpack.c.l.b16 %v90
    %v684 = vunpack.c.h.b16 %v90
    %v685 = vpack.c.b16 %v679, %v673
    %v686 = vpack.c.b16 %v680, %v674
    %v687 = vpack.c.b16 %v681, %v675
    %v688 = vpack.c.b16 %v682, %v676
    %v689 = vpack.c.b16 %v683, %v677
    %v690 = vpack.c.b16 %v684, %v678
    %v1273 = vunpack.c.l.b16 %v91
    %v1274 = vunpack.c.h.b16 %v91
    %v1275 = vunpack.c.l.b16 %v92
    %v1276 = vunpack.c.h.b16 %v92
    %v1277 = vunpack.c.l.b16 %v93
    %v1278 = vunpack.c.h.b16 %v93
    %v1279 = vunpack.c.l.b16 %v94
    %v1280 = vunpack.c.h.b16 %v94
    %v1281 = vunpack.c.l.b16 %v95
    %v1282 = vunpack.c.h.b16 %v95
    %v1283 = vunpack.c.l.b16 %v96
    %v1284 = vunpack.c.h.b16 %v96
    %v1285 = vunpack.c.l.b16 %v97
    %v1286 = vunpack.c.h.b16 %v97
    %v1287 = vunpack.c.l.b16 %v98
    %v1288 = vunpack.c.h.b16 %v98
    %v1289 = vunpack.c.l.b16 %v99
    %v1290 = vunpack.c.h.b16 %v99
    %v1291 = vunpack.c.l.b16 %v100
    %v1292 = vunpack.c.h.b16 %v100
    %v1293 = vunpack.c.l.b16 %v101
    %v1294 = vunpack.c.h.b16 %v101
    %v1295 = vunpack.c.l.b16 %v102
    %v1296 = vunpack.c.h.b16 %v102
    %v1297 = vunpack.c.l.b16 %v103
    %v1298 = vunpack.c.h.b16 %v103
    %v1299 = vunpack.c.l.b16 %v104
    %v1300 = vunpack.c.h.b16 %v104
    %v1301 = vunpack.c.l.b16 %v105
    %v1302 = vunpack.c.h.b16 %v105
    %v1303 = vunpack.c.l.b16 %v106
    %v1304 = vunpack.c.h.b16 %v106
    %v1305 = vunpack.c.l.b16 %v107
    %v1306 = vunpack.c.h.b16 %v107
    %v1307 = vunpack.c.l.b16 %v108
    %v1308 = vunpack.c.h.b16 %v108
    %v1309 = vunpack.c.l.b16 %v109
    %v1310 = vunpack.c.h.b16 %v109
    %v1311 = vunpack.c.l.b16 %v110
    %v1312 = vunpack.c.h.b16 %v110
    %v1313 = vunpack.c.l.b16 %v111
    %v1314 = vunpack.c.h.b16 %v111
    %v1315 = vunpack.c.l.b16 %v112
    %v1316 = vunpack.c.h.b16 %v112
    %v1317 = vunpack.c.l.b16 %v113
    %v1318 = vunpack.c.h.b16 %v113
    %v1319 = vunpack.c.l.b16 %v114
    %v1320 = vunpack.c.h.b16 %v114
    %v1321 = vunpack.c.l.b16 %v115
    %v1322 = vunpack.c.h.b16 %v115
    %v1323 = vunpack.c.l.b16 %v116
    %v1324 = vunpack.c.h.b16 %v116
    %v1325 = vunpack.c.l.b16 %v117
    %v1326 = vunpack.c.h.b16 %v117
    %v1327 = vunpack.c.l.b16 %v118
    %v1328 = vunpack.c.h.b16 %v118
    %v1329 = vunpack.c.l.b16 %v119
    %v1330 = vunpack.c.h.b16 %v119
    %v1331 = vunpack.c.l.b16 %v120
    %v1332 = vunpack.c.h.b16 %v120
    %v1333 = vunpack.c.l.b16 %v121
    %v1334 = vunpack.c.h.b16 %v121
    %v1335 = vunpack.c.l.b16 %v122
    %v1336 = vunpack.c.h.b16 %v122
    %v1337 = vunpack.c.l.b16 %v123
    %v1338 = vunpack.c.h.b16 %v123
    %v1339 = vunpack.c.l.b16 %v124
    %v1340 = vunpack.c.h.b16 %v124
    %v1341 = vunpack.c.l.b16 %v125
    %v1342 = vunpack.c.h.b16 %v125
    %v1343 = vunpack.c.l.b16 %v126
    %v1344 = vunpack.c.h.b16 %v126
    %v1345 = vunpack.c.l.b16 %v127
    %v1346 = vunpack.c.h.b16 %v127
    %v1347 = vunpack.c.l.b16 %v128
    %v1348 = vunpack.c.h.b16 %v128
    %v1349 = vunpack.c.l.b16 %v129
    %v1350 = vunpack.c.h.b16 %v129
    %v1351 = vunpack.c.l.b16 %v130
    %v1352 = vunpack.c.h.b16 %v130
    %v1353 = vunpack.c.l.b16 %v131
    %v1354 = vunpack.c.h.b16 %v131
    %v1355 = vunpack.c.l.b16 %v132
    %v1356 = vunpack.c.h.b16 %v132
    %v1357 = vunpack.c.l.b16 %v133
    %v1358 = vunpack.c.h.b16 %v133
    %v1359 = vunpack.c.l.b16 %v134
    %v1360 = vunpack.c.h.b16 %v134
    %v1361 = vunpack.c.l.b16 %v135
    %v1362 = vunpack.c.h.b16 %v135
    %v1363 = vunpack.c.l.b16 %v136
    %v1364 = vunpack.c.h.b16 %v136
    %v1365 = vunpack.c.l.b16 %v137
    %v1366 = vunpack.c.h.b16 %v137
    %v1367 = vunpack.c.l.b16 %v138
    %v1368 = vunpack.c.h.b16 %v138
    %v1369 = vunpack.c.l.b16 %v139
    %v1370 = vunpack.c.h.b16 %v139
    %v1371 = vunpack.c.l.b16 %v140
    %v1372 = vunpack.c.h.b16 %v140
    %v1373 = vunpack.c.l.b16 %v141
    %v1374 = vunpack.c.h.b16 %v141
    %v1375 = vunpack.c.l.b16 %v142
    %v1376 = vunpack.c.h.b16 %v142
    %v1377 = vunpack.c.l.b16 %v143
    %v1378 = vunpack.c.h.b16 %v143
    %v1379 = vunpack.c.l.b16 %v144
    %v1380 = vunpack.c.h.b16 %v144
    %v1381 = vunpack.c.l.b16 %v145
    %v1382 = vunpack.c.h.b16 %v145
    %v1383 = vunpack.c.l.b16 %v146
    %v1384 = vunpack.c.h.b16 %v146
    %v1385 = vunpack.c.l.b16 %v147
    %v1386 = vunpack.c.h.b16 %v147
    %v1387 = vunpack.c.l.b16 %v148
    %v1388 = vunpack.c.h.b16 %v148
    %v1389 = vunpack.c.l.b16 %v149
    %v1390 = vunpack.c.h.b16 %v149
    %v1391 = vunpack.c.l.b16 %v150
    %v1392 = vunpack.c.h.b16 %v150
    %v1393 = vunpack.c.l.b16 %v151
    %v1394 = vunpack.c.h.b16 %v151
    %v1395 = vunpack.c.l.b16 %v152
    %v1396 = vunpack.c.h.b16 %v152
    %v1397 = vunpack.c.l.b16 %v153
    %v1398 = vunpack.c.h.b16 %v153
    %v1399 = vunpack.c.l.b16 %v154
    %v1400 = vunpack.c.h.b16 %v154
    %v1401 = vunpack.c.l.b16 %v155
    %v1402 = vunpack.c.h.b16 %v155
    %v1403 = vunpack.c.l.b16 %v156
    %v1404 = vunpack.c.h.b16 %v156
    %v1405 = vunpack.c.l.b16 %v157
    %v1406 = vunpack.c.h.b16 %v157
    %v1407 = vunpack.c.l.b16 %v158
    %v1408 = vunpack.c.h.b16 %v158
    %v1409 = vunpack.c.l.b16 %v159
    %v1410 = vunpack.c.h.b16 %v159
    %v1411 = vunpack.c.l.b16 %v160
    %v1412 = vunpack.c.h.b16 %v160
    %v1413 = vunpack.c.l.b16 %v161
    %v1414 = vunpack.c.h.b16 %v161
    %v1415 = vunpack.c.l.b16 %v162
    %v1416 = vunpack.c.h.b16 %v162
    %v1417 = vunpack.c.l.b16 %v163
    %v1418 = vunpack.c.h.b16 %v163
    %v1419 = vunpack.c.l.b16 %v164
    %v1420 = vunpack.c.h.b16 %v164
    %v1421 = vunpack.c.l.b16 %v165
    %v1422 = vunpack.c.h.b16 %v165
    %v1423 = vunpack.c.l.b16 %v166
    %v1424 = vunpack.c.h.b16 %v166
    %v1425 = vunpack.c.l.b16 %v167
    %v1426 = vunpack.c.h.b16 %v167
    %v1427 = vunpack.c.l.b16 %v168
    %v1428 = vunpack.c.h.b16 %v168
    %v1429 = vunpack.c.l.b16 %v169
    %v1430 = vunpack.c.h.b16 %v169
    %v1431 = vunpack.c.l.b16 %v170
    %v1432 = vunpack.c.h.b16 %v170
    %v1433 = vunpack.c.l.b16 %v171
    %v1434 = vunpack.c.h.b16 %v171
    %v1435 = vunpack.c.l.b16 %v172
    %v1436 = vunpack.c.h.b16 %v172
    %v1437 = vunpack.c.l.b16 %v173
    %v1438 = vunpack.c.h.b16 %v173
    %v1439 = vunpack.c.l.b16 %v174
    %v1440 = vunpack.c.h.b16 %v174
    %v1441 = vunpack.c.l.b16 %v175
    %v1442 = vunpack.c.h.b16 %v175
    %v1443 = vunpack.c.l.b16 %v176
    %v1444 = vunpack.c.h.b16 %v176
    %v1445 = vunpack.c.l.b16 %v177
    %v1446 = vunpack.c.h.b16 %v177
    %v1447 = vunpack.c.l.b16 %v178
    %v1448 = vunpack.c.h.b16 %v178
    %v1449 = vunpack.c.l.b16 %v179
    %v1450 = vunpack.c.h.b16 %v179
    %v1451 = vunpack.c.l.b16 %v180
    %v1452 = vunpack.c.h.b16 %v180
    %v1453 = vunpack.c.l.b16 %v181
    %v1454 = vunpack.c.h.b16 %v181
    %v1455 = vunpack.c.l.b16 %v182
    %v1456 = vunpack.c.h.b16 %v182
    %v1457 = vunpack.c.l.b16 %v183
    %v1458 = vunpack.c.h.b16 %v183
    %v1459 = vunpack.c.l.b16 %v184
    %v1460 = vunpack.c.h.b16 %v184
    %v1461 = vunpack.c.l.b16 %v185
    %v1462 = vunpack.c.h.b16 %v185
    %v1463 = vunpack.c.l.b16 %v186
    %v1464 = vunpack.c.h.b16 %v186
    %v1465 = vunpack.c.l.b16 %v187
    %v1466 = vunpack.c.h.b16 %v187
    %v1467 = vunpack.c.l.b16 %v188
    %v1468 = vunpack.c.h.b16 %v188
    %v1469 = vunpack.c.l.b16 %v189
    %v1470 = vunpack.c.h.b16 %v189
    %v1471 = vunpack.c.l.b16 %v190
    %v1472 = vunpack.c.h.b16 %v190
    %v1473 = vunpack.c.l.b16 %v191
    %v1474 = vunpack.c.h.b16 %v191
    %v1475 = vunpack.c.l.b16 %v192
    %v1476 = vunpack.c.h.b16 %v192
    %v1477 = vunpack.c.l.b16 %v193
    %v1478 = vunpack.c.h.b16 %v193
    %v1479 = vunpack.c.l.b16 %v194
    %v1480 = vunpack.c.h.b16 %v194
    %v1481 = vunpack.c.l.b16 %v195
    %v1482 = vunpack.c.h.b16 %v195
    %v1483 = vunpack.c.l.b16 %v196
    %v1484 = vunpack.c.h.b16 %v196
    %v1485 = vunpack.c.l.b16 %v197
    %v1486 = vunpack.c.h.b16 %v197
    %v1487 = vunpack.c.l.b16 %v198
    %v1488 = vunpack.c.h.b16 %v198
    %v1489 = vunpack.c.l.b16 %v199
    %v1490 = vunpack.c.h.b16 %v199
    %v1491 = vunpack.c.l.b16 %v200
    %v1492 = vunpack.c.h.b16 %v200
    %v1493 = vunpack.c.l.b16 %v201
    %v1494 = vunpack.c.h.b16 %v201
    %v1495 = vunpack.c.l.b16 %v202
    %v1496 = vunpack.c.h.b16 %v202
    %v1497 = vunpack.c.l.b16 %v203
    %v1498 = vunpack.c.h.b16 %v203
    %v1499 = vunpack.c.l.b16 %v204
    %v1500 = vunpack.c.h.b16 %v204
    %v1501 = vunpack.c.l.b16 %v205
    %v1502 = vunpack.c.h.b16 %v205
    %v1503 = vunpack.c.l.b16 %v206
    %v1504 = vunpack.c.h.b16 %v206
    %v1505 = vunpack.c.l.b16 %v207
    %v1506 = vunpack.c.h.b16 %v207
    %v1507 = vunpack.c.l.b16 %v208
    %v1508 = vunpack.c.h.b16 %v208
    %v1509 = vunpack.c.l.b16 %v209
    %v1510 = vunpack.c.h.b16 %v209
    %v1511 = vunpack.c.l.b16 %v210
    %v1512 = vunpack.c.h.b16 %v210
    %v1513 = vunpack.c.l.b16 %v211
    %v1514 = vunpack.c.h.b16 %v211
    %v1515 = vunpack.c.l.b16 %v212
    %v1516 = vunpack.c.h.b16 %v212
    %v1517 = vunpack.c.l.b16 %v213
    %v1518 = vunpack.c.h.b16 %v213
    %v1519 = vunpack.c.l.b16 %v214
    %v1520 = vunpack.c.h.b16 %v214
    %v1521 = vunpack.c.l.b16 %v215
    %v1522 = vunpack.c.h.b16 %v215
    %v1523 = vunpack.c.l.b16 %v216
    %v1524 = vunpack.c.h.b16 %v216
    %v1525 = vunpack.c.l.b16 %v217
    %v1526 = vunpack.c.h.b16 %v217
    %v1527 = vunpack.c.l.b16 %v218
    %v1528 = vunpack.c.h.b16 %v218
    %v1529 = vunpack.c.l.b16 %v219
    %v1530 = vunpack.c.h.b16 %v219
    %v1531 = vunpack.c.l.b16 %v220
    %v1532 = vunpack.c.h.b16 %v220
    %v1533 = vunpack.c.l.b16 %v221
    %v1534 = vunpack.c.h.b16 %v221
    %v1535 = vunpack.c.l.b16 %v222
    %v1536 = vunpack.c.h.b16 %v222
    %v1537 = vunpack.c.l.b16 %v223
    %v1538 = vunpack.c.h.b16 %v223
    %v1539 = vunpack.c.l.b16 %v224
    %v1540 = vunpack.c.h.b16 %v224
    %v1541 = vunpack.c.l.b16 %v225
    %v1542 = vunpack.c.h.b16 %v225
    %v1543 = vunpack.c.l.b16 %v226
    %v1544 = vunpack.c.h.b16 %v226
    %v1545 = vunpack.c.l.b16 %v227
    %v1546 = vunpack.c.h.b16 %v227
    %v1547 = vunpack.c.l.b16 %v228
    %v1548 = vunpack.c.h.b16 %v228
    %v1549 = vunpack.c.l.b16 %v229
    %v1550 = vunpack.c.h.b16 %v229
    %v1551 = vunpack.c.l.b16 %v230
    %v1552 = vunpack.c.h.b16 %v230
    %v1553 = vunpack.c.l.b16 %v231
    %v1554 = vunpack.c.h.b16 %v231
    %v1555 = vunpack.c.l.b16 %v232
    %v1556 = vunpack.c.h.b16 %v232
    %v1557 = vunpack.c.l.b16 %v233
    %v1558 = vunpack.c.h.b16 %v233
    %v1559 = vunpack.c.l.b16 %v234
    %v1560 = vunpack.c.h.b16 %v234
    %v1561 = vunpack.c.l.b16 %v235
    %v1562 = vunpack.c.h.b16 %v235
    %v1563 = vunpack.c.l.b16 %v236
    %v1564 = vunpack.c.h.b16 %v236
    %v1565 = vunpack.c.l.b16 %v237
    %v1566 = vunpack.c.h.b16 %v237
    %v1567 = vunpack.c.l.b16 %v238
    %v1568 = vunpack.c.h.b16 %v238
    %v1569 = vunpack.c.l.b16 %v239
    %v1570 = vunpack.c.h.b16 %v239
    %v1571 = vunpack.c.l.b16 %v240
    %v1572 = vunpack.c.h.b16 %v240
    %v1573 = vunpack.c.l.b16 %v241
    %v1574 = vunpack.c.h.b16 %v241
    %v1575 = vunpack.c.l.b16 %v242
    %v1576 = vunpack.c.h.b16 %v242
    %v1577 = vunpack.c.l.b16 %v243
    %v1578 = vunpack.c.h.b16 %v243
    %v1579 = vunpack.c.l.b16 %v244
    %v1580 = vunpack.c.h.b16 %v244
    %v1581 = vunpack.c.l.b16 %v245
    %v1582 = vunpack.c.h.b16 %v245
    %v1583 = vunpack.c.l.b16 %v246
    %v1584 = vunpack.c.h.b16 %v246
    %v1585 = vunpack.c.l.b16 %v247
    %v1586 = vunpack.c.h.b16 %v247
    %v1587 = vunpack.c.l.b16 %v248
    %v1588 = vunpack.c.h.b16 %v248
    %v1589 = vunpack.c.l.b16 %v249
    %v1590 = vunpack.c.h.b16 %v249
    %v1591 = vunpack.c.l.b16 %v250
    %v1592 = vunpack.c.h.b16 %v250
    %v1593 = vunpack.c.l.b16 %v251
    %v1594 = vunpack.c.h.b16 %v251
    %v1595 = vunpack.c.l.b16 %v252
    %v1596 = vunpack.c.h.b16 %v252
    %v1597 = vunpack.c.l.b16 %v253
    %v1598 = vunpack.c.h.b16 %v253
    %v1599 = vunpack.c.l.b16 %v254
    %v1600 = vunpack.c.h.b16 %v254
    %v1601 = vunpack.c.l.b16 %v255
    %v1602 = vunpack.c.h.b16 %v255
    %v1603 = vunpack.c.l.b16 %v256
    %v1604 = vunpack.c.h.b16 %v256
    %v1605 = vunpack.c.l.b16 %v257
    %v1606 = vunpack.c.h.b16 %v257
    %v1607 = vunpack.c.l.b16 %v258
    %v1608 = vunpack.c.h.b16 %v258
    %v1609 = vunpack.c.l.b16 %v259
    %v1610 = vunpack.c.h.b16 %v259
    %v1611 = vunpack.c.l.b16 %v260
    %v1612 = vunpack.c.h.b16 %v260
    %v1613 = vunpack.c.l.b16 %v261
    %v1614 = vunpack.c.h.b16 %v261
    %v1615 = vunpack.c.l.b16 %v262
    %v1616 = vunpack.c.h.b16 %v262
    %v1617 = vunpack.c.l.b16 %v263
    %v1618 = vunpack.c.h.b16 %v263
    %v1619 = vunpack.c.l.b16 %v264
    %v1620 = vunpack.c.h.b16 %v264
    %v1621 = vunpack.c.l.b16 %v265
    %v1622 = vunpack.c.h.b16 %v265
    %v1623 = vunpack.c.l.b16 %v266
    %v1624 = vunpack.c.h.b16 %v266
    %v1625 = vunpack.c.l.b16 %v267
    %v1626 = vunpack.c.h.b16 %v267
    %v1627 = vunpack.c.l.b16 %v268
    %v1628 = vunpack.c.h.b16 %v268
    %v1629 = vunpack.c.l.b16 %v269
    %v1630 = vunpack.c.h.b16 %v269
    %v1631 = vunpack.c.l.b16 %v270
    %v1632 = vunpack.c.h.b16 %v270
    %v1633 = vunpack.c.l.b16 %v271
    %v1634 = vunpack.c.h.b16 %v271
    %v1635 = vunpack.c.l.b16 %v272
    %v1636 = vunpack.c.h.b16 %v272
    %v1637 = vunpack.c.l.b16 %v273
    %v1638 = vunpack.c.h.b16 %v273
    %v1639 = vunpack.c.l.b16 %v274
    %v1640 = vunpack.c.h.b16 %v274
    %v1641 = vunpack.c.l.b16 %v275
    %v1642 = vunpack.c.h.b16 %v275
    %v1643 = vunpack.c.l.b16 %v276
    %v1644 = vunpack.c.h.b16 %v276
    %v1645 = vunpack.c.l.b16 %v277
    %v1646 = vunpack.c.h.b16 %v277
    %v1647 = vunpack.c.l.b16 %v278
    %v1648 = vunpack.c.h.b16 %v278
    %v1649 = vunpack.c.l.b16 %v279
    %v1650 = vunpack.c.h.b16 %v279
    %v1651 = vunpack.c.l.b16 %v280
    %v1652 = vunpack.c.h.b16 %v280
    %v1653 = vunpack.c.l.b16 %v281
    %v1654 = vunpack.c.h.b16 %v281
    %v1655 = vunpack.c.l.b16 %v282
    %v1656 = vunpack.c.h.b16 %v282
    %v1657 = vunpack.c.l.b16 %v283
    %v1658 = vunpack.c.h.b16 %v283
    %v1659 = vunpack.c.l.b16 %v284
    %v1660 = vunpack.c.h.b16 %v284
    %v1661 = vunpack.c.l.b16 %v285
    %v1662 = vunpack.c.h.b16 %v285
    %v1663 = vunpack.c.l.b16 %v286
    %v1664 = vunpack.c.h.b16 %v286
    %v1665 = vunpack.c.l.b16 %v287
    %v1666 = vunpack.c.h.b16 %v287
    %v1667 = vunpack.c.l.b16 %v288
    %v1668 = vunpack.c.h.b16 %v288
    %v1669 = vunpack.c.l.b16 %v289
    %v1670 = vunpack.c.h.b16 %v289
    %v1671 = vunpack.c.l.b16 %v290
    %v1672 = vunpack.c.h.b16 %v290
    %v1673 = vunpack.c.l.b16 %v291
    %v1674 = vunpack.c.h.b16 %v291
    %v1675 = vunpack.c.l.b16 %v292
    %v1676 = vunpack.c.h.b16 %v292
    %v1677 = vunpack.c.l.b16 %v293
    %v1678 = vunpack.c.h.b16 %v293
    %v1679 = vunpack.c.l.b16 %v294
    %v1680 = vunpack.c.h.b16 %v294
    %v1681 = vunpack.c.l.b16 %v295
    %v1682 = vunpack.c.h.b16 %v295
    %v1683 = vunpack.c.l.b16 %v296
    %v1684 = vunpack.c.h.b16 %v296
    %v1685 = vunpack.c.l.b16 %v297
    %v1686 = vunpack.c.h.b16 %v297
    %v1687 = vunpack.c.l.b16 %v298
    %v1688 = vunpack.c.h.b16 %v298
    %v1689 = vunpack.c.l.b16 %v299
    %v1690 = vunpack.c.h.b16 %v299
    %v1691 = vunpack.c.l.b16 %v300
    %v1692 = vunpack.c.h.b16 %v300
    %v1693 = vunpack.c.l.b16 %v301
    %v1694 = vunpack.c.h.b16 %v301
    %v1695 = vunpack.c.l.b16 %v302
    %v1696 = vunpack.c.h.b16 %v302
    %v1697 = vunpack.c.l.b16 %v303
    %v1698 = vunpack.c.h.b16 %v303
    %v1699 = vunpack.c.l.b16 %v304
    %v1700 = vunpack.c.h.b16 %v304
    %v1701 = vunpack.c.l.b16 %v305
    %v1702 = vunpack.c.h.b16 %v305
    %v1703 = vunpack.c.l.b16 %v306
    %v1704 = vunpack.c.h.b16 %v306
    %v1705 = vunpack.c.l.b16 %v307
    %v1706 = vunpack.c.h.b16 %v307
    %v1707 = vunpack.c.l.b16 %v308
    %v1708 = vunpack.c.h.b16 %v308
    %v1709 = vunpack.c.l.b16 %v309
    %v1710 = vunpack.c.h.b16 %v309
    %v1711 = vunpack.c.l.b16 %v310
    %v1712 = vunpack.c.h.b16 %v310
    %v1713 = vunpack.c.l.b16 %v311
    %v1714 = vunpack.c.h.b16 %v311
    %v1715 = vunpack.c.l.b16 %v312
    %v1716 = vunpack.c.h.b16 %v312
    %v1717 = vunpack.c.l.b16 %v313
    %v1718 = vunpack.c.h.b16 %v313
    %v1719 = vunpack.c.l.b16 %v314
    %v1720 = vunpack.c.h.b16 %v314
    %v1721 = vunpack.c.l.b16 %v315
    %v1722 = vunpack.c.h.b16 %v315
    %v1723 = vunpack.c.l.b16 %v316
    %v1724 = vunpack.c.h.b16 %v316
    %v1725 = vunpack.c.l.b16 %v317
    %v1726 = vunpack.c.h.b16 %v317
    %v1727 = vunpack.c.l.b16 %v318
    %v1728 = vunpack.c.h.b16 %v318
    %v1729 = vunpack.c.l.b16 %v319
    %v1730 = vunpack.c.h.b16 %v319
    %v1731 = vunpack.c.l.b16 %v320
    %v1732 = vunpack.c.h.b16 %v320
    %v1733 = vunpack.c.l.b16 %v321
    %v1734 = vunpack.c.h.b16 %v321
    %v1735 = vunpack.c.l.b16 %v322
    %v1736 = vunpack.c.h.b16 %v322
    %v1737 = vunpack.c.l.b16 %v323
    %v1738 = vunpack.c.h.b16 %v323
    %v1739 = vunpack.c.l.b16 %v324
    %v1740 = vunpack.c.h.b16 %v324
    %v1741 = vunpack.c.l.b16 %v325
    %v1742 = vunpack.c.h.b16 %v325
    %v1743 = vunpack.c.l.b16 %v326
    %v1744 = vunpack.c.h.b16 %v326
    %v1745 = vunpack.c.l.b16 %v327
    %v1746 = vunpack.c.h.b16 %v327
    %v1747 = vunpack.c.l.b16 %v328
    %v1748 = vunpack.c.h.b16 %v328
    %v1749 = vunpack.c.l.b16 %v329
    %v1750 = vunpack.c.h.b16 %v329
    %v1751 = vunpack.c.l.b16 %v330
    %v1752 = vunpack.c.h.b16 %v330
    %v1753 = vunpack.c.l.b16 %v331
    %v1754 = vunpack.c.h.b16 %v331
    %v1755 = vunpack.c.l.b16 %v332
    %v1756 = vunpack.c.h.b16 %v332
    %v1757 = vunpack.c.l.b16 %v333
    %v1758 = vunpack.c.h.b16 %v333
    %v1759 = vunpack.c.l.b16 %v334
    %v1760 = vunpack.c.h.b16 %v334
    %v1761 = vunpack.c.l.b16 %v335
    %v1762 = vunpack.c.h.b16 %v335
    %v1763 = vunpack.c.l.b16 %v336
    %v1764 = vunpack.c.h.b16 %v336
    %v1765 = vunpack.c.l.b16 %v337
    %v1766 = vunpack.c.h.b16 %v337
    %v1767 = vunpack.c.l.b16 %v338
    %v1768 = vunpack.c.h.b16 %v338
    %v1769 = vunpack.c.l.b16 %v339
    %v1770 = vunpack.c.h.b16 %v339
    %v1771 = vunpack.c.l.b16 %v340
    %v1772 = vunpack.c.h.b16 %v340
    %v1773 = vunpack.c.l.b16 %v341
    %v1774 = vunpack.c.h.b16 %v341
    %v1775 = vunpack.c.l.b16 %v342
    %v1776 = vunpack.c.h.b16 %v342
    %v1777 = vunpack.c.l.b16 %v343
    %v1778 = vunpack.c.h.b16 %v343
    %v1779 = vunpack.c.l.b16 %v344
    %v1780 = vunpack.c.h.b16 %v344
    %v1781 = vunpack.c.l.b16 %v345
    %v1782 = vunpack.c.h.b16 %v345
    %v1783 = vunpack.c.l.b16 %v346
    %v1784 = vunpack.c.h.b16 %v346
    %v1785 = vunpack.c.l.b16 %v347
    %v1786 = vunpack.c.h.b16 %v347
    %v1787 = vunpack.c.l.b16 %v348
    %v1788 = vunpack.c.h.b16 %v348
    %v1789 = vunpack.c.l.b16 %v349
    %v1790 = vunpack.c.h.b16 %v349
    %v1791 = vunpack.c.l.b16 %v350
    %v1792 = vunpack.c.h.b16 %v350
    %v1793 = vunpack.c.l.b16 %v351
    %v1794 = vunpack.c.h.b16 %v351
    %v1795 = vunpack.c.l.b16 %v352
    %v1796 = vunpack.c.h.b16 %v352
    %v1797 = vunpack.c.l.b16 %v353
    %v1798 = vunpack.c.h.b16 %v353
    %v1799 = vunpack.c.l.b16 %v354
    %v1800 = vunpack.c.h.b16 %v354
    %v1801 = vunpack.c.l.b16 %v355
    %v1802 = vunpack.c.h.b16 %v355
    %v1803 = vunpack.c.l.b16 %v356
    %v1804 = vunpack.c.h.b16 %v356
    %v1805 = vunpack.c.l.b16 %v357
    %v1806 = vunpack.c.h.b16 %v357
    %v1807 = vunpack.c.l.b16 %v358
    %v1808 = vunpack.c.h.b16 %v358
    %v1809 = vunpack.c.l.b16 %v359
    %v1810 = vunpack.c.h.b16 %v359
    %v1811 = vunpack.c.l.b16 %v360
    %v1812 = vunpack.c.h.b16 %v360
    %v1813 = vunpack.c.l.b16 %v361
    %v1814 = vunpack.c.h.b16 %v361
    %v1815 = vunpack.c.l.b16 %v362
    %v1816 = vunpack.c.h.b16 %v362
    %v1817 = vunpack.c.l.b16 %v363
    %v1818 = vunpack.c.h.b16 %v363
    %v1819 = vunpack.c.l.b16 %v364
    %v1820 = vunpack.c.h.b16 %v364
    %v1821 = vunpack.c.l.b16 %v365
    %v1822 = vunpack.c.h.b16 %v365
    %v1823 = vunpack.c.l.b16 %v366
    %v1824 = vunpack.c.h.b16 %v366
    %v1825 = vunpack.c.l.b16 %v367
    %v1826 = vunpack.c.h.b16 %v367
    %v1827 = vunpack.c.l.b16 %v368
    %v1828 = vunpack.c.h.b16 %v368
    %v1829 = vunpack.c.l.b16 %v369
    %v1830 = vunpack.c.h.b16 %v369
    %v1831 = vunpack.c.l.b16 %v370
    %v1832 = vunpack.c.h.b16 %v370
    %v1833 = vunpack.c.l.b16 %v371
    %v1834 = vunpack.c.h.b16 %v371
    %v1835 = vunpack.c.l.b16 %v372
    %v1836 = vunpack.c.h.b16 %v372
    %v1837 = vunpack.c.l.b16 %v373
    %v1838 = vunpack.c.h.b16 %v373
    %v1839 = vunpack.c.l.b16 %v374
    %v1840 = vunpack.c.h.b16 %v374
    %v1841 = vunpack.c.l.b16 %v375
    %v1842 = vunpack.c.h.b16 %v375
    %v1843 = vunpack.c.l.b16 %v376
    %v1844 = vunpack.c.h.b16 %v376
    %v1845 = vunpack.c.l.b16 %v377
    %v1846 = vunpack.c.h.b16 %v377
    %v1847 = vunpack.c.l.b16 %v378
    %v1848 = vunpack.c.h.b16 %v378
    %v1849 = vunpack.c.l.b16 %v379
    %v1850 = vunpack.c.h.b16 %v379
    %v1851 = vunpack.c.l.b16 %v380
    %v1852 = vunpack.c.h.b16 %v380
    %v1853 = vunpack.c.l.b16 %v381
    %v1854 = vunpack.c.h.b16 %v381
    %v1855 = vunpack.c.l.b16 %v382
    %v1856 = vunpack.c.h.b16 %v382
    %v1857 = vunpack.c.l.b16 %v383
    %v1858 = vunpack.c.h.b16 %v383
    %v1859 = vunpack.c.l.b16 %v384
    %v1860 = vunpack.c.h.b16 %v384
    %v1861 = vunpack.c.l.b16 %v385
    %v1862 = vunpack.c.h.b16 %v385
    %v1863 = vunpack.c.l.b16 %v386
    %v1864 = vunpack.c.h.b16 %v386
    %v1865 = vunpack.c.l.b16 %v387
    %v1866 = vunpack.c.h.b16 %v387
    %v1867 = vunpack.c.l.b16 %v388
    %v1868 = vunpack.c.h.b16 %v388
    %v1869 = vunpack.c.l.b16 %v389
    %v1870 = vunpack.c.h.b16 %v389
    %v1871 = vunpack.c.l.b16 %v390
    %v1872 = vunpack.c.h.b16 %v390
    %v1873 = vunpack.c.l.b16 %v391
    %v1874 = vunpack.c.h.b16 %v391
    %v1875 = vunpack.c.l.b16 %v392
    %v1876 = vunpack.c.h.b16 %v392
    %v1877 = vunpack.c.l.b16 %v393
    %v1878 = vunpack.c.h.b16 %v393
    %v1879 = vunpack.c.l.b16 %v394
    %v1880 = vunpack.c.h.b16 %v394
    %v1881 = vunpack.c.l.b16 %v395
    %v1882 = vunpack.c.h.b16 %v395
    %v1883 = vunpack.c.l.b16 %v396
    %v1884 = vunpack.c.h.b16 %v396
    %v1885 = vunpack.c.l.b16 %v397
    %v1886 = vunpack.c.h.b16 %v397
    %v1887 = vunpack.c.l.b16 %v398
    %v1888 = vunpack.c.h.b16 %v398
    %v1889 = vunpack.c.l.b16 %v399
    %v1890 = vunpack.c.h.b16 %v399
    %v1891 = vunpack.c.l.b16 %v400
    %v1892 = vunpack.c.h.b16 %v400
    %v1893 = vunpack.c.l.b16 %v401
    %v1894 = vunpack.c.h.b16 %v401
    %v1895 = vunpack.c.l.b16 %v402
    %v1896 = vunpack.c.h.b16 %v402
    %v1897 = vunpack.c.l.b16 %v403
    %v1898 = vunpack.c.h.b16 %v403
    %v1899 = vunpack.c.l.b16 %v404
    %v1900 = vunpack.c.h.b16 %v404
    %v1901 = vunpack.c.l.b16 %v405
    %v1902 = vunpack.c.h.b16 %v405
    %v1903 = vunpack.c.l.b16 %v406
    %v1904 = vunpack.c.h.b16 %v406
    %v1905 = vunpack.c.l.b16 %v407
    %v1906 = vunpack.c.h.b16 %v407
    %v1907 = vunpack.c.l.b16 %v408
    %v1908 = vunpack.c.h.b16 %v408
    %v1909 = vunpack.c.l.b16 %v409
    %v1910 = vunpack.c.h.b16 %v409
    %v1911 = vunpack.c.l.b16 %v410
    %v1912 = vunpack.c.h.b16 %v410
    %v1913 = vunpack.c.l.b16 %v411
    %v1914 = vunpack.c.h.b16 %v411
    %v1915 = vunpack.c.l.b16 %v412
    %v1916 = vunpack.c.h.b16 %v412
    %v1917 = vunpack.c.l.b16 %v413
    %v1918 = vunpack.c.h.b16 %v413
    %v1919 = vunpack.c.l.b16 %v414
    %v1920 = vunpack.c.h.b16 %v414
    %v1921 = vunpack.c.l.b16 %v415
    %v1922 = vunpack.c.h.b16 %v415
    %v1923 = vunpack.c.l.b16 %v416
    %v1924 = vunpack.c.h.b16 %v416
    %v1925 = vunpack.c.l.b16 %v417
    %v1926 = vunpack.c.h.b16 %v417
    %v1927 = vunpack.c.l.b16 %v418
    %v1928 = vunpack.c.h.b16 %v418
    %v1929 = vunpack.c.l.b16 %v419
    %v1930 = vunpack.c.h.b16 %v419
    %v1931 = vunpack.c.l.b16 %v420
    %v1932 = vunpack.c.h.b16 %v420
    %v1933 = vunpack.c.l.b16 %v421
    %v1934 = vunpack.c.h.b16 %v421
    %v1935 = vunpack.c.l.b16 %v422
    %v1936 = vunpack.c.h.b16 %v422
    %v1937 = vunpack.c.l.b16 %v423
    %v1938 = vunpack.c.h.b16 %v423
    %v1939 = vunpack.c.l.b16 %v424
    %v1940 = vunpack.c.h.b16 %v424
    %v1941 = vunpack.c.l.b16 %v425
    %v1942 = vunpack.c.h.b16 %v425
    %v1943 = vunpack.c.l.b16 %v426
    %v1944 = vunpack.c.h.b16 %v426
    %v1945 = vunpack.c.l.b16 %v427
    %v1946 = vunpack.c.h.b16 %v427
    %v1947 = vunpack.c.l.b16 %v428
    %v1948 = vunpack.c.h.b16 %v428
    %v1949 = vunpack.c.l.b16 %v429
    %v1950 = vunpack.c.h.b16 %v429
    %v1951 = vunpack.c.l.b16 %v430
    %v1952 = vunpack.c.h.b16 %v430
    %v1953 = vunpack.c.l.b16 %v431
    %v1954 = vunpack.c.h.b16 %v431
    %v1955 = vunpack.c.l.b16 %v432
    %v1956 = vunpack.c.h.b16 %v432
    %v1957 = vunpack.c.l.b16 %v433
    %v1958 = vunpack.c.h.b16 %v433
    %v1959 = vunpack.c.l.b16 %v434
    %v1960 = vunpack.c.h.b16 %v434
    %v1961 = vunpack.c.l.b16 %v435
    %v1962 = vunpack.c.h.b16 %v435
    %v1963 = vunpack.c.l.b16 %v436
    %v1964 = vunpack.c.h.b16 %v436
    %v1965 = vunpack.c.l.b16 %v437
    %v1966 = vunpack.c.h.b16 %v437
    %v1967 = vunpack.c.l.b16 %v438
    %v1968 = vunpack.c.h.b16 %v438
    %v1969 = vunpack.c.l.b16 %v439
    %v1970 = vunpack.c.h.b16 %v439
    %v1971 = vunpack.c.l.b16 %v440
    %v1972 = vunpack.c.h.b16 %v440
    %v1973 = vunpack.c.l.b16 %v441
    %v1974 = vunpack.c.h.b16 %v441
    %v1975 = vunpack.c.l.b16 %v442
    %v1976 = vunpack.c.h.b16 %v442
    %v1977 = vunpack.c.l.b16 %v443
    %v1978 = vunpack.c.h.b16 %v443
    %v1979 = vunpack.c.l.b16 %v444
    %v1980 = vunpack.c.h.b16 %v444
    %v1981 = vunpack.c.l.b16 %v445
    %v1982 = vunpack.c.h.b16 %v445
    %v1983 = vunpack.c.l.b16 %v446
    %v1984 = vunpack.c.h.b16 %v446
    %v1985 = vunpack.c.l.b16 %v447
    %v1986 = vunpack.c.h.b16 %v447
    %v1987 = vunpack.c.l.b16 %v448
    %v1988 = vunpack.c.h.b16 %v448
    %v1989 = vunpack.c.l.b16 %v449
    %v1990 = vunpack.c.h.b16 %v449
    %v1991 = vunpack.c.l.b16 %v450
    %v1992 = vunpack.c.h.b16 %v450
    %v1993 = vunpack.c.l.b16 %v451
    %v1994 = vunpack.c.h.b16 %v451
    %v1995 = vunpack.c.l.b16 %v452
    %v1996 = vunpack.c.h.b16 %v452
    %v1997 = vunpack.c.l.b16 %v453
    %v1998 = vunpack.c.h.b16 %v453
    %v1999 = vunpack.c.l.b16 %v454
    %v2000 = vunpack.c.h.b16 %v454
    %v2001 = vunpack.c.l.b16 %v455
    %v2002 = vunpack.c.h.b16 %v455
    %v2003 = vunpack.c.l.b16 %v456
    %v2004 = vunpack.c.h.b16 %v456
    %v2005 = vunpack.c.l.b16 %v457
    %v2006 = vunpack.c.h.b16 %v457
    %v2007 = vunpack.c.l.b16 %v458
    %v2008 = vunpack.c.h.b16 %v458
    %v2009 = vunpack.c.l.b16 %v459
    %v2010 = vunpack.c.h.b16 %v459
    %v2011 = vunpack.c.l.b16 %v460
    %v2012 = vunpack.c.h.b16 %v460
    %v2013 = vunpack.c.l.b16 %v461
    %v2014 = vunpack.c.h.b16 %v461
    %v2015 = vunpack.c.l.b16 %v462
    %v2016 = vunpack.c.h.b16 %v462
    %v2017 = vunpack.c.l.b16 %v463
    %v2018 = vunpack.c.h.b16 %v463
    %v2019 = vunpack.c.l.b16 %v464
    %v2020 = vunpack.c.h.b16 %v464
    %v2021 = vunpack.c.l.b16 %v465
    %v2022 = vunpack.c.h.b16 %v465
    %v2023 = vunpack.c.l.b16 %v466
    %v2024 = vunpack.c.h.b16 %v466
    %v2025 = vunpack.c.l.b16 %v467
    %v2026 = vunpack.c.h.b16 %v467
    %v2027 = vunpack.c.l.b16 %v468
    %v2028 = vunpack.c.h.b16 %v468
    %v2029 = vunpack.c.l.b16 %v469
    %v2030 = vunpack.c.h.b16 %v469
    %v2031 = vunpack.c.l.b16 %v470
    %v2032 = vunpack.c.h.b16 %v470
    %v2033 = vunpack.c.l.b16 %v471
    %v2034 = vunpack.c.h.b16 %v471
    %v2035 = vunpack.c.l.b16 %v472
    %v2036 = vunpack.c.h.b16 %v472
    %v2037 = vunpack.c.l.b16 %v473
    %v2038 = vunpack.c.h.b16 %v473
    %v2039 = vunpack.c.l.b16 %v474
    %v2040 = vunpack.c.h.b16 %v474
    %v2041 = vunpack.c.l.b16 %v475
    %v2042 = vunpack.c.h.b16 %v475
    %v2043 = vunpack.c.l.b16 %v476
    %v2044 = vunpack.c.h.b16 %v476
    %v2045 = vunpack.c.l.b16 %v477
    %v2046 = vunpack.c.h.b16 %v477
    %v2047 = vunpack.c.l.b16 %v478
    %v2048 = vunpack.c.h.b16 %v478
    %v2049 = vunpack.c.l.b16 %v479
    %v2050 = vunpack.c.h.b16 %v479
    %v2051 = vunpack.c.l.b16 %v480
    %v2052 = vunpack.c.h.b16 %v480
    %v2053 = vunpack.c.l.b16 %v481
    %v2054 = vunpack.c.h.b16 %v481
    %v2055 = vunpack.c.l.b16 %v482
    %v2056 = vunpack.c.h.b16 %v482
    %v2057 = vunpack.c.l.b16 %v483
    %v2058 = vunpack.c.h.b16 %v483
    %v2059 = vunpack.c.l.b16 %v484
    %v2060 = vunpack.c.h.b16 %v484
    %v2061 = vunpack.c.l.b16 %v485
    %v2062 = vunpack.c.h.b16 %v485
    %v2063 = vunpack.c.l.b16 %v486
    %v2064 = vunpack.c.h.b16 %v486
    %v2065 = vunpack.c.l.b16 %v487
    %v2066 = vunpack.c.h.b16 %v487
    %v2067 = vunpack.c.l.b16 %v488
    %v2068 = vunpack.c.h.b16 %v488
    %v2069 = vunpack.c.l.b16 %v489
    %v2070 = vunpack.c.h.b16 %v489
    %v2071 = vunpack.c.l.b16 %v490
    %v2072 = vunpack.c.h.b16 %v490
    %v2073 = vunpack.c.l.b16 %v491
    %v2074 = vunpack.c.h.b16 %v491
    %v2075 = vunpack.c.l.b16 %v492
    %v2076 = vunpack.c.h.b16 %v492
    %v2077 = vunpack.c.l.b16 %v493
    %v2078 = vunpack.c.h.b16 %v493
    %v2079 = vunpack.c.l.b16 %v494
    %v2080 = vunpack.c.h.b16 %v494
    %v2081 = vunpack.c.l.b16 %v495
    %v2082 = vunpack.c.h.b16 %v495
    %v2083 = vunpack.c.l.b16 %v496
    %v2084 = vunpack.c.h.b16 %v496
    %v2085 = vunpack.c.l.b16 %v497
    %v2086 = vunpack.c.h.b16 %v497
    %v2087 = vunpack.c.l.b16 %v498
    %v2088 = vunpack.c.h.b16 %v498
    %v2089 = vunpack.c.l.b16 %v499
    %v2090 = vunpack.c.h.b16 %v499
    %v2091 = vunpack.c.l.b16 %v500
    %v2092 = vunpack.c.h.b16 %v500
    %v2093 = vunpack.c.l.b16 %v501
    %v2094 = vunpack.c.h.b16 %v501
    %v2095 = vunpack.c.l.b16 %v502
    %v2096 = vunpack.c.h.b16 %v502
    %v2097 = vunpack.c.l.b16 %v503
    %v2098 = vunpack.c.h.b16 %v503
    %v2099 = vunpack.c.l.b16 %v504
    %v2100 = vunpack.c.h.b16 %v504
    %v2101 = vunpack.c.l.b16 %v505
    %v2102 = vunpack.c.h.b16 %v505
    %v2103 = vunpack.c.l.b16 %v506
    %v2104 = vunpack.c.h.b16 %v506
    %v2105 = vunpack.c.l.b16 %v507
    %v2106 = vunpack.c.h.b16 %v507
    %v2107 = vunpack.c.l.b16 %v508
    %v2108 = vunpack.c.h.b16 %v508
    %v2109 = vunpack.c.l.b16 %v509
    %v2110 = vunpack.c.h.b16 %v509
    %v2111 = vunpack.c.l.b16 %v510
    %v2112 = vunpack.c.h.b16 %v510
    %v2113 = vunpack.c.l.b16 %v511
    %v2114 = vunpack.c.h.b16 %v511
    %v2115 = vunpack.c.l.b16 %v512
    %v2116 = vunpack.c.h.b16 %v512
    %v2117 = vunpack.c.l.b16 %v513
    %v2118 = vunpack.c.h.b16 %v513
    %v2119 = vunpack.c.l.b16 %v514
    %v2120 = vunpack.c.h.b16 %v514
    %v2121 = vunpack.c.l.b16 %v515
    %v2122 = vunpack.c.h.b16 %v515
    %v2123 = vunpack.c.l.b16 %v516
    %v2124 = vunpack.c.h.b16 %v516
    %v2125 = vunpack.c.l.b16 %v517
    %v2126 = vunpack.c.h.b16 %v517
    %v2127 = vunpack.c.l.b16 %v518
    %v2128 = vunpack.c.h.b16 %v518
    %v2129 = vunpack.c.l.b16 %v519
    %v2130 = vunpack.c.h.b16 %v519
    %v2131 = vunpack.c.l.b16 %v520
    %v2132 = vunpack.c.h.b16 %v520
    %v2133 = vunpack.c.l.b16 %v521
    %v2134 = vunpack.c.h.b16 %v521
    %v2135 = vunpack.c.l.b16 %v522
    %v2136 = vunpack.c.h.b16 %v522
    %v2137 = vunpack.c.l.b16 %v523
    %v2138 = vunpack.c.h.b16 %v523
    %v2139 = vunpack.c.l.b16 %v524
    %v2140 = vunpack.c.h.b16 %v524
    %v2141 = vunpack.c.l.b16 %v525
    %v2142 = vunpack.c.h.b16 %v525
    %v2143 = vunpack.c.l.b16 %v526
    %v2144 = vunpack.c.h.b16 %v526
    %v2145 = vunpack.c.l.b16 %v527
    %v2146 = vunpack.c.h.b16 %v527
    %v2147 = vunpack.c.l.b16 %v528
    %v2148 = vunpack.c.h.b16 %v528
    %v2149 = vunpack.c.l.b16 %v529
    %v2150 = vunpack.c.h.b16 %v529
    %v2151 = vunpack.c.l.b16 %v530
    %v2152 = vunpack.c.h.b16 %v530
    %v2153 = vunpack.c.l.b16 %v531
    %v2154 = vunpack.c.h.b16 %v531
    %v2155 = vunpack.c.l.b16 %v532
    %v2156 = vunpack.c.h.b16 %v532
    %v2157 = vunpack.c.l.b16 %v533
    %v2158 = vunpack.c.h.b16 %v533
    %v2159 = vunpack.c.l.b16 %v534
    %v2160 = vunpack.c.h.b16 %v534
    %v2161 = vunpack.c.l.b16 %v535
    %v2162 = vunpack.c.h.b16 %v535
    %v2163 = vunpack.c.l.b16 %v536
    %v2164 = vunpack.c.h.b16 %v536
    %v2165 = vunpack.c.l.b16 %v537
    %v2166 = vunpack.c.h.b16 %v537
    %v2167 = vunpack.c.l.b16 %v538
    %v2168 = vunpack.c.h.b16 %v538
    %v2169 = vunpack.c.l.b16 %v539
    %v2170 = vunpack.c.h.b16 %v539
    %v2171 = vunpack.c.l.b16 %v540
    %v2172 = vunpack.c.h.b16 %v540
    %v2173 = vunpack.c.l.b16 %v541
    %v2174 = vunpack.c.h.b16 %v541
    %v2175 = vunpack.c.l.b16 %v542
    %v2176 = vunpack.c.h.b16 %v542
    %v2177 = vunpack.c.l.b16 %v543
    %v2178 = vunpack.c.h.b16 %v543
    %v2179 = vunpack.c.l.b16 %v544
    %v2180 = vunpack.c.h.b16 %v544
    %v2181 = vunpack.c.l.b16 %v545
    %v2182 = vunpack.c.h.b16 %v545
    %v2183 = vunpack.c.l.b16 %v546
    %v2184 = vunpack.c.h.b16 %v546
    %v2185 = vunpack.c.l.b16 %v547
    %v2186 = vunpack.c.h.b16 %v547
    %v2187 = vunpack.c.l.b16 %v548
    %v2188 = vunpack.c.h.b16 %v548
    %v2189 = vunpack.c.l.b16 %v549
    %v2190 = vunpack.c.h.b16 %v549
    %v2191 = vunpack.c.l.b16 %v550
    %v2192 = vunpack.c.h.b16 %v550
    %v2193 = vunpack.c.l.b16 %v551
    %v2194 = vunpack.c.h.b16 %v551
    %v2195 = vunpack.c.l.b16 %v552
    %v2196 = vunpack.c.h.b16 %v552
    %v2197 = vunpack.c.l.b16 %v553
    %v2198 = vunpack.c.h.b16 %v553
    %v2199 = vunpack.c.l.b16 %v554
    %v2200 = vunpack.c.h.b16 %v554
    %v2201 = vunpack.c.l.b16 %v555
    %v2202 = vunpack.c.h.b16 %v555
    %v2203 = vunpack.c.l.b16 %v556
    %v2204 = vunpack.c.h.b16 %v556
    %v2205 = vunpack.c.l.b16 %v557
    %v2206 = vunpack.c.h.b16 %v557
    %v2207 = vunpack.c.l.b16 %v558
    %v2208 = vunpack.c.h.b16 %v558
    %v2209 = vunpack.c.l.b16 %v559
    %v2210 = vunpack.c.h.b16 %v559
    %v2211 = vunpack.c.l.b16 %v560
    %v2212 = vunpack.c.h.b16 %v560
    %v2213 = vunpack.c.l.b16 %v561
    %v2214 = vunpack.c.h.b16 %v561
    %v2215 = vunpack.c.l.b16 %v562
    %v2216 = vunpack.c.h.b16 %v562
    %v2217 = vunpack.c.l.b16 %v563
    %v2218 = vunpack.c.h.b16 %v563
    %v2219 = vunpack.c.l.b16 %v564
    %v2220 = vunpack.c.h.b16 %v564
    %v2221 = vunpack.c.l.b16 %v565
    %v2222 = vunpack.c.h.b16 %v565
    %v2223 = vunpack.c.l.b16 %v566
    %v2224 = vunpack.c.h.b16 %v566
    %v2225 = vunpack.c.l.b16 %v567
    %v2226 = vunpack.c.h.b16 %v567
    %v2227 = vunpack.c.l.b16 %v568
    %v2228 = vunpack.c.h.b16 %v568
    %v2229 = vunpack.c.l.b16 %v569
    %v2230 = vunpack.c.h.b16 %v569
    %v2231 = vunpack.c.l.b16 %v570
    %v2232 = vunpack.c.h.b16 %v570
    %v2233 = vunpack.c.l.b16 %v571
    %v2234 = vunpack.c.h.b16 %v571
    %v2235 = vunpack.c.l.b16 %v572
    %v2236 = vunpack.c.h.b16 %v572
    %v2237 = vunpack.c.l.b16 %v573
    %v2238 = vunpack.c.h.b16 %v573
    %v2239 = vunpack.c.l.b16 %v574
    %v2240 = vunpack.c.h.b16 %v574
    %v2241 = vunpack.c.l.b16 %v575
    %v2242 = vunpack.c.h.b16 %v575
    %v2243 = vunpack.c.l.b16 %v576
    %v2244 = vunpack.c.h.b16 %v576
    %v2245 = vunpack.c.l.b16 %v577
    %v2246 = vunpack.c.h.b16 %v577
    %v2247 = vunpack.c.l.b16 %v578
    %v2248 = vunpack.c.h.b16 %v578
    %v2249 = vunpack.c.l.b16 %v579
    %v2250 = vunpack.c.h.b16 %v579
    %v2251 = vunpack.c.l.b16 %v580
    %v2252 = vunpack.c.h.b16 %v580
    %v2253 = vunpack.c.l.b16 %v581
    %v2254 = vunpack.c.h.b16 %v581
    %v2255 = vunpack.c.l.b16 %v582
    %v2256 = vunpack.c.h.b16 %v582
    %v2257 = vunpack.c.l.b16 %v583
    %v2258 = vunpack.c.h.b16 %v583
    %v2259 = vunpack.c.l.b16 %v584
    %v2260 = vunpack.c.h.b16 %v584
    %v2261 = vunpack.c.l.b16 %v585
    %v2262 = vunpack.c.h.b16 %v585
    %v2263 = vunpack.c.l.b16 %v586
    %v2264 = vunpack.c.h.b16 %v586
    %v2265 = vunpack.c.l.b16 %v587
    %v2266 = vunpack.c.h.b16 %v587
    %v2267 = vunpack.c.l.b16 %v588
    %v2268 = vunpack.c.h.b16 %v588
    %v2269 = vunpack.c.l.b16 %v589
    %v2270 = vunpack.c.h.b16 %v589
    %v2271 = vunpack.c.l.b16 %v590
    %v2272 = vunpack.c.h.b16 %v590
    %v2273 = vunpack.c.l.b16 %v591
    %v2274 = vunpack.c.h.b16 %v591
    %v2275 = vunpack.c.l.b16 %v592
    %v2276 = vunpack.c.h.b16 %v592
    %v2277 = vunpack.c.l.b16 %v593
    %v2278 = vunpack.c.h.b16 %v593
    %v2279 = vunpack.c.l.b16 %v594
    %v2280 = vunpack.c.h.b16 %v594
    %v2281 = vunpack.c.l.b16 %v595
    %v2282 = vunpack.c.h.b16 %v595
    %v2283 = vunpack.c.l.b16 %v596
    %v2284 = vunpack.c.h.b16 %v596
    %v2285 = vunpack.c.l.b16 %v597
    %v2286 = vunpack.c.h.b16 %v597
    %v2287 = vunpack.c.l.b16 %v598
    %v2288 = vunpack.c.h.b16 %v598
    %v2289 = vunpack.c.l.b16 %v599
    %v2290 = vunpack.c.h.b16 %v599
    %v2291 = vunpack.c.l.b16 %v600
    %v2292 = vunpack.c.h.b16 %v600
    %v2293 = vunpack.c.l.b16 %v601
    %v2294 = vunpack.c.h.b16 %v601
    %v2295 = vunpack.c.l.b16 %v602
    %v2296 = vunpack.c.h.b16 %v602
    %v2297 = vunpack.c.l.b16 %v603
    %v2298 = vunpack.c.h.b16 %v603
    %v2299 = vunpack.c.l.b16 %v604
    %v2300 = vunpack.c.h.b16 %v604
    %v2301 = vunpack.c.l.b16 %v605
    %v2302 = vunpack.c.h.b16 %v605
    %v2303 = vunpack.c.l.b16 %v606
    %v2304 = vunpack.c.h.b16 %v606
    %v2305 = vunpack.c.l.b16 %v607
    %v2306 = vunpack.c.h.b16 %v607
    %v2307 = vunpack.c.l.b16 %v608
    %v2308 = vunpack.c.h.b16 %v608
    %v2309 = vunpack.c.l.b16 %v609
    %v2310 = vunpack.c.h.b16 %v609
    %v2311 = vunpack.c.l.b16 %v610
    %v2312 = vunpack.c.h.b16 %v610
    %v2313 = vunpack.c.l.b16 %v611
    %v2314 = vunpack.c.h.b16 %v611
    %v2315 = vunpack.c.l.b16 %v612
    %v2316 = vunpack.c.h.b16 %v612
    %v2317 = vunpack.c.l.b16 %v613
    %v2318 = vunpack.c.h.b16 %v613
    %v2319 = vunpack.c.l.b16 %v614
    %v2320 = vunpack.c.h.b16 %v614
    %v2321 = vunpack.c.l.b16 %v615
    %v2322 = vunpack.c.h.b16 %v615
    %v2323 = vunpack.c.l.b16 %v616
    %v2324 = vunpack.c.h.b16 %v616
    %v2325 = vunpack.c.l.b16 %v617
    %v2326 = vunpack.c.h.b16 %v617
    %v2327 = vunpack.c.l.b16 %v618
    %v2328 = vunpack.c.h.b16 %v618
    %v2329 = vunpack.c.l.b16 %v619
    %v2330 = vunpack.c.h.b16 %v619
    %v2331 = vunpack.c.l.b16 %v620
    %v2332 = vunpack.c.h.b16 %v620
    %v2333 = vunpack.c.l.b16 %v621
    %v2334 = vunpack.c.h.b16 %v621
    %v2335 = vunpack.c.l.b16 %v622
    %v2336 = vunpack.c.h.b16 %v622
    %v2337 = vunpack.c.l.b16 %v623
    %v2338 = vunpack.c.h.b16 %v623
    %v2339 = vunpack.c.l.b16 %v624
    %v2340 = vunpack.c.h.b16 %v624
    %v2341 = vunpack.c.l.b16 %v625
    %v2342 = vunpack.c.h.b16 %v625
    %v2343 = vunpack.c.l.b16 %v626
    %v2344 = vunpack.c.h.b16 %v626
    %v2345 = vunpack.c.l.b16 %v627
    %v2346 = vunpack.c.h.b16 %v627
    %v2347 = vunpack.c.l.b16 %v628
    %v2348 = vunpack.c.h.b16 %v628
    %v2349 = vunpack.c.l.b16 %v629
    %v2350 = vunpack.c.h.b16 %v629
    %v2351 = vunpack.c.l.b16 %v630
    %v2352 = vunpack.c.h.b16 %v630
    %v2353 = vunpack.c.l.b16 %v631
    %v2354 = vunpack.c.h.b16 %v631
    %v2355 = vunpack.c.l.b16 %v632
    %v2356 = vunpack.c.h.b16 %v632
    %v2357 = vunpack.c.l.b16 %v633
    %v2358 = vunpack.c.h.b16 %v633
    %v2359 = vunpack.c.l.b16 %v634
    %v2360 = vunpack.c.h.b16 %v634
    %v2361 = vunpack.c.l.b16 %v635
    %v2362 = vunpack.c.h.b16 %v635
    %v2363 = vunpack.c.l.b16 %v636
    %v2364 = vunpack.c.h.b16 %v636
    %v2365 = vunpack.c.l.b16 %v637
    %v2366 = vunpack.c.h.b16 %v637
    %v2367 = vunpack.c.l.b16 %v638
    %v2368 = vunpack.c.h.b16 %v638
    %v2369 = vunpack.c.l.b16 %v639
    %v2370 = vunpack.c.h.b16 %v639
    %v2371 = vunpack.c.l.b16 %v640
    %v2372 = vunpack.c.h.b16 %v640
    %v2373 = vunpack.c.l.b16 %v641
    %v2374 = vunpack.c.h.b16 %v641
    %v2375 = vunpack.c.l.b16 %v642
    %v2376 = vunpack.c.h.b16 %v642
    %v2377 = vunpack.c.l.b16 %v643
    %v2378 = vunpack.c.h.b16 %v643
    %v2379 = vunpack.c.l.b16 %v644
    %v2380 = vunpack.c.h.b16 %v644
    %v2381 = vunpack.c.l.b16 %v645
    %v2382 = vunpack.c.h.b16 %v645
    %v2383 = vunpack.c.l.b16 %v646
    %v2384 = vunpack.c.h.b16 %v646
    %v2385 = vunpack.c.l.b16 %v647
    %v2386 = vunpack.c.h.b16 %v647
    %v2387 = vunpack.c.l.b16 %v648
    %v2388 = vunpack.c.h.b16 %v648
    %v2389 = vunpack.c.l.b16 %v649
    %v2390 = vunpack.c.h.b16 %v649
    %v2391 = vunpack.c.l.b16 %v650
    %v2392 = vunpack.c.h.b16 %v650
    %v2393 = vunpack.c.l.b16 %v651
    %v2394 = vunpack.c.h.b16 %v651
    %v2395 = vunpack.c.l.b16 %v652
    %v2396 = vunpack.c.h.b16 %v652
    %v2397 = vunpack.c.l.b16 %v653
    %v2398 = vunpack.c.h.b16 %v653
    %v2399 = vunpack.c.l.b16 %v654
    %v2400 = vunpack.c.h.b16 %v654
    %v2401 = vunpack.c.l.b16 %v655
    %v2402 = vunpack.c.h.b16 %v655
    %v2403 = vunpack.c.l.b16 %v656
    %v2404 = vunpack.c.h.b16 %v656
    %v2405 = vunpack.c.l.b16 %v657
    %v2406 = vunpack.c.h.b16 %v657
    %v2407 = vunpack.c.l.b16 %v658
    %v2408 = vunpack.c.h.b16 %v658
    %v2409 = vunpack.c.l.b16 %v659
    %v2410 = vunpack.c.h.b16 %v659
    %v2411 = vunpack.c.l.b16 %v660
    %v2412 = vunpack.c.h.b16 %v660
    %v2413 = vunpack.c.l.b16 %v661
    %v2414 = vunpack.c.h.b16 %v661
    %v2415 = vunpack.c.l.b16 %v662
    %v2416 = vunpack.c.h.b16 %v662
    %v2417 = vunpack.c.l.b16 %v663
    %v2418 = vunpack.c.h.b16 %v663
    %v2419 = vunpack.c.l.b16 %v664
    %v2420 = vunpack.c.h.b16 %v664
    %v2421 = vunpack.c.l.b16 %v665
    %v2422 = vunpack.c.h.b16 %v665
    %v2423 = vunpack.c.l.b16 %v666
    %v2424 = vunpack.c.h.b16 %v666
    %v2425 = vpack.c.b16 %v1285, %v1273
    %v2426 = vpack.c.b16 %v1286, %v1274
    %v2427 = vpack.c.b16 %v1287, %v1275
    %v2428 = vpack.c.b16 %v1288, %v1276
    %v2429 = vpack.c.b16 %v1289, %v1277
    %v2430 = vpack.c.b16 %v1290, %v1278
    %v2431 = vpack.c.b16 %v1291, %v1279
    %v2432 = vpack.c.b16 %v1292, %v1280
    %v2433 = vpack.c.b16 %v1293, %v1281
    %v2434 = vpack.c.b16 %v1294, %v1282
    %v2435 = vpack.c.b16 %v1295, %v1283
    %v2436 = vpack.c.b16 %v1296, %v1284
    %v2437 = vpack.c.b16 %v1309, %v1297
    %v2438 = vpack.c.b16 %v1310, %v1298
    %v2439 = vpack.c.b16 %v1311, %v1299
    %v2440 = vpack.c.b16 %v1312, %v1300
    %v2441 = vpack.c.b16 %v1313, %v1301
    %v2442 = vpack.c.b16 %v1314, %v1302
    %v2443 = vpack.c.b16 %v1315, %v1303
    %v2444 = vpack.c.b16 %v1316, %v1304
    %v2445 = vpack.c.b16 %v1317, %v1305
    %v2446 = vpack.c.b16 %v1318, %v1306
    %v2447 = vpack.c.b16 %v1319, %v1307
    %v2448 = vpack.c.b16 %v1320, %v1308
    %v2449 = vpack.c.b16 %v1333, %v1321
    %v2450 = vpack.c.b16 %v1334, %v1322
    %v2451 = vpack.c.b16 %v1335, %v1323
    %v2452 = vpack.c.b16 %v1336, %v1324
    %v2453 = vpack.c.b16 %v1337, %v1325
    %v2454 = vpack.c.b16 %v1338, %v1326
    %v2455 = vpack.c.b16 %v1339, %v1327
    %v2456 = vpack.c.b16 %v1340, %v1328
    %v2457 = vpack.c.b16 %v1341, %v1329
    %v2458 = vpack.c.b16 %v1342, %v1330
    %v2459 = vpack.c.b16 %v1343, %v1331
    %v2460 = vpack.c.b16 %v1344, %v1332
    %v2461 = vpack.c.b16 %v1357, %v1345
    %v2462 = vpack.c.b16 %v1358, %v1346
    %v2463 = vpack.c.b16 %v1359, %v1347
    %v2464 = vpack.c.b16 %v1360, %v1348
    %v2465 = vpack.c.b16 %v1361, %v1349
    %v2466 = vpack.c.b16 %v1362, %v1350
    %v2467 = vpack.c.b16 %v1363, %v1351
    %v2468 = vpack.c.b16 %v1364, %v1352
    %v2469 = vpack.c.b16 %v1365, %v1353
    %v2470 = vpack.c.b16 %v1366, %v1354
    %v2471 = vpack.c.b16 %v1367, %v1355
    %v2472 = vpack.c.b16 %v1368, %v1356
    %v2473 = vpack.c.b16 %v1381, %v1369
    %v2474 = vpack.c.b16 %v1382, %v1370
    %v2475 = vpack.c.b16 %v1383, %v1371
    %v2476 = vpack.c.b16 %v1384, %v1372
    %v2477 = vpack.c.b16 %v1385, %v1373
    %v2478 = vpack.c.b16 %v1386, %v1374
    %v2479 = vpack.c.b16 %v1387, %v1375
    %v2480 = vpack.c.b16 %v1388, %v1376
    %v2481 = vpack.c.b16 %v1389, %v1377
    %v2482 = vpack.c.b16 %v1390, %v1378
    %v2483 = vpack.c.b16 %v1391, %v1379
    %v2484 = vpack.c.b16 %v1392, %v1380
    %v2485 = vpack.c.b16 %v1405, %v1393
    %v2486 = vpack.c.b16 %v1406, %v1394
    %v2487 = vpack.c.b16 %v1407, %v1395
    %v2488 = vpack.c.b16 %v1408, %v1396
    %v2489 = vpack.c.b16 %v1409, %v1397
    %v2490 = vpack.c.b16 %v1410, %v1398
    %v2491 = vpack.c.b16 %v1411, %v1399
    %v2492 = vpack.c.b16 %v1412, %v1400
    %v2493 = vpack.c.b16 %v1413, %v1401
    %v2494 = vpack.c.b16 %v1414, %v1402
    %v2495 = vpack.c.b16 %v1415, %v1403
    %v2496 = vpack.c.b16 %v1416, %v1404
    %v2497 = vpack.c.b16 %v1429, %v1417
    %v2498 = vpack.c.b16 %v1430, %v1418
    %v2499 = vpack.c.b16 %v1431, %v1419
    %v2500 = vpack.c.b16 %v1432, %v1420
    %v2501 = vpack.c.b16 %v1433, %v1421
    %v2502 = vpack.c.b16 %v1434, %v1422
    %v2503 = vpack.c.b16 %v1435, %v1423
    %v2504 = vpack.c.b16 %v1436, %v1424
    %v2505 = vpack.c.b16 %v1437, %v1425
    %v2506 = vpack.c.b16 %v1438, %v1426
    %v2507 = vpack.c.b16 %v1439, %v1427
    %v2508 = vpack.c.b16 %v1440, %v1428
    %v2509 = vpack.c.b16 %v1453, %v1441
    %v2510 = vpack.c.b16 %v1454, %v1442
    %v2511 = vpack.c.b16 %v1455, %v1443
    %v2512 = vpack.c.b16 %v1456, %v1444
    %v2513 = vpack.c.b16 %v1457, %v1445
    %v2514 = vpack.c.b16 %v1458, %v1446
    %v2515 = vpack.c.b16 %v1459, %v1447
    %v2516 = vpack.c.b16 %v1460, %v1448
    %v2517 = vpack.c.b16 %v1461, %v1449
    %v2518 = vpack.c.b16 %v1462, %v1450
    %v2519 = vpack.c.b16 %v1463, %v1451
    %v2520 = vpack.c.b16 %v1464, %v1452
    %v2521 = vpack.c.b16 %v1477, %v1465
    %v2522 = vpack.c.b16 %v1478, %v1466
    %v2523 = vpack.c.b16 %v1479, %v1467
    %v2524 = vpack.c.b16 %v1480, %v1468
    %v2525 = vpack.c.b16 %v1481, %v1469
    %v2526 = vpack.c.b16 %v1482, %v1470
    %v2527 = vpack.c.b16 %v1483, %v1471
    %v2528 = vpack.c.b16 %v1484, %v1472
    %v2529 = vpack.c.b16 %v1485, %v1473
    %v2530 = vpack.c.b16 %v1486, %v1474
    %v2531 = vpack.c.b16 %v1487, %v1475
    %v2532 = vpack.c.b16 %v1488, %v1476
    %v2533 = vpack.c.b16 %v1501, %v1489
    %v2534 = vpack.c.b16 %v1502, %v1490
    %v2535 = vpack.c.b16 %v1503, %v1491
    %v2536 = vpack.c.b16 %v1504, %v1492
    %v2537 = vpack.c.b16 %v1505, %v1493
    %v2538 = vpack.c.b16 %v1506, %v1494
    %v2539 = vpack.c.b16 %v1507, %v1495
    %v2540 = vpack.c.b16 %v1508, %v1496
    %v2541 = vpack.c.b16 %v1509, %v1497
    %v2542 = vpack.c.b16 %v1510, %v1498
    %v2543 = vpack.c.b16 %v1511, %v1499
    %v2544 = vpack.c.b16 %v1512, %v1500
    %v2545 = vpack.c.b16 %v1525, %v1513
    %v2546 = vpack.c.b16 %v1526, %v1514
    %v2547 = vpack.c.b16 %v1527, %v1515
    %v2548 = vpack.c.b16 %v1528, %v1516
    %v2549 = vpack.c.b16 %v1529, %v1517
    %v2550 = vpack.c.b16 %v1530, %v1518
    %v2551 = vpack.c.b16 %v1531, %v1519
    %v2552 = vpack.c.b16 %v1532, %v1520
    %v2553 = vpack.c.b16 %v1533, %v1521
    %v2554 = vpack.c.b16 %v1534, %v1522
    %v2555 = vpack.c.b16 %v1535, %v1523
    %v2556 = vpack.c.b16 %v1536, %v1524
    %v2557 = vpack.c.b16 %v1549, %v1537
    %v2558 = vpack.c.b16 %v1550, %v1538
    %v2559 = vpack.c.b16 %v1551, %v1539
    %v2560 = vpack.c.b16 %v1552, %v1540
    %v2561 = vpack.c.b16 %v1553, %v1541
    %v2562 = vpack.c.b16 %v1554, %v1542
    %v2563 = vpack.c.b16 %v1555, %v1543
    %v2564 = vpack.c.b16 %v1556, %v1544
    %v2565 = vpack.c.b16 %v1557, %v1545
    %v2566 = vpack.c.b16 %v1558, %v1546
    %v2567 = vpack.c.b16 %v1559, %v1547
    %v2568 = vpack.c.b16 %v1560, %v1548
    %v2569 = vpack.c.b16 %v1573, %v1561
    %v2570 = vpack.c.b16 %v1574, %v1562
    %v2571 = vpack.c.b16 %v1575, %v1563
    %v2572 = vpack.c.b16 %v1576, %v1564
    %v2573 = vpack.c.b16 %v1577, %v1565
    %v2574 = vpack.c.b16 %v1578, %v1566
    %v2575 = vpack.c.b16 %v1579, %v1567
    %v2576 = vpack.c.b16 %v1580, %v1568
    %v2577 = vpack.c.b16 %v1581, %v1569
    %v2578 = vpack.c.b16 %v1582, %v1570
    %v2579 = vpack.c.b16 %v1583, %v1571
    %v2580 = vpack.c.b16 %v1584, %v1572
    %v2581 = vpack.c.b16 %v1597, %v1585
    %v2582 = vpack.c.b16 %v1598, %v1586
    %v2583 = vpack.c.b16 %v1599, %v1587
    %v2584 = vpack.c.b16 %v1600, %v1588
    %v2585 = vpack.c.b16 %v1601, %v1589
    %v2586 = vpack.c.b16 %v1602, %v1590
    %v2587 = vpack.c.b16 %v1603, %v1591
    %v2588 = vpack.c.b16 %v1604, %v1592
    %v2589 = vpack.c.b16 %v1605, %v1593
    %v2590 = vpack.c.b16 %v1606, %v1594
    %v2591 = vpack.c.b16 %v1607, %v1595
    %v2592 = vpack.c.b16 %v1608, %v1596
    %v2593 = vpack.c.b16 %v1621, %v1609
    %v2594 = vpack.c.b16 %v1622, %v1610
    %v2595 = vpack.c.b16 %v1623, %v1611
    %v2596 = vpack.c.b16 %v1624, %v1612
    %v2597 = vpack.c.b16 %v1625, %v1613
    %v2598 = vpack.c.b16 %v1626, %v1614
    %v2599 = vpack.c.b16 %v1627, %v1615
    %v2600 = vpack.c.b16 %v1628, %v1616
    %v2601 = vpack.c.b16 %v1629, %v1617
    %v2602 = vpack.c.b16 %v1630, %v1618
    %v2603 = vpack.c.b16 %v1631, %v1619
    %v2604 = vpack.c.b16 %v1632, %v1620
    %v2605 = vpack.c.b16 %v1645, %v1633
    %v2606 = vpack.c.b16 %v1646, %v1634
    %v2607 = vpack.c.b16 %v1647, %v1635
    %v2608 = vpack.c.b16 %v1648, %v1636
    %v2609 = vpack.c.b16 %v1649, %v1637
    %v2610 = vpack.c.b16 %v1650, %v1638
    %v2611 = vpack.c.b16 %v1651, %v1639
    %v2612 = vpack.c.b16 %v1652, %v1640
    %v2613 = vpack.c.b16 %v1653, %v1641
    %v2614 = vpack.c.b16 %v1654, %v1642
    %v2615 = vpack.c.b16 %v1655, %v1643
    %v2616 = vpack.c.b16 %v1656, %v1644
    %v2617 = vpack.c.b16 %v1669, %v1657
    %v2618 = vpack.c.b16 %v1670, %v1658
    %v2619 = vpack.c.b16 %v1671, %v1659
    %v2620 = vpack.c.b16 %v1672, %v1660
    %v2621 = vpack.c.b16 %v1673, %v1661
    %v2622 = vpack.c.b16 %v1674, %v1662
    %v2623 = vpack.c.b16 %v1675, %v1663
    %v2624 = vpack.c.b16 %v1676, %v1664
    %v2625 = vpack.c.b16 %v1677, %v1665
    %v2626 = vpack.c.b16 %v1678, %v1666
    %v2627 = vpack.c.b16 %v1679, %v1667
    %v2628 = vpack.c.b16 %v1680, %v1668
    %v2629 = vpack.c.b16 %v1693, %v1681
    %v2630 = vpack.c.b16 %v1694, %v1682
    %v2631 = vpack.c.b16 %v1695, %v1683
    %v2632 = vpack.c.b16 %v1696, %v1684
    %v2633 = vpack.c.b16 %v1697, %v1685
    %v2634 = vpack.c.b16 %v1698, %v1686
    %v2635 = vpack.c.b16 %v1699, %v1687
    %v2636 = vpack.c.b16 %v1700, %v1688
    %v2637 = vpack.c.b16 %v1701, %v1689
    %v2638 = vpack.c.b16 %v1702, %v1690
    %v2639 = vpack.c.b16 %v1703, %v1691
    %v2640 = vpack.c.b16 %v1704, %v1692
    %v2641 = vpack.c.b16 %v1717, %v1705
    %v2642 = vpack.c.b16 %v1718, %v1706
    %v2643 = vpack.c.b16 %v1719, %v1707
    %v2644 = vpack.c.b16 %v1720, %v1708
    %v2645 = vpack.c.b16 %v1721, %v1709
    %v2646 = vpack.c.b16 %v1722, %v1710
    %v2647 = vpack.c.b16 %v1723, %v1711
    %v2648 = vpack.c.b16 %v1724, %v1712
    %v2649 = vpack.c.b16 %v1725, %v1713
    %v2650 = vpack.c.b16 %v1726, %v1714
    %v2651 = vpack.c.b16 %v1727, %v1715
    %v2652 = vpack.c.b16 %v1728, %v1716
    %v2653 = vpack.c.b16 %v1741, %v1729
    %v2654 = vpack.c.b16 %v1742, %v1730
    %v2655 = vpack.c.b16 %v1743, %v1731
    %v2656 = vpack.c.b16 %v1744, %v1732
    %v2657 = vpack.c.b16 %v1745, %v1733
    %v2658 = vpack.c.b16 %v1746, %v1734
    %v2659 = vpack.c.b16 %v1747, %v1735
    %v2660 = vpack.c.b16 %v1748, %v1736
    %v2661 = vpack.c.b16 %v1749, %v1737
    %v2662 = vpack.c.b16 %v1750, %v1738
    %v2663 = vpack.c.b16 %v1751, %v1739
    %v2664 = vpack.c.b16 %v1752, %v1740
    %v2665 = vpack.c.b16 %v1765, %v1753
    %v2666 = vpack.c.b16 %v1766, %v1754
    %v2667 = vpack.c.b16 %v1767, %v1755
    %v2668 = vpack.c.b16 %v1768, %v1756
    %v2669 = vpack.c.b16 %v1769, %v1757
    %v2670 = vpack.c.b16 %v1770, %v1758
    %v2671 = vpack.c.b16 %v1771, %v1759
    %v2672 = vpack.c.b16 %v1772, %v1760
    %v2673 = vpack.c.b16 %v1773, %v1761
    %v2674 = vpack.c.b16 %v1774, %v1762
    %v2675 = vpack.c.b16 %v1775, %v1763
    %v2676 = vpack.c.b16 %v1776, %v1764
    %v2677 = vpack.c.b16 %v1789, %v1777
    %v2678 = vpack.c.b16 %v1790, %v1778
    %v2679 = vpack.c.b16 %v1791, %v1779
    %v2680 = vpack.c.b16 %v1792, %v1780
    %v2681 = vpack.c.b16 %v1793, %v1781
    %v2682 = vpack.c.b16 %v1794, %v1782
    %v2683 = vpack.c.b16 %v1795, %v1783
    %v2684 = vpack.c.b16 %v1796, %v1784
    %v2685 = vpack.c.b16 %v1797, %v1785
    %v2686 = vpack.c.b16 %v1798, %v1786
    %v2687 = vpack.c.b16 %v1799, %v1787
    %v2688 = vpack.c.b16 %v1800, %v1788
    %v2689 = vpack.c.b16 %v1813, %v1801
    %v2690 = vpack.c.b16 %v1814, %v1802
    %v2691 = vpack.c.b16 %v1815, %v1803
    %v2692 = vpack.c.b16 %v1816, %v1804
    %v2693 = vpack.c.b16 %v1817, %v1805
    %v2694 = vpack.c.b16 %v1818, %v1806
    %v2695 = vpack.c.b16 %v1819, %v1807
    %v2696 = vpack.c.b16 %v1820, %v1808
    %v2697 = vpack.c.b16 %v1821, %v1809
    %v2698 = vpack.c.b16 %v1822, %v1810
    %v2699 = vpack.c.b16 %v1823, %v1811
    %v2700 = vpack.c.b16 %v1824, %v1812
    %v2701 = vpack.c.b16 %v1837, %v1825
    %v2702 = vpack.c.b16 %v1838, %v1826
    %v2703 = vpack.c.b16 %v1839, %v1827
    %v2704 = vpack.c.b16 %v1840, %v1828
    %v2705 = vpack.c.b16 %v1841, %v1829
    %v2706 = vpack.c.b16 %v1842, %v1830
    %v2707 = vpack.c.b16 %v1843, %v1831
    %v2708 = vpack.c.b16 %v1844, %v1832
    %v2709 = vpack.c.b16 %v1845, %v1833
    %v2710 = vpack.c.b16 %v1846, %v1834
    %v2711 = vpack.c.b16 %v1847, %v1835
    %v2712 = vpack.c.b16 %v1848, %v1836
    %v2713 = vpack.c.b16 %v1861, %v1849
    %v2714 = vpack.c.b16 %v1862, %v1850
    %v2715 = vpack.c.b16 %v1863, %v1851
    %v2716 = vpack.c.b16 %v1864, %v1852
    %v2717 = vpack.c.b16 %v1865, %v1853
    %v2718 = vpack.c.b16 %v1866, %v1854
    %v2719 = vpack.c.b16 %v1867, %v1855
    %v2720 = vpack.c.b16 %v1868, %v1856
    %v2721 = vpack.c.b16 %v1869, %v1857
    %v2722 = vpack.c.b16 %v1870, %v1858
    %v2723 = vpack.c.b16 %v1871, %v1859
    %v2724 = vpack.c.b16 %v1872, %v1860
    %v2725 = vpack.c.b16 %v1885, %v1873
    %v2726 = vpack.c.b16 %v1886, %v1874
    %v2727 = vpack.c.b16 %v1887, %v1875
    %v2728 = vpack.c.b16 %v1888, %v1876
    %v2729 = vpack.c.b16 %v1889, %v1877
    %v2730 = vpack.c.b16 %v1890, %v1878
    %v2731 = vpack.c.b16 %v1891, %v1879
    %v2732 = vpack.c.b16 %v1892, %v1880
    %v2733 = vpack.c.b16 %v1893, %v1881
    %v2734 = vpack.c.b16 %v1894, %v1882
    %v2735 = vpack.c.b16 %v1895, %v1883
    %v2736 = vpack.c.b16 %v1896, %v1884
    %v2737 = vpack.c.b16 %v1909, %v1897
    %v2738 = vpack.c.b16 %v1910, %v1898
    %v2739 = vpack.c.b16 %v1911, %v1899
    %v2740 = vpack.c.b16 %v1912, %v1900
    %v2741 = vpack.c.b16 %v1913, %v1901
    %v2742 = vpack.c.b16 %v1914, %v1902
    %v2743 = vpack.c.b16 %v1915, %v1903
    %v2744 = vpack.c.b16 %v1916, %v1904
    %v2745 = vpack.c.b16 %v1917, %v1905
    %v2746 = vpack.c.b16 %v1918, %v1906
    %v2747 = vpack.c.b16 %v1919, %v1907
    %v2748 = vpack.c.b16 %v1920, %v1908
    %v2749 = vpack.c.b16 %v1933, %v1921
    %v2750 = vpack.c.b16 %v1934, %v1922
    %v2751 = vpack.c.b16 %v1935, %v1923
    %v2752 = vpack.c.b16 %v1936, %v1924
    %v2753 = vpack.c.b16 %v1937, %v1925
    %v2754 = vpack.c.b16 %v1938, %v1926
    %v2755 = vpack.c.b16 %v1939, %v1927
    %v2756 = vpack.c.b16 %v1940, %v1928
    %v2757 = vpack.c.b16 %v1941, %v1929
    %v2758 = vpack.c.b16 %v1942, %v1930
    %v2759 = vpack.c.b16 %v1943, %v1931
    %v2760 = vpack.c.b16 %v1944, %v1932
    %v2761 = vpack.c.b16 %v1957, %v1945
    %v2762 = vpack.c.b16 %v1958, %v1946
    %v2763 = vpack.c.b16 %v1959, %v1947
    %v2764 = vpack.c.b16 %v1960, %v1948
    %v2765 = vpack.c.b16 %v1961, %v1949
    %v2766 = vpack.c.b16 %v1962, %v1950
    %v2767 = vpack.c.b16 %v1963, %v1951
    %v2768 = vpack.c.b16 %v1964, %v1952
    %v2769 = vpack.c.b16 %v1965, %v1953
    %v2770 = vpack.c.b16 %v1966, %v1954
    %v2771 = vpack.c.b16 %v1967, %v1955
    %v2772 = vpack.c.b16 %v1968, %v1956
    %v2773 = vpack.c.b16 %v1981, %v1969
    %v2774 = vpack.c.b16 %v1982, %v1970
    %v2775 = vpack.c.b16 %v1983, %v1971
    %v2776 = vpack.c.b16 %v1984, %v1972
    %v2777 = vpack.c.b16 %v1985, %v1973
    %v2778 = vpack.c.b16 %v1986, %v1974
    %v2779 = vpack.c.b16 %v1987, %v1975
    %v2780 = vpack.c.b16 %v1988, %v1976
    %v2781 = vpack.c.b16 %v1989, %v1977
    %v2782 = vpack.c.b16 %v1990, %v1978
    %v2783 = vpack.c.b16 %v1991, %v1979
    %v2784 = vpack.c.b16 %v1992, %v1980
    %v2785 = vpack.c.b16 %v2005, %v1993
    %v2786 = vpack.c.b16 %v2006, %v1994
    %v2787 = vpack.c.b16 %v2007, %v1995
    %v2788 = vpack.c.b16 %v2008, %v1996
    %v2789 = vpack.c.b16 %v2009, %v1997
    %v2790 = vpack.c.b16 %v2010, %v1998
    %v2791 = vpack.c.b16 %v2011, %v1999
    %v2792 = vpack.c.b16 %v2012, %v2000
    %v2793 = vpack.c.b16 %v2013, %v2001
    %v2794 = vpack.c.b16 %v2014, %v2002
    %v2795 = vpack.c.b16 %v2015, %v2003
    %v2796 = vpack.c.b16 %v2016, %v2004
    %v2797 = vpack.c.b16 %v2029, %v2017
    %v2798 = vpack.c.b16 %v2030, %v2018
    %v2799 = vpack.c.b16 %v2031, %v2019
    %v2800 = vpack.c.b16 %v2032, %v2020
    %v2801 = vpack.c.b16 %v2033, %v2021
    %v2802 = vpack.c.b16 %v2034, %v2022
    %v2803 = vpack.c.b16 %v2035, %v2023
    %v2804 = vpack.c.b16 %v2036, %v2024
    %v2805 = vpack.c.b16 %v2037, %v2025
    %v2806 = vpack.c.b16 %v2038, %v2026
    %v2807 = vpack.c.b16 %v2039, %v2027
    %v2808 = vpack.c.b16 %v2040, %v2028
    %v2809 = vpack.c.b16 %v2053, %v2041
    %v2810 = vpack.c.b16 %v2054, %v2042
    %v2811 = vpack.c.b16 %v2055, %v2043
    %v2812 = vpack.c.b16 %v2056, %v2044
    %v2813 = vpack.c.b16 %v2057, %v2045
    %v2814 = vpack.c.b16 %v2058, %v2046
    %v2815 = vpack.c.b16 %v2059, %v2047
    %v2816 = vpack.c.b16 %v2060, %v2048
    %v2817 = vpack.c.b16 %v2061, %v2049
    %v2818 = vpack.c.b16 %v2062, %v2050
    %v2819 = vpack.c.b16 %v2063, %v2051
    %v2820 = vpack.c.b16 %v2064, %v2052
    %v2821 = vpack.c.b16 %v2077, %v2065
    %v2822 = vpack.c.b16 %v2078, %v2066
    %v2823 = vpack.c.b16 %v2079, %v2067
    %v2824 = vpack.c.b16 %v2080, %v2068
    %v2825 = vpack.c.b16 %v2081, %v2069
    %v2826 = vpack.c.b16 %v2082, %v2070
    %v2827 = vpack.c.b16 %v2083, %v2071
    %v2828 = vpack.c.b16 %v2084, %v2072
    %v2829 = vpack.c.b16 %v2085, %v2073
    %v2830 = vpack.c.b16 %v2086, %v2074
    %v2831 = vpack.c.b16 %v2087, %v2075
    %v2832 = vpack.c.b16 %v2088, %v2076
    %v2833 = vpack.c.b16 %v2101, %v2089
    %v2834 = vpack.c.b16 %v2102, %v2090
    %v2835 = vpack.c.b16 %v2103, %v2091
    %v2836 = vpack.c.b16 %v2104, %v2092
    %v2837 = vpack.c.b16 %v2105, %v2093
    %v2838 = vpack.c.b16 %v2106, %v2094
    %v2839 = vpack.c.b16 %v2107, %v2095
    %v2840 = vpack.c.b16 %v2108, %v2096
    %v2841 = vpack.c.b16 %v2109, %v2097
    %v2842 = vpack.c.b16 %v2110, %v2098
    %v2843 = vpack.c.b16 %v2111, %v2099
    %v2844 = vpack.c.b16 %v2112, %v2100
    %v2845 = vpack.c.b16 %v2125, %v2113
    %v2846 = vpack.c.b16 %v2126, %v2114
    %v2847 = vpack.c.b16 %v2127, %v2115
    %v2848 = vpack.c.b16 %v2128, %v2116
    %v2849 = vpack.c.b16 %v2129, %v2117
    %v2850 = vpack.c.b16 %v2130, %v2118
    %v2851 = vpack.c.b16 %v2131, %v2119
    %v2852 = vpack.c.b16 %v2132, %v2120
    %v2853 = vpack.c.b16 %v2133, %v2121
    %v2854 = vpack.c.b16 %v2134, %v2122
    %v2855 = vpack.c.b16 %v2135, %v2123
    %v2856 = vpack.c.b16 %v2136, %v2124
    %v2857 = vpack.c.b16 %v2149, %v2137
    %v2858 = vpack.c.b16 %v2150, %v2138
    %v2859 = vpack.c.b16 %v2151, %v2139
    %v2860 = vpack.c.b16 %v2152, %v2140
    %v2861 = vpack.c.b16 %v2153, %v2141
    %v2862 = vpack.c.b16 %v2154, %v2142
    %v2863 = vpack.c.b16 %v2155, %v2143
    %v2864 = vpack.c.b16 %v2156, %v2144
    %v2865 = vpack.c.b16 %v2157, %v2145
    %v2866 = vpack.c.b16 %v2158, %v2146
    %v2867 = vpack.c.b16 %v2159, %v2147
    %v2868 = vpack.c.b16 %v2160, %v2148
    %v2869 = vpack.c.b16 %v2173, %v2161
    %v2870 = vpack.c.b16 %v2174, %v2162
    %v2871 = vpack.c.b16 %v2175, %v2163
    %v2872 = vpack.c.b16 %v2176, %v2164
    %v2873 = vpack.c.b16 %v2177, %v2165
    %v2874 = vpack.c.b16 %v2178, %v2166
    %v2875 = vpack.c.b16 %v2179, %v2167
    %v2876 = vpack.c.b16 %v2180, %v2168
    %v2877 = vpack.c.b16 %v2181, %v2169
    %v2878 = vpack.c.b16 %v2182, %v2170
    %v2879 = vpack.c.b16 %v2183, %v2171
    %v2880 = vpack.c.b16 %v2184, %v2172
    %v2881 = vpack.c.b16 %v2197, %v2185
    %v2882 = vpack.c.b16 %v2198, %v2186
    %v2883 = vpack.c.b16 %v2199, %v2187
    %v2884 = vpack.c.b16 %v2200, %v2188
    %v2885 = vpack.c.b16 %v2201, %v2189
    %v2886 = vpack.c.b16 %v2202, %v2190
    %v2887 = vpack.c.b16 %v2203, %v2191
    %v2888 = vpack.c.b16 %v2204, %v2192
    %v2889 = vpack.c.b16 %v2205, %v2193
    %v2890 = vpack.c.b16 %v2206, %v2194
    %v2891 = vpack.c.b16 %v2207, %v2195
    %v2892 = vpack.c.b16 %v2208, %v2196
    %v2893 = vpack.c.b16 %v2221, %v2209
    %v2894 = vpack.c.b16 %v2222, %v2210
    %v2895 = vpack.c.b16 %v2223, %v2211
    %v2896 = vpack.c.b16 %v2224, %v2212
    %v2897 = vpack.c.b16 %v2225, %v2213
    %v2898 = vpack.c.b16 %v2226, %v2214
    %v2899 = vpack.c.b16 %v2227, %v2215
    %v2900 = vpack.c.b16 %v2228, %v2216
    %v2901 = vpack.c.b16 %v2229, %v2217
    %v2902 = vpack.c.b16 %v2230, %v2218
    %v2903 = vpack.c.b16 %v2231, %v2219
    %v2904 = vpack.c.b16 %v2232, %v2220
    %v2905 = vpack.c.b16 %v2245, %v2233
    %v2906 = vpack.c.b16 %v2246, %v2234
    %v2907 = vpack.c.b16 %v2247, %v2235
    %v2908 = vpack.c.b16 %v2248, %v2236
    %v2909 = vpack.c.b16 %v2249, %v2237
    %v2910 = vpack.c.b16 %v2250, %v2238
    %v2911 = vpack.c.b16 %v2251, %v2239
    %v2912 = vpack.c.b16 %v2252, %v2240
    %v2913 = vpack.c.b16 %v2253, %v2241
    %v2914 = vpack.c.b16 %v2254, %v2242
    %v2915 = vpack.c.b16 %v2255, %v2243
    %v2916 = vpack.c.b16 %v2256, %v2244
    %v2917 = vpack.c.b16 %v2269, %v2257
    %v2918 = vpack.c.b16 %v2270, %v2258
    %v2919 = vpack.c.b16 %v2271, %v2259
    %v2920 = vpack.c.b16 %v2272, %v2260
    %v2921 = vpack.c.b16 %v2273, %v2261
    %v2922 = vpack.c.b16 %v2274, %v2262
    %v2923 = vpack.c.b16 %v2275, %v2263
    %v2924 = vpack.c.b16 %v2276, %v2264
    %v2925 = vpack.c.b16 %v2277, %v2265
    %v2926 = vpack.c.b16 %v2278, %v2266
    %v2927 = vpack.c.b16 %v2279, %v2267
    %v2928 = vpack.c.b16 %v2280, %v2268
    %v2929 = vpack.c.b16 %v2293, %v2281
    %v2930 = vpack.c.b16 %v2294, %v2282
    %v2931 = vpack.c.b16 %v2295, %v2283
    %v2932 = vpack.c.b16 %v2296, %v2284
    %v2933 = vpack.c.b16 %v2297, %v2285
    %v2934 = vpack.c.b16 %v2298, %v2286
    %v2935 = vpack.c.b16 %v2299, %v2287
    %v2936 = vpack.c.b16 %v2300, %v2288
    %v2937 = vpack.c.b16 %v2301, %v2289
    %v2938 = vpack.c.b16 %v2302, %v2290
    %v2939 = vpack.c.b16 %v2303, %v2291
    %v2940 = vpack.c.b16 %v2304, %v2292
    %v2941 = vpack.c.b16 %v2317, %v2305
    %v2942 = vpack.c.b16 %v2318, %v2306
    %v2943 = vpack.c.b16 %v2319, %v2307
    %v2944 = vpack.c.b16 %v2320, %v2308
    %v2945 = vpack.c.b16 %v2321, %v2309
    %v2946 = vpack.c.b16 %v2322, %v2310
    %v2947 = vpack.c.b16 %v2323, %v2311
    %v2948 = vpack.c.b16 %v2324, %v2312
    %v2949 = vpack.c.b16 %v2325, %v2313
    %v2950 = vpack.c.b16 %v2326, %v2314
    %v2951 = vpack.c.b16 %v2327, %v2315
    %v2952 = vpack.c.b16 %v2328, %v2316
    %v2953 = vpack.c.b16 %v2341, %v2329
    %v2954 = vpack.c.b16 %v2342, %v2330
    %v2955 = vpack.c.b16 %v2343, %v2331
    %v2956 = vpack.c.b16 %v2344, %v2332
    %v2957 = vpack.c.b16 %v2345, %v2333
    %v2958 = vpack.c.b16 %v2346, %v2334
    %v2959 = vpack.c.b16 %v2347, %v2335
    %v2960 = vpack.c.b16 %v2348, %v2336
    %v2961 = vpack.c.b16 %v2349, %v2337
    %v2962 = vpack.c.b16 %v2350, %v2338
    %v2963 = vpack.c.b16 %v2351, %v2339
    %v2964 = vpack.c.b16 %v2352, %v2340
    %v2965 = vpack.c.b16 %v2365, %v2353
    %v2966 = vpack.c.b16 %v2366, %v2354
    %v2967 = vpack.c.b16 %v2367, %v2355
    %v2968 = vpack.c.b16 %v2368, %v2356
    %v2969 = vpack.c.b16 %v2369, %v2357
    %v2970 = vpack.c.b16 %v2370, %v2358
    %v2971 = vpack.c.b16 %v2371, %v2359
    %v2972 = vpack.c.b16 %v2372, %v2360
    %v2973 = vpack.c.b16 %v2373, %v2361
    %v2974 = vpack.c.b16 %v2374, %v2362
    %v2975 = vpack.c.b16 %v2375, %v2363
    %v2976 = vpack.c.b16 %v2376, %v2364
    %v2977 = vpack.c.b16 %v2389, %v2377
    %v2978 = vpack.c.b16 %v2390, %v2378
    %v2979 = vpack.c.b16 %v2391, %v2379
    %v2980 = vpack.c.b16 %v2392, %v2380
    %v2981 = vpack.c.b16 %v2393, %v2381
    %v2982 = vpack.c.b16 %v2394, %v2382
    %v2983 = vpack.c.b16 %v2395, %v2383
    %v2984 = vpack.c.b16 %v2396, %v2384
    %v2985 = vpack.c.b16 %v2397, %v2385
    %v2986 = vpack.c.b16 %v2398, %v2386
    %v2987 = vpack.c.b16 %v2399, %v2387
    %v2988 = vpack.c.b16 %v2400, %v2388
    %v2989 = vpack.c.b16 %v2413, %v2401
    %v2990 = vpack.c.b16 %v2414, %v2402
    %v2991 = vpack.c.b16 %v2415, %v2403
    %v2992 = vpack.c.b16 %v2416, %v2404
    %v2993 = vpack.c.b16 %v2417, %v2405
    %v2994 = vpack.c.b16 %v2418, %v2406
    %v2995 = vpack.c.b16 %v2419, %v2407
    %v2996 = vpack.c.b16 %v2420, %v2408
    %v2997 = vpack.c.b16 %v2421, %v2409
    %v2998 = vpack.c.b16 %v2422, %v2410
    %v2999 = vpack.c.b16 %v2423, %v2411
    %v3000 = vpack.c.b16 %v2424, %v2412
    %3577 = vmatprep.subr.bf16.mxu0 %v2510
    %3578 = vmatpush1.bf16.msra.mxu0 %v2509
    %3579 = vmatprep.subr.bf16.mxu0 %v2498
    %3580 = vmatpush1.bf16.msra.mxu0 %v2497
    %3581 = vmatprep.subr.bf16.mxu0 %v2486
    %3582 = vmatpush1.bf16.msra.mxu0 %v2485
    %3583 = vmatprep.subr.bf16.mxu0 %v2474
    %3584 = vmatpush1.bf16.msra.mxu0 %v2473
    %3585 = vmatprep.subr.bf16.mxu0 %v2462
    %3586 = vmatpush1.bf16.msra.mxu0 %v2461
    %3587 = vmatprep.subr.bf16.mxu0 %v2450
    %3588 = vmatpush1.bf16.msra.mxu0 %v2449
    %3589 = vmatprep.subr.bf16.mxu0 %v2438
    %3590 = vmatpush1.bf16.msra.mxu0 %v2437
    %3591 = vmatprep.subr.bf16.mxu0 %v2426
    %3592 = vmatpush1.bf16.msra.mxu0 %v2425
    %3593 = vmatprep.subr.bf16.mxu0 %v2606
    %3594 = vmatpush2.bf16.msra.mxu0 %v2605
    %3595 = vmatprep.subr.bf16.mxu0 %v2594
    %3596 = vmatpush2.bf16.msra.mxu0 %v2593
    %3597 = vmatprep.subr.bf16.mxu0 %v2582
    %3598 = vmatpush2.bf16.msra.mxu0 %v2581
    %3599 = vmatprep.subr.bf16.mxu0 %v2570
    %3600 = vmatpush2.bf16.msra.mxu0 %v2569
    %3601 = vmatprep.subr.bf16.mxu0 %v2558
    %3602 = vmatpush2.bf16.msra.mxu0 %v2557
    %3603 = vmatprep.subr.bf16.mxu0 %v2546
    %3604 = vmatpush2.bf16.msra.mxu0 %v2545
    %3605 = vmatprep.subr.bf16.mxu0 %v2534
    %3606 = vmatpush2.bf16.msra.mxu0 %v2533
    %3607 = vmatprep.subr.bf16.mxu0 %v2522
    %3608 = vmatpush2.bf16.msra.mxu0 %v2521
    %3609 = vmatprep.mubr.bf16.mxu0 %v686
    %3610 = vmatmul.mubr.bf16.gmra.mxu0 %v685
    %v3611 = vpop.f32.mrf.mxu0
    %v3612 = vadd.f32 0.0, %v3611
    %v3613 = vpop.f32.mrf.mxu0
    %v3614 = vadd.f32 0.0, %v3613
    %v3615 = vpop.f32.mrf.mxu0
    %v3616 = vadd.f32 0.0, %v3615
    %v3617 = vpop.f32.mrf.mxu0
    %v3618 = vadd.f32 0.0, %v3617
    %3619 = vdwg.mxu0
    %3620 = vmatprep.subr.bf16.mxu0 %v2702
    %3621 = vmatpush1.bf16.msra.mxu0 %v2701
    %3622 = vmatprep.subr.bf16.mxu0 %v2690
    %3623 = vmatpush1.bf16.msra.mxu0 %v2689
    %3624 = vmatprep.subr.bf16.mxu0 %v2678
    %3625 = vmatpush1.bf16.msra.mxu0 %v2677
    %3626 = vmatprep.subr.bf16.mxu0 %v2666
    %3627 = vmatpush1.bf16.msra.mxu0 %v2665
    %3628 = vmatprep.subr.bf16.mxu0 %v2654
    %3629 = vmatpush1.bf16.msra.mxu0 %v2653
    %3630 = vmatprep.subr.bf16.mxu0 %v2642
    %3631 = vmatpush1.bf16.msra.mxu0 %v2641
    %3632 = vmatprep.subr.bf16.mxu0 %v2630
    %3633 = vmatpush1.bf16.msra.mxu0 %v2629
    %3634 = vmatprep.subr.bf16.mxu0 %v2618
    %3635 = vmatpush1.bf16.msra.mxu0 %v2617
    %3636 = vmatprep.subr.bf16.mxu0 %v2798
    %3637 = vmatpush2.bf16.msra.mxu0 %v2797
    %3638 = vmatprep.subr.bf16.mxu0 %v2786
    %3639 = vmatpush2.bf16.msra.mxu0 %v2785
    %3640 = vmatprep.subr.bf16.mxu0 %v2774
    %3641 = vmatpush2.bf16.msra.mxu0 %v2773
    %3642 = vmatprep.subr.bf16.mxu0 %v2762
    %3643 = vmatpush2.bf16.msra.mxu0 %v2761
    %3644 = vmatprep.subr.bf16.mxu0 %v2750
    %3645 = vmatpush2.bf16.msra.mxu0 %v2749
    %3646 = vmatprep.subr.bf16.mxu0 %v2738
    %3647 = vmatpush2.bf16.msra.mxu0 %v2737
    %3648 = vmatprep.subr.bf16.mxu0 %v2726
    %3649 = vmatpush2.bf16.msra.mxu0 %v2725
    %3650 = vmatprep.subr.bf16.mxu0 %v2714
    %3651 = vmatpush2.bf16.msra.mxu0 %v2713
    %3652 = vmatprep.mubr.bf16.mxu0 %v688
    %3653 = vmatmul.mubr.bf16.gmra.mxu0 %v687
    %v3654 = vpop.f32.mrf.mxu0
    %v3655 = vadd.f32 %v3612, %v3654
    %v3656 = vpop.f32.mrf.mxu0
    %v3657 = vadd.f32 %v3614, %v3656
    %v3658 = vpop.f32.mrf.mxu0
    %v3659 = vadd.f32 %v3616, %v3658
    %v3660 = vpop.f32.mrf.mxu0
    %v3661 = vadd.f32 %v3618, %v3660
    %3662 = vdwg.mxu0
    %3663 = vmatprep.subr.bf16.mxu0 %v2894
    %3664 = vmatpush1.bf16.msra.mxu0 %v2893
    %3665 = vmatprep.subr.bf16.mxu0 %v2882
    %3666 = vmatpush1.bf16.msra.mxu0 %v2881
    %3667 = vmatprep.subr.bf16.mxu0 %v2870
    %3668 = vmatpush1.bf16.msra.mxu0 %v2869
    %3669 = vmatprep.subr.bf16.mxu0 %v2858
    %3670 = vmatpush1.bf16.msra.mxu0 %v2857
    %3671 = vmatprep.subr.bf16.mxu0 %v2846
    %3672 = vmatpush1.bf16.msra.mxu0 %v2845
    %3673 = vmatprep.subr.bf16.mxu0 %v2834
    %3674 = vmatpush1.bf16.msra.mxu0 %v2833
    %3675 = vmatprep.subr.bf16.mxu0 %v2822
    %3676 = vmatpush1.bf16.msra.mxu0 %v2821
    %3677 = vmatprep.subr.bf16.mxu0 %v2810
    %3678 = vmatpush1.bf16.msra.mxu0 %v2809
    %3679 = vmatprep.subr.bf16.mxu0 %v2990
    %3680 = vmatpush2.bf16.msra.mxu0 %v2989
    %3681 = vmatprep.subr.bf16.mxu0 %v2978
    %3682 = vmatpush2.bf16.msra.mxu0 %v2977
    %3683 = vmatprep.subr.bf16.mxu0 %v2966
    %3684 = vmatpush2.bf16.msra.mxu0 %v2965
    %3685 = vmatprep.subr.bf16.mxu0 %v2954
    %3686 = vmatpush2.bf16.msra.mxu0 %v2953
    %3687 = vmatprep.subr.bf16.mxu0 %v2942
    %3688 = vmatpush2.bf16.msra.mxu0 %v2941
    %3689 = vmatprep.subr.bf16.mxu0 %v2930
    %3690 = vmatpush2.bf16.msra.mxu0 %v2929
    %3691 = vmatprep.subr.bf16.mxu0 %v2918
    %3692 = vmatpush2.bf16.msra.mxu0 %v2917
    %3693 = vmatprep.subr.bf16.mxu0 %v2906
    %3694 = vmatpush2.bf16.msra.mxu0 %v2905
    %3695 = vmatprep.mubr.bf16.mxu0 %v690
    %3696 = vmatmul.mubr.bf16.gmra.mxu0 %v689
    %v3697 = vpop.f32.mrf.mxu0
    %v3698 = vadd.f32 %v3655, %v3697
    %v3699 = vpop.f32.mrf.mxu0
    %v3700 = vadd.f32 %v3657, %v3699
    %v3701 = vpop.f32.mrf.mxu0
    %v3702 = vadd.f32 %v3659, %v3701
    %v3703 = vpop.f32.mrf.mxu0
    %v3704 = vadd.f32 %v3661, %v3703
    %3705 = vdwg.mxu0
    %3706 = vmatprep.subr.bf16.mxu0 %v2512
    %3707 = vmatpush1.bf16.msra.mxu0 %v2511
    %3708 = vmatprep.subr.bf16.mxu0 %v2500
    %3709 = vmatpush1.bf16.msra.mxu0 %v2499
    %3710 = vmatprep.subr.bf16.mxu0 %v2488
    %3711 = vmatpush1.bf16.msra.mxu0 %v2487
    %3712 = vmatprep.subr.bf16.mxu0 %v2476
    %3713 = vmatpush1.bf16.msra.mxu0 %v2475
    %3714 = vmatprep.subr.bf16.mxu0 %v2464
    %3715 = vmatpush1.bf16.msra.mxu0 %v2463
    %3716 = vmatprep.subr.bf16.mxu0 %v2452
    %3717 = vmatpush1.bf16.msra.mxu0 %v2451
    %3718 = vmatprep.subr.bf16.mxu0 %v2440
    %3719 = vmatpush1.bf16.msra.mxu0 %v2439
    %3720 = vmatprep.subr.bf16.mxu0 %v2428
    %3721 = vmatpush1.bf16.msra.mxu0 %v2427
    %3722 = vmatprep.subr.bf16.mxu0 %v2608
    %3723 = vmatpush2.bf16.msra.mxu0 %v2607
    %3724 = vmatprep.subr.bf16.mxu0 %v2596
    %3725 = vmatpush2.bf16.msra.mxu0 %v2595
    %3726 = vmatprep.subr.bf16.mxu0 %v2584
    %3727 = vmatpush2.bf16.msra.mxu0 %v2583
    %3728 = vmatprep.subr.bf16.mxu0 %v2572
    %3729 = vmatpush2.bf16.msra.mxu0 %v2571
    %3730 = vmatprep.subr.bf16.mxu0 %v2560
    %3731 = vmatpush2.bf16.msra.mxu0 %v2559
    %3732 = vmatprep.subr.bf16.mxu0 %v2548
    %3733 = vmatpush2.bf16.msra.mxu0 %v2547
    %3734 = vmatprep.subr.bf16.mxu0 %v2536
    %3735 = vmatpush2.bf16.msra.mxu0 %v2535
    %3736 = vmatprep.subr.bf16.mxu0 %v2524
    %3737 = vmatpush2.bf16.msra.mxu0 %v2523
    %3738 = vmatprep.mubr.bf16.mxu0 %v686
    %3739 = vmatmul.mubr.bf16.gmra.mxu0 %v685
    %v3740 = vpop.f32.mrf.mxu0
    %v3741 = vadd.f32 0.0, %v3740
    %v3742 = vpop.f32.mrf.mxu0
    %v3743 = vadd.f32 0.0, %v3742
    %v3744 = vpop.f32.mrf.mxu0
    %v3745 = vadd.f32 0.0, %v3744
    %v3746 = vpop.f32.mrf.mxu0
    %v3747 = vadd.f32 0.0, %v3746
    %3748 = vdwg.mxu0
    %3749 = vmatprep.subr.bf16.mxu0 %v2704
    %3750 = vmatpush1.bf16.msra.mxu0 %v2703
    %3751 = vmatprep.subr.bf16.mxu0 %v2692
    %3752 = vmatpush1.bf16.msra.mxu0 %v2691
    %3753 = vmatprep.subr.bf16.mxu0 %v2680
    %3754 = vmatpush1.bf16.msra.mxu0 %v2679
    %3755 = vmatprep.subr.bf16.mxu0 %v2668
    %3756 = vmatpush1.bf16.msra.mxu0 %v2667
    %3757 = vmatprep.subr.bf16.mxu0 %v2656
    %3758 = vmatpush1.bf16.msra.mxu0 %v2655
    %3759 = vmatprep.subr.bf16.mxu0 %v2644
    %3760 = vmatpush1.bf16.msra.mxu0 %v2643
    %3761 = vmatprep.subr.bf16.mxu0 %v2632
    %3762 = vmatpush1.bf16.msra.mxu0 %v2631
    %3763 = vmatprep.subr.bf16.mxu0 %v2620
    %3764 = vmatpush1.bf16.msra.mxu0 %v2619
    %3765 = vmatprep.subr.bf16.mxu0 %v2800
    %3766 = vmatpush2.bf16.msra.mxu0 %v2799
    %3767 = vmatprep.subr.bf16.mxu0 %v2788
    %3768 = vmatpush2.bf16.msra.mxu0 %v2787
    %3769 = vmatprep.subr.bf16.mxu0 %v2776
    %3770 = vmatpush2.bf16.msra.mxu0 %v2775
    %3771 = vmatprep.subr.bf16.mxu0 %v2764
    %3772 = vmatpush2.bf16.msra.mxu0 %v2763
    %3773 = vmatprep.subr.bf16.mxu0 %v2752
    %3774 = vmatpush2.bf16.msra.mxu0 %v2751
    %3775 = vmatprep.subr.bf16.mxu0 %v2740
    %3776 = vmatpush2.bf16.msra.mxu0 %v2739
    %3777 = vmatprep.subr.bf16.mxu0 %v2728
    %3778 = vmatpush2.bf16.msra.mxu0 %v2727
    %3779 = vmatprep.subr.bf16.mxu0 %v2716
    %3780 = vmatpush2.bf16.msra.mxu0 %v2715
    %3781 = vmatprep.mubr.bf16.mxu0 %v688
    %3782 = vmatmul.mubr.bf16.gmra.mxu0 %v687
    %v3783 = vpop.f32.mrf.mxu0
    %v3784 = vadd.f32 %v3741, %v3783
    %v3785 = vpop.f32.mrf.mxu0
    %v3786 = vadd.f32 %v3743, %v3785
    %v3787 = vpop.f32.mrf.mxu0
    %v3788 = vadd.f32 %v3745, %v3787
    %v3789 = vpop.f32.mrf.mxu0
    %v3790 = vadd.f32 %v3747, %v3789
    %3791 = vdwg.mxu0
    %3792 = vmatprep.subr.bf16.mxu0 %v2896
    %3793 = vmatpush1.bf16.msra.mxu0 %v2895
    %3794 = vmatprep.subr.bf16.mxu0 %v2884
    %3795 = vmatpush1.bf16.msra.mxu0 %v2883
    %3796 = vmatprep.subr.bf16.mxu0 %v2872
    %3797 = vmatpush1.bf16.msra.mxu0 %v2871
    %3798 = vmatprep.subr.bf16.mxu0 %v2860
    %3799 = vmatpush1.bf16.msra.mxu0 %v2859
    %3800 = vmatprep.subr.bf16.mxu0 %v2848
    %3801 = vmatpush1.bf16.msra.mxu0 %v2847
    %3802 = vmatprep.subr.bf16.mxu0 %v2836
    %3803 = vmatpush1.bf16.msra.mxu0 %v2835
    %3804 = vmatprep.subr.bf16.mxu0 %v2824
    %3805 = vmatpush1.bf16.msra.mxu0 %v2823
    %3806 = vmatprep.subr.bf16.mxu0 %v2812
    %3807 = vmatpush1.bf16.msra.mxu0 %v2811
    %3808 = vmatprep.subr.bf16.mxu0 %v2992
    %3809 = vmatpush2.bf16.msra.mxu0 %v2991
    %3810 = vmatprep.subr.bf16.mxu0 %v2980
    %3811 = vmatpush2.bf16.msra.mxu0 %v2979
    %3812 = vmatprep.subr.bf16.mxu0 %v2968
    %3813 = vmatpush2.bf16.msra.mxu0 %v2967
    %3814 = vmatprep.subr.bf16.mxu0 %v2956
    %3815 = vmatpush2.bf16.msra.mxu0 %v2955
    %3816 = vmatprep.subr.bf16.mxu0 %v2944
    %3817 = vmatpush2.bf16.msra.mxu0 %v2943
    %3818 = vmatprep.subr.bf16.mxu0 %v2932
    %3819 = vmatpush2.bf16.msra.mxu0 %v2931
    %3820 = vmatprep.subr.bf16.mxu0 %v2920
    %3821 = vmatpush2.bf16.msra.mxu0 %v2919
    %3822 = vmatprep.subr.bf16.mxu0 %v2908
    %3823 = vmatpush2.bf16.msra.mxu0 %v2907
    %3824 = vmatprep.mubr.bf16.mxu0 %v690
    %3825 = vmatmul.mubr.bf16.gmra.mxu0 %v689
    %v3826 = vpop.f32.mrf.mxu0
    %v3827 = vadd.f32 %v3784, %v3826
    %v3828 = vpop.f32.mrf.mxu0
    %v3829 = vadd.f32 %v3786, %v3828
    %v3830 = vpop.f32.mrf.mxu0
    %v3831 = vadd.f32 %v3788, %v3830
    %v3832 = vpop.f32.mrf.mxu0
    %v3833 = vadd.f32 %v3790, %v3832
    %3834 = vdwg.mxu0
    %3835 = vmatprep.subr.bf16.mxu0 %v2514
    %3836 = vmatpush1.bf16.msra.mxu0 %v2513
    %3837 = vmatprep.subr.bf16.mxu0 %v2502
    %3838 = vmatpush1.bf16.msra.mxu0 %v2501
    %3839 = vmatprep.subr.bf16.mxu0 %v2490
    %3840 = vmatpush1.bf16.msra.mxu0 %v2489
    %3841 = vmatprep.subr.bf16.mxu0 %v2478
    %3842 = vmatpush1.bf16.msra.mxu0 %v2477
    %3843 = vmatprep.subr.bf16.mxu0 %v2466
    %3844 = vmatpush1.bf16.msra.mxu0 %v2465
    %3845 = vmatprep.subr.bf16.mxu0 %v2454
    %3846 = vmatpush1.bf16.msra.mxu0 %v2453
    %3847 = vmatprep.subr.bf16.mxu0 %v2442
    %3848 = vmatpush1.bf16.msra.mxu0 %v2441
    %3849 = vmatprep.subr.bf16.mxu0 %v2430
    %3850 = vmatpush1.bf16.msra.mxu0 %v2429
    %3851 = vmatprep.subr.bf16.mxu0 %v2610
    %3852 = vmatpush2.bf16.msra.mxu0 %v2609
    %3853 = vmatprep.subr.bf16.mxu0 %v2598
    %3854 = vmatpush2.bf16.msra.mxu0 %v2597
    %3855 = vmatprep.subr.bf16.mxu0 %v2586
    %3856 = vmatpush2.bf16.msra.mxu0 %v2585
    %3857 = vmatprep.subr.bf16.mxu0 %v2574
    %3858 = vmatpush2.bf16.msra.mxu0 %v2573
    %3859 = vmatprep.subr.bf16.mxu0 %v2562
    %3860 = vmatpush2.bf16.msra.mxu0 %v2561
    %3861 = vmatprep.subr.bf16.mxu0 %v2550
    %3862 = vmatpush2.bf16.msra.mxu0 %v2549
    %3863 = vmatprep.subr.bf16.mxu0 %v2538
    %3864 = vmatpush2.bf16.msra.mxu0 %v2537
    %3865 = vmatprep.subr.bf16.mxu0 %v2526
    %3866 = vmatpush2.bf16.msra.mxu0 %v2525
    %3867 = vmatprep.mubr.bf16.mxu0 %v686
    %3868 = vmatmul.mubr.bf16.gmra.mxu0 %v685
    %v3869 = vpop.f32.mrf.mxu0
    %v3870 = vadd.f32 0.0, %v3869
    %v3871 = vpop.f32.mrf.mxu0
    %v3872 = vadd.f32 0.0, %v3871
    %v3873 = vpop.f32.mrf.mxu0
    %v3874 = vadd.f32 0.0, %v3873
    %v3875 = vpop.f32.mrf.mxu0
    %v3876 = vadd.f32 0.0, %v3875
    %3877 = vdwg.mxu0
    %3878 = vmatprep.subr.bf16.mxu0 %v2706
    %3879 = vmatpush1.bf16.msra.mxu0 %v2705
    %3880 = vmatprep.subr.bf16.mxu0 %v2694
    %3881 = vmatpush1.bf16.msra.mxu0 %v2693
    %3882 = vmatprep.subr.bf16.mxu0 %v2682
    %3883 = vmatpush1.bf16.msra.mxu0 %v2681
    %3884 = vmatprep.subr.bf16.mxu0 %v2670
    %3885 = vmatpush1.bf16.msra.mxu0 %v2669
    %3886 = vmatprep.subr.bf16.mxu0 %v2658
    %3887 = vmatpush1.bf16.msra.mxu0 %v2657
    %3888 = vmatprep.subr.bf16.mxu0 %v2646
    %3889 = vmatpush1.bf16.msra.mxu0 %v2645
    %3890 = vmatprep.subr.bf16.mxu0 %v2634
    %3891 = vmatpush1.bf16.msra.mxu0 %v2633
    %3892 = vmatprep.subr.bf16.mxu0 %v2622
    %3893 = vmatpush1.bf16.msra.mxu0 %v2621
    %3894 = vmatprep.subr.bf16.mxu0 %v2802
    %3895 = vmatpush2.bf16.msra.mxu0 %v2801
    %3896 = vmatprep.subr.bf16.mxu0 %v2790
    %3897 = vmatpush2.bf16.msra.mxu0 %v2789
    %3898 = vmatprep.subr.bf16.mxu0 %v2778
    %3899 = vmatpush2.bf16.msra.mxu0 %v2777
    %3900 = vmatprep.subr.bf16.mxu0 %v2766
    %3901 = vmatpush2.bf16.msra.mxu0 %v2765
    %3902 = vmatprep.subr.bf16.mxu0 %v2754
    %3903 = vmatpush2.bf16.msra.mxu0 %v2753
    %3904 = vmatprep.subr.bf16.mxu0 %v2742
    %3905 = vmatpush2.bf16.msra.mxu0 %v2741
    %3906 = vmatprep.subr.bf16.mxu0 %v2730
    %3907 = vmatpush2.bf16.msra.mxu0 %v2729
    %3908 = vmatprep.subr.bf16.mxu0 %v2718
    %3909 = vmatpush2.bf16.msra.mxu0 %v2717
    %3910 = vmatprep.mubr.bf16.mxu0 %v688
    %3911 = vmatmul.mubr.bf16.gmra.mxu0 %v687
    %v3912 = vpop.f32.mrf.mxu0
    %v3913 = vadd.f32 %v3870, %v3912
    %v3914 = vpop.f32.mrf.mxu0
    %v3915 = vadd.f32 %v3872, %v3914
    %v3916 = vpop.f32.mrf.mxu0
    %v3917 = vadd.f32 %v3874, %v3916
    %v3918 = vpop.f32.mrf.mxu0
    %v3919 = vadd.f32 %v3876, %v3918
    %3920 = vdwg.mxu0
    %3921 = vmatprep.subr.bf16.mxu0 %v2898
    %3922 = vmatpush1.bf16.msra.mxu0 %v2897
    %3923 = vmatprep.subr.bf16.mxu0 %v2886
    %3924 = vmatpush1.bf16.msra.mxu0 %v2885
    %3925 = vmatprep.subr.bf16.mxu0 %v2874
    %3926 = vmatpush1.bf16.msra.mxu0 %v2873
    %3927 = vmatprep.subr.bf16.mxu0 %v2862
    %3928 = vmatpush1.bf16.msra.mxu0 %v2861
    %3929 = vmatprep.subr.bf16.mxu0 %v2850
    %3930 = vmatpush1.bf16.msra.mxu0 %v2849
    %3931 = vmatprep.subr.bf16.mxu0 %v2838
    %3932 = vmatpush1.bf16.msra.mxu0 %v2837
    %3933 = vmatprep.subr.bf16.mxu0 %v2826
    %3934 = vmatpush1.bf16.msra.mxu0 %v2825
    %3935 = vmatprep.subr.bf16.mxu0 %v2814
    %3936 = vmatpush1.bf16.msra.mxu0 %v2813
    %3937 = vmatprep.subr.bf16.mxu0 %v2994
    %3938 = vmatpush2.bf16.msra.mxu0 %v2993
    %3939 = vmatprep.subr.bf16.mxu0 %v2982
    %3940 = vmatpush2.bf16.msra.mxu0 %v2981
    %3941 = vmatprep.subr.bf16.mxu0 %v2970
    %3942 = vmatpush2.bf16.msra.mxu0 %v2969
    %3943 = vmatprep.subr.bf16.mxu0 %v2958
    %3944 = vmatpush2.bf16.msra.mxu0 %v2957
    %3945 = vmatprep.subr.bf16.mxu0 %v2946
    %3946 = vmatpush2.bf16.msra.mxu0 %v2945
    %3947 = vmatprep.subr.bf16.mxu0 %v2934
    %3948 = vmatpush2.bf16.msra.mxu0 %v2933
    %3949 = vmatprep.subr.bf16.mxu0 %v2922
    %3950 = vmatpush2.bf16.msra.mxu0 %v2921
    %3951 = vmatprep.subr.bf16.mxu0 %v2910
    %3952 = vmatpush2.bf16.msra.mxu0 %v2909
    %3953 = vmatprep.mubr.bf16.mxu0 %v690
    %3954 = vmatmul.mubr.bf16.gmra.mxu0 %v689
    %v3955 = vpop.f32.mrf.mxu0
    %v3956 = vadd.f32 %v3913, %v3955
    %v3957 = vpop.f32.mrf.mxu0
    %v3958 = vadd.f32 %v3915, %v3957
    %v3959 = vpop.f32.mrf.mxu0
    %v3960 = vadd.f32 %v3917, %v3959
    %v3961 = vpop.f32.mrf.mxu0
    %v3962 = vadd.f32 %v3919, %v3961
    %3963 = vdwg.mxu0
    %3964 = vmatprep.subr.bf16.mxu0 %v2516
    %3965 = vmatpush1.bf16.msra.mxu0 %v2515
    %3966 = vmatprep.subr.bf16.mxu0 %v2504
    %3967 = vmatpush1.bf16.msra.mxu0 %v2503
    %3968 = vmatprep.subr.bf16.mxu0 %v2492
    %3969 = vmatpush1.bf16.msra.mxu0 %v2491
    %3970 = vmatprep.subr.bf16.mxu0 %v2480
    %3971 = vmatpush1.bf16.msra.mxu0 %v2479
    %3972 = vmatprep.subr.bf16.mxu0 %v2468
    %3973 = vmatpush1.bf16.msra.mxu0 %v2467
    %3974 = vmatprep.subr.bf16.mxu0 %v2456
    %3975 = vmatpush1.bf16.msra.mxu0 %v2455
    %3976 = vmatprep.subr.bf16.mxu0 %v2444
    %3977 = vmatpush1.bf16.msra.mxu0 %v2443
    %3978 = vmatprep.subr.bf16.mxu0 %v2432
    %3979 = vmatpush1.bf16.msra.mxu0 %v2431
    %3980 = vmatprep.subr.bf16.mxu0 %v2612
    %3981 = vmatpush2.bf16.msra.mxu0 %v2611
    %3982 = vmatprep.subr.bf16.mxu0 %v2600
    %3983 = vmatpush2.bf16.msra.mxu0 %v2599
    %3984 = vmatprep.subr.bf16.mxu0 %v2588
    %3985 = vmatpush2.bf16.msra.mxu0 %v2587
    %3986 = vmatprep.subr.bf16.mxu0 %v2576
    %3987 = vmatpush2.bf16.msra.mxu0 %v2575
    %3988 = vmatprep.subr.bf16.mxu0 %v2564
    %3989 = vmatpush2.bf16.msra.mxu0 %v2563
    %3990 = vmatprep.subr.bf16.mxu0 %v2552
    %3991 = vmatpush2.bf16.msra.mxu0 %v2551
    %3992 = vmatprep.subr.bf16.mxu0 %v2540
    %3993 = vmatpush2.bf16.msra.mxu0 %v2539
    %3994 = vmatprep.subr.bf16.mxu0 %v2528
    %3995 = vmatpush2.bf16.msra.mxu0 %v2527
    %3996 = vmatprep.mubr.bf16.mxu0 %v686
    %3997 = vmatmul.mubr.bf16.gmra.mxu0 %v685
    %v3998 = vpop.f32.mrf.mxu0
    %v3999 = vadd.f32 0.0, %v3998
    %v4000 = vpop.f32.mrf.mxu0
    %v4001 = vadd.f32 0.0, %v4000
    %v4002 = vpop.f32.mrf.mxu0
    %v4003 = vadd.f32 0.0, %v4002
    %v4004 = vpop.f32.mrf.mxu0
    %v4005 = vadd.f32 0.0, %v4004
    %4006 = vdwg.mxu0
    %4007 = vmatprep.subr.bf16.mxu0 %v2708
    %4008 = vmatpush1.bf16.msra.mxu0 %v2707
    %4009 = vmatprep.subr.bf16.mxu0 %v2696
    %4010 = vmatpush1.bf16.msra.mxu0 %v2695
    %4011 = vmatprep.subr.bf16.mxu0 %v2684
    %4012 = vmatpush1.bf16.msra.mxu0 %v2683
    %4013 = vmatprep.subr.bf16.mxu0 %v2672
    %4014 = vmatpush1.bf16.msra.mxu0 %v2671
    %4015 = vmatprep.subr.bf16.mxu0 %v2660
    %4016 = vmatpush1.bf16.msra.mxu0 %v2659
    %4017 = vmatprep.subr.bf16.mxu0 %v2648
    %4018 = vmatpush1.bf16.msra.mxu0 %v2647
    %4019 = vmatprep.subr.bf16.mxu0 %v2636
    %4020 = vmatpush1.bf16.msra.mxu0 %v2635
    %4021 = vmatprep.subr.bf16.mxu0 %v2624
    %4022 = vmatpush1.bf16.msra.mxu0 %v2623
    %4023 = vmatprep.subr.bf16.mxu0 %v2804
    %4024 = vmatpush2.bf16.msra.mxu0 %v2803
    %4025 = vmatprep.subr.bf16.mxu0 %v2792
    %4026 = vmatpush2.bf16.msra.mxu0 %v2791
    %4027 = vmatprep.subr.bf16.mxu0 %v2780
    %4028 = vmatpush2.bf16.msra.mxu0 %v2779
    %4029 = vmatprep.subr.bf16.mxu0 %v2768
    %4030 = vmatpush2.bf16.msra.mxu0 %v2767
    %4031 = vmatprep.subr.bf16.mxu0 %v2756
    %4032 = vmatpush2.bf16.msra.mxu0 %v2755
    %4033 = vmatprep.subr.bf16.mxu0 %v2744
    %4034 = vmatpush2.bf16.msra.mxu0 %v2743
    %4035 = vmatprep.subr.bf16.mxu0 %v2732
    %4036 = vmatpush2.bf16.msra.mxu0 %v2731
    %4037 = vmatprep.subr.bf16.mxu0 %v2720
    %4038 = vmatpush2.bf16.msra.mxu0 %v2719
    %4039 = vmatprep.mubr.bf16.mxu0 %v688
    %4040 = vmatmul.mubr.bf16.gmra.mxu0 %v687
    %v4041 = vpop.f32.mrf.mxu0
    %v4042 = vadd.f32 %v3999, %v4041
    %v4043 = vpop.f32.mrf.mxu0
    %v4044 = vadd.f32 %v4001, %v4043
    %v4045 = vpop.f32.mrf.mxu0
    %v4046 = vadd.f32 %v4003, %v4045
    %v4047 = vpop.f32.mrf.mxu0
    %v4048 = vadd.f32 %v4005, %v4047
    %4049 = vdwg.mxu0
    %4050 = vmatprep.subr.bf16.mxu0 %v2900
    %4051 = vmatpush1.bf16.msra.mxu0 %v2899
    %4052 = vmatprep.subr.bf16.mxu0 %v2888
    %4053 = vmatpush1.bf16.msra.mxu0 %v2887
    %4054 = vmatprep.subr.bf16.mxu0 %v2876
    %4055 = vmatpush1.bf16.msra.mxu0 %v2875
    %4056 = vmatprep.subr.bf16.mxu0 %v2864
    %4057 = vmatpush1.bf16.msra.mxu0 %v2863
    %4058 = vmatprep.subr.bf16.mxu0 %v2852
    %4059 = vmatpush1.bf16.msra.mxu0 %v2851
    %4060 = vmatprep.subr.bf16.mxu0 %v2840
    %4061 = vmatpush1.bf16.msra.mxu0 %v2839
    %4062 = vmatprep.subr.bf16.mxu0 %v2828
    %4063 = vmatpush1.bf16.msra.mxu0 %v2827
    %4064 = vmatprep.subr.bf16.mxu0 %v2816
    %4065 = vmatpush1.bf16.msra.mxu0 %v2815
    %4066 = vmatprep.subr.bf16.mxu0 %v2996
    %4067 = vmatpush2.bf16.msra.mxu0 %v2995
    %4068 = vmatprep.subr.bf16.mxu0 %v2984
    %4069 = vmatpush2.bf16.msra.mxu0 %v2983
    %4070 = vmatprep.subr.bf16.mxu0 %v2972
    %4071 = vmatpush2.bf16.msra.mxu0 %v2971
    %4072 = vmatprep.subr.bf16.mxu0 %v2960
    %4073 = vmatpush2.bf16.msra.mxu0 %v2959
    %4074 = vmatprep.subr.bf16.mxu0 %v2948
    %4075 = vmatpush2.bf16.msra.mxu0 %v2947
    %4076 = vmatprep.subr.bf16.mxu0 %v2936
    %4077 = vmatpush2.bf16.msra.mxu0 %v2935
    %4078 = vmatprep.subr.bf16.mxu0 %v2924
    %4079 = vmatpush2.bf16.msra.mxu0 %v2923
    %4080 = vmatprep.subr.bf16.mxu0 %v2912
    %4081 = vmatpush2.bf16.msra.mxu0 %v2911
    %4082 = vmatprep.mubr.bf16.mxu0 %v690
    %4083 = vmatmul.mubr.bf16.gmra.mxu0 %v689
    %v4084 = vpop.f32.mrf.mxu0
    %v4085 = vadd.f32 %v4042, %v4084
    %v4086 = vpop.f32.mrf.mxu0
    %v4087 = vadd.f32 %v4044, %v4086
    %v4088 = vpop.f32.mrf.mxu0
    %v4089 = vadd.f32 %v4046, %v4088
    %v4090 = vpop.f32.mrf.mxu0
    %v4091 = vadd.f32 %v4048, %v4090
    %4092 = vdwg.mxu0
    %4093 = vmatprep.subr.bf16.mxu0 %v2518
    %4094 = vmatpush1.bf16.msra.mxu0 %v2517
    %4095 = vmatprep.subr.bf16.mxu0 %v2506
    %4096 = vmatpush1.bf16.msra.mxu0 %v2505
    %4097 = vmatprep.subr.bf16.mxu0 %v2494
    %4098 = vmatpush1.bf16.msra.mxu0 %v2493
    %4099 = vmatprep.subr.bf16.mxu0 %v2482
    %4100 = vmatpush1.bf16.msra.mxu0 %v2481
    %4101 = vmatprep.subr.bf16.mxu0 %v2470
    %4102 = vmatpush1.bf16.msra.mxu0 %v2469
    %4103 = vmatprep.subr.bf16.mxu0 %v2458
    %4104 = vmatpush1.bf16.msra.mxu0 %v2457
    %4105 = vmatprep.subr.bf16.mxu0 %v2446
    %4106 = vmatpush1.bf16.msra.mxu0 %v2445
    %4107 = vmatprep.subr.bf16.mxu0 %v2434
    %4108 = vmatpush1.bf16.msra.mxu0 %v2433
    %4109 = vmatprep.subr.bf16.mxu0 %v2614
    %4110 = vmatpush2.bf16.msra.mxu0 %v2613
    %4111 = vmatprep.subr.bf16.mxu0 %v2602
    %4112 = vmatpush2.bf16.msra.mxu0 %v2601
    %4113 = vmatprep.subr.bf16.mxu0 %v2590
    %4114 = vmatpush2.bf16.msra.mxu0 %v2589
    %4115 = vmatprep.subr.bf16.mxu0 %v2578
    %4116 = vmatpush2.bf16.msra.mxu0 %v2577
    %4117 = vmatprep.subr.bf16.mxu0 %v2566
    %4118 = vmatpush2.bf16.msra.mxu0 %v2565
    %4119 = vmatprep.subr.bf16.mxu0 %v2554
    %4120 = vmatpush2.bf16.msra.mxu0 %v2553
    %4121 = vmatprep.subr.bf16.mxu0 %v2542
    %4122 = vmatpush2.bf16.msra.mxu0 %v2541
    %4123 = vmatprep.subr.bf16.mxu0 %v2530
    %4124 = vmatpush2.bf16.msra.mxu0 %v2529
    %4125 = vmatprep.mubr.bf16.mxu0 %v686
    %4126 = vmatmul.mubr.bf16.gmra.mxu0 %v685
    %v4127 = vpop.f32.mrf.mxu0
    %v4128 = vadd.f32 0.0, %v4127
    %v4129 = vpop.f32.mrf.mxu0
    %v4130 = vadd.f32 0.0, %v4129
    %v4131 = vpop.f32.mrf.mxu0
    %v4132 = vadd.f32 0.0, %v4131
    %v4133 = vpop.f32.mrf.mxu0
    %v4134 = vadd.f32 0.0, %v4133
    %4135 = vdwg.mxu0
    %4136 = vmatprep.subr.bf16.mxu0 %v2710
    %4137 = vmatpush1.bf16.msra.mxu0 %v2709
    %4138 = vmatprep.subr.bf16.mxu0 %v2698
    %4139 = vmatpush1.bf16.msra.mxu0 %v2697
    %4140 = vmatprep.subr.bf16.mxu0 %v2686
    %4141 = vmatpush1.bf16.msra.mxu0 %v2685
    %4142 = vmatprep.subr.bf16.mxu0 %v2674
    %4143 = vmatpush1.bf16.msra.mxu0 %v2673
    %4144 = vmatprep.subr.bf16.mxu0 %v2662
    %4145 = vmatpush1.bf16.msra.mxu0 %v2661
    %4146 = vmatprep.subr.bf16.mxu0 %v2650
    %4147 = vmatpush1.bf16.msra.mxu0 %v2649
    %4148 = vmatprep.subr.bf16.mxu0 %v2638
    %4149 = vmatpush1.bf16.msra.mxu0 %v2637
    %4150 = vmatprep.subr.bf16.mxu0 %v2626
    %4151 = vmatpush1.bf16.msra.mxu0 %v2625
    %4152 = vmatprep.subr.bf16.mxu0 %v2806
    %4153 = vmatpush2.bf16.msra.mxu0 %v2805
    %4154 = vmatprep.subr.bf16.mxu0 %v2794
    %4155 = vmatpush2.bf16.msra.mxu0 %v2793
    %4156 = vmatprep.subr.bf16.mxu0 %v2782
    %4157 = vmatpush2.bf16.msra.mxu0 %v2781
    %4158 = vmatprep.subr.bf16.mxu0 %v2770
    %4159 = vmatpush2.bf16.msra.mxu0 %v2769
    %4160 = vmatprep.subr.bf16.mxu0 %v2758
    %4161 = vmatpush2.bf16.msra.mxu0 %v2757
    %4162 = vmatprep.subr.bf16.mxu0 %v2746
    %4163 = vmatpush2.bf16.msra.mxu0 %v2745
    %4164 = vmatprep.subr.bf16.mxu0 %v2734
    %4165 = vmatpush2.bf16.msra.mxu0 %v2733
    %4166 = vmatprep.subr.bf16.mxu0 %v2722
    %4167 = vmatpush2.bf16.msra.mxu0 %v2721
    %4168 = vmatprep.mubr.bf16.mxu0 %v688
    %4169 = vmatmul.mubr.bf16.gmra.mxu0 %v687
    %v4170 = vpop.f32.mrf.mxu0
    %v4171 = vadd.f32 %v4128, %v4170
    %v4172 = vpop.f32.mrf.mxu0
    %v4173 = vadd.f32 %v4130, %v4172
    %v4174 = vpop.f32.mrf.mxu0
    %v4175 = vadd.f32 %v4132, %v4174
    %v4176 = vpop.f32.mrf.mxu0
    %v4177 = vadd.f32 %v4134, %v4176
    %4178 = vdwg.mxu0
    %4179 = vmatprep.subr.bf16.mxu0 %v2902
    %4180 = vmatpush1.bf16.msra.mxu0 %v2901
    %4181 = vmatprep.subr.bf16.mxu0 %v2890
    %4182 = vmatpush1.bf16.msra.mxu0 %v2889
    %4183 = vmatprep.subr.bf16.mxu0 %v2878
    %4184 = vmatpush1.bf16.msra.mxu0 %v2877
    %4185 = vmatprep.subr.bf16.mxu0 %v2866
    %4186 = vmatpush1.bf16.msra.mxu0 %v2865
    %4187 = vmatprep.subr.bf16.mxu0 %v2854
    %4188 = vmatpush1.bf16.msra.mxu0 %v2853
    %4189 = vmatprep.subr.bf16.mxu0 %v2842
    %4190 = vmatpush1.bf16.msra.mxu0 %v2841
    %4191 = vmatprep.subr.bf16.mxu0 %v2830
    %4192 = vmatpush1.bf16.msra.mxu0 %v2829
    %4193 = vmatprep.subr.bf16.mxu0 %v2818
    %4194 = vmatpush1.bf16.msra.mxu0 %v2817
    %4195 = vmatprep.subr.bf16.mxu0 %v2998
    %4196 = vmatpush2.bf16.msra.mxu0 %v2997
    %4197 = vmatprep.subr.bf16.mxu0 %v2986
    %4198 = vmatpush2.bf16.msra.mxu0 %v2985
    %4199 = vmatprep.subr.bf16.mxu0 %v2974
    %4200 = vmatpush2.bf16.msra.mxu0 %v2973
    %4201 = vmatprep.subr.bf16.mxu0 %v2962
    %4202 = vmatpush2.bf16.msra.mxu0 %v2961
    %4203 = vmatprep.subr.bf16.mxu0 %v2950
    %4204 = vmatpush2.bf16.msra.mxu0 %v2949
    %4205 = vmatprep.subr.bf16.mxu0 %v2938
    %4206 = vmatpush2.bf16.msra.mxu0 %v2937
    %4207 = vmatprep.subr.bf16.mxu0 %v2926
    %4208 = vmatpush2.bf16.msra.mxu0 %v2925
    %4209 = vmatprep.subr.bf16.mxu0 %v2914
    %4210 = vmatpush2.bf16.msra.mxu0 %v2913
    %4211 = vmatprep.mubr.bf16.mxu0 %v690
    %4212 = vmatmul.mubr.bf16.gmra.mxu0 %v689
    %v4213 = vpop.f32.mrf.mxu0
    %v4214 = vadd.f32 %v4171, %v4213
    %v4215 = vpop.f32.mrf.mxu0
    %v4216 = vadd.f32 %v4173, %v4215
    %v4217 = vpop.f32.mrf.mxu0
    %v4218 = vadd.f32 %v4175, %v4217
    %v4219 = vpop.f32.mrf.mxu0
    %v4220 = vadd.f32 %v4177, %v4219
    %4221 = vdwg.mxu0
    %4222 = vmatprep.subr.bf16.mxu0 %v2520
    %4223 = vmatpush1.bf16.msra.mxu0 %v2519
    %4224 = vmatprep.subr.bf16.mxu0 %v2508
    %4225 = vmatpush1.bf16.msra.mxu0 %v2507
    %4226 = vmatprep.subr.bf16.mxu0 %v2496
    %4227 = vmatpush1.bf16.msra.mxu0 %v2495
    %4228 = vmatprep.subr.bf16.mxu0 %v2484
    %4229 = vmatpush1.bf16.msra.mxu0 %v2483
    %4230 = vmatprep.subr.bf16.mxu0 %v2472
    %4231 = vmatpush1.bf16.msra.mxu0 %v2471
    %4232 = vmatprep.subr.bf16.mxu0 %v2460
    %4233 = vmatpush1.bf16.msra.mxu0 %v2459
    %4234 = vmatprep.subr.bf16.mxu0 %v2448
    %4235 = vmatpush1.bf16.msra.mxu0 %v2447
    %4236 = vmatprep.subr.bf16.mxu0 %v2436
    %4237 = vmatpush1.bf16.msra.mxu0 %v2435
    %4238 = vmatprep.subr.bf16.mxu0 %v2616
    %4239 = vmatpush2.bf16.msra.mxu0 %v2615
    %4240 = vmatprep.subr.bf16.mxu0 %v2604
    %4241 = vmatpush2.bf16.msra.mxu0 %v2603
    %4242 = vmatprep.subr.bf16.mxu0 %v2592
    %4243 = vmatpush2.bf16.msra.mxu0 %v2591
    %4244 = vmatprep.subr.bf16.mxu0 %v2580
    %4245 = vmatpush2.bf16.msra.mxu0 %v2579
    %4246 = vmatprep.subr.bf16.mxu0 %v2568
    %4247 = vmatpush2.bf16.msra.mxu0 %v2567
    %4248 = vmatprep.subr.bf16.mxu0 %v2556
    %4249 = vmatpush2.bf16.msra.mxu0 %v2555
    %4250 = vmatprep.subr.bf16.mxu0 %v2544
    %4251 = vmatpush2.bf16.msra.mxu0 %v2543
    %4252 = vmatprep.subr.bf16.mxu0 %v2532
    %4253 = vmatpush2.bf16.msra.mxu0 %v2531
    %4254 = vmatprep.mubr.bf16.mxu0 %v686
    %4255 = vmatmul.mubr.bf16.gmra.mxu0 %v685
    %v4256 = vpop.f32.mrf.mxu0
    %v4257 = vadd.f32 0.0, %v4256
    %v4258 = vpop.f32.mrf.mxu0
    %v4259 = vadd.f32 0.0, %v4258
    %v4260 = vpop.f32.mrf.mxu0
    %v4261 = vadd.f32 0.0, %v4260
    %v4262 = vpop.f32.mrf.mxu0
    %v4263 = vadd.f32 0.0, %v4262
    %4264 = vdwg.mxu0
    %4265 = vmatprep.subr.bf16.mxu0 %v2712
    %4266 = vmatpush1.bf16.msra.mxu0 %v2711
    %4267 = vmatprep.subr.bf16.mxu0 %v2700
    %4268 = vmatpush1.bf16.msra.mxu0 %v2699
    %4269 = vmatprep.subr.bf16.mxu0 %v2688
    %4270 = vmatpush1.bf16.msra.mxu0 %v2687
    %4271 = vmatprep.subr.bf16.mxu0 %v2676
    %4272 = vmatpush1.bf16.msra.mxu0 %v2675
    %4273 = vmatprep.subr.bf16.mxu0 %v2664
    %4274 = vmatpush1.bf16.msra.mxu0 %v2663
    %4275 = vmatprep.subr.bf16.mxu0 %v2652
    %4276 = vmatpush1.bf16.msra.mxu0 %v2651
    %4277 = vmatprep.subr.bf16.mxu0 %v2640
    %4278 = vmatpush1.bf16.msra.mxu0 %v2639
    %4279 = vmatprep.subr.bf16.mxu0 %v2628
    %4280 = vmatpush1.bf16.msra.mxu0 %v2627
    %4281 = vmatprep.subr.bf16.mxu0 %v2808
    %4282 = vmatpush2.bf16.msra.mxu0 %v2807
    %4283 = vmatprep.subr.bf16.mxu0 %v2796
    %4284 = vmatpush2.bf16.msra.mxu0 %v2795
    %4285 = vmatprep.subr.bf16.mxu0 %v2784
    %4286 = vmatpush2.bf16.msra.mxu0 %v2783
    %4287 = vmatprep.subr.bf16.mxu0 %v2772
    %4288 = vmatpush2.bf16.msra.mxu0 %v2771
    %4289 = vmatprep.subr.bf16.mxu0 %v2760
    %4290 = vmatpush2.bf16.msra.mxu0 %v2759
    %4291 = vmatprep.subr.bf16.mxu0 %v2748
    %4292 = vmatpush2.bf16.msra.mxu0 %v2747
    %4293 = vmatprep.subr.bf16.mxu0 %v2736
    %4294 = vmatpush2.bf16.msra.mxu0 %v2735
    %4295 = vmatprep.subr.bf16.mxu0 %v2724
    %4296 = vmatpush2.bf16.msra.mxu0 %v2723
    %4297 = vmatprep.mubr.bf16.mxu0 %v688
    %4298 = vmatmul.mubr.bf16.gmra.mxu0 %v687
    %v4299 = vpop.f32.mrf.mxu0
    %v4300 = vadd.f32 %v4257, %v4299
    %v4301 = vpop.f32.mrf.mxu0
    %v4302 = vadd.f32 %v4259, %v4301
    %v4303 = vpop.f32.mrf.mxu0
    %v4304 = vadd.f32 %v4261, %v4303
    %v4305 = vpop.f32.mrf.mxu0
    %v4306 = vadd.f32 %v4263, %v4305
    %4307 = vdwg.mxu0
    %4308 = vmatprep.subr.bf16.mxu0 %v2904
    %4309 = vmatpush1.bf16.msra.mxu0 %v2903
    %4310 = vmatprep.subr.bf16.mxu0 %v2892
    %4311 = vmatpush1.bf16.msra.mxu0 %v2891
    %4312 = vmatprep.subr.bf16.mxu0 %v2880
    %4313 = vmatpush1.bf16.msra.mxu0 %v2879
    %4314 = vmatprep.subr.bf16.mxu0 %v2868
    %4315 = vmatpush1.bf16.msra.mxu0 %v2867
    %4316 = vmatprep.subr.bf16.mxu0 %v2856
    %4317 = vmatpush1.bf16.msra.mxu0 %v2855
    %4318 = vmatprep.subr.bf16.mxu0 %v2844
    %4319 = vmatpush1.bf16.msra.mxu0 %v2843
    %4320 = vmatprep.subr.bf16.mxu0 %v2832
    %4321 = vmatpush1.bf16.msra.mxu0 %v2831
    %4322 = vmatprep.subr.bf16.mxu0 %v2820
    %4323 = vmatpush1.bf16.msra.mxu0 %v2819
    %4324 = vmatprep.subr.bf16.mxu0 %v3000
    %4325 = vmatpush2.bf16.msra.mxu0 %v2999
    %4326 = vmatprep.subr.bf16.mxu0 %v2988
    %4327 = vmatpush2.bf16.msra.mxu0 %v2987
    %4328 = vmatprep.subr.bf16.mxu0 %v2976
    %4329 = vmatpush2.bf16.msra.mxu0 %v2975
    %4330 = vmatprep.subr.bf16.mxu0 %v2964
    %4331 = vmatpush2.bf16.msra.mxu0 %v2963
    %4332 = vmatprep.subr.bf16.mxu0 %v2952
    %4333 = vmatpush2.bf16.msra.mxu0 %v2951
    %4334 = vmatprep.subr.bf16.mxu0 %v2940
    %4335 = vmatpush2.bf16.msra.mxu0 %v2939
    %4336 = vmatprep.subr.bf16.mxu0 %v2928
    %4337 = vmatpush2.bf16.msra.mxu0 %v2927
    %4338 = vmatprep.subr.bf16.mxu0 %v2916
    %4339 = vmatpush2.bf16.msra.mxu0 %v2915
    %4340 = vmatprep.mubr.bf16.mxu0 %v690
    %4341 = vmatmul.mubr.bf16.gmra.mxu0 %v689
    %v4342 = vpop.f32.mrf.mxu0
    %v4343 = vadd.f32 %v4300, %v4342
    %v4344 = vpop.f32.mrf.mxu0
    %v4345 = vadd.f32 %v4302, %v4344
    %v4346 = vpop.f32.mrf.mxu0
    %v4347 = vadd.f32 %v4304, %v4346
    %v4348 = vpop.f32.mrf.mxu0
    %v4349 = vadd.f32 %v4306, %v4348
    %4350 = vdwg.mxu0
    %v4351 = vld [vmem:[#allocation9] sm:$0x3f]
    %v4353 = vlaneseq
    %v4354 = vshrl.u32 %v4353, 7
    %v4355 = vsub.s32 0, %v4354
    %v4356 = vrot.slane %v4351, %v4355
    %v4357 = vlaneseq
    %v4358 = vshrl.u32 %v4357, 7
    %v4359 = vsub.s32 1, %v4358
    %v4360 = vrot.slane %v4351, %v4359
    %v4361 = vlaneseq
    %v4362 = vshrl.u32 %v4361, 7
    %v4363 = vsub.s32 2, %v4362
    %v4364 = vrot.slane %v4351, %v4363
    %v4365 = vlaneseq
    %v4366 = vshrl.u32 %v4365, 7
    %v4367 = vsub.s32 3, %v4366
    %v4368 = vrot.slane %v4351, %v4367
    %v4369 = vlaneseq
    %v4370 = vshrl.u32 %v4369, 7
    %v4371 = vsub.s32 4, %v4370
    %v4372 = vrot.slane %v4351, %v4371
    %v4373 = vlaneseq
    %v4374 = vshrl.u32 %v4373, 7
    %v4375 = vsub.s32 5, %v4374
    %v4376 = vrot.slane %v4351, %v4375
    %v4383 = vadd.f32 %v3698, %v4356
    %v4384 = vadd.f32 %v3700, %v4360
    %v4385 = vadd.f32 %v3827, %v4364
    %v4386 = vadd.f32 %v3829, %v4368
    %v4387 = vadd.f32 %v3956, %v4372
    %v4388 = vadd.f32 %v3958, %v4376
    %v4389 = vadd.f32 %v3702, %v4356
    %v4390 = vadd.f32 %v3704, %v4360
    %v4391 = vadd.f32 %v3831, %v4364
    %v4392 = vadd.f32 %v3833, %v4368
    %v4393 = vadd.f32 %v3960, %v4372
    %v4394 = vadd.f32 %v3962, %v4376
    %4395 = vst [vmem:[#allocation2] sm:$0xff] %v4383
    %4396 = vst [vmem:[#allocation2 + $0x8] sm:$0xff] %v4384
    %4397 = vst [vmem:[#allocation2 + $0x10] sm:$0xff] %v4385
    %4398 = vst [vmem:[#allocation2 + $0x18] sm:$0xff] %v4386
    %4399 = vst [vmem:[#allocation2 + $0x20] sm:$0xff] %v4387
    %4400 = vst [vmem:[#allocation2 + $0x28] sm:$0xff] %v4388
    %4401 = vst [vmem:[#allocation2 + $0x30] sm:$0xff] %v4389
    %4402 = vst [vmem:[#allocation2 + $0x38] sm:$0xff] %v4390
    %4403 = vst [vmem:[#allocation2 + $0x40] sm:$0xff] %v4391
    %4404 = vst [vmem:[#allocation2 + $0x48] sm:$0xff] %v4392
    %4405 = vst [vmem:[#allocation2 + $0x50] sm:$0xff] %v4393
    %4406 = vst [vmem:[#allocation2 + $0x58] sm:$0xff] %v4394
    %4407 = vst [vmem:[#allocation3] sm:$0xff] %v4085
    %4408 = vst [vmem:[#allocation3 + $0x8] sm:$0xff] %v4087
    %4409 = vst [vmem:[#allocation3 + $0x10] sm:$0xff] %v4214
    %4410 = vst [vmem:[#allocation3 + $0x18] sm:$0xff] %v4216
    %4411 = vst [vmem:[#allocation3 + $0x20] sm:$0xff] %v4343
    %4412 = vst [vmem:[#allocation3 + $0x28] sm:$0xff] %v4345
    %4413 = vst [vmem:[#allocation3 + $0x30] sm:$0xff] %v4089
    %4414 = vst [vmem:[#allocation3 + $0x38] sm:$0xff] %v4091
    %4415 = vst [vmem:[#allocation3 + $0x40] sm:$0xff] %v4218
    %4416 = vst [vmem:[#allocation3 + $0x48] sm:$0xff] %v4220
    %4417 = vst [vmem:[#allocation3 + $0x50] sm:$0xff] %v4347
    %4418 = vst [vmem:[#allocation3 + $0x58] sm:$0xff] %v4349
    %v4419 = vld [vmem:[#allocation10] sm:$0xff]
    %v4420 = vld [vmem:[#allocation10 + $0x8] sm:$0xff]
    %v4421 = vld [vmem:[#allocation10 + $0x10] sm:$0xff]
    %v4422 = vld [vmem:[#allocation10 + $0x18] sm:$0xff]
    %v4423 = vld [vmem:[#allocation10 + $0x20] sm:$0xff]
    %v4424 = vld [vmem:[#allocation10 + $0x28] sm:$0xff]
    %v4425 = vld [vmem:[#allocation10 + $0x30] sm:$0xff]
    %v4426 = vld [vmem:[#allocation10 + $0x38] sm:$0xff]
    %v4427 = vld [vmem:[#allocation10 + $0x40] sm:$0xff]
    %v4428 = vld [vmem:[#allocation10 + $0x48] sm:$0xff]
    %v4429 = vld [vmem:[#allocation10 + $0x50] sm:$0xff]
    %v4430 = vld [vmem:[#allocation10 + $0x58] sm:$0xff]
    %v4431 = vld [vmem:[#allocation10 + $0x60] sm:$0xff]
    %v4432 = vld [vmem:[#allocation10 + $0x68] sm:$0xff]
    %v4433 = vld [vmem:[#allocation10 + $0x70] sm:$0xff]
    %v4434 = vld [vmem:[#allocation10 + $0x78] sm:$0xff]
    %v4435 = vld [vmem:[#allocation10 + $0x80] sm:$0xff]
    %v4436 = vld [vmem:[#allocation10 + $0x88] sm:$0xff]
    %v4437 = vld [vmem:[#allocation10 + $0x90] sm:$0xff]
    %v4438 = vld [vmem:[#allocation10 + $0x98] sm:$0xff]
    %v4439 = vld [vmem:[#allocation10 + $0xa0] sm:$0xff]
    %v4440 = vld [vmem:[#allocation10 + $0xa8] sm:$0xff]
    %v4441 = vld [vmem:[#allocation10 + $0xb0] sm:$0xff]
    %v4442 = vld [vmem:[#allocation10 + $0xb8] sm:$0xff]
    %v4443 = vld [vmem:[#allocation10 + $0xc0] sm:$0xff]
    %v4444 = vld [vmem:[#allocation10 + $0xc8] sm:$0xff]
    %v4445 = vld [vmem:[#allocation10 + $0xd0] sm:$0xff]
    %v4446 = vld [vmem:[#allocation10 + $0xd8] sm:$0xff]
    %v4447 = vld [vmem:[#allocation10 + $0xe0] sm:$0xff]
    %v4448 = vld [vmem:[#allocation10 + $0xe8] sm:$0xff]
    %v4449 = vld [vmem:[#allocation10 + $0xf0] sm:$0xff]
    %v4450 = vld [vmem:[#allocation10 + $0xf8] sm:$0xff]
    %v4451 = vld [vmem:[#allocation10 + $0x100] sm:$0xff]
    %v4452 = vld [vmem:[#allocation10 + $0x108] sm:$0xff]
    %v4453 = vld [vmem:[#allocation10 + $0x110] sm:$0xff]
    %v4454 = vld [vmem:[#allocation10 + $0x118] sm:$0xff]
    %v4455 = vld [vmem:[#allocation10 + $0x120] sm:$0xff]
    %v4456 = vld [vmem:[#allocation10 + $0x128] sm:$0xff]
    %v4457 = vld [vmem:[#allocation10 + $0x130] sm:$0xff]
    %v4458 = vld [vmem:[#allocation10 + $0x138] sm:$0xff]
    %v4459 = vld [vmem:[#allocation10 + $0x140] sm:$0xff]
    %v4460 = vld [vmem:[#allocation10 + $0x148] sm:$0xff]
    %v4461 = vld [vmem:[#allocation10 + $0x150] sm:$0xff]
    %v4462 = vld [vmem:[#allocation10 + $0x158] sm:$0xff]
    %v4463 = vld [vmem:[#allocation10 + $0x160] sm:$0xff]
    %v4464 = vld [vmem:[#allocation10 + $0x168] sm:$0xff]
    %v4465 = vld [vmem:[#allocation10 + $0x170] sm:$0xff]
    %v4466 = vld [vmem:[#allocation10 + $0x178] sm:$0xff]
    %v4467 = vld [vmem:[#allocation10 + $0x180] sm:$0xff]
    %v4468 = vld [vmem:[#allocation10 + $0x188] sm:$0xff]
    %v4469 = vld [vmem:[#allocation10 + $0x190] sm:$0xff]
    %v4470 = vld [vmem:[#allocation10 + $0x198] sm:$0xff]
    %v4471 = vld [vmem:[#allocation10 + $0x1a0] sm:$0xff]
    %v4472 = vld [vmem:[#allocation10 + $0x1a8] sm:$0xff]
    %v4473 = vld [vmem:[#allocation10 + $0x1b0] sm:$0xff]
    %v4474 = vld [vmem:[#allocation10 + $0x1b8] sm:$0xff]
    %v4475 = vld [vmem:[#allocation10 + $0x1c0] sm:$0xff]
    %v4476 = vld [vmem:[#allocation10 + $0x1c8] sm:$0xff]
    %v4477 = vld [vmem:[#allocation10 + $0x1d0] sm:$0xff]
    %v4478 = vld [vmem:[#allocation10 + $0x1d8] sm:$0xff]
    %v4479 = vld [vmem:[#allocation10 + $0x1e0] sm:$0xff]
    %v4480 = vld [vmem:[#allocation10 + $0x1e8] sm:$0xff]
    %v4481 = vld [vmem:[#allocation10 + $0x1f0] sm:$0xff]
    %v4482 = vld [vmem:[#allocation10 + $0x1f8] sm:$0xff]
    %v4483 = vld [vmem:[#allocation10 + $0x200] sm:$0xff]
    %v4484 = vld [vmem:[#allocation10 + $0x208] sm:$0xff]
    %v4485 = vld [vmem:[#allocation10 + $0x210] sm:$0xff]
    %v4486 = vld [vmem:[#allocation10 + $0x218] sm:$0xff]
    %v4487 = vld [vmem:[#allocation10 + $0x220] sm:$0xff]
    %v4488 = vld [vmem:[#allocation10 + $0x228] sm:$0xff]
    %v4489 = vld [vmem:[#allocation10 + $0x230] sm:$0xff]
    %v4490 = vld [vmem:[#allocation10 + $0x238] sm:$0xff]
    %v4491 = vld [vmem:[#allocation10 + $0x240] sm:$0xff]
    %v4492 = vld [vmem:[#allocation10 + $0x248] sm:$0xff]
    %v4493 = vld [vmem:[#allocation10 + $0x250] sm:$0xff]
    %v4494 = vld [vmem:[#allocation10 + $0x258] sm:$0xff]
    %v4495 = vld [vmem:[#allocation10 + $0x260] sm:$0xff]
    %v4496 = vld [vmem:[#allocation10 + $0x268] sm:$0xff]
    %v4497 = vld [vmem:[#allocation10 + $0x270] sm:$0xff]
    %v4498 = vld [vmem:[#allocation10 + $0x278] sm:$0xff]
    %v4499 = vld [vmem:[#allocation10 + $0x280] sm:$0xff]
    %v4500 = vld [vmem:[#allocation10 + $0x288] sm:$0xff]
    %v4501 = vld [vmem:[#allocation10 + $0x290] sm:$0xff]
    %v4502 = vld [vmem:[#allocation10 + $0x298] sm:$0xff]
    %v4503 = vld [vmem:[#allocation10 + $0x2a0] sm:$0xff]
    %v4504 = vld [vmem:[#allocation10 + $0x2a8] sm:$0xff]
    %v4505 = vld [vmem:[#allocation10 + $0x2b0] sm:$0xff]
    %v4506 = vld [vmem:[#allocation10 + $0x2b8] sm:$0xff]
    %v4507 = vld [vmem:[#allocation10 + $0x2c0] sm:$0xff]
    %v4508 = vld [vmem:[#allocation10 + $0x2c8] sm:$0xff]
    %v4509 = vld [vmem:[#allocation10 + $0x2d0] sm:$0xff]
    %v4510 = vld [vmem:[#allocation10 + $0x2d8] sm:$0xff]
    %v4511 = vld [vmem:[#allocation10 + $0x2e0] sm:$0xff]
    %v4512 = vld [vmem:[#allocation10 + $0x2e8] sm:$0xff]
    %v4513 = vld [vmem:[#allocation10 + $0x2f0] sm:$0xff]
    %v4514 = vld [vmem:[#allocation10 + $0x2f8] sm:$0xff]
    %v4515 = vld [vmem:[#allocation12] sm:$0x1]
    %v4516 = vld [vmem:[#allocation3] sm:$0xff]
    %v4517 = vld [vmem:[#allocation3 + $0x8] sm:$0xff]
    %v4518 = vld [vmem:[#allocation3 + $0x10] sm:$0xff]
    %v4519 = vld [vmem:[#allocation3 + $0x18] sm:$0xff]
    %v4520 = vld [vmem:[#allocation3 + $0x20] sm:$0xff]
    %v4521 = vld [vmem:[#allocation3 + $0x28] sm:$0xff]
    %v4522 = vld [vmem:[#allocation2] ss:$8 sm:$0xf]
    %v4523 = vld [vmem:[#allocation2] ss:$8 sm:$0x30]
    %v4524 = vor.u32 %v4522, %v4523
    %v4526 = vlaneseq
    %v4527 = vshrl.u32 %v4526, 7
    %v4528 = vsub.s32 0, %v4527
    %v4529 = vrot.slane %v4524, %v4528
    %v4530 = vlaneseq
    %v4531 = vshrl.u32 %v4530, 7
    %v4532 = vsub.s32 1, %v4531
    %v4533 = vrot.slane %v4524, %v4532
    %v4534 = vlaneseq
    %v4535 = vshrl.u32 %v4534, 7
    %v4536 = vsub.s32 2, %v4535
    %v4537 = vrot.slane %v4524, %v4536
    %v4538 = vlaneseq
    %v4539 = vshrl.u32 %v4538, 7
    %v4540 = vsub.s32 3, %v4539
    %v4541 = vrot.slane %v4524, %v4540
    %v4542 = vlaneseq
    %v4543 = vshrl.u32 %v4542, 7
    %v4544 = vsub.s32 4, %v4543
    %v4545 = vrot.slane %v4524, %v4544
    %v4546 = vlaneseq
    %v4547 = vshrl.u32 %v4546, 7
    %v4548 = vsub.s32 5, %v4547
    %v4549 = vrot.slane %v4524, %v4548
    %v4556 = vadd.f32 %v4529, %v4516
    %v4557 = vadd.f32 %v4533, %v4517
    %v4558 = vadd.f32 %v4537, %v4518
    %v4559 = vadd.f32 %v4541, %v4519
    %v4560 = vadd.f32 %v4545, %v4520
    %v4561 = vadd.f32 %v4549, %v4521
    %vm4562 = vcmp.ge.f32.partialorder %v4556, 0.0
    %vm4563 = vcmp.ge.f32.partialorder %v4557, 0.0
    %vm4564 = vcmp.ge.f32.partialorder %v4558, 0.0
    %vm4565 = vcmp.ge.f32.partialorder %v4559, 0.0
    %vm4566 = vcmp.ge.f32.partialorder %v4560, 0.0
    %vm4567 = vcmp.ge.f32.partialorder %v4561, 0.0
    %v4568 = vmul.f32 %v4556, 0.01
    %v4569 = vmul.f32 %v4557, 0.01
    %v4570 = vmul.f32 %v4558, 0.01
    %v4571 = vmul.f32 %v4559, 0.01
    %v4572 = vmul.f32 %v4560, 0.01
    %v4573 = vmul.f32 %v4561, 0.01
    %v4574 = vsel %vm4562, %v4556, %v4568
    %v4575 = vsel %vm4563, %v4557, %v4569
    %v4576 = vsel %vm4564, %v4558, %v4570
    %v4577 = vsel %vm4565, %v4559, %v4571
    %v4578 = vsel %vm4566, %v4560, %v4572
    %v4579 = vsel %vm4567, %v4561, %v4573
    %v4581 = vlaneseq
    %v4582 = vshrl.u32 %v4581, 7
    %v4583 = vsub.s32 0, %v4582
    %v4584 = vrot.slane %v4515, %v4583
    %4586 = vmatprep.subr.mxu0 0.0
    %4587 = vmatpush1.msra.mxu0 %v4434
    %4588 = vmatprep.subr.mxu0 0.0
    %4589 = vmatpush1.msra.mxu0 %v4433
    %4590 = vmatprep.subr.mxu0 0.0
    %4591 = vmatpush1.msra.mxu0 %v4432
    %4592 = vmatprep.subr.mxu0 0.0
    %4593 = vmatpush1.msra.mxu0 %v4431
    %4594 = vmatprep.subr.mxu0 0.0
    %4595 = vmatpush1.msra.mxu0 %v4430
    %4596 = vmatprep.subr.mxu0 0.0
    %4597 = vmatpush1.msra.mxu0 %v4429
    %4598 = vmatprep.subr.mxu0 0.0
    %4599 = vmatpush1.msra.mxu0 %v4428
    %4600 = vmatprep.subr.mxu0 0.0
    %4601 = vmatpush1.msra.mxu0 %v4427
    %4602 = vmatprep.subr.mxu0 0.0
    %4603 = vmatpush1.msra.mxu0 %v4426
    %4604 = vmatprep.subr.mxu0 0.0
    %4605 = vmatpush1.msra.mxu0 %v4425
    %4606 = vmatprep.subr.mxu0 0.0
    %4607 = vmatpush1.msra.mxu0 %v4424
    %4608 = vmatprep.subr.mxu0 0.0
    %4609 = vmatpush1.msra.mxu0 %v4423
    %4610 = vmatprep.subr.mxu0 0.0
    %4611 = vmatpush1.msra.mxu0 %v4422
    %4612 = vmatprep.subr.mxu0 0.0
    %4613 = vmatpush1.msra.mxu0 %v4421
    %4614 = vmatprep.subr.mxu0 0.0
    %4615 = vmatpush1.msra.mxu0 %v4420
    %4616 = vmatprep.subr.mxu0 0.0
    %4617 = vmatpush1.msra.mxu0 %v4419
    %4618 = vmatprep.subr.mxu0 0.0
    %4619 = vmatpush2.msra.mxu0 %v4450
    %4620 = vmatprep.subr.mxu0 0.0
    %4621 = vmatpush2.msra.mxu0 %v4449
    %4622 = vmatprep.subr.mxu0 0.0
    %4623 = vmatpush2.msra.mxu0 %v4448
    %4624 = vmatprep.subr.mxu0 0.0
    %4625 = vmatpush2.msra.mxu0 %v4447
    %4626 = vmatprep.subr.mxu0 0.0
    %4627 = vmatpush2.msra.mxu0 %v4446
    %4628 = vmatprep.subr.mxu0 0.0
    %4629 = vmatpush2.msra.mxu0 %v4445
    %4630 = vmatprep.subr.mxu0 0.0
    %4631 = vmatpush2.msra.mxu0 %v4444
    %4632 = vmatprep.subr.mxu0 0.0
    %4633 = vmatpush2.msra.mxu0 %v4443
    %4634 = vmatprep.subr.mxu0 0.0
    %4635 = vmatpush2.msra.mxu0 %v4442
    %4636 = vmatprep.subr.mxu0 0.0
    %4637 = vmatpush2.msra.mxu0 %v4441
    %4638 = vmatprep.subr.mxu0 0.0
    %4639 = vmatpush2.msra.mxu0 %v4440
    %4640 = vmatprep.subr.mxu0 0.0
    %4641 = vmatpush2.msra.mxu0 %v4439
    %4642 = vmatprep.subr.mxu0 0.0
    %4643 = vmatpush2.msra.mxu0 %v4438
    %4644 = vmatprep.subr.mxu0 0.0
    %4645 = vmatpush2.msra.mxu0 %v4437
    %4646 = vmatprep.subr.mxu0 0.0
    %4647 = vmatpush2.msra.mxu0 %v4436
    %4648 = vmatprep.subr.mxu0 0.0
    %4649 = vmatpush2.msra.mxu0 %v4435
    %4650 = vmatprep.mubr.f32.mxu0 %v4575
    %4651 = vmatmul.mubr.f32.gmra.mxu0 %v4574
    %v4652 = vpop.f32.mrf.mxu0
    %v4653 = vadd.f32 %v4584, %v4652
    %v4654 = vpop.f32.mrf.mxu0
    %4655 = vdwg.mxu0
    %4656 = vmatprep.subr.mxu0 0.0
    %4657 = vmatpush1.msra.mxu0 %v4466
    %4658 = vmatprep.subr.mxu0 0.0
    %4659 = vmatpush1.msra.mxu0 %v4465
    %4660 = vmatprep.subr.mxu0 0.0
    %4661 = vmatpush1.msra.mxu0 %v4464
    %4662 = vmatprep.subr.mxu0 0.0
    %4663 = vmatpush1.msra.mxu0 %v4463
    %4664 = vmatprep.subr.mxu0 0.0
    %4665 = vmatpush1.msra.mxu0 %v4462
    %4666 = vmatprep.subr.mxu0 0.0
    %4667 = vmatpush1.msra.mxu0 %v4461
    %4668 = vmatprep.subr.mxu0 0.0
    %4669 = vmatpush1.msra.mxu0 %v4460
    %4670 = vmatprep.subr.mxu0 0.0
    %4671 = vmatpush1.msra.mxu0 %v4459
    %4672 = vmatprep.subr.mxu0 0.0
    %4673 = vmatpush1.msra.mxu0 %v4458
    %4674 = vmatprep.subr.mxu0 0.0
    %4675 = vmatpush1.msra.mxu0 %v4457
    %4676 = vmatprep.subr.mxu0 0.0
    %4677 = vmatpush1.msra.mxu0 %v4456
    %4678 = vmatprep.subr.mxu0 0.0
    %4679 = vmatpush1.msra.mxu0 %v4455
    %4680 = vmatprep.subr.mxu0 0.0
    %4681 = vmatpush1.msra.mxu0 %v4454
    %4682 = vmatprep.subr.mxu0 0.0
    %4683 = vmatpush1.msra.mxu0 %v4453
    %4684 = vmatprep.subr.mxu0 0.0
    %4685 = vmatpush1.msra.mxu0 %v4452
    %4686 = vmatprep.subr.mxu0 0.0
    %4687 = vmatpush1.msra.mxu0 %v4451
    %4688 = vmatprep.subr.mxu0 0.0
    %4689 = vmatpush2.msra.mxu0 %v4482
    %4690 = vmatprep.subr.mxu0 0.0
    %4691 = vmatpush2.msra.mxu0 %v4481
    %4692 = vmatprep.subr.mxu0 0.0
    %4693 = vmatpush2.msra.mxu0 %v4480
    %4694 = vmatprep.subr.mxu0 0.0
    %4695 = vmatpush2.msra.mxu0 %v4479
    %4696 = vmatprep.subr.mxu0 0.0
    %4697 = vmatpush2.msra.mxu0 %v4478
    %4698 = vmatprep.subr.mxu0 0.0
    %4699 = vmatpush2.msra.mxu0 %v4477
    %4700 = vmatprep.subr.mxu0 0.0
    %4701 = vmatpush2.msra.mxu0 %v4476
    %4702 = vmatprep.subr.mxu0 0.0
    %4703 = vmatpush2.msra.mxu0 %v4475
    %4704 = vmatprep.subr.mxu0 0.0
    %4705 = vmatpush2.msra.mxu0 %v4474
    %4706 = vmatprep.subr.mxu0 0.0
    %4707 = vmatpush2.msra.mxu0 %v4473
    %4708 = vmatprep.subr.mxu0 0.0
    %4709 = vmatpush2.msra.mxu0 %v4472
    %4710 = vmatprep.subr.mxu0 0.0
    %4711 = vmatpush2.msra.mxu0 %v4471
    %4712 = vmatprep.subr.mxu0 0.0
    %4713 = vmatpush2.msra.mxu0 %v4470
    %4714 = vmatprep.subr.mxu0 0.0
    %4715 = vmatpush2.msra.mxu0 %v4469
    %4716 = vmatprep.subr.mxu0 0.0
    %4717 = vmatpush2.msra.mxu0 %v4468
    %4718 = vmatprep.subr.mxu0 0.0
    %4719 = vmatpush2.msra.mxu0 %v4467
    %4720 = vmatprep.mubr.f32.mxu0 %v4577
    %4721 = vmatmul.mubr.f32.gmra.mxu0 %v4576
    %v4722 = vpop.f32.mrf.mxu0
    %v4723 = vadd.f32 %v4653, %v4722
    %v4724 = vpop.f32.mrf.mxu0
    %4725 = vdwg.mxu0
    %4726 = vmatprep.subr.mxu0 0.0
    %4727 = vmatpush1.msra.mxu0 %v4498
    %4728 = vmatprep.subr.mxu0 0.0
    %4729 = vmatpush1.msra.mxu0 %v4497
    %4730 = vmatprep.subr.mxu0 0.0
    %4731 = vmatpush1.msra.mxu0 %v4496
    %4732 = vmatprep.subr.mxu0 0.0
    %4733 = vmatpush1.msra.mxu0 %v4495
    %4734 = vmatprep.subr.mxu0 0.0
    %4735 = vmatpush1.msra.mxu0 %v4494
    %4736 = vmatprep.subr.mxu0 0.0
    %4737 = vmatpush1.msra.mxu0 %v4493
    %4738 = vmatprep.subr.mxu0 0.0
    %4739 = vmatpush1.msra.mxu0 %v4492
    %4740 = vmatprep.subr.mxu0 0.0
    %4741 = vmatpush1.msra.mxu0 %v4491
    %4742 = vmatprep.subr.mxu0 0.0
    %4743 = vmatpush1.msra.mxu0 %v4490
    %4744 = vmatprep.subr.mxu0 0.0
    %4745 = vmatpush1.msra.mxu0 %v4489
    %4746 = vmatprep.subr.mxu0 0.0
    %4747 = vmatpush1.msra.mxu0 %v4488
    %4748 = vmatprep.subr.mxu0 0.0
    %4749 = vmatpush1.msra.mxu0 %v4487
    %4750 = vmatprep.subr.mxu0 0.0
    %4751 = vmatpush1.msra.mxu0 %v4486
    %4752 = vmatprep.subr.mxu0 0.0
    %4753 = vmatpush1.msra.mxu0 %v4485
    %4754 = vmatprep.subr.mxu0 0.0
    %4755 = vmatpush1.msra.mxu0 %v4484
    %4756 = vmatprep.subr.mxu0 0.0
    %4757 = vmatpush1.msra.mxu0 %v4483
    %4758 = vmatprep.subr.mxu0 0.0
    %4759 = vmatpush2.msra.mxu0 %v4514
    %4760 = vmatprep.subr.mxu0 0.0
    %4761 = vmatpush2.msra.mxu0 %v4513
    %4762 = vmatprep.subr.mxu0 0.0
    %4763 = vmatpush2.msra.mxu0 %v4512
    %4764 = vmatprep.subr.mxu0 0.0
    %4765 = vmatpush2.msra.mxu0 %v4511
    %4766 = vmatprep.subr.mxu0 0.0
    %4767 = vmatpush2.msra.mxu0 %v4510
    %4768 = vmatprep.subr.mxu0 0.0
    %4769 = vmatpush2.msra.mxu0 %v4509
    %4770 = vmatprep.subr.mxu0 0.0
    %4771 = vmatpush2.msra.mxu0 %v4508
    %4772 = vmatprep.subr.mxu0 0.0
    %4773 = vmatpush2.msra.mxu0 %v4507
    %4774 = vmatprep.subr.mxu0 0.0
    %4775 = vmatpush2.msra.mxu0 %v4506
    %4776 = vmatprep.subr.mxu0 0.0
    %4777 = vmatpush2.msra.mxu0 %v4505
    %4778 = vmatprep.subr.mxu0 0.0
    %4779 = vmatpush2.msra.mxu0 %v4504
    %4780 = vmatprep.subr.mxu0 0.0
    %4781 = vmatpush2.msra.mxu0 %v4503
    %4782 = vmatprep.subr.mxu0 0.0
    %4783 = vmatpush2.msra.mxu0 %v4502
    %4784 = vmatprep.subr.mxu0 0.0
    %4785 = vmatpush2.msra.mxu0 %v4501
    %4786 = vmatprep.subr.mxu0 0.0
    %4787 = vmatpush2.msra.mxu0 %v4500
    %4788 = vmatprep.subr.mxu0 0.0
    %4789 = vmatpush2.msra.mxu0 %v4499
    %4790 = vmatprep.mubr.f32.mxu0 %v4579
    %4791 = vmatmul.mubr.f32.gmra.mxu0 %v4578
    %v4792 = vpop.f32.mrf.mxu0
    %v4793 = vadd.f32 %v4723, %v4792
    %v4794 = vpop.f32.mrf.mxu0
    %4795 = vdwg.mxu0
    %4796 = vmax.xlane.f32.xlu0 %v4793
    %v4797 = vpop.xlane.xlu0 %4796
    %v4798 = vsub.f32 %v4793, %v4797
    %v4799 = vmul.f32 %v4798, 1.442695
    %v4800 = vpow.pop %v4799
    %4801 = vadd.xlane.f32.xlu0 %v4800
    %v4802 = vpop.xlane.xlu0 %4801
    %v4803 = vrcp.pop %v4802
    %v4804 = vmul.f32 %v4800, %v4803
    %4805 = vst [vmem:[#allocation13] sm:$0xff] %v4804
    %s4806 = scalar_lea.vmem [#allocation2], 1
    %v4807 = vld [vmem:[%s4806] ss:$8 sm:$0xf]
    %v4808 = vld [vmem:[%s4806] ss:$8 sm:$0x30]
    %v4809 = vor.u32 %v4807, %v4808
    %v4811 = vlaneseq
    %v4812 = vshrl.u32 %v4811, 7
    %v4813 = vsub.s32 0, %v4812
    %v4814 = vrot.slane %v4809, %v4813
    %v4815 = vlaneseq
    %v4816 = vshrl.u32 %v4815, 7
    %v4817 = vsub.s32 1, %v4816
    %v4818 = vrot.slane %v4809, %v4817
    %v4819 = vlaneseq
    %v4820 = vshrl.u32 %v4819, 7
    %v4821 = vsub.s32 2, %v4820
    %v4822 = vrot.slane %v4809, %v4821
    %v4823 = vlaneseq
    %v4824 = vshrl.u32 %v4823, 7
    %v4825 = vsub.s32 3, %v4824
    %v4826 = vrot.slane %v4809, %v4825
    %v4827 = vlaneseq
    %v4828 = vshrl.u32 %v4827, 7
    %v4829 = vsub.s32 4, %v4828
    %v4830 = vrot.slane %v4809, %v4829
    %v4831 = vlaneseq
    %v4832 = vshrl.u32 %v4831, 7
    %v4833 = vsub.s32 5, %v4832
    %v4834 = vrot.slane %v4809, %v4833
    %v4841 = vadd.f32 %v4814, %v4516
    %v4842 = vadd.f32 %v4818, %v4517
    %v4843 = vadd.f32 %v4822, %v4518
    %v4844 = vadd.f32 %v4826, %v4519
    %v4845 = vadd.f32 %v4830, %v4520
    %v4846 = vadd.f32 %v4834, %v4521
    %vm4847 = vcmp.ge.f32.partialorder %v4841, 0.0
    %vm4848 = vcmp.ge.f32.partialorder %v4842, 0.0
    %vm4849 = vcmp.ge.f32.partialorder %v4843, 0.0
    %vm4850 = vcmp.ge.f32.partialorder %v4844, 0.0
    %vm4851 = vcmp.ge.f32.partialorder %v4845, 0.0
    %vm4852 = vcmp.ge.f32.partialorder %v4846, 0.0
    %v4853 = vmul.f32 %v4841, 0.01
    %v4854 = vmul.f32 %v4842, 0.01
    %v4855 = vmul.f32 %v4843, 0.01
    %v4856 = vmul.f32 %v4844, 0.01
    %v4857 = vmul.f32 %v4845, 0.01
    %v4858 = vmul.f32 %v4846, 0.01
    %v4859 = vsel %vm4847, %v4841, %v4853
    %v4860 = vsel %vm4848, %v4842, %v4854
    %v4861 = vsel %vm4849, %v4843, %v4855
    %v4862 = vsel %vm4850, %v4844, %v4856
    %v4863 = vsel %vm4851, %v4845, %v4857
    %v4864 = vsel %vm4852, %v4846, %v4858
    %4865 = vmatprep.subr.mxu0 0.0
    %4866 = vmatpush1.msra.mxu0 %v4434
    %4867 = vmatprep.subr.mxu0 0.0
    %4868 = vmatpush1.msra.mxu0 %v4433
    %4869 = vmatprep.subr.mxu0 0.0
    %4870 = vmatpush1.msra.mxu0 %v4432
    %4871 = vmatprep.subr.mxu0 0.0
    %4872 = vmatpush1.msra.mxu0 %v4431
    %4873 = vmatprep.subr.mxu0 0.0
    %4874 = vmatpush1.msra.mxu0 %v4430
    %4875 = vmatprep.subr.mxu0 0.0
    %4876 = vmatpush1.msra.mxu0 %v4429
    %4877 = vmatprep.subr.mxu0 0.0
    %4878 = vmatpush1.msra.mxu0 %v4428
    %4879 = vmatprep.subr.mxu0 0.0
    %4880 = vmatpush1.msra.mxu0 %v4427
    %4881 = vmatprep.subr.mxu0 0.0
    %4882 = vmatpush1.msra.mxu0 %v4426
    %4883 = vmatprep.subr.mxu0 0.0
    %4884 = vmatpush1.msra.mxu0 %v4425
    %4885 = vmatprep.subr.mxu0 0.0
    %4886 = vmatpush1.msra.mxu0 %v4424
    %4887 = vmatprep.subr.mxu0 0.0
    %4888 = vmatpush1.msra.mxu0 %v4423
    %4889 = vmatprep.subr.mxu0 0.0
    %4890 = vmatpush1.msra.mxu0 %v4422
    %4891 = vmatprep.subr.mxu0 0.0
    %4892 = vmatpush1.msra.mxu0 %v4421
    %4893 = vmatprep.subr.mxu0 0.0
    %4894 = vmatpush1.msra.mxu0 %v4420
    %4895 = vmatprep.subr.mxu0 0.0
    %4896 = vmatpush1.msra.mxu0 %v4419
    %4897 = vmatprep.subr.mxu0 0.0
    %4898 = vmatpush2.msra.mxu0 %v4450
    %4899 = vmatprep.subr.mxu0 0.0
    %4900 = vmatpush2.msra.mxu0 %v4449
    %4901 = vmatprep.subr.mxu0 0.0
    %4902 = vmatpush2.msra.mxu0 %v4448
    %4903 = vmatprep.subr.mxu0 0.0
    %4904 = vmatpush2.msra.mxu0 %v4447
    %4905 = vmatprep.subr.mxu0 0.0
    %4906 = vmatpush2.msra.mxu0 %v4446
    %4907 = vmatprep.subr.mxu0 0.0
    %4908 = vmatpush2.msra.mxu0 %v4445
    %4909 = vmatprep.subr.mxu0 0.0
    %4910 = vmatpush2.msra.mxu0 %v4444
    %4911 = vmatprep.subr.mxu0 0.0
    %4912 = vmatpush2.msra.mxu0 %v4443
    %4913 = vmatprep.subr.mxu0 0.0
    %4914 = vmatpush2.msra.mxu0 %v4442
    %4915 = vmatprep.subr.mxu0 0.0
    %4916 = vmatpush2.msra.mxu0 %v4441
    %4917 = vmatprep.subr.mxu0 0.0
    %4918 = vmatpush2.msra.mxu0 %v4440
    %4919 = vmatprep.subr.mxu0 0.0
    %4920 = vmatpush2.msra.mxu0 %v4439
    %4921 = vmatprep.subr.mxu0 0.0
    %4922 = vmatpush2.msra.mxu0 %v4438
    %4923 = vmatprep.subr.mxu0 0.0
    %4924 = vmatpush2.msra.mxu0 %v4437
    %4925 = vmatprep.subr.mxu0 0.0
    %4926 = vmatpush2.msra.mxu0 %v4436
    %4927 = vmatprep.subr.mxu0 0.0
    %4928 = vmatpush2.msra.mxu0 %v4435
    %4929 = vmatprep.mubr.f32.mxu0 %v4860
    %4930 = vmatmul.mubr.f32.gmra.mxu0 %v4859
    %v4931 = vpop.f32.mrf.mxu0
    %v4932 = vadd.f32 %v4584, %v4931
    %v4933 = vpop.f32.mrf.mxu0
    %4934 = vdwg.mxu0
    %4935 = vmatprep.subr.mxu0 0.0
    %4936 = vmatpush1.msra.mxu0 %v4466
    %4937 = vmatprep.subr.mxu0 0.0
    %4938 = vmatpush1.msra.mxu0 %v4465
    %4939 = vmatprep.subr.mxu0 0.0
    %4940 = vmatpush1.msra.mxu0 %v4464
    %4941 = vmatprep.subr.mxu0 0.0
    %4942 = vmatpush1.msra.mxu0 %v4463
    %4943 = vmatprep.subr.mxu0 0.0
    %4944 = vmatpush1.msra.mxu0 %v4462
    %4945 = vmatprep.subr.mxu0 0.0
    %4946 = vmatpush1.msra.mxu0 %v4461
    %4947 = vmatprep.subr.mxu0 0.0
    %4948 = vmatpush1.msra.mxu0 %v4460
    %4949 = vmatprep.subr.mxu0 0.0
    %4950 = vmatpush1.msra.mxu0 %v4459
    %4951 = vmatprep.subr.mxu0 0.0
    %4952 = vmatpush1.msra.mxu0 %v4458
    %4953 = vmatprep.subr.mxu0 0.0
    %4954 = vmatpush1.msra.mxu0 %v4457
    %4955 = vmatprep.subr.mxu0 0.0
    %4956 = vmatpush1.msra.mxu0 %v4456
    %4957 = vmatprep.subr.mxu0 0.0
    %4958 = vmatpush1.msra.mxu0 %v4455
    %4959 = vmatprep.subr.mxu0 0.0
    %4960 = vmatpush1.msra.mxu0 %v4454
    %4961 = vmatprep.subr.mxu0 0.0
    %4962 = vmatpush1.msra.mxu0 %v4453
    %4963 = vmatprep.subr.mxu0 0.0
    %4964 = vmatpush1.msra.mxu0 %v4452
    %4965 = vmatprep.subr.mxu0 0.0
    %4966 = vmatpush1.msra.mxu0 %v4451
    %4967 = vmatprep.subr.mxu0 0.0
    %4968 = vmatpush2.msra.mxu0 %v4482
    %4969 = vmatprep.subr.mxu0 0.0
    %4970 = vmatpush2.msra.mxu0 %v4481
    %4971 = vmatprep.subr.mxu0 0.0
    %4972 = vmatpush2.msra.mxu0 %v4480
    %4973 = vmatprep.subr.mxu0 0.0
    %4974 = vmatpush2.msra.mxu0 %v4479
    %4975 = vmatprep.subr.mxu0 0.0
    %4976 = vmatpush2.msra.mxu0 %v4478
    %4977 = vmatprep.subr.mxu0 0.0
    %4978 = vmatpush2.msra.mxu0 %v4477
    %4979 = vmatprep.subr.mxu0 0.0
    %4980 = vmatpush2.msra.mxu0 %v4476
    %4981 = vmatprep.subr.mxu0 0.0
    %4982 = vmatpush2.msra.mxu0 %v4475
    %4983 = vmatprep.subr.mxu0 0.0
    %4984 = vmatpush2.msra.mxu0 %v4474
    %4985 = vmatprep.subr.mxu0 0.0
    %4986 = vmatpush2.msra.mxu0 %v4473
    %4987 = vmatprep.subr.mxu0 0.0
    %4988 = vmatpush2.msra.mxu0 %v4472
    %4989 = vmatprep.subr.mxu0 0.0
    %4990 = vmatpush2.msra.mxu0 %v4471
    %4991 = vmatprep.subr.mxu0 0.0
    %4992 = vmatpush2.msra.mxu0 %v4470
    %4993 = vmatprep.subr.mxu0 0.0
    %4994 = vmatpush2.msra.mxu0 %v4469
    %4995 = vmatprep.subr.mxu0 0.0
    %4996 = vmatpush2.msra.mxu0 %v4468
    %4997 = vmatprep.subr.mxu0 0.0
    %4998 = vmatpush2.msra.mxu0 %v4467
    %4999 = vmatprep.mubr.f32.mxu0 %v4862
    %5000 = vmatmul.mubr.f32.gmra.mxu0 %v4861
    %v5001 = vpop.f32.mrf.mxu0
    %v5002 = vadd.f32 %v4932, %v5001
    %v5003 = vpop.f32.mrf.mxu0
    %5004 = vdwg.mxu0
    %5005 = vmatprep.subr.mxu0 0.0
    %5006 = vmatpush1.msra.mxu0 %v4498
    %5007 = vmatprep.subr.mxu0 0.0
    %5008 = vmatpush1.msra.mxu0 %v4497
    %5009 = vmatprep.subr.mxu0 0.0
    %5010 = vmatpush1.msra.mxu0 %v4496
    %5011 = vmatprep.subr.mxu0 0.0
    %5012 = vmatpush1.msra.mxu0 %v4495
    %5013 = vmatprep.subr.mxu0 0.0
    %5014 = vmatpush1.msra.mxu0 %v4494
    %5015 = vmatprep.subr.mxu0 0.0
    %5016 = vmatpush1.msra.mxu0 %v4493
    %5017 = vmatprep.subr.mxu0 0.0
    %5018 = vmatpush1.msra.mxu0 %v4492
    %5019 = vmatprep.subr.mxu0 0.0
    %5020 = vmatpush1.msra.mxu0 %v4491
    %5021 = vmatprep.subr.mxu0 0.0
    %5022 = vmatpush1.msra.mxu0 %v4490
    %5023 = vmatprep.subr.mxu0 0.0
    %5024 = vmatpush1.msra.mxu0 %v4489
    %5025 = vmatprep.subr.mxu0 0.0
    %5026 = vmatpush1.msra.mxu0 %v4488
    %5027 = vmatprep.subr.mxu0 0.0
    %5028 = vmatpush1.msra.mxu0 %v4487
    %5029 = vmatprep.subr.mxu0 0.0
    %5030 = vmatpush1.msra.mxu0 %v4486
    %5031 = vmatprep.subr.mxu0 0.0
    %5032 = vmatpush1.msra.mxu0 %v4485
    %5033 = vmatprep.subr.mxu0 0.0
    %5034 = vmatpush1.msra.mxu0 %v4484
    %5035 = vmatprep.subr.mxu0 0.0
    %5036 = vmatpush1.msra.mxu0 %v4483
    %5037 = vmatprep.subr.mxu0 0.0
    %5038 = vmatpush2.msra.mxu0 %v4514
    %5039 = vmatprep.subr.mxu0 0.0
    %5040 = vmatpush2.msra.mxu0 %v4513
    %5041 = vmatprep.subr.mxu0 0.0
    %5042 = vmatpush2.msra.mxu0 %v4512
    %5043 = vmatprep.subr.mxu0 0.0
    %5044 = vmatpush2.msra.mxu0 %v4511
    %5045 = vmatprep.subr.mxu0 0.0
    %5046 = vmatpush2.msra.mxu0 %v4510
    %5047 = vmatprep.subr.mxu0 0.0
    %5048 = vmatpush2.msra.mxu0 %v4509
    %5049 = vmatprep.subr.mxu0 0.0
    %5050 = vmatpush2.msra.mxu0 %v4508
    %5051 = vmatprep.subr.mxu0 0.0
    %5052 = vmatpush2.msra.mxu0 %v4507
    %5053 = vmatprep.subr.mxu0 0.0
    %5054 = vmatpush2.msra.mxu0 %v4506
    %5055 = vmatprep.subr.mxu0 0.0
    %5056 = vmatpush2.msra.mxu0 %v4505
    %5057 = vmatprep.subr.mxu0 0.0
    %5058 = vmatpush2.msra.mxu0 %v4504
    %5059 = vmatprep.subr.mxu0 0.0
    %5060 = vmatpush2.msra.mxu0 %v4503
    %5061 = vmatprep.subr.mxu0 0.0
    %5062 = vmatpush2.msra.mxu0 %v4502
    %5063 = vmatprep.subr.mxu0 0.0
    %5064 = vmatpush2.msra.mxu0 %v4501
    %5065 = vmatprep.subr.mxu0 0.0
    %5066 = vmatpush2.msra.mxu0 %v4500
    %5067 = vmatprep.subr.mxu0 0.0
    %5068 = vmatpush2.msra.mxu0 %v4499
    %5069 = vmatprep.mubr.f32.mxu0 %v4864
    %5070 = vmatmul.mubr.f32.gmra.mxu0 %v4863
    %v5071 = vpop.f32.mrf.mxu0
    %v5072 = vadd.f32 %v5002, %v5071
    %v5073 = vpop.f32.mrf.mxu0
    %5074 = vdwg.mxu0
    %5075 = vmax.xlane.f32.xlu0 %v5072
    %v5076 = vpop.xlane.xlu0 %5075
    %v5077 = vsub.f32 %v5072, %v5076
    %v5078 = vmul.f32 %v5077, 1.442695
    %v5079 = vpow.pop %v5078
    %5080 = vadd.xlane.f32.xlu0 %v5079
    %v5081 = vpop.xlane.xlu0 %5080
    %v5082 = vrcp.pop %v5081
    %v5083 = vmul.f32 %v5079, %v5082
    %5084 = vst [vmem:[#allocation13 + $0x8] sm:$0xff] %v5083
    %s5085 = scalar_lea.vmem [#allocation2], 2
    %v5086 = vld [vmem:[%s5085] ss:$8 sm:$0xf]
    %v5087 = vld [vmem:[%s5085] ss:$8 sm:$0x30]
    %v5088 = vor.u32 %v5086, %v5087
    %v5090 = vlaneseq
    %v5091 = vshrl.u32 %v5090, 7
    %v5092 = vsub.s32 0, %v5091
    %v5093 = vrot.slane %v5088, %v5092
    %v5094 = vlaneseq
    %v5095 = vshrl.u32 %v5094, 7
    %v5096 = vsub.s32 1, %v5095
    %v5097 = vrot.slane %v5088, %v5096
    %v5098 = vlaneseq
    %v5099 = vshrl.u32 %v5098, 7
    %v5100 = vsub.s32 2, %v5099
    %v5101 = vrot.slane %v5088, %v5100
    %v5102 = vlaneseq
    %v5103 = vshrl.u32 %v5102, 7
    %v5104 = vsub.s32 3, %v5103
    %v5105 = vrot.slane %v5088, %v5104
    %v5106 = vlaneseq
    %v5107 = vshrl.u32 %v5106, 7
    %v5108 = vsub.s32 4, %v5107
    %v5109 = vrot.slane %v5088, %v5108
    %v5110 = vlaneseq
    %v5111 = vshrl.u32 %v5110, 7
    %v5112 = vsub.s32 5, %v5111
    %v5113 = vrot.slane %v5088, %v5112
    %v5120 = vadd.f32 %v5093, %v4516
    %v5121 = vadd.f32 %v5097, %v4517
    %v5122 = vadd.f32 %v5101, %v4518
    %v5123 = vadd.f32 %v5105, %v4519
    %v5124 = vadd.f32 %v5109, %v4520
    %v5125 = vadd.f32 %v5113, %v4521
    %vm5126 = vcmp.ge.f32.partialorder %v5120, 0.0
    %vm5127 = vcmp.ge.f32.partialorder %v5121, 0.0
    %vm5128 = vcmp.ge.f32.partialorder %v5122, 0.0
    %vm5129 = vcmp.ge.f32.partialorder %v5123, 0.0
    %vm5130 = vcmp.ge.f32.partialorder %v5124, 0.0
    %vm5131 = vcmp.ge.f32.partialorder %v5125, 0.0
    %v5132 = vmul.f32 %v5120, 0.01
    %v5133 = vmul.f32 %v5121, 0.01
    %v5134 = vmul.f32 %v5122, 0.01
    %v5135 = vmul.f32 %v5123, 0.01
    %v5136 = vmul.f32 %v5124, 0.01
    %v5137 = vmul.f32 %v5125, 0.01
    %v5138 = vsel %vm5126, %v5120, %v5132
    %v5139 = vsel %vm5127, %v5121, %v5133
    %v5140 = vsel %vm5128, %v5122, %v5134
    %v5141 = vsel %vm5129, %v5123, %v5135
    %v5142 = vsel %vm5130, %v5124, %v5136
    %v5143 = vsel %vm5131, %v5125, %v5137
    %5144 = vmatprep.subr.mxu0 0.0
    %5145 = vmatpush1.msra.mxu0 %v4434
    %5146 = vmatprep.subr.mxu0 0.0
    %5147 = vmatpush1.msra.mxu0 %v4433
    %5148 = vmatprep.subr.mxu0 0.0
    %5149 = vmatpush1.msra.mxu0 %v4432
    %5150 = vmatprep.subr.mxu0 0.0
    %5151 = vmatpush1.msra.mxu0 %v4431
    %5152 = vmatprep.subr.mxu0 0.0
    %5153 = vmatpush1.msra.mxu0 %v4430
    %5154 = vmatprep.subr.mxu0 0.0
    %5155 = vmatpush1.msra.mxu0 %v4429
    %5156 = vmatprep.subr.mxu0 0.0
    %5157 = vmatpush1.msra.mxu0 %v4428
    %5158 = vmatprep.subr.mxu0 0.0
    %5159 = vmatpush1.msra.mxu0 %v4427
    %5160 = vmatprep.subr.mxu0 0.0
    %5161 = vmatpush1.msra.mxu0 %v4426
    %5162 = vmatprep.subr.mxu0 0.0
    %5163 = vmatpush1.msra.mxu0 %v4425
    %5164 = vmatprep.subr.mxu0 0.0
    %5165 = vmatpush1.msra.mxu0 %v4424
    %5166 = vmatprep.subr.mxu0 0.0
    %5167 = vmatpush1.msra.mxu0 %v4423
    %5168 = vmatprep.subr.mxu0 0.0
    %5169 = vmatpush1.msra.mxu0 %v4422
    %5170 = vmatprep.subr.mxu0 0.0
    %5171 = vmatpush1.msra.mxu0 %v4421
    %5172 = vmatprep.subr.mxu0 0.0
    %5173 = vmatpush1.msra.mxu0 %v4420
    %5174 = vmatprep.subr.mxu0 0.0
    %5175 = vmatpush1.msra.mxu0 %v4419
    %5176 = vmatprep.subr.mxu0 0.0
    %5177 = vmatpush2.msra.mxu0 %v4450
    %5178 = vmatprep.subr.mxu0 0.0
    %5179 = vmatpush2.msra.mxu0 %v4449
    %5180 = vmatprep.subr.mxu0 0.0
    %5181 = vmatpush2.msra.mxu0 %v4448
    %5182 = vmatprep.subr.mxu0 0.0
    %5183 = vmatpush2.msra.mxu0 %v4447
    %5184 = vmatprep.subr.mxu0 0.0
    %5185 = vmatpush2.msra.mxu0 %v4446
    %5186 = vmatprep.subr.mxu0 0.0
    %5187 = vmatpush2.msra.mxu0 %v4445
    %5188 = vmatprep.subr.mxu0 0.0
    %5189 = vmatpush2.msra.mxu0 %v4444
    %5190 = vmatprep.subr.mxu0 0.0
    %5191 = vmatpush2.msra.mxu0 %v4443
    %5192 = vmatprep.subr.mxu0 0.0
    %5193 = vmatpush2.msra.mxu0 %v4442
    %5194 = vmatprep.subr.mxu0 0.0
    %5195 = vmatpush2.msra.mxu0 %v4441
    %5196 = vmatprep.subr.mxu0 0.0
    %5197 = vmatpush2.msra.mxu0 %v4440
    %5198 = vmatprep.subr.mxu0 0.0
    %5199 = vmatpush2.msra.mxu0 %v4439
    %5200 = vmatprep.subr.mxu0 0.0
    %5201 = vmatpush2.msra.mxu0 %v4438
    %5202 = vmatprep.subr.mxu0 0.0
    %5203 = vmatpush2.msra.mxu0 %v4437
    %5204 = vmatprep.subr.mxu0 0.0
    %5205 = vmatpush2.msra.mxu0 %v4436
    %5206 = vmatprep.subr.mxu0 0.0
    %5207 = vmatpush2.msra.mxu0 %v4435
    %5208 = vmatprep.mubr.f32.mxu0 %v5139
    %5209 = vmatmul.mubr.f32.gmra.mxu0 %v5138
    %v5210 = vpop.f32.mrf.mxu0
    %v5211 = vadd.f32 %v4584, %v5210
    %v5212 = vpop.f32.mrf.mxu0
    %5213 = vdwg.mxu0
    %5214 = vmatprep.subr.mxu0 0.0
    %5215 = vmatpush1.msra.mxu0 %v4466
    %5216 = vmatprep.subr.mxu0 0.0
    %5217 = vmatpush1.msra.mxu0 %v4465
    %5218 = vmatprep.subr.mxu0 0.0
    %5219 = vmatpush1.msra.mxu0 %v4464
    %5220 = vmatprep.subr.mxu0 0.0
    %5221 = vmatpush1.msra.mxu0 %v4463
    %5222 = vmatprep.subr.mxu0 0.0
    %5223 = vmatpush1.msra.mxu0 %v4462
    %5224 = vmatprep.subr.mxu0 0.0
    %5225 = vmatpush1.msra.mxu0 %v4461
    %5226 = vmatprep.subr.mxu0 0.0
    %5227 = vmatpush1.msra.mxu0 %v4460
    %5228 = vmatprep.subr.mxu0 0.0
    %5229 = vmatpush1.msra.mxu0 %v4459
    %5230 = vmatprep.subr.mxu0 0.0
    %5231 = vmatpush1.msra.mxu0 %v4458
    %5232 = vmatprep.subr.mxu0 0.0
    %5233 = vmatpush1.msra.mxu0 %v4457
    %5234 = vmatprep.subr.mxu0 0.0
    %5235 = vmatpush1.msra.mxu0 %v4456
    %5236 = vmatprep.subr.mxu0 0.0
    %5237 = vmatpush1.msra.mxu0 %v4455
    %5238 = vmatprep.subr.mxu0 0.0
    %5239 = vmatpush1.msra.mxu0 %v4454
    %5240 = vmatprep.subr.mxu0 0.0
    %5241 = vmatpush1.msra.mxu0 %v4453
    %5242 = vmatprep.subr.mxu0 0.0
    %5243 = vmatpush1.msra.mxu0 %v4452
    %5244 = vmatprep.subr.mxu0 0.0
    %5245 = vmatpush1.msra.mxu0 %v4451
    %5246 = vmatprep.subr.mxu0 0.0
    %5247 = vmatpush2.msra.mxu0 %v4482
    %5248 = vmatprep.subr.mxu0 0.0
    %5249 = vmatpush2.msra.mxu0 %v4481
    %5250 = vmatprep.subr.mxu0 0.0
    %5251 = vmatpush2.msra.mxu0 %v4480
    %5252 = vmatprep.subr.mxu0 0.0
    %5253 = vmatpush2.msra.mxu0 %v4479
    %5254 = vmatprep.subr.mxu0 0.0
    %5255 = vmatpush2.msra.mxu0 %v4478
    %5256 = vmatprep.subr.mxu0 0.0
    %5257 = vmatpush2.msra.mxu0 %v4477
    %5258 = vmatprep.subr.mxu0 0.0
    %5259 = vmatpush2.msra.mxu0 %v4476
    %5260 = vmatprep.subr.mxu0 0.0
    %5261 = vmatpush2.msra.mxu0 %v4475
    %5262 = vmatprep.subr.mxu0 0.0
    %5263 = vmatpush2.msra.mxu0 %v4474
    %5264 = vmatprep.subr.mxu0 0.0
    %5265 = vmatpush2.msra.mxu0 %v4473
    %5266 = vmatprep.subr.mxu0 0.0
    %5267 = vmatpush2.msra.mxu0 %v4472
    %5268 = vmatprep.subr.mxu0 0.0
    %5269 = vmatpush2.msra.mxu0 %v4471
    %5270 = vmatprep.subr.mxu0 0.0
    %5271 = vmatpush2.msra.mxu0 %v4470
    %5272 = vmatprep.subr.mxu0 0.0
    %5273 = vmatpush2.msra.mxu0 %v4469
    %5274 = vmatprep.subr.mxu0 0.0
    %5275 = vmatpush2.msra.mxu0 %v4468
    %5276 = vmatprep.subr.mxu0 0.0
    %5277 = vmatpush2.msra.mxu0 %v4467
    %5278 = vmatprep.mubr.f32.mxu0 %v5141
    %5279 = vmatmul.mubr.f32.gmra.mxu0 %v5140
    %v5280 = vpop.f32.mrf.mxu0
    %v5281 = vadd.f32 %v5211, %v5280
    %v5282 = vpop.f32.mrf.mxu0
    %5283 = vdwg.mxu0
    %5284 = vmatprep.subr.mxu0 0.0
    %5285 = vmatpush1.msra.mxu0 %v4498
    %5286 = vmatprep.subr.mxu0 0.0
    %5287 = vmatpush1.msra.mxu0 %v4497
    %5288 = vmatprep.subr.mxu0 0.0
    %5289 = vmatpush1.msra.mxu0 %v4496
    %5290 = vmatprep.subr.mxu0 0.0
    %5291 = vmatpush1.msra.mxu0 %v4495
    %5292 = vmatprep.subr.mxu0 0.0
    %5293 = vmatpush1.msra.mxu0 %v4494
    %5294 = vmatprep.subr.mxu0 0.0
    %5295 = vmatpush1.msra.mxu0 %v4493
    %5296 = vmatprep.subr.mxu0 0.0
    %5297 = vmatpush1.msra.mxu0 %v4492
    %5298 = vmatprep.subr.mxu0 0.0
    %5299 = vmatpush1.msra.mxu0 %v4491
    %5300 = vmatprep.subr.mxu0 0.0
    %5301 = vmatpush1.msra.mxu0 %v4490
    %5302 = vmatprep.subr.mxu0 0.0
    %5303 = vmatpush1.msra.mxu0 %v4489
    %5304 = vmatprep.subr.mxu0 0.0
    %5305 = vmatpush1.msra.mxu0 %v4488
    %5306 = vmatprep.subr.mxu0 0.0
    %5307 = vmatpush1.msra.mxu0 %v4487
    %5308 = vmatprep.subr.mxu0 0.0
    %5309 = vmatpush1.msra.mxu0 %v4486
    %5310 = vmatprep.subr.mxu0 0.0
    %5311 = vmatpush1.msra.mxu0 %v4485
    %5312 = vmatprep.subr.mxu0 0.0
    %5313 = vmatpush1.msra.mxu0 %v4484
    %5314 = vmatprep.subr.mxu0 0.0
    %5315 = vmatpush1.msra.mxu0 %v4483
    %5316 = vmatprep.subr.mxu0 0.0
    %5317 = vmatpush2.msra.mxu0 %v4514
    %5318 = vmatprep.subr.mxu0 0.0
    %5319 = vmatpush2.msra.mxu0 %v4513
    %5320 = vmatprep.subr.mxu0 0.0
    %5321 = vmatpush2.msra.mxu0 %v4512
    %5322 = vmatprep.subr.mxu0 0.0
    %5323 = vmatpush2.msra.mxu0 %v4511
    %5324 = vmatprep.subr.mxu0 0.0
    %5325 = vmatpush2.msra.mxu0 %v4510
    %5326 = vmatprep.subr.mxu0 0.0
    %5327 = vmatpush2.msra.mxu0 %v4509
    %5328 = vmatprep.subr.mxu0 0.0
    %5329 = vmatpush2.msra.mxu0 %v4508
    %5330 = vmatprep.subr.mxu0 0.0
    %5331 = vmatpush2.msra.mxu0 %v4507
    %5332 = vmatprep.subr.mxu0 0.0
    %5333 = vmatpush2.msra.mxu0 %v4506
    %5334 = vmatprep.subr.mxu0 0.0
    %5335 = vmatpush2.msra.mxu0 %v4505
    %5336 = vmatprep.subr.mxu0 0.0
    %5337 = vmatpush2.msra.mxu0 %v4504
    %5338 = vmatprep.subr.mxu0 0.0
    %5339 = vmatpush2.msra.mxu0 %v4503
    %5340 = vmatprep.subr.mxu0 0.0
    %5341 = vmatpush2.msra.mxu0 %v4502
    %5342 = vmatprep.subr.mxu0 0.0
    %5343 = vmatpush2.msra.mxu0 %v4501
    %5344 = vmatprep.subr.mxu0 0.0
    %5345 = vmatpush2.msra.mxu0 %v4500
    %5346 = vmatprep.subr.mxu0 0.0
    %5347 = vmatpush2.msra.mxu0 %v4499
    %5348 = vmatprep.mubr.f32.mxu0 %v5143
    %5349 = vmatmul.mubr.f32.gmra.mxu0 %v5142
    %v5350 = vpop.f32.mrf.mxu0
    %v5351 = vadd.f32 %v5281, %v5350
    %v5352 = vpop.f32.mrf.mxu0
    %5353 = vdwg.mxu0
    %5354 = vmax.xlane.f32.xlu0 %v5351
    %v5355 = vpop.xlane.xlu0 %5354
    %v5356 = vsub.f32 %v5351, %v5355
    %v5357 = vmul.f32 %v5356, 1.442695
    %v5358 = vpow.pop %v5357
    %5359 = vadd.xlane.f32.xlu0 %v5358
    %v5360 = vpop.xlane.xlu0 %5359
    %v5361 = vrcp.pop %v5360
    %v5362 = vmul.f32 %v5358, %v5361
    %5363 = vst [vmem:[#allocation13 + $0x10] sm:$0xff] %v5362
    %s5364 = scalar_lea.vmem [#allocation2], 3
    %v5365 = vld [vmem:[%s5364] ss:$8 sm:$0xf]
    %v5366 = vld [vmem:[%s5364] ss:$8 sm:$0x30]
    %v5367 = vor.u32 %v5365, %v5366
    %v5369 = vlaneseq
    %v5370 = vshrl.u32 %v5369, 7
    %v5371 = vsub.s32 0, %v5370
    %v5372 = vrot.slane %v5367, %v5371
    %v5373 = vlaneseq
    %v5374 = vshrl.u32 %v5373, 7
    %v5375 = vsub.s32 1, %v5374
    %v5376 = vrot.slane %v5367, %v5375
    %v5377 = vlaneseq
    %v5378 = vshrl.u32 %v5377, 7
    %v5379 = vsub.s32 2, %v5378
    %v5380 = vrot.slane %v5367, %v5379
    %v5381 = vlaneseq
    %v5382 = vshrl.u32 %v5381, 7
    %v5383 = vsub.s32 3, %v5382
    %v5384 = vrot.slane %v5367, %v5383
    %v5385 = vlaneseq
    %v5386 = vshrl.u32 %v5385, 7
    %v5387 = vsub.s32 4, %v5386
    %v5388 = vrot.slane %v5367, %v5387
    %v5389 = vlaneseq
    %v5390 = vshrl.u32 %v5389, 7
    %v5391 = vsub.s32 5, %v5390
    %v5392 = vrot.slane %v5367, %v5391
    %v5399 = vadd.f32 %v5372, %v4516
    %v5400 = vadd.f32 %v5376, %v4517
    %v5401 = vadd.f32 %v5380, %v4518
    %v5402 = vadd.f32 %v5384, %v4519
    %v5403 = vadd.f32 %v5388, %v4520
    %v5404 = vadd.f32 %v5392, %v4521
    %vm5405 = vcmp.ge.f32.partialorder %v5399, 0.0
    %vm5406 = vcmp.ge.f32.partialorder %v5400, 0.0
    %vm5407 = vcmp.ge.f32.partialorder %v5401, 0.0
    %vm5408 = vcmp.ge.f32.partialorder %v5402, 0.0
    %vm5409 = vcmp.ge.f32.partialorder %v5403, 0.0
    %vm5410 = vcmp.ge.f32.partialorder %v5404, 0.0
    %v5411 = vmul.f32 %v5399, 0.01
    %v5412 = vmul.f32 %v5400, 0.01
    %v5413 = vmul.f32 %v5401, 0.01
    %v5414 = vmul.f32 %v5402, 0.01
    %v5415 = vmul.f32 %v5403, 0.01
    %v5416 = vmul.f32 %v5404, 0.01
    %v5417 = vsel %vm5405, %v5399, %v5411
    %v5418 = vsel %vm5406, %v5400, %v5412
    %v5419 = vsel %vm5407, %v5401, %v5413
    %v5420 = vsel %vm5408, %v5402, %v5414
    %v5421 = vsel %vm5409, %v5403, %v5415
    %v5422 = vsel %vm5410, %v5404, %v5416
    %5423 = vmatprep.subr.mxu0 0.0
    %5424 = vmatpush1.msra.mxu0 %v4434
    %5425 = vmatprep.subr.mxu0 0.0
    %5426 = vmatpush1.msra.mxu0 %v4433
    %5427 = vmatprep.subr.mxu0 0.0
    %5428 = vmatpush1.msra.mxu0 %v4432
    %5429 = vmatprep.subr.mxu0 0.0
    %5430 = vmatpush1.msra.mxu0 %v4431
    %5431 = vmatprep.subr.mxu0 0.0
    %5432 = vmatpush1.msra.mxu0 %v4430
    %5433 = vmatprep.subr.mxu0 0.0
    %5434 = vmatpush1.msra.mxu0 %v4429
    %5435 = vmatprep.subr.mxu0 0.0
    %5436 = vmatpush1.msra.mxu0 %v4428
    %5437 = vmatprep.subr.mxu0 0.0
    %5438 = vmatpush1.msra.mxu0 %v4427
    %5439 = vmatprep.subr.mxu0 0.0
    %5440 = vmatpush1.msra.mxu0 %v4426
    %5441 = vmatprep.subr.mxu0 0.0
    %5442 = vmatpush1.msra.mxu0 %v4425
    %5443 = vmatprep.subr.mxu0 0.0
    %5444 = vmatpush1.msra.mxu0 %v4424
    %5445 = vmatprep.subr.mxu0 0.0
    %5446 = vmatpush1.msra.mxu0 %v4423
    %5447 = vmatprep.subr.mxu0 0.0
    %5448 = vmatpush1.msra.mxu0 %v4422
    %5449 = vmatprep.subr.mxu0 0.0
    %5450 = vmatpush1.msra.mxu0 %v4421
    %5451 = vmatprep.subr.mxu0 0.0
    %5452 = vmatpush1.msra.mxu0 %v4420
    %5453 = vmatprep.subr.mxu0 0.0
    %5454 = vmatpush1.msra.mxu0 %v4419
    %5455 = vmatprep.subr.mxu0 0.0
    %5456 = vmatpush2.msra.mxu0 %v4450
    %5457 = vmatprep.subr.mxu0 0.0
    %5458 = vmatpush2.msra.mxu0 %v4449
    %5459 = vmatprep.subr.mxu0 0.0
    %5460 = vmatpush2.msra.mxu0 %v4448
    %5461 = vmatprep.subr.mxu0 0.0
    %5462 = vmatpush2.msra.mxu0 %v4447
    %5463 = vmatprep.subr.mxu0 0.0
    %5464 = vmatpush2.msra.mxu0 %v4446
    %5465 = vmatprep.subr.mxu0 0.0
    %5466 = vmatpush2.msra.mxu0 %v4445
    %5467 = vmatprep.subr.mxu0 0.0
    %5468 = vmatpush2.msra.mxu0 %v4444
    %5469 = vmatprep.subr.mxu0 0.0
    %5470 = vmatpush2.msra.mxu0 %v4443
    %5471 = vmatprep.subr.mxu0 0.0
    %5472 = vmatpush2.msra.mxu0 %v4442
    %5473 = vmatprep.subr.mxu0 0.0
    %5474 = vmatpush2.msra.mxu0 %v4441
    %5475 = vmatprep.subr.mxu0 0.0
    %5476 = vmatpush2.msra.mxu0 %v4440
    %5477 = vmatprep.subr.mxu0 0.0
    %5478 = vmatpush2.msra.mxu0 %v4439
    %5479 = vmatprep.subr.mxu0 0.0
    %5480 = vmatpush2.msra.mxu0 %v4438
    %5481 = vmatprep.subr.mxu0 0.0
    %5482 = vmatpush2.msra.mxu0 %v4437
    %5483 = vmatprep.subr.mxu0 0.0
    %5484 = vmatpush2.msra.mxu0 %v4436
    %5485 = vmatprep.subr.mxu0 0.0
    %5486 = vmatpush2.msra.mxu0 %v4435
    %5487 = vmatprep.mubr.f32.mxu0 %v5418
    %5488 = vmatmul.mubr.f32.gmra.mxu0 %v5417
    %v5489 = vpop.f32.mrf.mxu0
    %v5490 = vadd.f32 %v4584, %v5489
    %v5491 = vpop.f32.mrf.mxu0
    %5492 = vdwg.mxu0
    %5493 = vmatprep.subr.mxu0 0.0
    %5494 = vmatpush1.msra.mxu0 %v4466
    %5495 = vmatprep.subr.mxu0 0.0
    %5496 = vmatpush1.msra.mxu0 %v4465
    %5497 = vmatprep.subr.mxu0 0.0
    %5498 = vmatpush1.msra.mxu0 %v4464
    %5499 = vmatprep.subr.mxu0 0.0
    %5500 = vmatpush1.msra.mxu0 %v4463
    %5501 = vmatprep.subr.mxu0 0.0
    %5502 = vmatpush1.msra.mxu0 %v4462
    %5503 = vmatprep.subr.mxu0 0.0
    %5504 = vmatpush1.msra.mxu0 %v4461
    %5505 = vmatprep.subr.mxu0 0.0
    %5506 = vmatpush1.msra.mxu0 %v4460
    %5507 = vmatprep.subr.mxu0 0.0
    %5508 = vmatpush1.msra.mxu0 %v4459
    %5509 = vmatprep.subr.mxu0 0.0
    %5510 = vmatpush1.msra.mxu0 %v4458
    %5511 = vmatprep.subr.mxu0 0.0
    %5512 = vmatpush1.msra.mxu0 %v4457
    %5513 = vmatprep.subr.mxu0 0.0
    %5514 = vmatpush1.msra.mxu0 %v4456
    %5515 = vmatprep.subr.mxu0 0.0
    %5516 = vmatpush1.msra.mxu0 %v4455
    %5517 = vmatprep.subr.mxu0 0.0
    %5518 = vmatpush1.msra.mxu0 %v4454
    %5519 = vmatprep.subr.mxu0 0.0
    %5520 = vmatpush1.msra.mxu0 %v4453
    %5521 = vmatprep.subr.mxu0 0.0
    %5522 = vmatpush1.msra.mxu0 %v4452
    %5523 = vmatprep.subr.mxu0 0.0
    %5524 = vmatpush1.msra.mxu0 %v4451
    %5525 = vmatprep.subr.mxu0 0.0
    %5526 = vmatpush2.msra.mxu0 %v4482
    %5527 = vmatprep.subr.mxu0 0.0
    %5528 = vmatpush2.msra.mxu0 %v4481
    %5529 = vmatprep.subr.mxu0 0.0
    %5530 = vmatpush2.msra.mxu0 %v4480
    %5531 = vmatprep.subr.mxu0 0.0
    %5532 = vmatpush2.msra.mxu0 %v4479
    %5533 = vmatprep.subr.mxu0 0.0
    %5534 = vmatpush2.msra.mxu0 %v4478
    %5535 = vmatprep.subr.mxu0 0.0
    %5536 = vmatpush2.msra.mxu0 %v4477
    %5537 = vmatprep.subr.mxu0 0.0
    %5538 = vmatpush2.msra.mxu0 %v4476
    %5539 = vmatprep.subr.mxu0 0.0
    %5540 = vmatpush2.msra.mxu0 %v4475
    %5541 = vmatprep.subr.mxu0 0.0
    %5542 = vmatpush2.msra.mxu0 %v4474
    %5543 = vmatprep.subr.mxu0 0.0
    %5544 = vmatpush2.msra.mxu0 %v4473
    %5545 = vmatprep.subr.mxu0 0.0
    %5546 = vmatpush2.msra.mxu0 %v4472
    %5547 = vmatprep.subr.mxu0 0.0
    %5548 = vmatpush2.msra.mxu0 %v4471
    %5549 = vmatprep.subr.mxu0 0.0
    %5550 = vmatpush2.msra.mxu0 %v4470
    %5551 = vmatprep.subr.mxu0 0.0
    %5552 = vmatpush2.msra.mxu0 %v4469
    %5553 = vmatprep.subr.mxu0 0.0
    %5554 = vmatpush2.msra.mxu0 %v4468
    %5555 = vmatprep.subr.mxu0 0.0
    %5556 = vmatpush2.msra.mxu0 %v4467
    %5557 = vmatprep.mubr.f32.mxu0 %v5420
    %5558 = vmatmul.mubr.f32.gmra.mxu0 %v5419
    %v5559 = vpop.f32.mrf.mxu0
    %v5560 = vadd.f32 %v5490, %v5559
    %v5561 = vpop.f32.mrf.mxu0
    %5562 = vdwg.mxu0
    %5563 = vmatprep.subr.mxu0 0.0
    %5564 = vmatpush1.msra.mxu0 %v4498
    %5565 = vmatprep.subr.mxu0 0.0
    %5566 = vmatpush1.msra.mxu0 %v4497
    %5567 = vmatprep.subr.mxu0 0.0
    %5568 = vmatpush1.msra.mxu0 %v4496
    %5569 = vmatprep.subr.mxu0 0.0
    %5570 = vmatpush1.msra.mxu0 %v4495
    %5571 = vmatprep.subr.mxu0 0.0
    %5572 = vmatpush1.msra.mxu0 %v4494
    %5573 = vmatprep.subr.mxu0 0.0
    %5574 = vmatpush1.msra.mxu0 %v4493
    %5575 = vmatprep.subr.mxu0 0.0
    %5576 = vmatpush1.msra.mxu0 %v4492
    %5577 = vmatprep.subr.mxu0 0.0
    %5578 = vmatpush1.msra.mxu0 %v4491
    %5579 = vmatprep.subr.mxu0 0.0
    %5580 = vmatpush1.msra.mxu0 %v4490
    %5581 = vmatprep.subr.mxu0 0.0
    %5582 = vmatpush1.msra.mxu0 %v4489
    %5583 = vmatprep.subr.mxu0 0.0
    %5584 = vmatpush1.msra.mxu0 %v4488
    %5585 = vmatprep.subr.mxu0 0.0
    %5586 = vmatpush1.msra.mxu0 %v4487
    %5587 = vmatprep.subr.mxu0 0.0
    %5588 = vmatpush1.msra.mxu0 %v4486
    %5589 = vmatprep.subr.mxu0 0.0
    %5590 = vmatpush1.msra.mxu0 %v4485
    %5591 = vmatprep.subr.mxu0 0.0
    %5592 = vmatpush1.msra.mxu0 %v4484
    %5593 = vmatprep.subr.mxu0 0.0
    %5594 = vmatpush1.msra.mxu0 %v4483
    %5595 = vmatprep.subr.mxu0 0.0
    %5596 = vmatpush2.msra.mxu0 %v4514
    %5597 = vmatprep.subr.mxu0 0.0
    %5598 = vmatpush2.msra.mxu0 %v4513
    %5599 = vmatprep.subr.mxu0 0.0
    %5600 = vmatpush2.msra.mxu0 %v4512
    %5601 = vmatprep.subr.mxu0 0.0
    %5602 = vmatpush2.msra.mxu0 %v4511
    %5603 = vmatprep.subr.mxu0 0.0
    %5604 = vmatpush2.msra.mxu0 %v4510
    %5605 = vmatprep.subr.mxu0 0.0
    %5606 = vmatpush2.msra.mxu0 %v4509
    %5607 = vmatprep.subr.mxu0 0.0
    %5608 = vmatpush2.msra.mxu0 %v4508
    %5609 = vmatprep.subr.mxu0 0.0
    %5610 = vmatpush2.msra.mxu0 %v4507
    %5611 = vmatprep.subr.mxu0 0.0
    %5612 = vmatpush2.msra.mxu0 %v4506
    %5613 = vmatprep.subr.mxu0 0.0
    %5614 = vmatpush2.msra.mxu0 %v4505
    %5615 = vmatprep.subr.mxu0 0.0
    %5616 = vmatpush2.msra.mxu0 %v4504
    %5617 = vmatprep.subr.mxu0 0.0
    %5618 = vmatpush2.msra.mxu0 %v4503
    %5619 = vmatprep.subr.mxu0 0.0
    %5620 = vmatpush2.msra.mxu0 %v4502
    %5621 = vmatprep.subr.mxu0 0.0
    %5622 = vmatpush2.msra.mxu0 %v4501
    %5623 = vmatprep.subr.mxu0 0.0
    %5624 = vmatpush2.msra.mxu0 %v4500
    %5625 = vmatprep.subr.mxu0 0.0
    %5626 = vmatpush2.msra.mxu0 %v4499
    %5627 = vmatprep.mubr.f32.mxu0 %v5422
    %5628 = vmatmul.mubr.f32.gmra.mxu0 %v5421
    %v5629 = vpop.f32.mrf.mxu0
    %v5630 = vadd.f32 %v5560, %v5629
    %v5631 = vpop.f32.mrf.mxu0
    %5632 = vdwg.mxu0
    %5633 = vmax.xlane.f32.xlu0 %v5630
    %v5634 = vpop.xlane.xlu0 %5633
    %v5635 = vsub.f32 %v5630, %v5634
    %v5636 = vmul.f32 %v5635, 1.442695
    %v5637 = vpow.pop %v5636
    %5638 = vadd.xlane.f32.xlu0 %v5637
    %v5639 = vpop.xlane.xlu0 %5638
    %v5640 = vrcp.pop %v5639
    %v5641 = vmul.f32 %v5637, %v5640
    %5642 = vst [vmem:[#allocation13 + $0x18] sm:$0xff] %v5641
    %s5643 = scalar_lea.vmem [#allocation2], 4
    %v5644 = vld [vmem:[%s5643] ss:$8 sm:$0xf]
    %v5645 = vld [vmem:[%s5643] ss:$8 sm:$0x30]
    %v5646 = vor.u32 %v5644, %v5645
    %v5648 = vlaneseq
    %v5649 = vshrl.u32 %v5648, 7
    %v5650 = vsub.s32 0, %v5649
    %v5651 = vrot.slane %v5646, %v5650
    %v5652 = vlaneseq
    %v5653 = vshrl.u32 %v5652, 7
    %v5654 = vsub.s32 1, %v5653
    %v5655 = vrot.slane %v5646, %v5654
    %v5656 = vlaneseq
    %v5657 = vshrl.u32 %v5656, 7
    %v5658 = vsub.s32 2, %v5657
    %v5659 = vrot.slane %v5646, %v5658
    %v5660 = vlaneseq
    %v5661 = vshrl.u32 %v5660, 7
    %v5662 = vsub.s32 3, %v5661
    %v5663 = vrot.slane %v5646, %v5662
    %v5664 = vlaneseq
    %v5665 = vshrl.u32 %v5664, 7
    %v5666 = vsub.s32 4, %v5665
    %v5667 = vrot.slane %v5646, %v5666
    %v5668 = vlaneseq
    %v5669 = vshrl.u32 %v5668, 7
    %v5670 = vsub.s32 5, %v5669
    %v5671 = vrot.slane %v5646, %v5670
    %v5678 = vadd.f32 %v5651, %v4516
    %v5679 = vadd.f32 %v5655, %v4517
    %v5680 = vadd.f32 %v5659, %v4518
    %v5681 = vadd.f32 %v5663, %v4519
    %v5682 = vadd.f32 %v5667, %v4520
    %v5683 = vadd.f32 %v5671, %v4521
    %vm5684 = vcmp.ge.f32.partialorder %v5678, 0.0
    %vm5685 = vcmp.ge.f32.partialorder %v5679, 0.0
    %vm5686 = vcmp.ge.f32.partialorder %v5680, 0.0
    %vm5687 = vcmp.ge.f32.partialorder %v5681, 0.0
    %vm5688 = vcmp.ge.f32.partialorder %v5682, 0.0
    %vm5689 = vcmp.ge.f32.partialorder %v5683, 0.0
    %v5690 = vmul.f32 %v5678, 0.01
    %v5691 = vmul.f32 %v5679, 0.01
    %v5692 = vmul.f32 %v5680, 0.01
    %v5693 = vmul.f32 %v5681, 0.01
    %v5694 = vmul.f32 %v5682, 0.01
    %v5695 = vmul.f32 %v5683, 0.01
    %v5696 = vsel %vm5684, %v5678, %v5690
    %v5697 = vsel %vm5685, %v5679, %v5691
    %v5698 = vsel %vm5686, %v5680, %v5692
    %v5699 = vsel %vm5687, %v5681, %v5693
    %v5700 = vsel %vm5688, %v5682, %v5694
    %v5701 = vsel %vm5689, %v5683, %v5695
    %5702 = vmatprep.subr.mxu0 0.0
    %5703 = vmatpush1.msra.mxu0 %v4434
    %5704 = vmatprep.subr.mxu0 0.0
    %5705 = vmatpush1.msra.mxu0 %v4433
    %5706 = vmatprep.subr.mxu0 0.0
    %5707 = vmatpush1.msra.mxu0 %v4432
    %5708 = vmatprep.subr.mxu0 0.0
    %5709 = vmatpush1.msra.mxu0 %v4431
    %5710 = vmatprep.subr.mxu0 0.0
    %5711 = vmatpush1.msra.mxu0 %v4430
    %5712 = vmatprep.subr.mxu0 0.0
    %5713 = vmatpush1.msra.mxu0 %v4429
    %5714 = vmatprep.subr.mxu0 0.0
    %5715 = vmatpush1.msra.mxu0 %v4428
    %5716 = vmatprep.subr.mxu0 0.0
    %5717 = vmatpush1.msra.mxu0 %v4427
    %5718 = vmatprep.subr.mxu0 0.0
    %5719 = vmatpush1.msra.mxu0 %v4426
    %5720 = vmatprep.subr.mxu0 0.0
    %5721 = vmatpush1.msra.mxu0 %v4425
    %5722 = vmatprep.subr.mxu0 0.0
    %5723 = vmatpush1.msra.mxu0 %v4424
    %5724 = vmatprep.subr.mxu0 0.0
    %5725 = vmatpush1.msra.mxu0 %v4423
    %5726 = vmatprep.subr.mxu0 0.0
    %5727 = vmatpush1.msra.mxu0 %v4422
    %5728 = vmatprep.subr.mxu0 0.0
    %5729 = vmatpush1.msra.mxu0 %v4421
    %5730 = vmatprep.subr.mxu0 0.0
    %5731 = vmatpush1.msra.mxu0 %v4420
    %5732 = vmatprep.subr.mxu0 0.0
    %5733 = vmatpush1.msra.mxu0 %v4419
    %5734 = vmatprep.subr.mxu0 0.0
    %5735 = vmatpush2.msra.mxu0 %v4450
    %5736 = vmatprep.subr.mxu0 0.0
    %5737 = vmatpush2.msra.mxu0 %v4449
    %5738 = vmatprep.subr.mxu0 0.0
    %5739 = vmatpush2.msra.mxu0 %v4448
    %5740 = vmatprep.subr.mxu0 0.0
    %5741 = vmatpush2.msra.mxu0 %v4447
    %5742 = vmatprep.subr.mxu0 0.0
    %5743 = vmatpush2.msra.mxu0 %v4446
    %5744 = vmatprep.subr.mxu0 0.0
    %5745 = vmatpush2.msra.mxu0 %v4445
    %5746 = vmatprep.subr.mxu0 0.0
    %5747 = vmatpush2.msra.mxu0 %v4444
    %5748 = vmatprep.subr.mxu0 0.0
    %5749 = vmatpush2.msra.mxu0 %v4443
    %5750 = vmatprep.subr.mxu0 0.0
    %5751 = vmatpush2.msra.mxu0 %v4442
    %5752 = vmatprep.subr.mxu0 0.0
    %5753 = vmatpush2.msra.mxu0 %v4441
    %5754 = vmatprep.subr.mxu0 0.0
    %5755 = vmatpush2.msra.mxu0 %v4440
    %5756 = vmatprep.subr.mxu0 0.0
    %5757 = vmatpush2.msra.mxu0 %v4439
    %5758 = vmatprep.subr.mxu0 0.0
    %5759 = vmatpush2.msra.mxu0 %v4438
    %5760 = vmatprep.subr.mxu0 0.0
    %5761 = vmatpush2.msra.mxu0 %v4437
    %5762 = vmatprep.subr.mxu0 0.0
    %5763 = vmatpush2.msra.mxu0 %v4436
    %5764 = vmatprep.subr.mxu0 0.0
    %5765 = vmatpush2.msra.mxu0 %v4435
    %5766 = vmatprep.mubr.f32.mxu0 %v5697
    %5767 = vmatmul.mubr.f32.gmra.mxu0 %v5696
    %v5768 = vpop.f32.mrf.mxu0
    %v5769 = vadd.f32 %v4584, %v5768
    %v5770 = vpop.f32.mrf.mxu0
    %5771 = vdwg.mxu0
    %5772 = vmatprep.subr.mxu0 0.0
    %5773 = vmatpush1.msra.mxu0 %v4466
    %5774 = vmatprep.subr.mxu0 0.0
    %5775 = vmatpush1.msra.mxu0 %v4465
    %5776 = vmatprep.subr.mxu0 0.0
    %5777 = vmatpush1.msra.mxu0 %v4464
    %5778 = vmatprep.subr.mxu0 0.0
    %5779 = vmatpush1.msra.mxu0 %v4463
    %5780 = vmatprep.subr.mxu0 0.0
    %5781 = vmatpush1.msra.mxu0 %v4462
    %5782 = vmatprep.subr.mxu0 0.0
    %5783 = vmatpush1.msra.mxu0 %v4461
    %5784 = vmatprep.subr.mxu0 0.0
    %5785 = vmatpush1.msra.mxu0 %v4460
    %5786 = vmatprep.subr.mxu0 0.0
    %5787 = vmatpush1.msra.mxu0 %v4459
    %5788 = vmatprep.subr.mxu0 0.0
    %5789 = vmatpush1.msra.mxu0 %v4458
    %5790 = vmatprep.subr.mxu0 0.0
    %5791 = vmatpush1.msra.mxu0 %v4457
    %5792 = vmatprep.subr.mxu0 0.0
    %5793 = vmatpush1.msra.mxu0 %v4456
    %5794 = vmatprep.subr.mxu0 0.0
    %5795 = vmatpush1.msra.mxu0 %v4455
    %5796 = vmatprep.subr.mxu0 0.0
    %5797 = vmatpush1.msra.mxu0 %v4454
    %5798 = vmatprep.subr.mxu0 0.0
    %5799 = vmatpush1.msra.mxu0 %v4453
    %5800 = vmatprep.subr.mxu0 0.0
    %5801 = vmatpush1.msra.mxu0 %v4452
    %5802 = vmatprep.subr.mxu0 0.0
    %5803 = vmatpush1.msra.mxu0 %v4451
    %5804 = vmatprep.subr.mxu0 0.0
    %5805 = vmatpush2.msra.mxu0 %v4482
    %5806 = vmatprep.subr.mxu0 0.0
    %5807 = vmatpush2.msra.mxu0 %v4481
    %5808 = vmatprep.subr.mxu0 0.0
    %5809 = vmatpush2.msra.mxu0 %v4480
    %5810 = vmatprep.subr.mxu0 0.0
    %5811 = vmatpush2.msra.mxu0 %v4479
    %5812 = vmatprep.subr.mxu0 0.0
    %5813 = vmatpush2.msra.mxu0 %v4478
    %5814 = vmatprep.subr.mxu0 0.0
    %5815 = vmatpush2.msra.mxu0 %v4477
    %5816 = vmatprep.subr.mxu0 0.0
    %5817 = vmatpush2.msra.mxu0 %v4476
    %5818 = vmatprep.subr.mxu0 0.0
    %5819 = vmatpush2.msra.mxu0 %v4475
    %5820 = vmatprep.subr.mxu0 0.0
    %5821 = vmatpush2.msra.mxu0 %v4474
    %5822 = vmatprep.subr.mxu0 0.0
    %5823 = vmatpush2.msra.mxu0 %v4473
    %5824 = vmatprep.subr.mxu0 0.0
    %5825 = vmatpush2.msra.mxu0 %v4472
    %5826 = vmatprep.subr.mxu0 0.0
    %5827 = vmatpush2.msra.mxu0 %v4471
    %5828 = vmatprep.subr.mxu0 0.0
    %5829 = vmatpush2.msra.mxu0 %v4470
    %5830 = vmatprep.subr.mxu0 0.0
    %5831 = vmatpush2.msra.mxu0 %v4469
    %5832 = vmatprep.subr.mxu0 0.0
    %5833 = vmatpush2.msra.mxu0 %v4468
    %5834 = vmatprep.subr.mxu0 0.0
    %5835 = vmatpush2.msra.mxu0 %v4467
    %5836 = vmatprep.mubr.f32.mxu0 %v5699
    %5837 = vmatmul.mubr.f32.gmra.mxu0 %v5698
    %v5838 = vpop.f32.mrf.mxu0
    %v5839 = vadd.f32 %v5769, %v5838
    %v5840 = vpop.f32.mrf.mxu0
    %5841 = vdwg.mxu0
    %5842 = vmatprep.subr.mxu0 0.0
    %5843 = vmatpush1.msra.mxu0 %v4498
    %5844 = vmatprep.subr.mxu0 0.0
    %5845 = vmatpush1.msra.mxu0 %v4497
    %5846 = vmatprep.subr.mxu0 0.0
    %5847 = vmatpush1.msra.mxu0 %v4496
    %5848 = vmatprep.subr.mxu0 0.0
    %5849 = vmatpush1.msra.mxu0 %v4495
    %5850 = vmatprep.subr.mxu0 0.0
    %5851 = vmatpush1.msra.mxu0 %v4494
    %5852 = vmatprep.subr.mxu0 0.0
    %5853 = vmatpush1.msra.mxu0 %v4493
    %5854 = vmatprep.subr.mxu0 0.0
    %5855 = vmatpush1.msra.mxu0 %v4492
    %5856 = vmatprep.subr.mxu0 0.0
    %5857 = vmatpush1.msra.mxu0 %v4491
    %5858 = vmatprep.subr.mxu0 0.0
    %5859 = vmatpush1.msra.mxu0 %v4490
    %5860 = vmatprep.subr.mxu0 0.0
    %5861 = vmatpush1.msra.mxu0 %v4489
    %5862 = vmatprep.subr.mxu0 0.0
    %5863 = vmatpush1.msra.mxu0 %v4488
    %5864 = vmatprep.subr.mxu0 0.0
    %5865 = vmatpush1.msra.mxu0 %v4487
    %5866 = vmatprep.subr.mxu0 0.0
    %5867 = vmatpush1.msra.mxu0 %v4486
    %5868 = vmatprep.subr.mxu0 0.0
    %5869 = vmatpush1.msra.mxu0 %v4485
    %5870 = vmatprep.subr.mxu0 0.0
    %5871 = vmatpush1.msra.mxu0 %v4484
    %5872 = vmatprep.subr.mxu0 0.0
    %5873 = vmatpush1.msra.mxu0 %v4483
    %5874 = vmatprep.subr.mxu0 0.0
    %5875 = vmatpush2.msra.mxu0 %v4514
    %5876 = vmatprep.subr.mxu0 0.0
    %5877 = vmatpush2.msra.mxu0 %v4513
    %5878 = vmatprep.subr.mxu0 0.0
    %5879 = vmatpush2.msra.mxu0 %v4512
    %5880 = vmatprep.subr.mxu0 0.0
    %5881 = vmatpush2.msra.mxu0 %v4511
    %5882 = vmatprep.subr.mxu0 0.0
    %5883 = vmatpush2.msra.mxu0 %v4510
    %5884 = vmatprep.subr.mxu0 0.0
    %5885 = vmatpush2.msra.mxu0 %v4509
    %5886 = vmatprep.subr.mxu0 0.0
    %5887 = vmatpush2.msra.mxu0 %v4508
    %5888 = vmatprep.subr.mxu0 0.0
    %5889 = vmatpush2.msra.mxu0 %v4507
    %5890 = vmatprep.subr.mxu0 0.0
    %5891 = vmatpush2.msra.mxu0 %v4506
    %5892 = vmatprep.subr.mxu0 0.0
    %5893 = vmatpush2.msra.mxu0 %v4505
    %5894 = vmatprep.subr.mxu0 0.0
    %5895 = vmatpush2.msra.mxu0 %v4504
    %5896 = vmatprep.subr.mxu0 0.0
    %5897 = vmatpush2.msra.mxu0 %v4503
    %5898 = vmatprep.subr.mxu0 0.0
    %5899 = vmatpush2.msra.mxu0 %v4502
    %5900 = vmatprep.subr.mxu0 0.0
    %5901 = vmatpush2.msra.mxu0 %v4501
    %5902 = vmatprep.subr.mxu0 0.0
    %5903 = vmatpush2.msra.mxu0 %v4500
    %5904 = vmatprep.subr.mxu0 0.0
    %5905 = vmatpush2.msra.mxu0 %v4499
    %5906 = vmatprep.mubr.f32.mxu0 %v5701
    %5907 = vmatmul.mubr.f32.gmra.mxu0 %v5700
    %v5908 = vpop.f32.mrf.mxu0
    %v5909 = vadd.f32 %v5839, %v5908
    %v5910 = vpop.f32.mrf.mxu0
    %5911 = vdwg.mxu0
    %5912 = vmax.xlane.f32.xlu0 %v5909
    %v5913 = vpop.xlane.xlu0 %5912
    %v5914 = vsub.f32 %v5909, %v5913
    %v5915 = vmul.f32 %v5914, 1.442695
    %v5916 = vpow.pop %v5915
    %5917 = vadd.xlane.f32.xlu0 %v5916
    %v5918 = vpop.xlane.xlu0 %5917
    %v5919 = vrcp.pop %v5918
    %v5920 = vmul.f32 %v5916, %v5919
    %5921 = vst [vmem:[#allocation13 + $0x20] sm:$0xff] %v5920
    %s5922 = scalar_lea.vmem [#allocation2], 5
    %v5923 = vld [vmem:[%s5922] ss:$8 sm:$0xf]
    %v5924 = vld [vmem:[%s5922] ss:$8 sm:$0x30]
    %v5925 = vor.u32 %v5923, %v5924
    %v5927 = vlaneseq
    %v5928 = vshrl.u32 %v5927, 7
    %v5929 = vsub.s32 0, %v5928
    %v5930 = vrot.slane %v5925, %v5929
    %v5931 = vlaneseq
    %v5932 = vshrl.u32 %v5931, 7
    %v5933 = vsub.s32 1, %v5932
    %v5934 = vrot.slane %v5925, %v5933
    %v5935 = vlaneseq
    %v5936 = vshrl.u32 %v5935, 7
    %v5937 = vsub.s32 2, %v5936
    %v5938 = vrot.slane %v5925, %v5937
    %v5939 = vlaneseq
    %v5940 = vshrl.u32 %v5939, 7
    %v5941 = vsub.s32 3, %v5940
    %v5942 = vrot.slane %v5925, %v5941
    %v5943 = vlaneseq
    %v5944 = vshrl.u32 %v5943, 7
    %v5945 = vsub.s32 4, %v5944
    %v5946 = vrot.slane %v5925, %v5945
    %v5947 = vlaneseq
    %v5948 = vshrl.u32 %v5947, 7
    %v5949 = vsub.s32 5, %v5948
    %v5950 = vrot.slane %v5925, %v5949
    %v5957 = vadd.f32 %v5930, %v4516
    %v5958 = vadd.f32 %v5934, %v4517
    %v5959 = vadd.f32 %v5938, %v4518
    %v5960 = vadd.f32 %v5942, %v4519
    %v5961 = vadd.f32 %v5946, %v4520
    %v5962 = vadd.f32 %v5950, %v4521
    %vm5963 = vcmp.ge.f32.partialorder %v5957, 0.0
    %vm5964 = vcmp.ge.f32.partialorder %v5958, 0.0
    %vm5965 = vcmp.ge.f32.partialorder %v5959, 0.0
    %vm5966 = vcmp.ge.f32.partialorder %v5960, 0.0
    %vm5967 = vcmp.ge.f32.partialorder %v5961, 0.0
    %vm5968 = vcmp.ge.f32.partialorder %v5962, 0.0
    %v5969 = vmul.f32 %v5957, 0.01
    %v5970 = vmul.f32 %v5958, 0.01
    %v5971 = vmul.f32 %v5959, 0.01
    %v5972 = vmul.f32 %v5960, 0.01
    %v5973 = vmul.f32 %v5961, 0.01
    %v5974 = vmul.f32 %v5962, 0.01
    %v5975 = vsel %vm5963, %v5957, %v5969
    %v5976 = vsel %vm5964, %v5958, %v5970
    %v5977 = vsel %vm5965, %v5959, %v5971
    %v5978 = vsel %vm5966, %v5960, %v5972
    %v5979 = vsel %vm5967, %v5961, %v5973
    %v5980 = vsel %vm5968, %v5962, %v5974
    %5981 = vmatprep.subr.mxu0 0.0
    %5982 = vmatpush1.msra.mxu0 %v4434
    %5983 = vmatprep.subr.mxu0 0.0
    %5984 = vmatpush1.msra.mxu0 %v4433
    %5985 = vmatprep.subr.mxu0 0.0
    %5986 = vmatpush1.msra.mxu0 %v4432
    %5987 = vmatprep.subr.mxu0 0.0
    %5988 = vmatpush1.msra.mxu0 %v4431
    %5989 = vmatprep.subr.mxu0 0.0
    %5990 = vmatpush1.msra.mxu0 %v4430
    %5991 = vmatprep.subr.mxu0 0.0
    %5992 = vmatpush1.msra.mxu0 %v4429
    %5993 = vmatprep.subr.mxu0 0.0
    %5994 = vmatpush1.msra.mxu0 %v4428
    %5995 = vmatprep.subr.mxu0 0.0
    %5996 = vmatpush1.msra.mxu0 %v4427
    %5997 = vmatprep.subr.mxu0 0.0
    %5998 = vmatpush1.msra.mxu0 %v4426
    %5999 = vmatprep.subr.mxu0 0.0
    %6000 = vmatpush1.msra.mxu0 %v4425
    %6001 = vmatprep.subr.mxu0 0.0
    %6002 = vmatpush1.msra.mxu0 %v4424
    %6003 = vmatprep.subr.mxu0 0.0
    %6004 = vmatpush1.msra.mxu0 %v4423
    %6005 = vmatprep.subr.mxu0 0.0
    %6006 = vmatpush1.msra.mxu0 %v4422
    %6007 = vmatprep.subr.mxu0 0.0
    %6008 = vmatpush1.msra.mxu0 %v4421
    %6009 = vmatprep.subr.mxu0 0.0
    %6010 = vmatpush1.msra.mxu0 %v4420
    %6011 = vmatprep.subr.mxu0 0.0
    %6012 = vmatpush1.msra.mxu0 %v4419
    %6013 = vmatprep.subr.mxu0 0.0
    %6014 = vmatpush2.msra.mxu0 %v4450
    %6015 = vmatprep.subr.mxu0 0.0
    %6016 = vmatpush2.msra.mxu0 %v4449
    %6017 = vmatprep.subr.mxu0 0.0
    %6018 = vmatpush2.msra.mxu0 %v4448
    %6019 = vmatprep.subr.mxu0 0.0
    %6020 = vmatpush2.msra.mxu0 %v4447
    %6021 = vmatprep.subr.mxu0 0.0
    %6022 = vmatpush2.msra.mxu0 %v4446
    %6023 = vmatprep.subr.mxu0 0.0
    %6024 = vmatpush2.msra.mxu0 %v4445
    %6025 = vmatprep.subr.mxu0 0.0
    %6026 = vmatpush2.msra.mxu0 %v4444
    %6027 = vmatprep.subr.mxu0 0.0
    %6028 = vmatpush2.msra.mxu0 %v4443
    %6029 = vmatprep.subr.mxu0 0.0
    %6030 = vmatpush2.msra.mxu0 %v4442
    %6031 = vmatprep.subr.mxu0 0.0
    %6032 = vmatpush2.msra.mxu0 %v4441
    %6033 = vmatprep.subr.mxu0 0.0
    %6034 = vmatpush2.msra.mxu0 %v4440
    %6035 = vmatprep.subr.mxu0 0.0
    %6036 = vmatpush2.msra.mxu0 %v4439
    %6037 = vmatprep.subr.mxu0 0.0
    %6038 = vmatpush2.msra.mxu0 %v4438
    %6039 = vmatprep.subr.mxu0 0.0
    %6040 = vmatpush2.msra.mxu0 %v4437
    %6041 = vmatprep.subr.mxu0 0.0
    %6042 = vmatpush2.msra.mxu0 %v4436
    %6043 = vmatprep.subr.mxu0 0.0
    %6044 = vmatpush2.msra.mxu0 %v4435
    %6045 = vmatprep.mubr.f32.mxu0 %v5976
    %6046 = vmatmul.mubr.f32.gmra.mxu0 %v5975
    %v6047 = vpop.f32.mrf.mxu0
    %v6048 = vadd.f32 %v4584, %v6047
    %v6049 = vpop.f32.mrf.mxu0
    %6050 = vdwg.mxu0
    %6051 = vmatprep.subr.mxu0 0.0
    %6052 = vmatpush1.msra.mxu0 %v4466
    %6053 = vmatprep.subr.mxu0 0.0
    %6054 = vmatpush1.msra.mxu0 %v4465
    %6055 = vmatprep.subr.mxu0 0.0
    %6056 = vmatpush1.msra.mxu0 %v4464
    %6057 = vmatprep.subr.mxu0 0.0
    %6058 = vmatpush1.msra.mxu0 %v4463
    %6059 = vmatprep.subr.mxu0 0.0
    %6060 = vmatpush1.msra.mxu0 %v4462
    %6061 = vmatprep.subr.mxu0 0.0
    %6062 = vmatpush1.msra.mxu0 %v4461
    %6063 = vmatprep.subr.mxu0 0.0
    %6064 = vmatpush1.msra.mxu0 %v4460
    %6065 = vmatprep.subr.mxu0 0.0
    %6066 = vmatpush1.msra.mxu0 %v4459
    %6067 = vmatprep.subr.mxu0 0.0
    %6068 = vmatpush1.msra.mxu0 %v4458
    %6069 = vmatprep.subr.mxu0 0.0
    %6070 = vmatpush1.msra.mxu0 %v4457
    %6071 = vmatprep.subr.mxu0 0.0
    %6072 = vmatpush1.msra.mxu0 %v4456
    %6073 = vmatprep.subr.mxu0 0.0
    %6074 = vmatpush1.msra.mxu0 %v4455
    %6075 = vmatprep.subr.mxu0 0.0
    %6076 = vmatpush1.msra.mxu0 %v4454
    %6077 = vmatprep.subr.mxu0 0.0
    %6078 = vmatpush1.msra.mxu0 %v4453
    %6079 = vmatprep.subr.mxu0 0.0
    %6080 = vmatpush1.msra.mxu0 %v4452
    %6081 = vmatprep.subr.mxu0 0.0
    %6082 = vmatpush1.msra.mxu0 %v4451
    %6083 = vmatprep.subr.mxu0 0.0
    %6084 = vmatpush2.msra.mxu0 %v4482
    %6085 = vmatprep.subr.mxu0 0.0
    %6086 = vmatpush2.msra.mxu0 %v4481
    %6087 = vmatprep.subr.mxu0 0.0
    %6088 = vmatpush2.msra.mxu0 %v4480
    %6089 = vmatprep.subr.mxu0 0.0
    %6090 = vmatpush2.msra.mxu0 %v4479
    %6091 = vmatprep.subr.mxu0 0.0
    %6092 = vmatpush2.msra.mxu0 %v4478
    %6093 = vmatprep.subr.mxu0 0.0
    %6094 = vmatpush2.msra.mxu0 %v4477
    %6095 = vmatprep.subr.mxu0 0.0
    %6096 = vmatpush2.msra.mxu0 %v4476
    %6097 = vmatprep.subr.mxu0 0.0
    %6098 = vmatpush2.msra.mxu0 %v4475
    %6099 = vmatprep.subr.mxu0 0.0
    %6100 = vmatpush2.msra.mxu0 %v4474
    %6101 = vmatprep.subr.mxu0 0.0
    %6102 = vmatpush2.msra.mxu0 %v4473
    %6103 = vmatprep.subr.mxu0 0.0
    %6104 = vmatpush2.msra.mxu0 %v4472
    %6105 = vmatprep.subr.mxu0 0.0
    %6106 = vmatpush2.msra.mxu0 %v4471
    %6107 = vmatprep.subr.mxu0 0.0
    %6108 = vmatpush2.msra.mxu0 %v4470
    %6109 = vmatprep.subr.mxu0 0.0
    %6110 = vmatpush2.msra.mxu0 %v4469
    %6111 = vmatprep.subr.mxu0 0.0
    %6112 = vmatpush2.msra.mxu0 %v4468
    %6113 = vmatprep.subr.mxu0 0.0
    %6114 = vmatpush2.msra.mxu0 %v4467
    %6115 = vmatprep.mubr.f32.mxu0 %v5978
    %6116 = vmatmul.mubr.f32.gmra.mxu0 %v5977
    %v6117 = vpop.f32.mrf.mxu0
    %v6118 = vadd.f32 %v6048, %v6117
    %v6119 = vpop.f32.mrf.mxu0
    %6120 = vdwg.mxu0
    %6121 = vmatprep.subr.mxu0 0.0
    %6122 = vmatpush1.msra.mxu0 %v4498
    %6123 = vmatprep.subr.mxu0 0.0
    %6124 = vmatpush1.msra.mxu0 %v4497
    %6125 = vmatprep.subr.mxu0 0.0
    %6126 = vmatpush1.msra.mxu0 %v4496
    %6127 = vmatprep.subr.mxu0 0.0
    %6128 = vmatpush1.msra.mxu0 %v4495
    %6129 = vmatprep.subr.mxu0 0.0
    %6130 = vmatpush1.msra.mxu0 %v4494
    %6131 = vmatprep.subr.mxu0 0.0
    %6132 = vmatpush1.msra.mxu0 %v4493
    %6133 = vmatprep.subr.mxu0 0.0
    %6134 = vmatpush1.msra.mxu0 %v4492
    %6135 = vmatprep.subr.mxu0 0.0
    %6136 = vmatpush1.msra.mxu0 %v4491
    %6137 = vmatprep.subr.mxu0 0.0
    %6138 = vmatpush1.msra.mxu0 %v4490
    %6139 = vmatprep.subr.mxu0 0.0
    %6140 = vmatpush1.msra.mxu0 %v4489
    %6141 = vmatprep.subr.mxu0 0.0
    %6142 = vmatpush1.msra.mxu0 %v4488
    %6143 = vmatprep.subr.mxu0 0.0
    %6144 = vmatpush1.msra.mxu0 %v4487
    %6145 = vmatprep.subr.mxu0 0.0
    %6146 = vmatpush1.msra.mxu0 %v4486
    %6147 = vmatprep.subr.mxu0 0.0
    %6148 = vmatpush1.msra.mxu0 %v4485
    %6149 = vmatprep.subr.mxu0 0.0
    %6150 = vmatpush1.msra.mxu0 %v4484
    %6151 = vmatprep.subr.mxu0 0.0
    %6152 = vmatpush1.msra.mxu0 %v4483
    %6153 = vmatprep.subr.mxu0 0.0
    %6154 = vmatpush2.msra.mxu0 %v4514
    %6155 = vmatprep.subr.mxu0 0.0
    %6156 = vmatpush2.msra.mxu0 %v4513
    %6157 = vmatprep.subr.mxu0 0.0
    %6158 = vmatpush2.msra.mxu0 %v4512
    %6159 = vmatprep.subr.mxu0 0.0
    %6160 = vmatpush2.msra.mxu0 %v4511
    %6161 = vmatprep.subr.mxu0 0.0
    %6162 = vmatpush2.msra.mxu0 %v4510
    %6163 = vmatprep.subr.mxu0 0.0
    %6164 = vmatpush2.msra.mxu0 %v4509
    %6165 = vmatprep.subr.mxu0 0.0
    %6166 = vmatpush2.msra.mxu0 %v4508
    %6167 = vmatprep.subr.mxu0 0.0
    %6168 = vmatpush2.msra.mxu0 %v4507
    %6169 = vmatprep.subr.mxu0 0.0
    %6170 = vmatpush2.msra.mxu0 %v4506
    %6171 = vmatprep.subr.mxu0 0.0
    %6172 = vmatpush2.msra.mxu0 %v4505
    %6173 = vmatprep.subr.mxu0 0.0
    %6174 = vmatpush2.msra.mxu0 %v4504
    %6175 = vmatprep.subr.mxu0 0.0
    %6176 = vmatpush2.msra.mxu0 %v4503
    %6177 = vmatprep.subr.mxu0 0.0
    %6178 = vmatpush2.msra.mxu0 %v4502
    %6179 = vmatprep.subr.mxu0 0.0
    %6180 = vmatpush2.msra.mxu0 %v4501
    %6181 = vmatprep.subr.mxu0 0.0
    %6182 = vmatpush2.msra.mxu0 %v4500
    %6183 = vmatprep.subr.mxu0 0.0
    %6184 = vmatpush2.msra.mxu0 %v4499
    %6185 = vmatprep.mubr.f32.mxu0 %v5980
    %6186 = vmatmul.mubr.f32.gmra.mxu0 %v5979
    %v6187 = vpop.f32.mrf.mxu0
    %v6188 = vadd.f32 %v6118, %v6187
    %v6189 = vpop.f32.mrf.mxu0
    %6190 = vdwg.mxu0
    %6191 = vmax.xlane.f32.xlu0 %v6188
    %v6192 = vpop.xlane.xlu0 %6191
    %v6193 = vsub.f32 %v6188, %v6192
    %v6194 = vmul.f32 %v6193, 1.442695
    %v6195 = vpow.pop %v6194
    %6196 = vadd.xlane.f32.xlu0 %v6195
    %v6197 = vpop.xlane.xlu0 %6196
    %v6198 = vrcp.pop %v6197
    %v6199 = vmul.f32 %v6195, %v6198
    %6200 = vst [vmem:[#allocation13 + $0x28] sm:$0xff] %v6199
    %s6201 = scalar_lea.vmem [#allocation2], 6
    %v6202 = vld [vmem:[%s6201] ss:$8 sm:$0xf]
    %v6203 = vld [vmem:[%s6201] ss:$8 sm:$0x30]
    %v6204 = vor.u32 %v6202, %v6203
    %v6206 = vlaneseq
    %v6207 = vshrl.u32 %v6206, 7
    %v6208 = vsub.s32 0, %v6207
    %v6209 = vrot.slane %v6204, %v6208
    %v6210 = vlaneseq
    %v6211 = vshrl.u32 %v6210, 7
    %v6212 = vsub.s32 1, %v6211
    %v6213 = vrot.slane %v6204, %v6212
    %v6214 = vlaneseq
    %v6215 = vshrl.u32 %v6214, 7
    %v6216 = vsub.s32 2, %v6215
    %v6217 = vrot.slane %v6204, %v6216
    %v6218 = vlaneseq
    %v6219 = vshrl.u32 %v6218, 7
    %v6220 = vsub.s32 3, %v6219
    %v6221 = vrot.slane %v6204, %v6220
    %v6222 = vlaneseq
    %v6223 = vshrl.u32 %v6222, 7
    %v6224 = vsub.s32 4, %v6223
    %v6225 = vrot.slane %v6204, %v6224
    %v6226 = vlaneseq
    %v6227 = vshrl.u32 %v6226, 7
    %v6228 = vsub.s32 5, %v6227
    %v6229 = vrot.slane %v6204, %v6228
    %v6236 = vadd.f32 %v6209, %v4516
    %v6237 = vadd.f32 %v6213, %v4517
    %v6238 = vadd.f32 %v6217, %v4518
    %v6239 = vadd.f32 %v6221, %v4519
    %v6240 = vadd.f32 %v6225, %v4520
    %v6241 = vadd.f32 %v6229, %v4521
    %vm6242 = vcmp.ge.f32.partialorder %v6236, 0.0
    %vm6243 = vcmp.ge.f32.partialorder %v6237, 0.0
    %vm6244 = vcmp.ge.f32.partialorder %v6238, 0.0
    %vm6245 = vcmp.ge.f32.partialorder %v6239, 0.0
    %vm6246 = vcmp.ge.f32.partialorder %v6240, 0.0
    %vm6247 = vcmp.ge.f32.partialorder %v6241, 0.0
    %v6248 = vmul.f32 %v6236, 0.01
    %v6249 = vmul.f32 %v6237, 0.01
    %v6250 = vmul.f32 %v6238, 0.01
    %v6251 = vmul.f32 %v6239, 0.01
    %v6252 = vmul.f32 %v6240, 0.01
    %v6253 = vmul.f32 %v6241, 0.01
    %v6254 = vsel %vm6242, %v6236, %v6248
    %v6255 = vsel %vm6243, %v6237, %v6249
    %v6256 = vsel %vm6244, %v6238, %v6250
    %v6257 = vsel %vm6245, %v6239, %v6251
    %v6258 = vsel %vm6246, %v6240, %v6252
    %v6259 = vsel %vm6247, %v6241, %v6253
    %6260 = vmatprep.subr.mxu0 0.0
    %6261 = vmatpush1.msra.mxu0 %v4434
    %6262 = vmatprep.subr.mxu0 0.0
    %6263 = vmatpush1.msra.mxu0 %v4433
    %6264 = vmatprep.subr.mxu0 0.0
    %6265 = vmatpush1.msra.mxu0 %v4432
    %6266 = vmatprep.subr.mxu0 0.0
    %6267 = vmatpush1.msra.mxu0 %v4431
    %6268 = vmatprep.subr.mxu0 0.0
    %6269 = vmatpush1.msra.mxu0 %v4430
    %6270 = vmatprep.subr.mxu0 0.0
    %6271 = vmatpush1.msra.mxu0 %v4429
    %6272 = vmatprep.subr.mxu0 0.0
    %6273 = vmatpush1.msra.mxu0 %v4428
    %6274 = vmatprep.subr.mxu0 0.0
    %6275 = vmatpush1.msra.mxu0 %v4427
    %6276 = vmatprep.subr.mxu0 0.0
    %6277 = vmatpush1.msra.mxu0 %v4426
    %6278 = vmatprep.subr.mxu0 0.0
    %6279 = vmatpush1.msra.mxu0 %v4425
    %6280 = vmatprep.subr.mxu0 0.0
    %6281 = vmatpush1.msra.mxu0 %v4424
    %6282 = vmatprep.subr.mxu0 0.0
    %6283 = vmatpush1.msra.mxu0 %v4423
    %6284 = vmatprep.subr.mxu0 0.0
    %6285 = vmatpush1.msra.mxu0 %v4422
    %6286 = vmatprep.subr.mxu0 0.0
    %6287 = vmatpush1.msra.mxu0 %v4421
    %6288 = vmatprep.subr.mxu0 0.0
    %6289 = vmatpush1.msra.mxu0 %v4420
    %6290 = vmatprep.subr.mxu0 0.0
    %6291 = vmatpush1.msra.mxu0 %v4419
    %6292 = vmatprep.subr.mxu0 0.0
    %6293 = vmatpush2.msra.mxu0 %v4450
    %6294 = vmatprep.subr.mxu0 0.0
    %6295 = vmatpush2.msra.mxu0 %v4449
    %6296 = vmatprep.subr.mxu0 0.0
    %6297 = vmatpush2.msra.mxu0 %v4448
    %6298 = vmatprep.subr.mxu0 0.0
    %6299 = vmatpush2.msra.mxu0 %v4447
    %6300 = vmatprep.subr.mxu0 0.0
    %6301 = vmatpush2.msra.mxu0 %v4446
    %6302 = vmatprep.subr.mxu0 0.0
    %6303 = vmatpush2.msra.mxu0 %v4445
    %6304 = vmatprep.subr.mxu0 0.0
    %6305 = vmatpush2.msra.mxu0 %v4444
    %6306 = vmatprep.subr.mxu0 0.0
    %6307 = vmatpush2.msra.mxu0 %v4443
    %6308 = vmatprep.subr.mxu0 0.0
    %6309 = vmatpush2.msra.mxu0 %v4442
    %6310 = vmatprep.subr.mxu0 0.0
    %6311 = vmatpush2.msra.mxu0 %v4441
    %6312 = vmatprep.subr.mxu0 0.0
    %6313 = vmatpush2.msra.mxu0 %v4440
    %6314 = vmatprep.subr.mxu0 0.0
    %6315 = vmatpush2.msra.mxu0 %v4439
    %6316 = vmatprep.subr.mxu0 0.0
    %6317 = vmatpush2.msra.mxu0 %v4438
    %6318 = vmatprep.subr.mxu0 0.0
    %6319 = vmatpush2.msra.mxu0 %v4437
    %6320 = vmatprep.subr.mxu0 0.0
    %6321 = vmatpush2.msra.mxu0 %v4436
    %6322 = vmatprep.subr.mxu0 0.0
    %6323 = vmatpush2.msra.mxu0 %v4435
    %6324 = vmatprep.mubr.f32.mxu0 %v6255
    %6325 = vmatmul.mubr.f32.gmra.mxu0 %v6254
    %v6326 = vpop.f32.mrf.mxu0
    %v6327 = vadd.f32 %v4584, %v6326
    %v6328 = vpop.f32.mrf.mxu0
    %6329 = vdwg.mxu0
    %6330 = vmatprep.subr.mxu0 0.0
    %6331 = vmatpush1.msra.mxu0 %v4466
    %6332 = vmatprep.subr.mxu0 0.0
    %6333 = vmatpush1.msra.mxu0 %v4465
    %6334 = vmatprep.subr.mxu0 0.0
    %6335 = vmatpush1.msra.mxu0 %v4464
    %6336 = vmatprep.subr.mxu0 0.0
    %6337 = vmatpush1.msra.mxu0 %v4463
    %6338 = vmatprep.subr.mxu0 0.0
    %6339 = vmatpush1.msra.mxu0 %v4462
    %6340 = vmatprep.subr.mxu0 0.0
    %6341 = vmatpush1.msra.mxu0 %v4461
    %6342 = vmatprep.subr.mxu0 0.0
    %6343 = vmatpush1.msra.mxu0 %v4460
    %6344 = vmatprep.subr.mxu0 0.0
    %6345 = vmatpush1.msra.mxu0 %v4459
    %6346 = vmatprep.subr.mxu0 0.0
    %6347 = vmatpush1.msra.mxu0 %v4458
    %6348 = vmatprep.subr.mxu0 0.0
    %6349 = vmatpush1.msra.mxu0 %v4457
    %6350 = vmatprep.subr.mxu0 0.0
    %6351 = vmatpush1.msra.mxu0 %v4456
    %6352 = vmatprep.subr.mxu0 0.0
    %6353 = vmatpush1.msra.mxu0 %v4455
    %6354 = vmatprep.subr.mxu0 0.0
    %6355 = vmatpush1.msra.mxu0 %v4454
    %6356 = vmatprep.subr.mxu0 0.0
    %6357 = vmatpush1.msra.mxu0 %v4453
    %6358 = vmatprep.subr.mxu0 0.0
    %6359 = vmatpush1.msra.mxu0 %v4452
    %6360 = vmatprep.subr.mxu0 0.0
    %6361 = vmatpush1.msra.mxu0 %v4451
    %6362 = vmatprep.subr.mxu0 0.0
    %6363 = vmatpush2.msra.mxu0 %v4482
    %6364 = vmatprep.subr.mxu0 0.0
    %6365 = vmatpush2.msra.mxu0 %v4481
    %6366 = vmatprep.subr.mxu0 0.0
    %6367 = vmatpush2.msra.mxu0 %v4480
    %6368 = vmatprep.subr.mxu0 0.0
    %6369 = vmatpush2.msra.mxu0 %v4479
    %6370 = vmatprep.subr.mxu0 0.0
    %6371 = vmatpush2.msra.mxu0 %v4478
    %6372 = vmatprep.subr.mxu0 0.0
    %6373 = vmatpush2.msra.mxu0 %v4477
    %6374 = vmatprep.subr.mxu0 0.0
    %6375 = vmatpush2.msra.mxu0 %v4476
    %6376 = vmatprep.subr.mxu0 0.0
    %6377 = vmatpush2.msra.mxu0 %v4475
    %6378 = vmatprep.subr.mxu0 0.0
    %6379 = vmatpush2.msra.mxu0 %v4474
    %6380 = vmatprep.subr.mxu0 0.0
    %6381 = vmatpush2.msra.mxu0 %v4473
    %6382 = vmatprep.subr.mxu0 0.0
    %6383 = vmatpush2.msra.mxu0 %v4472
    %6384 = vmatprep.subr.mxu0 0.0
    %6385 = vmatpush2.msra.mxu0 %v4471
    %6386 = vmatprep.subr.mxu0 0.0
    %6387 = vmatpush2.msra.mxu0 %v4470
    %6388 = vmatprep.subr.mxu0 0.0
    %6389 = vmatpush2.msra.mxu0 %v4469
    %6390 = vmatprep.subr.mxu0 0.0
    %6391 = vmatpush2.msra.mxu0 %v4468
    %6392 = vmatprep.subr.mxu0 0.0
    %6393 = vmatpush2.msra.mxu0 %v4467
    %6394 = vmatprep.mubr.f32.mxu0 %v6257
    %6395 = vmatmul.mubr.f32.gmra.mxu0 %v6256
    %v6396 = vpop.f32.mrf.mxu0
    %v6397 = vadd.f32 %v6327, %v6396
    %v6398 = vpop.f32.mrf.mxu0
    %6399 = vdwg.mxu0
    %6400 = vmatprep.subr.mxu0 0.0
    %6401 = vmatpush1.msra.mxu0 %v4498
    %6402 = vmatprep.subr.mxu0 0.0
    %6403 = vmatpush1.msra.mxu0 %v4497
    %6404 = vmatprep.subr.mxu0 0.0
    %6405 = vmatpush1.msra.mxu0 %v4496
    %6406 = vmatprep.subr.mxu0 0.0
    %6407 = vmatpush1.msra.mxu0 %v4495
    %6408 = vmatprep.subr.mxu0 0.0
    %6409 = vmatpush1.msra.mxu0 %v4494
    %6410 = vmatprep.subr.mxu0 0.0
    %6411 = vmatpush1.msra.mxu0 %v4493
    %6412 = vmatprep.subr.mxu0 0.0
    %6413 = vmatpush1.msra.mxu0 %v4492
    %6414 = vmatprep.subr.mxu0 0.0
    %6415 = vmatpush1.msra.mxu0 %v4491
    %6416 = vmatprep.subr.mxu0 0.0
    %6417 = vmatpush1.msra.mxu0 %v4490
    %6418 = vmatprep.subr.mxu0 0.0
    %6419 = vmatpush1.msra.mxu0 %v4489
    %6420 = vmatprep.subr.mxu0 0.0
    %6421 = vmatpush1.msra.mxu0 %v4488
    %6422 = vmatprep.subr.mxu0 0.0
    %6423 = vmatpush1.msra.mxu0 %v4487
    %6424 = vmatprep.subr.mxu0 0.0
    %6425 = vmatpush1.msra.mxu0 %v4486
    %6426 = vmatprep.subr.mxu0 0.0
    %6427 = vmatpush1.msra.mxu0 %v4485
    %6428 = vmatprep.subr.mxu0 0.0
    %6429 = vmatpush1.msra.mxu0 %v4484
    %6430 = vmatprep.subr.mxu0 0.0
    %6431 = vmatpush1.msra.mxu0 %v4483
    %6432 = vmatprep.subr.mxu0 0.0
    %6433 = vmatpush2.msra.mxu0 %v4514
    %6434 = vmatprep.subr.mxu0 0.0
    %6435 = vmatpush2.msra.mxu0 %v4513
    %6436 = vmatprep.subr.mxu0 0.0
    %6437 = vmatpush2.msra.mxu0 %v4512
    %6438 = vmatprep.subr.mxu0 0.0
    %6439 = vmatpush2.msra.mxu0 %v4511
    %6440 = vmatprep.subr.mxu0 0.0
    %6441 = vmatpush2.msra.mxu0 %v4510
    %6442 = vmatprep.subr.mxu0 0.0
    %6443 = vmatpush2.msra.mxu0 %v4509
    %6444 = vmatprep.subr.mxu0 0.0
    %6445 = vmatpush2.msra.mxu0 %v4508
    %6446 = vmatprep.subr.mxu0 0.0
    %6447 = vmatpush2.msra.mxu0 %v4507
    %6448 = vmatprep.subr.mxu0 0.0
    %6449 = vmatpush2.msra.mxu0 %v4506
    %6450 = vmatprep.subr.mxu0 0.0
    %6451 = vmatpush2.msra.mxu0 %v4505
    %6452 = vmatprep.subr.mxu0 0.0
    %6453 = vmatpush2.msra.mxu0 %v4504
    %6454 = vmatprep.subr.mxu0 0.0
    %6455 = vmatpush2.msra.mxu0 %v4503
    %6456 = vmatprep.subr.mxu0 0.0
    %6457 = vmatpush2.msra.mxu0 %v4502
    %6458 = vmatprep.subr.mxu0 0.0
    %6459 = vmatpush2.msra.mxu0 %v4501
    %6460 = vmatprep.subr.mxu0 0.0
    %6461 = vmatpush2.msra.mxu0 %v4500
    %6462 = vmatprep.subr.mxu0 0.0
    %6463 = vmatpush2.msra.mxu0 %v4499
    %6464 = vmatprep.mubr.f32.mxu0 %v6259
    %6465 = vmatmul.mubr.f32.gmra.mxu0 %v6258
    %v6466 = vpop.f32.mrf.mxu0
    %v6467 = vadd.f32 %v6397, %v6466
    %v6468 = vpop.f32.mrf.mxu0
    %6469 = vdwg.mxu0
    %6470 = vmax.xlane.f32.xlu0 %v6467
    %v6471 = vpop.xlane.xlu0 %6470
    %v6472 = vsub.f32 %v6467, %v6471
    %v6473 = vmul.f32 %v6472, 1.442695
    %v6474 = vpow.pop %v6473
    %6475 = vadd.xlane.f32.xlu0 %v6474
    %v6476 = vpop.xlane.xlu0 %6475
    %v6477 = vrcp.pop %v6476
    %v6478 = vmul.f32 %v6474, %v6477
    %6479 = vst [vmem:[#allocation13 + $0x30] sm:$0xff] %v6478
    %s6480 = scalar_lea.vmem [#allocation2], 7
    %v6481 = vld [vmem:[%s6480] ss:$8 sm:$0xf]
    %v6482 = vld [vmem:[%s6480] ss:$8 sm:$0x30]
    %v6483 = vor.u32 %v6481, %v6482
    %v6485 = vlaneseq
    %v6486 = vshrl.u32 %v6485, 7
    %v6487 = vsub.s32 0, %v6486
    %v6488 = vrot.slane %v6483, %v6487
    %v6489 = vlaneseq
    %v6490 = vshrl.u32 %v6489, 7
    %v6491 = vsub.s32 1, %v6490
    %v6492 = vrot.slane %v6483, %v6491
    %v6493 = vlaneseq
    %v6494 = vshrl.u32 %v6493, 7
    %v6495 = vsub.s32 2, %v6494
    %v6496 = vrot.slane %v6483, %v6495
    %v6497 = vlaneseq
    %v6498 = vshrl.u32 %v6497, 7
    %v6499 = vsub.s32 3, %v6498
    %v6500 = vrot.slane %v6483, %v6499
    %v6501 = vlaneseq
    %v6502 = vshrl.u32 %v6501, 7
    %v6503 = vsub.s32 4, %v6502
    %v6504 = vrot.slane %v6483, %v6503
    %v6505 = vlaneseq
    %v6506 = vshrl.u32 %v6505, 7
    %v6507 = vsub.s32 5, %v6506
    %v6508 = vrot.slane %v6483, %v6507
    %v6515 = vadd.f32 %v6488, %v4516
    %v6516 = vadd.f32 %v6492, %v4517
    %v6517 = vadd.f32 %v6496, %v4518
    %v6518 = vadd.f32 %v6500, %v4519
    %v6519 = vadd.f32 %v6504, %v4520
    %v6520 = vadd.f32 %v6508, %v4521
    %vm6521 = vcmp.ge.f32.partialorder %v6515, 0.0
    %vm6522 = vcmp.ge.f32.partialorder %v6516, 0.0
    %vm6523 = vcmp.ge.f32.partialorder %v6517, 0.0
    %vm6524 = vcmp.ge.f32.partialorder %v6518, 0.0
    %vm6525 = vcmp.ge.f32.partialorder %v6519, 0.0
    %vm6526 = vcmp.ge.f32.partialorder %v6520, 0.0
    %v6527 = vmul.f32 %v6515, 0.01
    %v6528 = vmul.f32 %v6516, 0.01
    %v6529 = vmul.f32 %v6517, 0.01
    %v6530 = vmul.f32 %v6518, 0.01
    %v6531 = vmul.f32 %v6519, 0.01
    %v6532 = vmul.f32 %v6520, 0.01
    %v6533 = vsel %vm6521, %v6515, %v6527
    %v6534 = vsel %vm6522, %v6516, %v6528
    %v6535 = vsel %vm6523, %v6517, %v6529
    %v6536 = vsel %vm6524, %v6518, %v6530
    %v6537 = vsel %vm6525, %v6519, %v6531
    %v6538 = vsel %vm6526, %v6520, %v6532
    %6539 = vmatprep.subr.mxu0 0.0
    %6540 = vmatpush1.msra.mxu0 %v4434
    %6541 = vmatprep.subr.mxu0 0.0
    %6542 = vmatpush1.msra.mxu0 %v4433
    %6543 = vmatprep.subr.mxu0 0.0
    %6544 = vmatpush1.msra.mxu0 %v4432
    %6545 = vmatprep.subr.mxu0 0.0
    %6546 = vmatpush1.msra.mxu0 %v4431
    %6547 = vmatprep.subr.mxu0 0.0
    %6548 = vmatpush1.msra.mxu0 %v4430
    %6549 = vmatprep.subr.mxu0 0.0
    %6550 = vmatpush1.msra.mxu0 %v4429
    %6551 = vmatprep.subr.mxu0 0.0
    %6552 = vmatpush1.msra.mxu0 %v4428
    %6553 = vmatprep.subr.mxu0 0.0
    %6554 = vmatpush1.msra.mxu0 %v4427
    %6555 = vmatprep.subr.mxu0 0.0
    %6556 = vmatpush1.msra.mxu0 %v4426
    %6557 = vmatprep.subr.mxu0 0.0
    %6558 = vmatpush1.msra.mxu0 %v4425
    %6559 = vmatprep.subr.mxu0 0.0
    %6560 = vmatpush1.msra.mxu0 %v4424
    %6561 = vmatprep.subr.mxu0 0.0
    %6562 = vmatpush1.msra.mxu0 %v4423
    %6563 = vmatprep.subr.mxu0 0.0
    %6564 = vmatpush1.msra.mxu0 %v4422
    %6565 = vmatprep.subr.mxu0 0.0
    %6566 = vmatpush1.msra.mxu0 %v4421
    %6567 = vmatprep.subr.mxu0 0.0
    %6568 = vmatpush1.msra.mxu0 %v4420
    %6569 = vmatprep.subr.mxu0 0.0
    %6570 = vmatpush1.msra.mxu0 %v4419
    %6571 = vmatprep.subr.mxu0 0.0
    %6572 = vmatpush2.msra.mxu0 %v4450
    %6573 = vmatprep.subr.mxu0 0.0
    %6574 = vmatpush2.msra.mxu0 %v4449
    %6575 = vmatprep.subr.mxu0 0.0
    %6576 = vmatpush2.msra.mxu0 %v4448
    %6577 = vmatprep.subr.mxu0 0.0
    %6578 = vmatpush2.msra.mxu0 %v4447
    %6579 = vmatprep.subr.mxu0 0.0
    %6580 = vmatpush2.msra.mxu0 %v4446
    %6581 = vmatprep.subr.mxu0 0.0
    %6582 = vmatpush2.msra.mxu0 %v4445
    %6583 = vmatprep.subr.mxu0 0.0
    %6584 = vmatpush2.msra.mxu0 %v4444
    %6585 = vmatprep.subr.mxu0 0.0
    %6586 = vmatpush2.msra.mxu0 %v4443
    %6587 = vmatprep.subr.mxu0 0.0
    %6588 = vmatpush2.msra.mxu0 %v4442
    %6589 = vmatprep.subr.mxu0 0.0
    %6590 = vmatpush2.msra.mxu0 %v4441
    %6591 = vmatprep.subr.mxu0 0.0
    %6592 = vmatpush2.msra.mxu0 %v4440
    %6593 = vmatprep.subr.mxu0 0.0
    %6594 = vmatpush2.msra.mxu0 %v4439
    %6595 = vmatprep.subr.mxu0 0.0
    %6596 = vmatpush2.msra.mxu0 %v4438
    %6597 = vmatprep.subr.mxu0 0.0
    %6598 = vmatpush2.msra.mxu0 %v4437
    %6599 = vmatprep.subr.mxu0 0.0
    %6600 = vmatpush2.msra.mxu0 %v4436
    %6601 = vmatprep.subr.mxu0 0.0
    %6602 = vmatpush2.msra.mxu0 %v4435
    %6603 = vmatprep.mubr.f32.mxu0 %v6534
    %6604 = vmatmul.mubr.f32.gmra.mxu0 %v6533
    %v6605 = vpop.f32.mrf.mxu0
    %v6606 = vadd.f32 %v4584, %v6605
    %v6607 = vpop.f32.mrf.mxu0
    %6608 = vdwg.mxu0
    %6609 = vmatprep.subr.mxu0 0.0
    %6610 = vmatpush1.msra.mxu0 %v4466
    %6611 = vmatprep.subr.mxu0 0.0
    %6612 = vmatpush1.msra.mxu0 %v4465
    %6613 = vmatprep.subr.mxu0 0.0
    %6614 = vmatpush1.msra.mxu0 %v4464
    %6615 = vmatprep.subr.mxu0 0.0
    %6616 = vmatpush1.msra.mxu0 %v4463
    %6617 = vmatprep.subr.mxu0 0.0
    %6618 = vmatpush1.msra.mxu0 %v4462
    %6619 = vmatprep.subr.mxu0 0.0
    %6620 = vmatpush1.msra.mxu0 %v4461
    %6621 = vmatprep.subr.mxu0 0.0
    %6622 = vmatpush1.msra.mxu0 %v4460
    %6623 = vmatprep.subr.mxu0 0.0
    %6624 = vmatpush1.msra.mxu0 %v4459
    %6625 = vmatprep.subr.mxu0 0.0
    %6626 = vmatpush1.msra.mxu0 %v4458
    %6627 = vmatprep.subr.mxu0 0.0
    %6628 = vmatpush1.msra.mxu0 %v4457
    %6629 = vmatprep.subr.mxu0 0.0
    %6630 = vmatpush1.msra.mxu0 %v4456
    %6631 = vmatprep.subr.mxu0 0.0
    %6632 = vmatpush1.msra.mxu0 %v4455
    %6633 = vmatprep.subr.mxu0 0.0
    %6634 = vmatpush1.msra.mxu0 %v4454
    %6635 = vmatprep.subr.mxu0 0.0
    %6636 = vmatpush1.msra.mxu0 %v4453
    %6637 = vmatprep.subr.mxu0 0.0
    %6638 = vmatpush1.msra.mxu0 %v4452
    %6639 = vmatprep.subr.mxu0 0.0
    %6640 = vmatpush1.msra.mxu0 %v4451
    %6641 = vmatprep.subr.mxu0 0.0
    %6642 = vmatpush2.msra.mxu0 %v4482
    %6643 = vmatprep.subr.mxu0 0.0
    %6644 = vmatpush2.msra.mxu0 %v4481
    %6645 = vmatprep.subr.mxu0 0.0
    %6646 = vmatpush2.msra.mxu0 %v4480
    %6647 = vmatprep.subr.mxu0 0.0
    %6648 = vmatpush2.msra.mxu0 %v4479
    %6649 = vmatprep.subr.mxu0 0.0
    %6650 = vmatpush2.msra.mxu0 %v4478
    %6651 = vmatprep.subr.mxu0 0.0
    %6652 = vmatpush2.msra.mxu0 %v4477
    %6653 = vmatprep.subr.mxu0 0.0
    %6654 = vmatpush2.msra.mxu0 %v4476
    %6655 = vmatprep.subr.mxu0 0.0
    %6656 = vmatpush2.msra.mxu0 %v4475
    %6657 = vmatprep.subr.mxu0 0.0
    %6658 = vmatpush2.msra.mxu0 %v4474
    %6659 = vmatprep.subr.mxu0 0.0
    %6660 = vmatpush2.msra.mxu0 %v4473
    %6661 = vmatprep.subr.mxu0 0.0
    %6662 = vmatpush2.msra.mxu0 %v4472
    %6663 = vmatprep.subr.mxu0 0.0
    %6664 = vmatpush2.msra.mxu0 %v4471
    %6665 = vmatprep.subr.mxu0 0.0
    %6666 = vmatpush2.msra.mxu0 %v4470
    %6667 = vmatprep.subr.mxu0 0.0
    %6668 = vmatpush2.msra.mxu0 %v4469
    %6669 = vmatprep.subr.mxu0 0.0
    %6670 = vmatpush2.msra.mxu0 %v4468
    %6671 = vmatprep.subr.mxu0 0.0
    %6672 = vmatpush2.msra.mxu0 %v4467
    %6673 = vmatprep.mubr.f32.mxu0 %v6536
    %6674 = vmatmul.mubr.f32.gmra.mxu0 %v6535
    %v6675 = vpop.f32.mrf.mxu0
    %v6676 = vadd.f32 %v6606, %v6675
    %v6677 = vpop.f32.mrf.mxu0
    %6678 = vdwg.mxu0
    %6679 = vmatprep.subr.mxu0 0.0
    %6680 = vmatpush1.msra.mxu0 %v4498
    %6681 = vmatprep.subr.mxu0 0.0
    %6682 = vmatpush1.msra.mxu0 %v4497
    %6683 = vmatprep.subr.mxu0 0.0
    %6684 = vmatpush1.msra.mxu0 %v4496
    %6685 = vmatprep.subr.mxu0 0.0
    %6686 = vmatpush1.msra.mxu0 %v4495
    %6687 = vmatprep.subr.mxu0 0.0
    %6688 = vmatpush1.msra.mxu0 %v4494
    %6689 = vmatprep.subr.mxu0 0.0
    %6690 = vmatpush1.msra.mxu0 %v4493
    %6691 = vmatprep.subr.mxu0 0.0
    %6692 = vmatpush1.msra.mxu0 %v4492
    %6693 = vmatprep.subr.mxu0 0.0
    %6694 = vmatpush1.msra.mxu0 %v4491
    %6695 = vmatprep.subr.mxu0 0.0
    %6696 = vmatpush1.msra.mxu0 %v4490
    %6697 = vmatprep.subr.mxu0 0.0
    %6698 = vmatpush1.msra.mxu0 %v4489
    %6699 = vmatprep.subr.mxu0 0.0
    %6700 = vmatpush1.msra.mxu0 %v4488
    %6701 = vmatprep.subr.mxu0 0.0
    %6702 = vmatpush1.msra.mxu0 %v4487
    %6703 = vmatprep.subr.mxu0 0.0
    %6704 = vmatpush1.msra.mxu0 %v4486
    %6705 = vmatprep.subr.mxu0 0.0
    %6706 = vmatpush1.msra.mxu0 %v4485
    %6707 = vmatprep.subr.mxu0 0.0
    %6708 = vmatpush1.msra.mxu0 %v4484
    %6709 = vmatprep.subr.mxu0 0.0
    %6710 = vmatpush1.msra.mxu0 %v4483
    %6711 = vmatprep.subr.mxu0 0.0
    %6712 = vmatpush2.msra.mxu0 %v4514
    %6713 = vmatprep.subr.mxu0 0.0
    %6714 = vmatpush2.msra.mxu0 %v4513
    %6715 = vmatprep.subr.mxu0 0.0
    %6716 = vmatpush2.msra.mxu0 %v4512
    %6717 = vmatprep.subr.mxu0 0.0
    %6718 = vmatpush2.msra.mxu0 %v4511
    %6719 = vmatprep.subr.mxu0 0.0
    %6720 = vmatpush2.msra.mxu0 %v4510
    %6721 = vmatprep.subr.mxu0 0.0
    %6722 = vmatpush2.msra.mxu0 %v4509
    %6723 = vmatprep.subr.mxu0 0.0
    %6724 = vmatpush2.msra.mxu0 %v4508
    %6725 = vmatprep.subr.mxu0 0.0
    %6726 = vmatpush2.msra.mxu0 %v4507
    %6727 = vmatprep.subr.mxu0 0.0
    %6728 = vmatpush2.msra.mxu0 %v4506
    %6729 = vmatprep.subr.mxu0 0.0
    %6730 = vmatpush2.msra.mxu0 %v4505
    %6731 = vmatprep.subr.mxu0 0.0
    %6732 = vmatpush2.msra.mxu0 %v4504
    %6733 = vmatprep.subr.mxu0 0.0
    %6734 = vmatpush2.msra.mxu0 %v4503
    %6735 = vmatprep.subr.mxu0 0.0
    %6736 = vmatpush2.msra.mxu0 %v4502
    %6737 = vmatprep.subr.mxu0 0.0
    %6738 = vmatpush2.msra.mxu0 %v4501
    %6739 = vmatprep.subr.mxu0 0.0
    %6740 = vmatpush2.msra.mxu0 %v4500
    %6741 = vmatprep.subr.mxu0 0.0
    %6742 = vmatpush2.msra.mxu0 %v4499
    %6743 = vmatprep.mubr.f32.mxu0 %v6538
    %6744 = vmatmul.mubr.f32.gmra.mxu0 %v6537
    %v6745 = vpop.f32.mrf.mxu0
    %v6746 = vadd.f32 %v6676, %v6745
    %v6747 = vpop.f32.mrf.mxu0
    %6748 = vdwg.mxu0
    %6749 = vmax.xlane.f32.xlu0 %v6746
    %v6750 = vpop.xlane.xlu0 %6749
    %v6751 = vsub.f32 %v6746, %v6750
    %v6752 = vmul.f32 %v6751, 1.442695
    %v6753 = vpow.pop %v6752
    %6754 = vadd.xlane.f32.xlu0 %v6753
    %v6755 = vpop.xlane.xlu0 %6754
    %v6756 = vrcp.pop %v6755
    %v6757 = vmul.f32 %v6753, %v6756
    %6758 = vst [vmem:[#allocation13 + $0x38] sm:$0xff] %v6757
    %v6759 = vld [vmem:[#allocation3 + $0x30] sm:$0xff]
    %v6760 = vld [vmem:[#allocation3 + $0x38] sm:$0xff]
    %v6761 = vld [vmem:[#allocation3 + $0x40] sm:$0xff]
    %v6762 = vld [vmem:[#allocation3 + $0x48] sm:$0xff]
    %v6763 = vld [vmem:[#allocation3 + $0x50] sm:$0xff]
    %v6764 = vld [vmem:[#allocation3 + $0x58] sm:$0xff]
    %s6765 = scalar_lea.vmem [#allocation2], 48
    %v6766 = vld [vmem:[%s6765] ss:$8 sm:$0xf]
    %v6767 = vld [vmem:[%s6765] ss:$8 sm:$0x30]
    %v6768 = vor.u32 %v6766, %v6767
    %v6770 = vlaneseq
    %v6771 = vshrl.u32 %v6770, 7
    %v6772 = vsub.s32 0, %v6771
    %v6773 = vrot.slane %v6768, %v6772
    %v6774 = vlaneseq
    %v6775 = vshrl.u32 %v6774, 7
    %v6776 = vsub.s32 1, %v6775
    %v6777 = vrot.slane %v6768, %v6776
    %v6778 = vlaneseq
    %v6779 = vshrl.u32 %v6778, 7
    %v6780 = vsub.s32 2, %v6779
    %v6781 = vrot.slane %v6768, %v6780
    %v6782 = vlaneseq
    %v6783 = vshrl.u32 %v6782, 7
    %v6784 = vsub.s32 3, %v6783
    %v6785 = vrot.slane %v6768, %v6784
    %v6786 = vlaneseq
    %v6787 = vshrl.u32 %v6786, 7
    %v6788 = vsub.s32 4, %v6787
    %v6789 = vrot.slane %v6768, %v6788
    %v6790 = vlaneseq
    %v6791 = vshrl.u32 %v6790, 7
    %v6792 = vsub.s32 5, %v6791
    %v6793 = vrot.slane %v6768, %v6792
    %v6800 = vadd.f32 %v6773, %v6759
    %v6801 = vadd.f32 %v6777, %v6760
    %v6802 = vadd.f32 %v6781, %v6761
    %v6803 = vadd.f32 %v6785, %v6762
    %v6804 = vadd.f32 %v6789, %v6763
    %v6805 = vadd.f32 %v6793, %v6764
    %vm6806 = vcmp.ge.f32.partialorder %v6800, 0.0
    %vm6807 = vcmp.ge.f32.partialorder %v6801, 0.0
    %vm6808 = vcmp.ge.f32.partialorder %v6802, 0.0
    %vm6809 = vcmp.ge.f32.partialorder %v6803, 0.0
    %vm6810 = vcmp.ge.f32.partialorder %v6804, 0.0
    %vm6811 = vcmp.ge.f32.partialorder %v6805, 0.0
    %v6812 = vmul.f32 %v6800, 0.01
    %v6813 = vmul.f32 %v6801, 0.01
    %v6814 = vmul.f32 %v6802, 0.01
    %v6815 = vmul.f32 %v6803, 0.01
    %v6816 = vmul.f32 %v6804, 0.01
    %v6817 = vmul.f32 %v6805, 0.01
    %v6818 = vsel %vm6806, %v6800, %v6812
    %v6819 = vsel %vm6807, %v6801, %v6813
    %v6820 = vsel %vm6808, %v6802, %v6814
    %v6821 = vsel %vm6809, %v6803, %v6815
    %v6822 = vsel %vm6810, %v6804, %v6816
    %v6823 = vsel %vm6811, %v6805, %v6817
    %6824 = vmatprep.subr.mxu0 0.0
    %6825 = vmatpush1.msra.mxu0 %v4434
    %6826 = vmatprep.subr.mxu0 0.0
    %6827 = vmatpush1.msra.mxu0 %v4433
    %6828 = vmatprep.subr.mxu0 0.0
    %6829 = vmatpush1.msra.mxu0 %v4432
    %6830 = vmatprep.subr.mxu0 0.0
    %6831 = vmatpush1.msra.mxu0 %v4431
    %6832 = vmatprep.subr.mxu0 0.0
    %6833 = vmatpush1.msra.mxu0 %v4430
    %6834 = vmatprep.subr.mxu0 0.0
    %6835 = vmatpush1.msra.mxu0 %v4429
    %6836 = vmatprep.subr.mxu0 0.0
    %6837 = vmatpush1.msra.mxu0 %v4428
    %6838 = vmatprep.subr.mxu0 0.0
    %6839 = vmatpush1.msra.mxu0 %v4427
    %6840 = vmatprep.subr.mxu0 0.0
    %6841 = vmatpush1.msra.mxu0 %v4426
    %6842 = vmatprep.subr.mxu0 0.0
    %6843 = vmatpush1.msra.mxu0 %v4425
    %6844 = vmatprep.subr.mxu0 0.0
    %6845 = vmatpush1.msra.mxu0 %v4424
    %6846 = vmatprep.subr.mxu0 0.0
    %6847 = vmatpush1.msra.mxu0 %v4423
    %6848 = vmatprep.subr.mxu0 0.0
    %6849 = vmatpush1.msra.mxu0 %v4422
    %6850 = vmatprep.subr.mxu0 0.0
    %6851 = vmatpush1.msra.mxu0 %v4421
    %6852 = vmatprep.subr.mxu0 0.0
    %6853 = vmatpush1.msra.mxu0 %v4420
    %6854 = vmatprep.subr.mxu0 0.0
    %6855 = vmatpush1.msra.mxu0 %v4419
    %6856 = vmatprep.subr.mxu0 0.0
    %6857 = vmatpush2.msra.mxu0 %v4450
    %6858 = vmatprep.subr.mxu0 0.0
    %6859 = vmatpush2.msra.mxu0 %v4449
    %6860 = vmatprep.subr.mxu0 0.0
    %6861 = vmatpush2.msra.mxu0 %v4448
    %6862 = vmatprep.subr.mxu0 0.0
    %6863 = vmatpush2.msra.mxu0 %v4447
    %6864 = vmatprep.subr.mxu0 0.0
    %6865 = vmatpush2.msra.mxu0 %v4446
    %6866 = vmatprep.subr.mxu0 0.0
    %6867 = vmatpush2.msra.mxu0 %v4445
    %6868 = vmatprep.subr.mxu0 0.0
    %6869 = vmatpush2.msra.mxu0 %v4444
    %6870 = vmatprep.subr.mxu0 0.0
    %6871 = vmatpush2.msra.mxu0 %v4443
    %6872 = vmatprep.subr.mxu0 0.0
    %6873 = vmatpush2.msra.mxu0 %v4442
    %6874 = vmatprep.subr.mxu0 0.0
    %6875 = vmatpush2.msra.mxu0 %v4441
    %6876 = vmatprep.subr.mxu0 0.0
    %6877 = vmatpush2.msra.mxu0 %v4440
    %6878 = vmatprep.subr.mxu0 0.0
    %6879 = vmatpush2.msra.mxu0 %v4439
    %6880 = vmatprep.subr.mxu0 0.0
    %6881 = vmatpush2.msra.mxu0 %v4438
    %6882 = vmatprep.subr.mxu0 0.0
    %6883 = vmatpush2.msra.mxu0 %v4437
    %6884 = vmatprep.subr.mxu0 0.0
    %6885 = vmatpush2.msra.mxu0 %v4436
    %6886 = vmatprep.subr.mxu0 0.0
    %6887 = vmatpush2.msra.mxu0 %v4435
    %6888 = vmatprep.mubr.f32.mxu0 %v6819
    %6889 = vmatmul.mubr.f32.gmra.mxu0 %v6818
    %v6890 = vpop.f32.mrf.mxu0
    %v6891 = vadd.f32 %v4584, %v6890
    %v6892 = vpop.f32.mrf.mxu0
    %6893 = vdwg.mxu0
    %6894 = vmatprep.subr.mxu0 0.0
    %6895 = vmatpush1.msra.mxu0 %v4466
    %6896 = vmatprep.subr.mxu0 0.0
    %6897 = vmatpush1.msra.mxu0 %v4465
    %6898 = vmatprep.subr.mxu0 0.0
    %6899 = vmatpush1.msra.mxu0 %v4464
    %6900 = vmatprep.subr.mxu0 0.0
    %6901 = vmatpush1.msra.mxu0 %v4463
    %6902 = vmatprep.subr.mxu0 0.0
    %6903 = vmatpush1.msra.mxu0 %v4462
    %6904 = vmatprep.subr.mxu0 0.0
    %6905 = vmatpush1.msra.mxu0 %v4461
    %6906 = vmatprep.subr.mxu0 0.0
    %6907 = vmatpush1.msra.mxu0 %v4460
    %6908 = vmatprep.subr.mxu0 0.0
    %6909 = vmatpush1.msra.mxu0 %v4459
    %6910 = vmatprep.subr.mxu0 0.0
    %6911 = vmatpush1.msra.mxu0 %v4458
    %6912 = vmatprep.subr.mxu0 0.0
    %6913 = vmatpush1.msra.mxu0 %v4457
    %6914 = vmatprep.subr.mxu0 0.0
    %6915 = vmatpush1.msra.mxu0 %v4456
    %6916 = vmatprep.subr.mxu0 0.0
    %6917 = vmatpush1.msra.mxu0 %v4455
    %6918 = vmatprep.subr.mxu0 0.0
    %6919 = vmatpush1.msra.mxu0 %v4454
    %6920 = vmatprep.subr.mxu0 0.0
    %6921 = vmatpush1.msra.mxu0 %v4453
    %6922 = vmatprep.subr.mxu0 0.0
    %6923 = vmatpush1.msra.mxu0 %v4452
    %6924 = vmatprep.subr.mxu0 0.0
    %6925 = vmatpush1.msra.mxu0 %v4451
    %6926 = vmatprep.subr.mxu0 0.0
    %6927 = vmatpush2.msra.mxu0 %v4482
    %6928 = vmatprep.subr.mxu0 0.0
    %6929 = vmatpush2.msra.mxu0 %v4481
    %6930 = vmatprep.subr.mxu0 0.0
    %6931 = vmatpush2.msra.mxu0 %v4480
    %6932 = vmatprep.subr.mxu0 0.0
    %6933 = vmatpush2.msra.mxu0 %v4479
    %6934 = vmatprep.subr.mxu0 0.0
    %6935 = vmatpush2.msra.mxu0 %v4478
    %6936 = vmatprep.subr.mxu0 0.0
    %6937 = vmatpush2.msra.mxu0 %v4477
    %6938 = vmatprep.subr.mxu0 0.0
    %6939 = vmatpush2.msra.mxu0 %v4476
    %6940 = vmatprep.subr.mxu0 0.0
    %6941 = vmatpush2.msra.mxu0 %v4475
    %6942 = vmatprep.subr.mxu0 0.0
    %6943 = vmatpush2.msra.mxu0 %v4474
    %6944 = vmatprep.subr.mxu0 0.0
    %6945 = vmatpush2.msra.mxu0 %v4473
    %6946 = vmatprep.subr.mxu0 0.0
    %6947 = vmatpush2.msra.mxu0 %v4472
    %6948 = vmatprep.subr.mxu0 0.0
    %6949 = vmatpush2.msra.mxu0 %v4471
    %6950 = vmatprep.subr.mxu0 0.0
    %6951 = vmatpush2.msra.mxu0 %v4470
    %6952 = vmatprep.subr.mxu0 0.0
    %6953 = vmatpush2.msra.mxu0 %v4469
    %6954 = vmatprep.subr.mxu0 0.0
    %6955 = vmatpush2.msra.mxu0 %v4468
    %6956 = vmatprep.subr.mxu0 0.0
    %6957 = vmatpush2.msra.mxu0 %v4467
    %6958 = vmatprep.mubr.f32.mxu0 %v6821
    %6959 = vmatmul.mubr.f32.gmra.mxu0 %v6820
    %v6960 = vpop.f32.mrf.mxu0
    %v6961 = vadd.f32 %v6891, %v6960
    %v6962 = vpop.f32.mrf.mxu0
    %6963 = vdwg.mxu0
    %6964 = vmatprep.subr.mxu0 0.0
    %6965 = vmatpush1.msra.mxu0 %v4498
    %6966 = vmatprep.subr.mxu0 0.0
    %6967 = vmatpush1.msra.mxu0 %v4497
    %6968 = vmatprep.subr.mxu0 0.0
    %6969 = vmatpush1.msra.mxu0 %v4496
    %6970 = vmatprep.subr.mxu0 0.0
    %6971 = vmatpush1.msra.mxu0 %v4495
    %6972 = vmatprep.subr.mxu0 0.0
    %6973 = vmatpush1.msra.mxu0 %v4494
    %6974 = vmatprep.subr.mxu0 0.0
    %6975 = vmatpush1.msra.mxu0 %v4493
    %6976 = vmatprep.subr.mxu0 0.0
    %6977 = vmatpush1.msra.mxu0 %v4492
    %6978 = vmatprep.subr.mxu0 0.0
    %6979 = vmatpush1.msra.mxu0 %v4491
    %6980 = vmatprep.subr.mxu0 0.0
    %6981 = vmatpush1.msra.mxu0 %v4490
    %6982 = vmatprep.subr.mxu0 0.0
    %6983 = vmatpush1.msra.mxu0 %v4489
    %6984 = vmatprep.subr.mxu0 0.0
    %6985 = vmatpush1.msra.mxu0 %v4488
    %6986 = vmatprep.subr.mxu0 0.0
    %6987 = vmatpush1.msra.mxu0 %v4487
    %6988 = vmatprep.subr.mxu0 0.0
    %6989 = vmatpush1.msra.mxu0 %v4486
    %6990 = vmatprep.subr.mxu0 0.0
    %6991 = vmatpush1.msra.mxu0 %v4485
    %6992 = vmatprep.subr.mxu0 0.0
    %6993 = vmatpush1.msra.mxu0 %v4484
    %6994 = vmatprep.subr.mxu0 0.0
    %6995 = vmatpush1.msra.mxu0 %v4483
    %6996 = vmatprep.subr.mxu0 0.0
    %6997 = vmatpush2.msra.mxu0 %v4514
    %6998 = vmatprep.subr.mxu0 0.0
    %6999 = vmatpush2.msra.mxu0 %v4513
    %7000 = vmatprep.subr.mxu0 0.0
    %7001 = vmatpush2.msra.mxu0 %v4512
    %7002 = vmatprep.subr.mxu0 0.0
    %7003 = vmatpush2.msra.mxu0 %v4511
    %7004 = vmatprep.subr.mxu0 0.0
    %7005 = vmatpush2.msra.mxu0 %v4510
    %7006 = vmatprep.subr.mxu0 0.0
    %7007 = vmatpush2.msra.mxu0 %v4509
    %7008 = vmatprep.subr.mxu0 0.0
    %7009 = vmatpush2.msra.mxu0 %v4508
    %7010 = vmatprep.subr.mxu0 0.0
    %7011 = vmatpush2.msra.mxu0 %v4507
    %7012 = vmatprep.subr.mxu0 0.0
    %7013 = vmatpush2.msra.mxu0 %v4506
    %7014 = vmatprep.subr.mxu0 0.0
    %7015 = vmatpush2.msra.mxu0 %v4505
    %7016 = vmatprep.subr.mxu0 0.0
    %7017 = vmatpush2.msra.mxu0 %v4504
    %7018 = vmatprep.subr.mxu0 0.0
    %7019 = vmatpush2.msra.mxu0 %v4503
    %7020 = vmatprep.subr.mxu0 0.0
    %7021 = vmatpush2.msra.mxu0 %v4502
    %7022 = vmatprep.subr.mxu0 0.0
    %7023 = vmatpush2.msra.mxu0 %v4501
    %7024 = vmatprep.subr.mxu0 0.0
    %7025 = vmatpush2.msra.mxu0 %v4500
    %7026 = vmatprep.subr.mxu0 0.0
    %7027 = vmatpush2.msra.mxu0 %v4499
    %7028 = vmatprep.mubr.f32.mxu0 %v6823
    %7029 = vmatmul.mubr.f32.gmra.mxu0 %v6822
    %v7030 = vpop.f32.mrf.mxu0
    %v7031 = vadd.f32 %v6961, %v7030
    %v7032 = vpop.f32.mrf.mxu0
    %7033 = vdwg.mxu0
    %7034 = vmax.xlane.f32.xlu0 %v7031
    %v7035 = vpop.xlane.xlu0 %7034
    %v7036 = vsub.f32 %v7031, %v7035
    %v7037 = vmul.f32 %v7036, 1.442695
    %v7038 = vpow.pop %v7037
    %7039 = vadd.xlane.f32.xlu0 %v7038
    %v7040 = vpop.xlane.xlu0 %7039
    %v7041 = vrcp.pop %v7040
    %v7042 = vmul.f32 %v7038, %v7041
    %7043 = vst [vmem:[#allocation13 + $0x40] sm:$0xff] %v7042
    %s7044 = scalar_lea.vmem [#allocation2], 49
    %v7045 = vld [vmem:[%s7044] ss:$8 sm:$0xf]
    %v7046 = vld [vmem:[%s7044] ss:$8 sm:$0x30]
    %v7047 = vor.u32 %v7045, %v7046
    %v7049 = vlaneseq
    %v7050 = vshrl.u32 %v7049, 7
    %v7051 = vsub.s32 0, %v7050
    %v7052 = vrot.slane %v7047, %v7051
    %v7053 = vlaneseq
    %v7054 = vshrl.u32 %v7053, 7
    %v7055 = vsub.s32 1, %v7054
    %v7056 = vrot.slane %v7047, %v7055
    %v7057 = vlaneseq
    %v7058 = vshrl.u32 %v7057, 7
    %v7059 = vsub.s32 2, %v7058
    %v7060 = vrot.slane %v7047, %v7059
    %v7061 = vlaneseq
    %v7062 = vshrl.u32 %v7061, 7
    %v7063 = vsub.s32 3, %v7062
    %v7064 = vrot.slane %v7047, %v7063
    %v7065 = vlaneseq
    %v7066 = vshrl.u32 %v7065, 7
    %v7067 = vsub.s32 4, %v7066
    %v7068 = vrot.slane %v7047, %v7067
    %v7069 = vlaneseq
    %v7070 = vshrl.u32 %v7069, 7
    %v7071 = vsub.s32 5, %v7070
    %v7072 = vrot.slane %v7047, %v7071
    %v7079 = vadd.f32 %v7052, %v6759
    %v7080 = vadd.f32 %v7056, %v6760
    %v7081 = vadd.f32 %v7060, %v6761
    %v7082 = vadd.f32 %v7064, %v6762
    %v7083 = vadd.f32 %v7068, %v6763
    %v7084 = vadd.f32 %v7072, %v6764
    %vm7085 = vcmp.ge.f32.partialorder %v7079, 0.0
    %vm7086 = vcmp.ge.f32.partialorder %v7080, 0.0
    %vm7087 = vcmp.ge.f32.partialorder %v7081, 0.0
    %vm7088 = vcmp.ge.f32.partialorder %v7082, 0.0
    %vm7089 = vcmp.ge.f32.partialorder %v7083, 0.0
    %vm7090 = vcmp.ge.f32.partialorder %v7084, 0.0
    %v7091 = vmul.f32 %v7079, 0.01
    %v7092 = vmul.f32 %v7080, 0.01
    %v7093 = vmul.f32 %v7081, 0.01
    %v7094 = vmul.f32 %v7082, 0.01
    %v7095 = vmul.f32 %v7083, 0.01
    %v7096 = vmul.f32 %v7084, 0.01
    %v7097 = vsel %vm7085, %v7079, %v7091
    %v7098 = vsel %vm7086, %v7080, %v7092
    %v7099 = vsel %vm7087, %v7081, %v7093
    %v7100 = vsel %vm7088, %v7082, %v7094
    %v7101 = vsel %vm7089, %v7083, %v7095
    %v7102 = vsel %vm7090, %v7084, %v7096
    %7103 = vmatprep.subr.mxu0 0.0
    %7104 = vmatpush1.msra.mxu0 %v4434
    %7105 = vmatprep.subr.mxu0 0.0
    %7106 = vmatpush1.msra.mxu0 %v4433
    %7107 = vmatprep.subr.mxu0 0.0
    %7108 = vmatpush1.msra.mxu0 %v4432
    %7109 = vmatprep.subr.mxu0 0.0
    %7110 = vmatpush1.msra.mxu0 %v4431
    %7111 = vmatprep.subr.mxu0 0.0
    %7112 = vmatpush1.msra.mxu0 %v4430
    %7113 = vmatprep.subr.mxu0 0.0
    %7114 = vmatpush1.msra.mxu0 %v4429
    %7115 = vmatprep.subr.mxu0 0.0
    %7116 = vmatpush1.msra.mxu0 %v4428
    %7117 = vmatprep.subr.mxu0 0.0
    %7118 = vmatpush1.msra.mxu0 %v4427
    %7119 = vmatprep.subr.mxu0 0.0
    %7120 = vmatpush1.msra.mxu0 %v4426
    %7121 = vmatprep.subr.mxu0 0.0
    %7122 = vmatpush1.msra.mxu0 %v4425
    %7123 = vmatprep.subr.mxu0 0.0
    %7124 = vmatpush1.msra.mxu0 %v4424
    %7125 = vmatprep.subr.mxu0 0.0
    %7126 = vmatpush1.msra.mxu0 %v4423
    %7127 = vmatprep.subr.mxu0 0.0
    %7128 = vmatpush1.msra.mxu0 %v4422
    %7129 = vmatprep.subr.mxu0 0.0
    %7130 = vmatpush1.msra.mxu0 %v4421
    %7131 = vmatprep.subr.mxu0 0.0
    %7132 = vmatpush1.msra.mxu0 %v4420
    %7133 = vmatprep.subr.mxu0 0.0
    %7134 = vmatpush1.msra.mxu0 %v4419
    %7135 = vmatprep.subr.mxu0 0.0
    %7136 = vmatpush2.msra.mxu0 %v4450
    %7137 = vmatprep.subr.mxu0 0.0
    %7138 = vmatpush2.msra.mxu0 %v4449
    %7139 = vmatprep.subr.mxu0 0.0
    %7140 = vmatpush2.msra.mxu0 %v4448
    %7141 = vmatprep.subr.mxu0 0.0
    %7142 = vmatpush2.msra.mxu0 %v4447
    %7143 = vmatprep.subr.mxu0 0.0
    %7144 = vmatpush2.msra.mxu0 %v4446
    %7145 = vmatprep.subr.mxu0 0.0
    %7146 = vmatpush2.msra.mxu0 %v4445
    %7147 = vmatprep.subr.mxu0 0.0
    %7148 = vmatpush2.msra.mxu0 %v4444
    %7149 = vmatprep.subr.mxu0 0.0
    %7150 = vmatpush2.msra.mxu0 %v4443
    %7151 = vmatprep.subr.mxu0 0.0
    %7152 = vmatpush2.msra.mxu0 %v4442
    %7153 = vmatprep.subr.mxu0 0.0
    %7154 = vmatpush2.msra.mxu0 %v4441
    %7155 = vmatprep.subr.mxu0 0.0
    %7156 = vmatpush2.msra.mxu0 %v4440
    %7157 = vmatprep.subr.mxu0 0.0
    %7158 = vmatpush2.msra.mxu0 %v4439
    %7159 = vmatprep.subr.mxu0 0.0
    %7160 = vmatpush2.msra.mxu0 %v4438
    %7161 = vmatprep.subr.mxu0 0.0
    %7162 = vmatpush2.msra.mxu0 %v4437
    %7163 = vmatprep.subr.mxu0 0.0
    %7164 = vmatpush2.msra.mxu0 %v4436
    %7165 = vmatprep.subr.mxu0 0.0
    %7166 = vmatpush2.msra.mxu0 %v4435
    %7167 = vmatprep.mubr.f32.mxu0 %v7098
    %7168 = vmatmul.mubr.f32.gmra.mxu0 %v7097
    %v7169 = vpop.f32.mrf.mxu0
    %v7170 = vadd.f32 %v4584, %v7169
    %v7171 = vpop.f32.mrf.mxu0
    %7172 = vdwg.mxu0
    %7173 = vmatprep.subr.mxu0 0.0
    %7174 = vmatpush1.msra.mxu0 %v4466
    %7175 = vmatprep.subr.mxu0 0.0
    %7176 = vmatpush1.msra.mxu0 %v4465
    %7177 = vmatprep.subr.mxu0 0.0
    %7178 = vmatpush1.msra.mxu0 %v4464
    %7179 = vmatprep.subr.mxu0 0.0
    %7180 = vmatpush1.msra.mxu0 %v4463
    %7181 = vmatprep.subr.mxu0 0.0
    %7182 = vmatpush1.msra.mxu0 %v4462
    %7183 = vmatprep.subr.mxu0 0.0
    %7184 = vmatpush1.msra.mxu0 %v4461
    %7185 = vmatprep.subr.mxu0 0.0
    %7186 = vmatpush1.msra.mxu0 %v4460
    %7187 = vmatprep.subr.mxu0 0.0
    %7188 = vmatpush1.msra.mxu0 %v4459
    %7189 = vmatprep.subr.mxu0 0.0
    %7190 = vmatpush1.msra.mxu0 %v4458
    %7191 = vmatprep.subr.mxu0 0.0
    %7192 = vmatpush1.msra.mxu0 %v4457
    %7193 = vmatprep.subr.mxu0 0.0
    %7194 = vmatpush1.msra.mxu0 %v4456
    %7195 = vmatprep.subr.mxu0 0.0
    %7196 = vmatpush1.msra.mxu0 %v4455
    %7197 = vmatprep.subr.mxu0 0.0
    %7198 = vmatpush1.msra.mxu0 %v4454
    %7199 = vmatprep.subr.mxu0 0.0
    %7200 = vmatpush1.msra.mxu0 %v4453
    %7201 = vmatprep.subr.mxu0 0.0
    %7202 = vmatpush1.msra.mxu0 %v4452
    %7203 = vmatprep.subr.mxu0 0.0
    %7204 = vmatpush1.msra.mxu0 %v4451
    %7205 = vmatprep.subr.mxu0 0.0
    %7206 = vmatpush2.msra.mxu0 %v4482
    %7207 = vmatprep.subr.mxu0 0.0
    %7208 = vmatpush2.msra.mxu0 %v4481
    %7209 = vmatprep.subr.mxu0 0.0
    %7210 = vmatpush2.msra.mxu0 %v4480
    %7211 = vmatprep.subr.mxu0 0.0
    %7212 = vmatpush2.msra.mxu0 %v4479
    %7213 = vmatprep.subr.mxu0 0.0
    %7214 = vmatpush2.msra.mxu0 %v4478
    %7215 = vmatprep.subr.mxu0 0.0
    %7216 = vmatpush2.msra.mxu0 %v4477
    %7217 = vmatprep.subr.mxu0 0.0
    %7218 = vmatpush2.msra.mxu0 %v4476
    %7219 = vmatprep.subr.mxu0 0.0
    %7220 = vmatpush2.msra.mxu0 %v4475
    %7221 = vmatprep.subr.mxu0 0.0
    %7222 = vmatpush2.msra.mxu0 %v4474
    %7223 = vmatprep.subr.mxu0 0.0
    %7224 = vmatpush2.msra.mxu0 %v4473
    %7225 = vmatprep.subr.mxu0 0.0
    %7226 = vmatpush2.msra.mxu0 %v4472
    %7227 = vmatprep.subr.mxu0 0.0
    %7228 = vmatpush2.msra.mxu0 %v4471
    %7229 = vmatprep.subr.mxu0 0.0
    %7230 = vmatpush2.msra.mxu0 %v4470
    %7231 = vmatprep.subr.mxu0 0.0
    %7232 = vmatpush2.msra.mxu0 %v4469
    %7233 = vmatprep.subr.mxu0 0.0
    %7234 = vmatpush2.msra.mxu0 %v4468
    %7235 = vmatprep.subr.mxu0 0.0
    %7236 = vmatpush2.msra.mxu0 %v4467
    %7237 = vmatprep.mubr.f32.mxu0 %v7100
    %7238 = vmatmul.mubr.f32.gmra.mxu0 %v7099
    %v7239 = vpop.f32.mrf.mxu0
    %v7240 = vadd.f32 %v7170, %v7239
    %v7241 = vpop.f32.mrf.mxu0
    %7242 = vdwg.mxu0
    %7243 = vmatprep.subr.mxu0 0.0
    %7244 = vmatpush1.msra.mxu0 %v4498
    %7245 = vmatprep.subr.mxu0 0.0
    %7246 = vmatpush1.msra.mxu0 %v4497
    %7247 = vmatprep.subr.mxu0 0.0
    %7248 = vmatpush1.msra.mxu0 %v4496
    %7249 = vmatprep.subr.mxu0 0.0
    %7250 = vmatpush1.msra.mxu0 %v4495
    %7251 = vmatprep.subr.mxu0 0.0
    %7252 = vmatpush1.msra.mxu0 %v4494
    %7253 = vmatprep.subr.mxu0 0.0
    %7254 = vmatpush1.msra.mxu0 %v4493
    %7255 = vmatprep.subr.mxu0 0.0
    %7256 = vmatpush1.msra.mxu0 %v4492
    %7257 = vmatprep.subr.mxu0 0.0
    %7258 = vmatpush1.msra.mxu0 %v4491
    %7259 = vmatprep.subr.mxu0 0.0
    %7260 = vmatpush1.msra.mxu0 %v4490
    %7261 = vmatprep.subr.mxu0 0.0
    %7262 = vmatpush1.msra.mxu0 %v4489
    %7263 = vmatprep.subr.mxu0 0.0
    %7264 = vmatpush1.msra.mxu0 %v4488
    %7265 = vmatprep.subr.mxu0 0.0
    %7266 = vmatpush1.msra.mxu0 %v4487
    %7267 = vmatprep.subr.mxu0 0.0
    %7268 = vmatpush1.msra.mxu0 %v4486
    %7269 = vmatprep.subr.mxu0 0.0
    %7270 = vmatpush1.msra.mxu0 %v4485
    %7271 = vmatprep.subr.mxu0 0.0
    %7272 = vmatpush1.msra.mxu0 %v4484
    %7273 = vmatprep.subr.mxu0 0.0
    %7274 = vmatpush1.msra.mxu0 %v4483
    %7275 = vmatprep.subr.mxu0 0.0
    %7276 = vmatpush2.msra.mxu0 %v4514
    %7277 = vmatprep.subr.mxu0 0.0
    %7278 = vmatpush2.msra.mxu0 %v4513
    %7279 = vmatprep.subr.mxu0 0.0
    %7280 = vmatpush2.msra.mxu0 %v4512
    %7281 = vmatprep.subr.mxu0 0.0
    %7282 = vmatpush2.msra.mxu0 %v4511
    %7283 = vmatprep.subr.mxu0 0.0
    %7284 = vmatpush2.msra.mxu0 %v4510
    %7285 = vmatprep.subr.mxu0 0.0
    %7286 = vmatpush2.msra.mxu0 %v4509
    %7287 = vmatprep.subr.mxu0 0.0
    %7288 = vmatpush2.msra.mxu0 %v4508
    %7289 = vmatprep.subr.mxu0 0.0
    %7290 = vmatpush2.msra.mxu0 %v4507
    %7291 = vmatprep.subr.mxu0 0.0
    %7292 = vmatpush2.msra.mxu0 %v4506
    %7293 = vmatprep.subr.mxu0 0.0
    %7294 = vmatpush2.msra.mxu0 %v4505
    %7295 = vmatprep.subr.mxu0 0.0
    %7296 = vmatpush2.msra.mxu0 %v4504
    %7297 = vmatprep.subr.mxu0 0.0
    %7298 = vmatpush2.msra.mxu0 %v4503
    %7299 = vmatprep.subr.mxu0 0.0
    %7300 = vmatpush2.msra.mxu0 %v4502
    %7301 = vmatprep.subr.mxu0 0.0
    %7302 = vmatpush2.msra.mxu0 %v4501
    %7303 = vmatprep.subr.mxu0 0.0
    %7304 = vmatpush2.msra.mxu0 %v4500
    %7305 = vmatprep.subr.mxu0 0.0
    %7306 = vmatpush2.msra.mxu0 %v4499
    %7307 = vmatprep.mubr.f32.mxu0 %v7102
    %7308 = vmatmul.mubr.f32.gmra.mxu0 %v7101
    %v7309 = vpop.f32.mrf.mxu0
    %v7310 = vadd.f32 %v7240, %v7309
    %v7311 = vpop.f32.mrf.mxu0
    %7312 = vdwg.mxu0
    %7313 = vmax.xlane.f32.xlu0 %v7310
    %v7314 = vpop.xlane.xlu0 %7313
    %v7315 = vsub.f32 %v7310, %v7314
    %v7316 = vmul.f32 %v7315, 1.442695
    %v7317 = vpow.pop %v7316
    %7318 = vadd.xlane.f32.xlu0 %v7317
    %v7319 = vpop.xlane.xlu0 %7318
    %v7320 = vrcp.pop %v7319
    %v7321 = vmul.f32 %v7317, %v7320
    %7322 = vst [vmem:[#allocation13 + $0x48] sm:$0xff] %v7321
    %s7323 = scalar_lea.vmem [#allocation2], 50
    %v7324 = vld [vmem:[%s7323] ss:$8 sm:$0xf]
    %v7325 = vld [vmem:[%s7323] ss:$8 sm:$0x30]
    %v7326 = vor.u32 %v7324, %v7325
    %v7328 = vlaneseq
    %v7329 = vshrl.u32 %v7328, 7
    %v7330 = vsub.s32 0, %v7329
    %v7331 = vrot.slane %v7326, %v7330
    %v7332 = vlaneseq
    %v7333 = vshrl.u32 %v7332, 7
    %v7334 = vsub.s32 1, %v7333
    %v7335 = vrot.slane %v7326, %v7334
    %v7336 = vlaneseq
    %v7337 = vshrl.u32 %v7336, 7
    %v7338 = vsub.s32 2, %v7337
    %v7339 = vrot.slane %v7326, %v7338
    %v7340 = vlaneseq
    %v7341 = vshrl.u32 %v7340, 7
    %v7342 = vsub.s32 3, %v7341
    %v7343 = vrot.slane %v7326, %v7342
    %v7344 = vlaneseq
    %v7345 = vshrl.u32 %v7344, 7
    %v7346 = vsub.s32 4, %v7345
    %v7347 = vrot.slane %v7326, %v7346
    %v7348 = vlaneseq
    %v7349 = vshrl.u32 %v7348, 7
    %v7350 = vsub.s32 5, %v7349
    %v7351 = vrot.slane %v7326, %v7350
    %v7358 = vadd.f32 %v7331, %v6759
    %v7359 = vadd.f32 %v7335, %v6760
    %v7360 = vadd.f32 %v7339, %v6761
    %v7361 = vadd.f32 %v7343, %v6762
    %v7362 = vadd.f32 %v7347, %v6763
    %v7363 = vadd.f32 %v7351, %v6764
    %vm7364 = vcmp.ge.f32.partialorder %v7358, 0.0
    %vm7365 = vcmp.ge.f32.partialorder %v7359, 0.0
    %vm7366 = vcmp.ge.f32.partialorder %v7360, 0.0
    %vm7367 = vcmp.ge.f32.partialorder %v7361, 0.0
    %vm7368 = vcmp.ge.f32.partialorder %v7362, 0.0
    %vm7369 = vcmp.ge.f32.partialorder %v7363, 0.0
    %v7370 = vmul.f32 %v7358, 0.01
    %v7371 = vmul.f32 %v7359, 0.01
    %v7372 = vmul.f32 %v7360, 0.01
    %v7373 = vmul.f32 %v7361, 0.01
    %v7374 = vmul.f32 %v7362, 0.01
    %v7375 = vmul.f32 %v7363, 0.01
    %v7376 = vsel %vm7364, %v7358, %v7370
    %v7377 = vsel %vm7365, %v7359, %v7371
    %v7378 = vsel %vm7366, %v7360, %v7372
    %v7379 = vsel %vm7367, %v7361, %v7373
    %v7380 = vsel %vm7368, %v7362, %v7374
    %v7381 = vsel %vm7369, %v7363, %v7375
    %7382 = vmatprep.subr.mxu0 0.0
    %7383 = vmatpush1.msra.mxu0 %v4434
    %7384 = vmatprep.subr.mxu0 0.0
    %7385 = vmatpush1.msra.mxu0 %v4433
    %7386 = vmatprep.subr.mxu0 0.0
    %7387 = vmatpush1.msra.mxu0 %v4432
    %7388 = vmatprep.subr.mxu0 0.0
    %7389 = vmatpush1.msra.mxu0 %v4431
    %7390 = vmatprep.subr.mxu0 0.0
    %7391 = vmatpush1.msra.mxu0 %v4430
    %7392 = vmatprep.subr.mxu0 0.0
    %7393 = vmatpush1.msra.mxu0 %v4429
    %7394 = vmatprep.subr.mxu0 0.0
    %7395 = vmatpush1.msra.mxu0 %v4428
    %7396 = vmatprep.subr.mxu0 0.0
    %7397 = vmatpush1.msra.mxu0 %v4427
    %7398 = vmatprep.subr.mxu0 0.0
    %7399 = vmatpush1.msra.mxu0 %v4426
    %7400 = vmatprep.subr.mxu0 0.0
    %7401 = vmatpush1.msra.mxu0 %v4425
    %7402 = vmatprep.subr.mxu0 0.0
    %7403 = vmatpush1.msra.mxu0 %v4424
    %7404 = vmatprep.subr.mxu0 0.0
    %7405 = vmatpush1.msra.mxu0 %v4423
    %7406 = vmatprep.subr.mxu0 0.0
    %7407 = vmatpush1.msra.mxu0 %v4422
    %7408 = vmatprep.subr.mxu0 0.0
    %7409 = vmatpush1.msra.mxu0 %v4421
    %7410 = vmatprep.subr.mxu0 0.0
    %7411 = vmatpush1.msra.mxu0 %v4420
    %7412 = vmatprep.subr.mxu0 0.0
    %7413 = vmatpush1.msra.mxu0 %v4419
    %7414 = vmatprep.subr.mxu0 0.0
    %7415 = vmatpush2.msra.mxu0 %v4450
    %7416 = vmatprep.subr.mxu0 0.0
    %7417 = vmatpush2.msra.mxu0 %v4449
    %7418 = vmatprep.subr.mxu0 0.0
    %7419 = vmatpush2.msra.mxu0 %v4448
    %7420 = vmatprep.subr.mxu0 0.0
    %7421 = vmatpush2.msra.mxu0 %v4447
    %7422 = vmatprep.subr.mxu0 0.0
    %7423 = vmatpush2.msra.mxu0 %v4446
    %7424 = vmatprep.subr.mxu0 0.0
    %7425 = vmatpush2.msra.mxu0 %v4445
    %7426 = vmatprep.subr.mxu0 0.0
    %7427 = vmatpush2.msra.mxu0 %v4444
    %7428 = vmatprep.subr.mxu0 0.0
    %7429 = vmatpush2.msra.mxu0 %v4443
    %7430 = vmatprep.subr.mxu0 0.0
    %7431 = vmatpush2.msra.mxu0 %v4442
    %7432 = vmatprep.subr.mxu0 0.0
    %7433 = vmatpush2.msra.mxu0 %v4441
    %7434 = vmatprep.subr.mxu0 0.0
    %7435 = vmatpush2.msra.mxu0 %v4440
    %7436 = vmatprep.subr.mxu0 0.0
    %7437 = vmatpush2.msra.mxu0 %v4439
    %7438 = vmatprep.subr.mxu0 0.0
    %7439 = vmatpush2.msra.mxu0 %v4438
    %7440 = vmatprep.subr.mxu0 0.0
    %7441 = vmatpush2.msra.mxu0 %v4437
    %7442 = vmatprep.subr.mxu0 0.0
    %7443 = vmatpush2.msra.mxu0 %v4436
    %7444 = vmatprep.subr.mxu0 0.0
    %7445 = vmatpush2.msra.mxu0 %v4435
    %7446 = vmatprep.mubr.f32.mxu0 %v7377
    %7447 = vmatmul.mubr.f32.gmra.mxu0 %v7376
    %v7448 = vpop.f32.mrf.mxu0
    %v7449 = vadd.f32 %v4584, %v7448
    %v7450 = vpop.f32.mrf.mxu0
    %7451 = vdwg.mxu0
    %7452 = vmatprep.subr.mxu0 0.0
    %7453 = vmatpush1.msra.mxu0 %v4466
    %7454 = vmatprep.subr.mxu0 0.0
    %7455 = vmatpush1.msra.mxu0 %v4465
    %7456 = vmatprep.subr.mxu0 0.0
    %7457 = vmatpush1.msra.mxu0 %v4464
    %7458 = vmatprep.subr.mxu0 0.0
    %7459 = vmatpush1.msra.mxu0 %v4463
    %7460 = vmatprep.subr.mxu0 0.0
    %7461 = vmatpush1.msra.mxu0 %v4462
    %7462 = vmatprep.subr.mxu0 0.0
    %7463 = vmatpush1.msra.mxu0 %v4461
    %7464 = vmatprep.subr.mxu0 0.0
    %7465 = vmatpush1.msra.mxu0 %v4460
    %7466 = vmatprep.subr.mxu0 0.0
    %7467 = vmatpush1.msra.mxu0 %v4459
    %7468 = vmatprep.subr.mxu0 0.0
    %7469 = vmatpush1.msra.mxu0 %v4458
    %7470 = vmatprep.subr.mxu0 0.0
    %7471 = vmatpush1.msra.mxu0 %v4457
    %7472 = vmatprep.subr.mxu0 0.0
    %7473 = vmatpush1.msra.mxu0 %v4456
    %7474 = vmatprep.subr.mxu0 0.0
    %7475 = vmatpush1.msra.mxu0 %v4455
    %7476 = vmatprep.subr.mxu0 0.0
    %7477 = vmatpush1.msra.mxu0 %v4454
    %7478 = vmatprep.subr.mxu0 0.0
    %7479 = vmatpush1.msra.mxu0 %v4453
    %7480 = vmatprep.subr.mxu0 0.0
    %7481 = vmatpush1.msra.mxu0 %v4452
    %7482 = vmatprep.subr.mxu0 0.0
    %7483 = vmatpush1.msra.mxu0 %v4451
    %7484 = vmatprep.subr.mxu0 0.0
    %7485 = vmatpush2.msra.mxu0 %v4482
    %7486 = vmatprep.subr.mxu0 0.0
    %7487 = vmatpush2.msra.mxu0 %v4481
    %7488 = vmatprep.subr.mxu0 0.0
    %7489 = vmatpush2.msra.mxu0 %v4480
    %7490 = vmatprep.subr.mxu0 0.0
    %7491 = vmatpush2.msra.mxu0 %v4479
    %7492 = vmatprep.subr.mxu0 0.0
    %7493 = vmatpush2.msra.mxu0 %v4478
    %7494 = vmatprep.subr.mxu0 0.0
    %7495 = vmatpush2.msra.mxu0 %v4477
    %7496 = vmatprep.subr.mxu0 0.0
    %7497 = vmatpush2.msra.mxu0 %v4476
    %7498 = vmatprep.subr.mxu0 0.0
    %7499 = vmatpush2.msra.mxu0 %v4475
    %7500 = vmatprep.subr.mxu0 0.0
    %7501 = vmatpush2.msra.mxu0 %v4474
    %7502 = vmatprep.subr.mxu0 0.0
    %7503 = vmatpush2.msra.mxu0 %v4473
    %7504 = vmatprep.subr.mxu0 0.0
    %7505 = vmatpush2.msra.mxu0 %v4472
    %7506 = vmatprep.subr.mxu0 0.0
    %7507 = vmatpush2.msra.mxu0 %v4471
    %7508 = vmatprep.subr.mxu0 0.0
    %7509 = vmatpush2.msra.mxu0 %v4470
    %7510 = vmatprep.subr.mxu0 0.0
    %7511 = vmatpush2.msra.mxu0 %v4469
    %7512 = vmatprep.subr.mxu0 0.0
    %7513 = vmatpush2.msra.mxu0 %v4468
    %7514 = vmatprep.subr.mxu0 0.0
    %7515 = vmatpush2.msra.mxu0 %v4467
    %7516 = vmatprep.mubr.f32.mxu0 %v7379
    %7517 = vmatmul.mubr.f32.gmra.mxu0 %v7378
    %v7518 = vpop.f32.mrf.mxu0
    %v7519 = vadd.f32 %v7449, %v7518
    %v7520 = vpop.f32.mrf.mxu0
    %7521 = vdwg.mxu0
    %7522 = vmatprep.subr.mxu0 0.0
    %7523 = vmatpush1.msra.mxu0 %v4498
    %7524 = vmatprep.subr.mxu0 0.0
    %7525 = vmatpush1.msra.mxu0 %v4497
    %7526 = vmatprep.subr.mxu0 0.0
    %7527 = vmatpush1.msra.mxu0 %v4496
    %7528 = vmatprep.subr.mxu0 0.0
    %7529 = vmatpush1.msra.mxu0 %v4495
    %7530 = vmatprep.subr.mxu0 0.0
    %7531 = vmatpush1.msra.mxu0 %v4494
    %7532 = vmatprep.subr.mxu0 0.0
    %7533 = vmatpush1.msra.mxu0 %v4493
    %7534 = vmatprep.subr.mxu0 0.0
    %7535 = vmatpush1.msra.mxu0 %v4492
    %7536 = vmatprep.subr.mxu0 0.0
    %7537 = vmatpush1.msra.mxu0 %v4491
    %7538 = vmatprep.subr.mxu0 0.0
    %7539 = vmatpush1.msra.mxu0 %v4490
    %7540 = vmatprep.subr.mxu0 0.0
    %7541 = vmatpush1.msra.mxu0 %v4489
    %7542 = vmatprep.subr.mxu0 0.0
    %7543 = vmatpush1.msra.mxu0 %v4488
    %7544 = vmatprep.subr.mxu0 0.0
    %7545 = vmatpush1.msra.mxu0 %v4487
    %7546 = vmatprep.subr.mxu0 0.0
    %7547 = vmatpush1.msra.mxu0 %v4486
    %7548 = vmatprep.subr.mxu0 0.0
    %7549 = vmatpush1.msra.mxu0 %v4485
    %7550 = vmatprep.subr.mxu0 0.0
    %7551 = vmatpush1.msra.mxu0 %v4484
    %7552 = vmatprep.subr.mxu0 0.0
    %7553 = vmatpush1.msra.mxu0 %v4483
    %7554 = vmatprep.subr.mxu0 0.0
    %7555 = vmatpush2.msra.mxu0 %v4514
    %7556 = vmatprep.subr.mxu0 0.0
    %7557 = vmatpush2.msra.mxu0 %v4513
    %7558 = vmatprep.subr.mxu0 0.0
    %7559 = vmatpush2.msra.mxu0 %v4512
    %7560 = vmatprep.subr.mxu0 0.0
    %7561 = vmatpush2.msra.mxu0 %v4511
    %7562 = vmatprep.subr.mxu0 0.0
    %7563 = vmatpush2.msra.mxu0 %v4510
    %7564 = vmatprep.subr.mxu0 0.0
    %7565 = vmatpush2.msra.mxu0 %v4509
    %7566 = vmatprep.subr.mxu0 0.0
    %7567 = vmatpush2.msra.mxu0 %v4508
    %7568 = vmatprep.subr.mxu0 0.0
    %7569 = vmatpush2.msra.mxu0 %v4507
    %7570 = vmatprep.subr.mxu0 0.0
    %7571 = vmatpush2.msra.mxu0 %v4506
    %7572 = vmatprep.subr.mxu0 0.0
    %7573 = vmatpush2.msra.mxu0 %v4505
    %7574 = vmatprep.subr.mxu0 0.0
    %7575 = vmatpush2.msra.mxu0 %v4504
    %7576 = vmatprep.subr.mxu0 0.0
    %7577 = vmatpush2.msra.mxu0 %v4503
    %7578 = vmatprep.subr.mxu0 0.0
    %7579 = vmatpush2.msra.mxu0 %v4502
    %7580 = vmatprep.subr.mxu0 0.0
    %7581 = vmatpush2.msra.mxu0 %v4501
    %7582 = vmatprep.subr.mxu0 0.0
    %7583 = vmatpush2.msra.mxu0 %v4500
    %7584 = vmatprep.subr.mxu0 0.0
    %7585 = vmatpush2.msra.mxu0 %v4499
    %7586 = vmatprep.mubr.f32.mxu0 %v7381
    %7587 = vmatmul.mubr.f32.gmra.mxu0 %v7380
    %v7588 = vpop.f32.mrf.mxu0
    %v7589 = vadd.f32 %v7519, %v7588
    %v7590 = vpop.f32.mrf.mxu0
    %7591 = vdwg.mxu0
    %7592 = vmax.xlane.f32.xlu0 %v7589
    %v7593 = vpop.xlane.xlu0 %7592
    %v7594 = vsub.f32 %v7589, %v7593
    %v7595 = vmul.f32 %v7594, 1.442695
    %v7596 = vpow.pop %v7595
    %7597 = vadd.xlane.f32.xlu0 %v7596
    %v7598 = vpop.xlane.xlu0 %7597
    %v7599 = vrcp.pop %v7598
    %v7600 = vmul.f32 %v7596, %v7599
    %7601 = vst [vmem:[#allocation13 + $0x50] sm:$0xff] %v7600
    %s7602 = scalar_lea.vmem [#allocation2], 51
    %v7603 = vld [vmem:[%s7602] ss:$8 sm:$0xf]
    %v7604 = vld [vmem:[%s7602] ss:$8 sm:$0x30]
    %v7605 = vor.u32 %v7603, %v7604
    %v7607 = vlaneseq
    %v7608 = vshrl.u32 %v7607, 7
    %v7609 = vsub.s32 0, %v7608
    %v7610 = vrot.slane %v7605, %v7609
    %v7611 = vlaneseq
    %v7612 = vshrl.u32 %v7611, 7
    %v7613 = vsub.s32 1, %v7612
    %v7614 = vrot.slane %v7605, %v7613
    %v7615 = vlaneseq
    %v7616 = vshrl.u32 %v7615, 7
    %v7617 = vsub.s32 2, %v7616
    %v7618 = vrot.slane %v7605, %v7617
    %v7619 = vlaneseq
    %v7620 = vshrl.u32 %v7619, 7
    %v7621 = vsub.s32 3, %v7620
    %v7622 = vrot.slane %v7605, %v7621
    %v7623 = vlaneseq
    %v7624 = vshrl.u32 %v7623, 7
    %v7625 = vsub.s32 4, %v7624
    %v7626 = vrot.slane %v7605, %v7625
    %v7627 = vlaneseq
    %v7628 = vshrl.u32 %v7627, 7
    %v7629 = vsub.s32 5, %v7628
    %v7630 = vrot.slane %v7605, %v7629
    %v7637 = vadd.f32 %v7610, %v6759
    %v7638 = vadd.f32 %v7614, %v6760
    %v7639 = vadd.f32 %v7618, %v6761
    %v7640 = vadd.f32 %v7622, %v6762
    %v7641 = vadd.f32 %v7626, %v6763
    %v7642 = vadd.f32 %v7630, %v6764
    %vm7643 = vcmp.ge.f32.partialorder %v7637, 0.0
    %vm7644 = vcmp.ge.f32.partialorder %v7638, 0.0
    %vm7645 = vcmp.ge.f32.partialorder %v7639, 0.0
    %vm7646 = vcmp.ge.f32.partialorder %v7640, 0.0
    %vm7647 = vcmp.ge.f32.partialorder %v7641, 0.0
    %vm7648 = vcmp.ge.f32.partialorder %v7642, 0.0
    %v7649 = vmul.f32 %v7637, 0.01
    %v7650 = vmul.f32 %v7638, 0.01
    %v7651 = vmul.f32 %v7639, 0.01
    %v7652 = vmul.f32 %v7640, 0.01
    %v7653 = vmul.f32 %v7641, 0.01
    %v7654 = vmul.f32 %v7642, 0.01
    %v7655 = vsel %vm7643, %v7637, %v7649
    %v7656 = vsel %vm7644, %v7638, %v7650
    %v7657 = vsel %vm7645, %v7639, %v7651
    %v7658 = vsel %vm7646, %v7640, %v7652
    %v7659 = vsel %vm7647, %v7641, %v7653
    %v7660 = vsel %vm7648, %v7642, %v7654
    %7661 = vmatprep.subr.mxu0 0.0
    %7662 = vmatpush1.msra.mxu0 %v4434
    %7663 = vmatprep.subr.mxu0 0.0
    %7664 = vmatpush1.msra.mxu0 %v4433
    %7665 = vmatprep.subr.mxu0 0.0
    %7666 = vmatpush1.msra.mxu0 %v4432
    %7667 = vmatprep.subr.mxu0 0.0
    %7668 = vmatpush1.msra.mxu0 %v4431
    %7669 = vmatprep.subr.mxu0 0.0
    %7670 = vmatpush1.msra.mxu0 %v4430
    %7671 = vmatprep.subr.mxu0 0.0
    %7672 = vmatpush1.msra.mxu0 %v4429
    %7673 = vmatprep.subr.mxu0 0.0
    %7674 = vmatpush1.msra.mxu0 %v4428
    %7675 = vmatprep.subr.mxu0 0.0
    %7676 = vmatpush1.msra.mxu0 %v4427
    %7677 = vmatprep.subr.mxu0 0.0
    %7678 = vmatpush1.msra.mxu0 %v4426
    %7679 = vmatprep.subr.mxu0 0.0
    %7680 = vmatpush1.msra.mxu0 %v4425
    %7681 = vmatprep.subr.mxu0 0.0
    %7682 = vmatpush1.msra.mxu0 %v4424
    %7683 = vmatprep.subr.mxu0 0.0
    %7684 = vmatpush1.msra.mxu0 %v4423
    %7685 = vmatprep.subr.mxu0 0.0
    %7686 = vmatpush1.msra.mxu0 %v4422
    %7687 = vmatprep.subr.mxu0 0.0
    %7688 = vmatpush1.msra.mxu0 %v4421
    %7689 = vmatprep.subr.mxu0 0.0
    %7690 = vmatpush1.msra.mxu0 %v4420
    %7691 = vmatprep.subr.mxu0 0.0
    %7692 = vmatpush1.msra.mxu0 %v4419
    %7693 = vmatprep.subr.mxu0 0.0
    %7694 = vmatpush2.msra.mxu0 %v4450
    %7695 = vmatprep.subr.mxu0 0.0
    %7696 = vmatpush2.msra.mxu0 %v4449
    %7697 = vmatprep.subr.mxu0 0.0
    %7698 = vmatpush2.msra.mxu0 %v4448
    %7699 = vmatprep.subr.mxu0 0.0
    %7700 = vmatpush2.msra.mxu0 %v4447
    %7701 = vmatprep.subr.mxu0 0.0
    %7702 = vmatpush2.msra.mxu0 %v4446
    %7703 = vmatprep.subr.mxu0 0.0
    %7704 = vmatpush2.msra.mxu0 %v4445
    %7705 = vmatprep.subr.mxu0 0.0
    %7706 = vmatpush2.msra.mxu0 %v4444
    %7707 = vmatprep.subr.mxu0 0.0
    %7708 = vmatpush2.msra.mxu0 %v4443
    %7709 = vmatprep.subr.mxu0 0.0
    %7710 = vmatpush2.msra.mxu0 %v4442
    %7711 = vmatprep.subr.mxu0 0.0
    %7712 = vmatpush2.msra.mxu0 %v4441
    %7713 = vmatprep.subr.mxu0 0.0
    %7714 = vmatpush2.msra.mxu0 %v4440
    %7715 = vmatprep.subr.mxu0 0.0
    %7716 = vmatpush2.msra.mxu0 %v4439
    %7717 = vmatprep.subr.mxu0 0.0
    %7718 = vmatpush2.msra.mxu0 %v4438
    %7719 = vmatprep.subr.mxu0 0.0
    %7720 = vmatpush2.msra.mxu0 %v4437
    %7721 = vmatprep.subr.mxu0 0.0
    %7722 = vmatpush2.msra.mxu0 %v4436
    %7723 = vmatprep.subr.mxu0 0.0
    %7724 = vmatpush2.msra.mxu0 %v4435
    %7725 = vmatprep.mubr.f32.mxu0 %v7656
    %7726 = vmatmul.mubr.f32.gmra.mxu0 %v7655
    %v7727 = vpop.f32.mrf.mxu0
    %v7728 = vadd.f32 %v4584, %v7727
    %v7729 = vpop.f32.mrf.mxu0
    %7730 = vdwg.mxu0
    %7731 = vmatprep.subr.mxu0 0.0
    %7732 = vmatpush1.msra.mxu0 %v4466
    %7733 = vmatprep.subr.mxu0 0.0
    %7734 = vmatpush1.msra.mxu0 %v4465
    %7735 = vmatprep.subr.mxu0 0.0
    %7736 = vmatpush1.msra.mxu0 %v4464
    %7737 = vmatprep.subr.mxu0 0.0
    %7738 = vmatpush1.msra.mxu0 %v4463
    %7739 = vmatprep.subr.mxu0 0.0
    %7740 = vmatpush1.msra.mxu0 %v4462
    %7741 = vmatprep.subr.mxu0 0.0
    %7742 = vmatpush1.msra.mxu0 %v4461
    %7743 = vmatprep.subr.mxu0 0.0
    %7744 = vmatpush1.msra.mxu0 %v4460
    %7745 = vmatprep.subr.mxu0 0.0
    %7746 = vmatpush1.msra.mxu0 %v4459
    %7747 = vmatprep.subr.mxu0 0.0
    %7748 = vmatpush1.msra.mxu0 %v4458
    %7749 = vmatprep.subr.mxu0 0.0
    %7750 = vmatpush1.msra.mxu0 %v4457
    %7751 = vmatprep.subr.mxu0 0.0
    %7752 = vmatpush1.msra.mxu0 %v4456
    %7753 = vmatprep.subr.mxu0 0.0
    %7754 = vmatpush1.msra.mxu0 %v4455
    %7755 = vmatprep.subr.mxu0 0.0
    %7756 = vmatpush1.msra.mxu0 %v4454
    %7757 = vmatprep.subr.mxu0 0.0
    %7758 = vmatpush1.msra.mxu0 %v4453
    %7759 = vmatprep.subr.mxu0 0.0
    %7760 = vmatpush1.msra.mxu0 %v4452
    %7761 = vmatprep.subr.mxu0 0.0
    %7762 = vmatpush1.msra.mxu0 %v4451
    %7763 = vmatprep.subr.mxu0 0.0
    %7764 = vmatpush2.msra.mxu0 %v4482
    %7765 = vmatprep.subr.mxu0 0.0
    %7766 = vmatpush2.msra.mxu0 %v4481
    %7767 = vmatprep.subr.mxu0 0.0
    %7768 = vmatpush2.msra.mxu0 %v4480
    %7769 = vmatprep.subr.mxu0 0.0
    %7770 = vmatpush2.msra.mxu0 %v4479
    %7771 = vmatprep.subr.mxu0 0.0
    %7772 = vmatpush2.msra.mxu0 %v4478
    %7773 = vmatprep.subr.mxu0 0.0
    %7774 = vmatpush2.msra.mxu0 %v4477
    %7775 = vmatprep.subr.mxu0 0.0
    %7776 = vmatpush2.msra.mxu0 %v4476
    %7777 = vmatprep.subr.mxu0 0.0
    %7778 = vmatpush2.msra.mxu0 %v4475
    %7779 = vmatprep.subr.mxu0 0.0
    %7780 = vmatpush2.msra.mxu0 %v4474
    %7781 = vmatprep.subr.mxu0 0.0
    %7782 = vmatpush2.msra.mxu0 %v4473
    %7783 = vmatprep.subr.mxu0 0.0
    %7784 = vmatpush2.msra.mxu0 %v4472
    %7785 = vmatprep.subr.mxu0 0.0
    %7786 = vmatpush2.msra.mxu0 %v4471
    %7787 = vmatprep.subr.mxu0 0.0
    %7788 = vmatpush2.msra.mxu0 %v4470
    %7789 = vmatprep.subr.mxu0 0.0
    %7790 = vmatpush2.msra.mxu0 %v4469
    %7791 = vmatprep.subr.mxu0 0.0
    %7792 = vmatpush2.msra.mxu0 %v4468
    %7793 = vmatprep.subr.mxu0 0.0
    %7794 = vmatpush2.msra.mxu0 %v4467
    %7795 = vmatprep.mubr.f32.mxu0 %v7658
    %7796 = vmatmul.mubr.f32.gmra.mxu0 %v7657
    %v7797 = vpop.f32.mrf.mxu0
    %v7798 = vadd.f32 %v7728, %v7797
    %v7799 = vpop.f32.mrf.mxu0
    %7800 = vdwg.mxu0
    %7801 = vmatprep.subr.mxu0 0.0
    %7802 = vmatpush1.msra.mxu0 %v4498
    %7803 = vmatprep.subr.mxu0 0.0
    %7804 = vmatpush1.msra.mxu0 %v4497
    %7805 = vmatprep.subr.mxu0 0.0
    %7806 = vmatpush1.msra.mxu0 %v4496
    %7807 = vmatprep.subr.mxu0 0.0
    %7808 = vmatpush1.msra.mxu0 %v4495
    %7809 = vmatprep.subr.mxu0 0.0
    %7810 = vmatpush1.msra.mxu0 %v4494
    %7811 = vmatprep.subr.mxu0 0.0
    %7812 = vmatpush1.msra.mxu0 %v4493
    %7813 = vmatprep.subr.mxu0 0.0
    %7814 = vmatpush1.msra.mxu0 %v4492
    %7815 = vmatprep.subr.mxu0 0.0
    %7816 = vmatpush1.msra.mxu0 %v4491
    %7817 = vmatprep.subr.mxu0 0.0
    %7818 = vmatpush1.msra.mxu0 %v4490
    %7819 = vmatprep.subr.mxu0 0.0
    %7820 = vmatpush1.msra.mxu0 %v4489
    %7821 = vmatprep.subr.mxu0 0.0
    %7822 = vmatpush1.msra.mxu0 %v4488
    %7823 = vmatprep.subr.mxu0 0.0
    %7824 = vmatpush1.msra.mxu0 %v4487
    %7825 = vmatprep.subr.mxu0 0.0
    %7826 = vmatpush1.msra.mxu0 %v4486
    %7827 = vmatprep.subr.mxu0 0.0
    %7828 = vmatpush1.msra.mxu0 %v4485
    %7829 = vmatprep.subr.mxu0 0.0
    %7830 = vmatpush1.msra.mxu0 %v4484
    %7831 = vmatprep.subr.mxu0 0.0
    %7832 = vmatpush1.msra.mxu0 %v4483
    %7833 = vmatprep.subr.mxu0 0.0
    %7834 = vmatpush2.msra.mxu0 %v4514
    %7835 = vmatprep.subr.mxu0 0.0
    %7836 = vmatpush2.msra.mxu0 %v4513
    %7837 = vmatprep.subr.mxu0 0.0
    %7838 = vmatpush2.msra.mxu0 %v4512
    %7839 = vmatprep.subr.mxu0 0.0
    %7840 = vmatpush2.msra.mxu0 %v4511
    %7841 = vmatprep.subr.mxu0 0.0
    %7842 = vmatpush2.msra.mxu0 %v4510
    %7843 = vmatprep.subr.mxu0 0.0
    %7844 = vmatpush2.msra.mxu0 %v4509
    %7845 = vmatprep.subr.mxu0 0.0
    %7846 = vmatpush2.msra.mxu0 %v4508
    %7847 = vmatprep.subr.mxu0 0.0
    %7848 = vmatpush2.msra.mxu0 %v4507
    %7849 = vmatprep.subr.mxu0 0.0
    %7850 = vmatpush2.msra.mxu0 %v4506
    %7851 = vmatprep.subr.mxu0 0.0
    %7852 = vmatpush2.msra.mxu0 %v4505
    %7853 = vmatprep.subr.mxu0 0.0
    %7854 = vmatpush2.msra.mxu0 %v4504
    %7855 = vmatprep.subr.mxu0 0.0
    %7856 = vmatpush2.msra.mxu0 %v4503
    %7857 = vmatprep.subr.mxu0 0.0
    %7858 = vmatpush2.msra.mxu0 %v4502
    %7859 = vmatprep.subr.mxu0 0.0
    %7860 = vmatpush2.msra.mxu0 %v4501
    %7861 = vmatprep.subr.mxu0 0.0
    %7862 = vmatpush2.msra.mxu0 %v4500
    %7863 = vmatprep.subr.mxu0 0.0
    %7864 = vmatpush2.msra.mxu0 %v4499
    %7865 = vmatprep.mubr.f32.mxu0 %v7660
    %7866 = vmatmul.mubr.f32.gmra.mxu0 %v7659
    %v7867 = vpop.f32.mrf.mxu0
    %v7868 = vadd.f32 %v7798, %v7867
    %v7869 = vpop.f32.mrf.mxu0
    %7870 = vdwg.mxu0
    %7871 = vmax.xlane.f32.xlu0 %v7868
    %v7872 = vpop.xlane.xlu0 %7871
    %v7873 = vsub.f32 %v7868, %v7872
    %v7874 = vmul.f32 %v7873, 1.442695
    %v7875 = vpow.pop %v7874
    %7876 = vadd.xlane.f32.xlu0 %v7875
    %v7877 = vpop.xlane.xlu0 %7876
    %v7878 = vrcp.pop %v7877
    %v7879 = vmul.f32 %v7875, %v7878
    %7880 = vst [vmem:[#allocation13 + $0x58] sm:$0xff] %v7879
    %s7881 = scalar_lea.vmem [#allocation2], 52
    %v7882 = vld [vmem:[%s7881] ss:$8 sm:$0xf]
    %v7883 = vld [vmem:[%s7881] ss:$8 sm:$0x30]
    %v7884 = vor.u32 %v7882, %v7883
    %v7886 = vlaneseq
    %v7887 = vshrl.u32 %v7886, 7
    %v7888 = vsub.s32 0, %v7887
    %v7889 = vrot.slane %v7884, %v7888
    %v7890 = vlaneseq
    %v7891 = vshrl.u32 %v7890, 7
    %v7892 = vsub.s32 1, %v7891
    %v7893 = vrot.slane %v7884, %v7892
    %v7894 = vlaneseq
    %v7895 = vshrl.u32 %v7894, 7
    %v7896 = vsub.s32 2, %v7895
    %v7897 = vrot.slane %v7884, %v7896
    %v7898 = vlaneseq
    %v7899 = vshrl.u32 %v7898, 7
    %v7900 = vsub.s32 3, %v7899
    %v7901 = vrot.slane %v7884, %v7900
    %v7902 = vlaneseq
    %v7903 = vshrl.u32 %v7902, 7
    %v7904 = vsub.s32 4, %v7903
    %v7905 = vrot.slane %v7884, %v7904
    %v7906 = vlaneseq
    %v7907 = vshrl.u32 %v7906, 7
    %v7908 = vsub.s32 5, %v7907
    %v7909 = vrot.slane %v7884, %v7908
    %v7916 = vadd.f32 %v7889, %v6759
    %v7917 = vadd.f32 %v7893, %v6760
    %v7918 = vadd.f32 %v7897, %v6761
    %v7919 = vadd.f32 %v7901, %v6762
    %v7920 = vadd.f32 %v7905, %v6763
    %v7921 = vadd.f32 %v7909, %v6764
    %vm7922 = vcmp.ge.f32.partialorder %v7916, 0.0
    %vm7923 = vcmp.ge.f32.partialorder %v7917, 0.0
    %vm7924 = vcmp.ge.f32.partialorder %v7918, 0.0
    %vm7925 = vcmp.ge.f32.partialorder %v7919, 0.0
    %vm7926 = vcmp.ge.f32.partialorder %v7920, 0.0
    %vm7927 = vcmp.ge.f32.partialorder %v7921, 0.0
    %v7928 = vmul.f32 %v7916, 0.01
    %v7929 = vmul.f32 %v7917, 0.01
    %v7930 = vmul.f32 %v7918, 0.01
    %v7931 = vmul.f32 %v7919, 0.01
    %v7932 = vmul.f32 %v7920, 0.01
    %v7933 = vmul.f32 %v7921, 0.01
    %v7934 = vsel %vm7922, %v7916, %v7928
    %v7935 = vsel %vm7923, %v7917, %v7929
    %v7936 = vsel %vm7924, %v7918, %v7930
    %v7937 = vsel %vm7925, %v7919, %v7931
    %v7938 = vsel %vm7926, %v7920, %v7932
    %v7939 = vsel %vm7927, %v7921, %v7933
    %7940 = vmatprep.subr.mxu0 0.0
    %7941 = vmatpush1.msra.mxu0 %v4434
    %7942 = vmatprep.subr.mxu0 0.0
    %7943 = vmatpush1.msra.mxu0 %v4433
    %7944 = vmatprep.subr.mxu0 0.0
    %7945 = vmatpush1.msra.mxu0 %v4432
    %7946 = vmatprep.subr.mxu0 0.0
    %7947 = vmatpush1.msra.mxu0 %v4431
    %7948 = vmatprep.subr.mxu0 0.0
    %7949 = vmatpush1.msra.mxu0 %v4430
    %7950 = vmatprep.subr.mxu0 0.0
    %7951 = vmatpush1.msra.mxu0 %v4429
    %7952 = vmatprep.subr.mxu0 0.0
    %7953 = vmatpush1.msra.mxu0 %v4428
    %7954 = vmatprep.subr.mxu0 0.0
    %7955 = vmatpush1.msra.mxu0 %v4427
    %7956 = vmatprep.subr.mxu0 0.0
    %7957 = vmatpush1.msra.mxu0 %v4426
    %7958 = vmatprep.subr.mxu0 0.0
    %7959 = vmatpush1.msra.mxu0 %v4425
    %7960 = vmatprep.subr.mxu0 0.0
    %7961 = vmatpush1.msra.mxu0 %v4424
    %7962 = vmatprep.subr.mxu0 0.0
    %7963 = vmatpush1.msra.mxu0 %v4423
    %7964 = vmatprep.subr.mxu0 0.0
    %7965 = vmatpush1.msra.mxu0 %v4422
    %7966 = vmatprep.subr.mxu0 0.0
    %7967 = vmatpush1.msra.mxu0 %v4421
    %7968 = vmatprep.subr.mxu0 0.0
    %7969 = vmatpush1.msra.mxu0 %v4420
    %7970 = vmatprep.subr.mxu0 0.0
    %7971 = vmatpush1.msra.mxu0 %v4419
    %7972 = vmatprep.subr.mxu0 0.0
    %7973 = vmatpush2.msra.mxu0 %v4450
    %7974 = vmatprep.subr.mxu0 0.0
    %7975 = vmatpush2.msra.mxu0 %v4449
    %7976 = vmatprep.subr.mxu0 0.0
    %7977 = vmatpush2.msra.mxu0 %v4448
    %7978 = vmatprep.subr.mxu0 0.0
    %7979 = vmatpush2.msra.mxu0 %v4447
    %7980 = vmatprep.subr.mxu0 0.0
    %7981 = vmatpush2.msra.mxu0 %v4446
    %7982 = vmatprep.subr.mxu0 0.0
    %7983 = vmatpush2.msra.mxu0 %v4445
    %7984 = vmatprep.subr.mxu0 0.0
    %7985 = vmatpush2.msra.mxu0 %v4444
    %7986 = vmatprep.subr.mxu0 0.0
    %7987 = vmatpush2.msra.mxu0 %v4443
    %7988 = vmatprep.subr.mxu0 0.0
    %7989 = vmatpush2.msra.mxu0 %v4442
    %7990 = vmatprep.subr.mxu0 0.0
    %7991 = vmatpush2.msra.mxu0 %v4441
    %7992 = vmatprep.subr.mxu0 0.0
    %7993 = vmatpush2.msra.mxu0 %v4440
    %7994 = vmatprep.subr.mxu0 0.0
    %7995 = vmatpush2.msra.mxu0 %v4439
    %7996 = vmatprep.subr.mxu0 0.0
    %7997 = vmatpush2.msra.mxu0 %v4438
    %7998 = vmatprep.subr.mxu0 0.0
    %7999 = vmatpush2.msra.mxu0 %v4437
    %8000 = vmatprep.subr.mxu0 0.0
    %8001 = vmatpush2.msra.mxu0 %v4436
    %8002 = vmatprep.subr.mxu0 0.0
    %8003 = vmatpush2.msra.mxu0 %v4435
    %8004 = vmatprep.mubr.f32.mxu0 %v7935
    %8005 = vmatmul.mubr.f32.gmra.mxu0 %v7934
    %v8006 = vpop.f32.mrf.mxu0
    %v8007 = vadd.f32 %v4584, %v8006
    %v8008 = vpop.f32.mrf.mxu0
    %8009 = vdwg.mxu0
    %8010 = vmatprep.subr.mxu0 0.0
    %8011 = vmatpush1.msra.mxu0 %v4466
    %8012 = vmatprep.subr.mxu0 0.0
    %8013 = vmatpush1.msra.mxu0 %v4465
    %8014 = vmatprep.subr.mxu0 0.0
    %8015 = vmatpush1.msra.mxu0 %v4464
    %8016 = vmatprep.subr.mxu0 0.0
    %8017 = vmatpush1.msra.mxu0 %v4463
    %8018 = vmatprep.subr.mxu0 0.0
    %8019 = vmatpush1.msra.mxu0 %v4462
    %8020 = vmatprep.subr.mxu0 0.0
    %8021 = vmatpush1.msra.mxu0 %v4461
    %8022 = vmatprep.subr.mxu0 0.0
    %8023 = vmatpush1.msra.mxu0 %v4460
    %8024 = vmatprep.subr.mxu0 0.0
    %8025 = vmatpush1.msra.mxu0 %v4459
    %8026 = vmatprep.subr.mxu0 0.0
    %8027 = vmatpush1.msra.mxu0 %v4458
    %8028 = vmatprep.subr.mxu0 0.0
    %8029 = vmatpush1.msra.mxu0 %v4457
    %8030 = vmatprep.subr.mxu0 0.0
    %8031 = vmatpush1.msra.mxu0 %v4456
    %8032 = vmatprep.subr.mxu0 0.0
    %8033 = vmatpush1.msra.mxu0 %v4455
    %8034 = vmatprep.subr.mxu0 0.0
    %8035 = vmatpush1.msra.mxu0 %v4454
    %8036 = vmatprep.subr.mxu0 0.0
    %8037 = vmatpush1.msra.mxu0 %v4453
    %8038 = vmatprep.subr.mxu0 0.0
    %8039 = vmatpush1.msra.mxu0 %v4452
    %8040 = vmatprep.subr.mxu0 0.0
    %8041 = vmatpush1.msra.mxu0 %v4451
    %8042 = vmatprep.subr.mxu0 0.0
    %8043 = vmatpush2.msra.mxu0 %v4482
    %8044 = vmatprep.subr.mxu0 0.0
    %8045 = vmatpush2.msra.mxu0 %v4481
    %8046 = vmatprep.subr.mxu0 0.0
    %8047 = vmatpush2.msra.mxu0 %v4480
    %8048 = vmatprep.subr.mxu0 0.0
    %8049 = vmatpush2.msra.mxu0 %v4479
    %8050 = vmatprep.subr.mxu0 0.0
    %8051 = vmatpush2.msra.mxu0 %v4478
    %8052 = vmatprep.subr.mxu0 0.0
    %8053 = vmatpush2.msra.mxu0 %v4477
    %8054 = vmatprep.subr.mxu0 0.0
    %8055 = vmatpush2.msra.mxu0 %v4476
    %8056 = vmatprep.subr.mxu0 0.0
    %8057 = vmatpush2.msra.mxu0 %v4475
    %8058 = vmatprep.subr.mxu0 0.0
    %8059 = vmatpush2.msra.mxu0 %v4474
    %8060 = vmatprep.subr.mxu0 0.0
    %8061 = vmatpush2.msra.mxu0 %v4473
    %8062 = vmatprep.subr.mxu0 0.0
    %8063 = vmatpush2.msra.mxu0 %v4472
    %8064 = vmatprep.subr.mxu0 0.0
    %8065 = vmatpush2.msra.mxu0 %v4471
    %8066 = vmatprep.subr.mxu0 0.0
    %8067 = vmatpush2.msra.mxu0 %v4470
    %8068 = vmatprep.subr.mxu0 0.0
    %8069 = vmatpush2.msra.mxu0 %v4469
    %8070 = vmatprep.subr.mxu0 0.0
    %8071 = vmatpush2.msra.mxu0 %v4468
    %8072 = vmatprep.subr.mxu0 0.0
    %8073 = vmatpush2.msra.mxu0 %v4467
    %8074 = vmatprep.mubr.f32.mxu0 %v7937
    %8075 = vmatmul.mubr.f32.gmra.mxu0 %v7936
    %v8076 = vpop.f32.mrf.mxu0
    %v8077 = vadd.f32 %v8007, %v8076
    %v8078 = vpop.f32.mrf.mxu0
    %8079 = vdwg.mxu0
    %8080 = vmatprep.subr.mxu0 0.0
    %8081 = vmatpush1.msra.mxu0 %v4498
    %8082 = vmatprep.subr.mxu0 0.0
    %8083 = vmatpush1.msra.mxu0 %v4497
    %8084 = vmatprep.subr.mxu0 0.0
    %8085 = vmatpush1.msra.mxu0 %v4496
    %8086 = vmatprep.subr.mxu0 0.0
    %8087 = vmatpush1.msra.mxu0 %v4495
    %8088 = vmatprep.subr.mxu0 0.0
    %8089 = vmatpush1.msra.mxu0 %v4494
    %8090 = vmatprep.subr.mxu0 0.0
    %8091 = vmatpush1.msra.mxu0 %v4493
    %8092 = vmatprep.subr.mxu0 0.0
    %8093 = vmatpush1.msra.mxu0 %v4492
    %8094 = vmatprep.subr.mxu0 0.0
    %8095 = vmatpush1.msra.mxu0 %v4491
    %8096 = vmatprep.subr.mxu0 0.0
    %8097 = vmatpush1.msra.mxu0 %v4490
    %8098 = vmatprep.subr.mxu0 0.0
    %8099 = vmatpush1.msra.mxu0 %v4489
    %8100 = vmatprep.subr.mxu0 0.0
    %8101 = vmatpush1.msra.mxu0 %v4488
    %8102 = vmatprep.subr.mxu0 0.0
    %8103 = vmatpush1.msra.mxu0 %v4487
    %8104 = vmatprep.subr.mxu0 0.0
    %8105 = vmatpush1.msra.mxu0 %v4486
    %8106 = vmatprep.subr.mxu0 0.0
    %8107 = vmatpush1.msra.mxu0 %v4485
    %8108 = vmatprep.subr.mxu0 0.0
    %8109 = vmatpush1.msra.mxu0 %v4484
    %8110 = vmatprep.subr.mxu0 0.0
    %8111 = vmatpush1.msra.mxu0 %v4483
    %8112 = vmatprep.subr.mxu0 0.0
    %8113 = vmatpush2.msra.mxu0 %v4514
    %8114 = vmatprep.subr.mxu0 0.0
    %8115 = vmatpush2.msra.mxu0 %v4513
    %8116 = vmatprep.subr.mxu0 0.0
    %8117 = vmatpush2.msra.mxu0 %v4512
    %8118 = vmatprep.subr.mxu0 0.0
    %8119 = vmatpush2.msra.mxu0 %v4511
    %8120 = vmatprep.subr.mxu0 0.0
    %8121 = vmatpush2.msra.mxu0 %v4510
    %8122 = vmatprep.subr.mxu0 0.0
    %8123 = vmatpush2.msra.mxu0 %v4509
    %8124 = vmatprep.subr.mxu0 0.0
    %8125 = vmatpush2.msra.mxu0 %v4508
    %8126 = vmatprep.subr.mxu0 0.0
    %8127 = vmatpush2.msra.mxu0 %v4507
    %8128 = vmatprep.subr.mxu0 0.0
    %8129 = vmatpush2.msra.mxu0 %v4506
    %8130 = vmatprep.subr.mxu0 0.0
    %8131 = vmatpush2.msra.mxu0 %v4505
    %8132 = vmatprep.subr.mxu0 0.0
    %8133 = vmatpush2.msra.mxu0 %v4504
    %8134 = vmatprep.subr.mxu0 0.0
    %8135 = vmatpush2.msra.mxu0 %v4503
    %8136 = vmatprep.subr.mxu0 0.0
    %8137 = vmatpush2.msra.mxu0 %v4502
    %8138 = vmatprep.subr.mxu0 0.0
    %8139 = vmatpush2.msra.mxu0 %v4501
    %8140 = vmatprep.subr.mxu0 0.0
    %8141 = vmatpush2.msra.mxu0 %v4500
    %8142 = vmatprep.subr.mxu0 0.0
    %8143 = vmatpush2.msra.mxu0 %v4499
    %8144 = vmatprep.mubr.f32.mxu0 %v7939
    %8145 = vmatmul.mubr.f32.gmra.mxu0 %v7938
    %v8146 = vpop.f32.mrf.mxu0
    %v8147 = vadd.f32 %v8077, %v8146
    %v8148 = vpop.f32.mrf.mxu0
    %8149 = vdwg.mxu0
    %8150 = vmax.xlane.f32.xlu0 %v8147
    %v8151 = vpop.xlane.xlu0 %8150
    %v8152 = vsub.f32 %v8147, %v8151
    %v8153 = vmul.f32 %v8152, 1.442695
    %v8154 = vpow.pop %v8153
    %8155 = vadd.xlane.f32.xlu0 %v8154
    %v8156 = vpop.xlane.xlu0 %8155
    %v8157 = vrcp.pop %v8156
    %v8158 = vmul.f32 %v8154, %v8157
    %8159 = vst [vmem:[#allocation13 + $0x60] sm:$0xff] %v8158
    %s8160 = scalar_lea.vmem [#allocation2], 53
    %v8161 = vld [vmem:[%s8160] ss:$8 sm:$0xf]
    %v8162 = vld [vmem:[%s8160] ss:$8 sm:$0x30]
    %v8163 = vor.u32 %v8161, %v8162
    %v8165 = vlaneseq
    %v8166 = vshrl.u32 %v8165, 7
    %v8167 = vsub.s32 0, %v8166
    %v8168 = vrot.slane %v8163, %v8167
    %v8169 = vlaneseq
    %v8170 = vshrl.u32 %v8169, 7
    %v8171 = vsub.s32 1, %v8170
    %v8172 = vrot.slane %v8163, %v8171
    %v8173 = vlaneseq
    %v8174 = vshrl.u32 %v8173, 7
    %v8175 = vsub.s32 2, %v8174
    %v8176 = vrot.slane %v8163, %v8175
    %v8177 = vlaneseq
    %v8178 = vshrl.u32 %v8177, 7
    %v8179 = vsub.s32 3, %v8178
    %v8180 = vrot.slane %v8163, %v8179
    %v8181 = vlaneseq
    %v8182 = vshrl.u32 %v8181, 7
    %v8183 = vsub.s32 4, %v8182
    %v8184 = vrot.slane %v8163, %v8183
    %v8185 = vlaneseq
    %v8186 = vshrl.u32 %v8185, 7
    %v8187 = vsub.s32 5, %v8186
    %v8188 = vrot.slane %v8163, %v8187
    %v8195 = vadd.f32 %v8168, %v6759
    %v8196 = vadd.f32 %v8172, %v6760
    %v8197 = vadd.f32 %v8176, %v6761
    %v8198 = vadd.f32 %v8180, %v6762
    %v8199 = vadd.f32 %v8184, %v6763
    %v8200 = vadd.f32 %v8188, %v6764
    %vm8201 = vcmp.ge.f32.partialorder %v8195, 0.0
    %vm8202 = vcmp.ge.f32.partialorder %v8196, 0.0
    %vm8203 = vcmp.ge.f32.partialorder %v8197, 0.0
    %vm8204 = vcmp.ge.f32.partialorder %v8198, 0.0
    %vm8205 = vcmp.ge.f32.partialorder %v8199, 0.0
    %vm8206 = vcmp.ge.f32.partialorder %v8200, 0.0
    %v8207 = vmul.f32 %v8195, 0.01
    %v8208 = vmul.f32 %v8196, 0.01
    %v8209 = vmul.f32 %v8197, 0.01
    %v8210 = vmul.f32 %v8198, 0.01
    %v8211 = vmul.f32 %v8199, 0.01
    %v8212 = vmul.f32 %v8200, 0.01
    %v8213 = vsel %vm8201, %v8195, %v8207
    %v8214 = vsel %vm8202, %v8196, %v8208
    %v8215 = vsel %vm8203, %v8197, %v8209
    %v8216 = vsel %vm8204, %v8198, %v8210
    %v8217 = vsel %vm8205, %v8199, %v8211
    %v8218 = vsel %vm8206, %v8200, %v8212
    %8219 = vmatprep.subr.mxu0 0.0
    %8220 = vmatpush1.msra.mxu0 %v4434
    %8221 = vmatprep.subr.mxu0 0.0
    %8222 = vmatpush1.msra.mxu0 %v4433
    %8223 = vmatprep.subr.mxu0 0.0
    %8224 = vmatpush1.msra.mxu0 %v4432
    %8225 = vmatprep.subr.mxu0 0.0
    %8226 = vmatpush1.msra.mxu0 %v4431
    %8227 = vmatprep.subr.mxu0 0.0
    %8228 = vmatpush1.msra.mxu0 %v4430
    %8229 = vmatprep.subr.mxu0 0.0
    %8230 = vmatpush1.msra.mxu0 %v4429
    %8231 = vmatprep.subr.mxu0 0.0
    %8232 = vmatpush1.msra.mxu0 %v4428
    %8233 = vmatprep.subr.mxu0 0.0
    %8234 = vmatpush1.msra.mxu0 %v4427
    %8235 = vmatprep.subr.mxu0 0.0
    %8236 = vmatpush1.msra.mxu0 %v4426
    %8237 = vmatprep.subr.mxu0 0.0
    %8238 = vmatpush1.msra.mxu0 %v4425
    %8239 = vmatprep.subr.mxu0 0.0
    %8240 = vmatpush1.msra.mxu0 %v4424
    %8241 = vmatprep.subr.mxu0 0.0
    %8242 = vmatpush1.msra.mxu0 %v4423
    %8243 = vmatprep.subr.mxu0 0.0
    %8244 = vmatpush1.msra.mxu0 %v4422
    %8245 = vmatprep.subr.mxu0 0.0
    %8246 = vmatpush1.msra.mxu0 %v4421
    %8247 = vmatprep.subr.mxu0 0.0
    %8248 = vmatpush1.msra.mxu0 %v4420
    %8249 = vmatprep.subr.mxu0 0.0
    %8250 = vmatpush1.msra.mxu0 %v4419
    %8251 = vmatprep.subr.mxu0 0.0
    %8252 = vmatpush2.msra.mxu0 %v4450
    %8253 = vmatprep.subr.mxu0 0.0
    %8254 = vmatpush2.msra.mxu0 %v4449
    %8255 = vmatprep.subr.mxu0 0.0
    %8256 = vmatpush2.msra.mxu0 %v4448
    %8257 = vmatprep.subr.mxu0 0.0
    %8258 = vmatpush2.msra.mxu0 %v4447
    %8259 = vmatprep.subr.mxu0 0.0
    %8260 = vmatpush2.msra.mxu0 %v4446
    %8261 = vmatprep.subr.mxu0 0.0
    %8262 = vmatpush2.msra.mxu0 %v4445
    %8263 = vmatprep.subr.mxu0 0.0
    %8264 = vmatpush2.msra.mxu0 %v4444
    %8265 = vmatprep.subr.mxu0 0.0
    %8266 = vmatpush2.msra.mxu0 %v4443
    %8267 = vmatprep.subr.mxu0 0.0
    %8268 = vmatpush2.msra.mxu0 %v4442
    %8269 = vmatprep.subr.mxu0 0.0
    %8270 = vmatpush2.msra.mxu0 %v4441
    %8271 = vmatprep.subr.mxu0 0.0
    %8272 = vmatpush2.msra.mxu0 %v4440
    %8273 = vmatprep.subr.mxu0 0.0
    %8274 = vmatpush2.msra.mxu0 %v4439
    %8275 = vmatprep.subr.mxu0 0.0
    %8276 = vmatpush2.msra.mxu0 %v4438
    %8277 = vmatprep.subr.mxu0 0.0
    %8278 = vmatpush2.msra.mxu0 %v4437
    %8279 = vmatprep.subr.mxu0 0.0
    %8280 = vmatpush2.msra.mxu0 %v4436
    %8281 = vmatprep.subr.mxu0 0.0
    %8282 = vmatpush2.msra.mxu0 %v4435
    %8283 = vmatprep.mubr.f32.mxu0 %v8214
    %8284 = vmatmul.mubr.f32.gmra.mxu0 %v8213
    %v8285 = vpop.f32.mrf.mxu0
    %v8286 = vadd.f32 %v4584, %v8285
    %v8287 = vpop.f32.mrf.mxu0
    %8288 = vdwg.mxu0
    %8289 = vmatprep.subr.mxu0 0.0
    %8290 = vmatpush1.msra.mxu0 %v4466
    %8291 = vmatprep.subr.mxu0 0.0
    %8292 = vmatpush1.msra.mxu0 %v4465
    %8293 = vmatprep.subr.mxu0 0.0
    %8294 = vmatpush1.msra.mxu0 %v4464
    %8295 = vmatprep.subr.mxu0 0.0
    %8296 = vmatpush1.msra.mxu0 %v4463
    %8297 = vmatprep.subr.mxu0 0.0
    %8298 = vmatpush1.msra.mxu0 %v4462
    %8299 = vmatprep.subr.mxu0 0.0
    %8300 = vmatpush1.msra.mxu0 %v4461
    %8301 = vmatprep.subr.mxu0 0.0
    %8302 = vmatpush1.msra.mxu0 %v4460
    %8303 = vmatprep.subr.mxu0 0.0
    %8304 = vmatpush1.msra.mxu0 %v4459
    %8305 = vmatprep.subr.mxu0 0.0
    %8306 = vmatpush1.msra.mxu0 %v4458
    %8307 = vmatprep.subr.mxu0 0.0
    %8308 = vmatpush1.msra.mxu0 %v4457
    %8309 = vmatprep.subr.mxu0 0.0
    %8310 = vmatpush1.msra.mxu0 %v4456
    %8311 = vmatprep.subr.mxu0 0.0
    %8312 = vmatpush1.msra.mxu0 %v4455
    %8313 = vmatprep.subr.mxu0 0.0
    %8314 = vmatpush1.msra.mxu0 %v4454
    %8315 = vmatprep.subr.mxu0 0.0
    %8316 = vmatpush1.msra.mxu0 %v4453
    %8317 = vmatprep.subr.mxu0 0.0
    %8318 = vmatpush1.msra.mxu0 %v4452
    %8319 = vmatprep.subr.mxu0 0.0
    %8320 = vmatpush1.msra.mxu0 %v4451
    %8321 = vmatprep.subr.mxu0 0.0
    %8322 = vmatpush2.msra.mxu0 %v4482
    %8323 = vmatprep.subr.mxu0 0.0
    %8324 = vmatpush2.msra.mxu0 %v4481
    %8325 = vmatprep.subr.mxu0 0.0
    %8326 = vmatpush2.msra.mxu0 %v4480
    %8327 = vmatprep.subr.mxu0 0.0
    %8328 = vmatpush2.msra.mxu0 %v4479
    %8329 = vmatprep.subr.mxu0 0.0
    %8330 = vmatpush2.msra.mxu0 %v4478
    %8331 = vmatprep.subr.mxu0 0.0
    %8332 = vmatpush2.msra.mxu0 %v4477
    %8333 = vmatprep.subr.mxu0 0.0
    %8334 = vmatpush2.msra.mxu0 %v4476
    %8335 = vmatprep.subr.mxu0 0.0
    %8336 = vmatpush2.msra.mxu0 %v4475
    %8337 = vmatprep.subr.mxu0 0.0
    %8338 = vmatpush2.msra.mxu0 %v4474
    %8339 = vmatprep.subr.mxu0 0.0
    %8340 = vmatpush2.msra.mxu0 %v4473
    %8341 = vmatprep.subr.mxu0 0.0
    %8342 = vmatpush2.msra.mxu0 %v4472
    %8343 = vmatprep.subr.mxu0 0.0
    %8344 = vmatpush2.msra.mxu0 %v4471
    %8345 = vmatprep.subr.mxu0 0.0
    %8346 = vmatpush2.msra.mxu0 %v4470
    %8347 = vmatprep.subr.mxu0 0.0
    %8348 = vmatpush2.msra.mxu0 %v4469
    %8349 = vmatprep.subr.mxu0 0.0
    %8350 = vmatpush2.msra.mxu0 %v4468
    %8351 = vmatprep.subr.mxu0 0.0
    %8352 = vmatpush2.msra.mxu0 %v4467
    %8353 = vmatprep.mubr.f32.mxu0 %v8216
    %8354 = vmatmul.mubr.f32.gmra.mxu0 %v8215
    %v8355 = vpop.f32.mrf.mxu0
    %v8356 = vadd.f32 %v8286, %v8355
    %v8357 = vpop.f32.mrf.mxu0
    %8358 = vdwg.mxu0
    %8359 = vmatprep.subr.mxu0 0.0
    %8360 = vmatpush1.msra.mxu0 %v4498
    %8361 = vmatprep.subr.mxu0 0.0
    %8362 = vmatpush1.msra.mxu0 %v4497
    %8363 = vmatprep.subr.mxu0 0.0
    %8364 = vmatpush1.msra.mxu0 %v4496
    %8365 = vmatprep.subr.mxu0 0.0
    %8366 = vmatpush1.msra.mxu0 %v4495
    %8367 = vmatprep.subr.mxu0 0.0
    %8368 = vmatpush1.msra.mxu0 %v4494
    %8369 = vmatprep.subr.mxu0 0.0
    %8370 = vmatpush1.msra.mxu0 %v4493
    %8371 = vmatprep.subr.mxu0 0.0
    %8372 = vmatpush1.msra.mxu0 %v4492
    %8373 = vmatprep.subr.mxu0 0.0
    %8374 = vmatpush1.msra.mxu0 %v4491
    %8375 = vmatprep.subr.mxu0 0.0
    %8376 = vmatpush1.msra.mxu0 %v4490
    %8377 = vmatprep.subr.mxu0 0.0
    %8378 = vmatpush1.msra.mxu0 %v4489
    %8379 = vmatprep.subr.mxu0 0.0
    %8380 = vmatpush1.msra.mxu0 %v4488
    %8381 = vmatprep.subr.mxu0 0.0
    %8382 = vmatpush1.msra.mxu0 %v4487
    %8383 = vmatprep.subr.mxu0 0.0
    %8384 = vmatpush1.msra.mxu0 %v4486
    %8385 = vmatprep.subr.mxu0 0.0
    %8386 = vmatpush1.msra.mxu0 %v4485
    %8387 = vmatprep.subr.mxu0 0.0
    %8388 = vmatpush1.msra.mxu0 %v4484
    %8389 = vmatprep.subr.mxu0 0.0
    %8390 = vmatpush1.msra.mxu0 %v4483
    %8391 = vmatprep.subr.mxu0 0.0
    %8392 = vmatpush2.msra.mxu0 %v4514
    %8393 = vmatprep.subr.mxu0 0.0
    %8394 = vmatpush2.msra.mxu0 %v4513
    %8395 = vmatprep.subr.mxu0 0.0
    %8396 = vmatpush2.msra.mxu0 %v4512
    %8397 = vmatprep.subr.mxu0 0.0
    %8398 = vmatpush2.msra.mxu0 %v4511
    %8399 = vmatprep.subr.mxu0 0.0
    %8400 = vmatpush2.msra.mxu0 %v4510
    %8401 = vmatprep.subr.mxu0 0.0
    %8402 = vmatpush2.msra.mxu0 %v4509
    %8403 = vmatprep.subr.mxu0 0.0
    %8404 = vmatpush2.msra.mxu0 %v4508
    %8405 = vmatprep.subr.mxu0 0.0
    %8406 = vmatpush2.msra.mxu0 %v4507
    %8407 = vmatprep.subr.mxu0 0.0
    %8408 = vmatpush2.msra.mxu0 %v4506
    %8409 = vmatprep.subr.mxu0 0.0
    %8410 = vmatpush2.msra.mxu0 %v4505
    %8411 = vmatprep.subr.mxu0 0.0
    %8412 = vmatpush2.msra.mxu0 %v4504
    %8413 = vmatprep.subr.mxu0 0.0
    %8414 = vmatpush2.msra.mxu0 %v4503
    %8415 = vmatprep.subr.mxu0 0.0
    %8416 = vmatpush2.msra.mxu0 %v4502
    %8417 = vmatprep.subr.mxu0 0.0
    %8418 = vmatpush2.msra.mxu0 %v4501
    %8419 = vmatprep.subr.mxu0 0.0
    %8420 = vmatpush2.msra.mxu0 %v4500
    %8421 = vmatprep.subr.mxu0 0.0
    %8422 = vmatpush2.msra.mxu0 %v4499
    %8423 = vmatprep.mubr.f32.mxu0 %v8218
    %8424 = vmatmul.mubr.f32.gmra.mxu0 %v8217
    %v8425 = vpop.f32.mrf.mxu0
    %v8426 = vadd.f32 %v8356, %v8425
    %v8427 = vpop.f32.mrf.mxu0
    %8428 = vdwg.mxu0
    %8429 = vmax.xlane.f32.xlu0 %v8426
    %v8430 = vpop.xlane.xlu0 %8429
    %v8431 = vsub.f32 %v8426, %v8430
    %v8432 = vmul.f32 %v8431, 1.442695
    %v8433 = vpow.pop %v8432
    %8434 = vadd.xlane.f32.xlu0 %v8433
    %v8435 = vpop.xlane.xlu0 %8434
    %v8436 = vrcp.pop %v8435
    %v8437 = vmul.f32 %v8433, %v8436
    %8438 = vst [vmem:[#allocation13 + $0x68] sm:$0xff] %v8437
    %s8439 = scalar_lea.vmem [#allocation2], 54
    %v8440 = vld [vmem:[%s8439] ss:$8 sm:$0xf]
    %v8441 = vld [vmem:[%s8439] ss:$8 sm:$0x30]
    %v8442 = vor.u32 %v8440, %v8441
    %v8444 = vlaneseq
    %v8445 = vshrl.u32 %v8444, 7
    %v8446 = vsub.s32 0, %v8445
    %v8447 = vrot.slane %v8442, %v8446
    %v8448 = vlaneseq
    %v8449 = vshrl.u32 %v8448, 7
    %v8450 = vsub.s32 1, %v8449
    %v8451 = vrot.slane %v8442, %v8450
    %v8452 = vlaneseq
    %v8453 = vshrl.u32 %v8452, 7
    %v8454 = vsub.s32 2, %v8453
    %v8455 = vrot.slane %v8442, %v8454
    %v8456 = vlaneseq
    %v8457 = vshrl.u32 %v8456, 7
    %v8458 = vsub.s32 3, %v8457
    %v8459 = vrot.slane %v8442, %v8458
    %v8460 = vlaneseq
    %v8461 = vshrl.u32 %v8460, 7
    %v8462 = vsub.s32 4, %v8461
    %v8463 = vrot.slane %v8442, %v8462
    %v8464 = vlaneseq
    %v8465 = vshrl.u32 %v8464, 7
    %v8466 = vsub.s32 5, %v8465
    %v8467 = vrot.slane %v8442, %v8466
    %v8474 = vadd.f32 %v8447, %v6759
    %v8475 = vadd.f32 %v8451, %v6760
    %v8476 = vadd.f32 %v8455, %v6761
    %v8477 = vadd.f32 %v8459, %v6762
    %v8478 = vadd.f32 %v8463, %v6763
    %v8479 = vadd.f32 %v8467, %v6764
    %vm8480 = vcmp.ge.f32.partialorder %v8474, 0.0
    %vm8481 = vcmp.ge.f32.partialorder %v8475, 0.0
    %vm8482 = vcmp.ge.f32.partialorder %v8476, 0.0
    %vm8483 = vcmp.ge.f32.partialorder %v8477, 0.0
    %vm8484 = vcmp.ge.f32.partialorder %v8478, 0.0
    %vm8485 = vcmp.ge.f32.partialorder %v8479, 0.0
    %v8486 = vmul.f32 %v8474, 0.01
    %v8487 = vmul.f32 %v8475, 0.01
    %v8488 = vmul.f32 %v8476, 0.01
    %v8489 = vmul.f32 %v8477, 0.01
    %v8490 = vmul.f32 %v8478, 0.01
    %v8491 = vmul.f32 %v8479, 0.01
    %v8492 = vsel %vm8480, %v8474, %v8486
    %v8493 = vsel %vm8481, %v8475, %v8487
    %v8494 = vsel %vm8482, %v8476, %v8488
    %v8495 = vsel %vm8483, %v8477, %v8489
    %v8496 = vsel %vm8484, %v8478, %v8490
    %v8497 = vsel %vm8485, %v8479, %v8491
    %8498 = vmatprep.subr.mxu0 0.0
    %8499 = vmatpush1.msra.mxu0 %v4434
    %8500 = vmatprep.subr.mxu0 0.0
    %8501 = vmatpush1.msra.mxu0 %v4433
    %8502 = vmatprep.subr.mxu0 0.0
    %8503 = vmatpush1.msra.mxu0 %v4432
    %8504 = vmatprep.subr.mxu0 0.0
    %8505 = vmatpush1.msra.mxu0 %v4431
    %8506 = vmatprep.subr.mxu0 0.0
    %8507 = vmatpush1.msra.mxu0 %v4430
    %8508 = vmatprep.subr.mxu0 0.0
    %8509 = vmatpush1.msra.mxu0 %v4429
    %8510 = vmatprep.subr.mxu0 0.0
    %8511 = vmatpush1.msra.mxu0 %v4428
    %8512 = vmatprep.subr.mxu0 0.0
    %8513 = vmatpush1.msra.mxu0 %v4427
    %8514 = vmatprep.subr.mxu0 0.0
    %8515 = vmatpush1.msra.mxu0 %v4426
    %8516 = vmatprep.subr.mxu0 0.0
    %8517 = vmatpush1.msra.mxu0 %v4425
    %8518 = vmatprep.subr.mxu0 0.0
    %8519 = vmatpush1.msra.mxu0 %v4424
    %8520 = vmatprep.subr.mxu0 0.0
    %8521 = vmatpush1.msra.mxu0 %v4423
    %8522 = vmatprep.subr.mxu0 0.0
    %8523 = vmatpush1.msra.mxu0 %v4422
    %8524 = vmatprep.subr.mxu0 0.0
    %8525 = vmatpush1.msra.mxu0 %v4421
    %8526 = vmatprep.subr.mxu0 0.0
    %8527 = vmatpush1.msra.mxu0 %v4420
    %8528 = vmatprep.subr.mxu0 0.0
    %8529 = vmatpush1.msra.mxu0 %v4419
    %8530 = vmatprep.subr.mxu0 0.0
    %8531 = vmatpush2.msra.mxu0 %v4450
    %8532 = vmatprep.subr.mxu0 0.0
    %8533 = vmatpush2.msra.mxu0 %v4449
    %8534 = vmatprep.subr.mxu0 0.0
    %8535 = vmatpush2.msra.mxu0 %v4448
    %8536 = vmatprep.subr.mxu0 0.0
    %8537 = vmatpush2.msra.mxu0 %v4447
    %8538 = vmatprep.subr.mxu0 0.0
    %8539 = vmatpush2.msra.mxu0 %v4446
    %8540 = vmatprep.subr.mxu0 0.0
    %8541 = vmatpush2.msra.mxu0 %v4445
    %8542 = vmatprep.subr.mxu0 0.0
    %8543 = vmatpush2.msra.mxu0 %v4444
    %8544 = vmatprep.subr.mxu0 0.0
    %8545 = vmatpush2.msra.mxu0 %v4443
    %8546 = vmatprep.subr.mxu0 0.0
    %8547 = vmatpush2.msra.mxu0 %v4442
    %8548 = vmatprep.subr.mxu0 0.0
    %8549 = vmatpush2.msra.mxu0 %v4441
    %8550 = vmatprep.subr.mxu0 0.0
    %8551 = vmatpush2.msra.mxu0 %v4440
    %8552 = vmatprep.subr.mxu0 0.0
    %8553 = vmatpush2.msra.mxu0 %v4439
    %8554 = vmatprep.subr.mxu0 0.0
    %8555 = vmatpush2.msra.mxu0 %v4438
    %8556 = vmatprep.subr.mxu0 0.0
    %8557 = vmatpush2.msra.mxu0 %v4437
    %8558 = vmatprep.subr.mxu0 0.0
    %8559 = vmatpush2.msra.mxu0 %v4436
    %8560 = vmatprep.subr.mxu0 0.0
    %8561 = vmatpush2.msra.mxu0 %v4435
    %8562 = vmatprep.mubr.f32.mxu0 %v8493
    %8563 = vmatmul.mubr.f32.gmra.mxu0 %v8492
    %v8564 = vpop.f32.mrf.mxu0
    %v8565 = vadd.f32 %v4584, %v8564
    %v8566 = vpop.f32.mrf.mxu0
    %8567 = vdwg.mxu0
    %8568 = vmatprep.subr.mxu0 0.0
    %8569 = vmatpush1.msra.mxu0 %v4466
    %8570 = vmatprep.subr.mxu0 0.0
    %8571 = vmatpush1.msra.mxu0 %v4465
    %8572 = vmatprep.subr.mxu0 0.0
    %8573 = vmatpush1.msra.mxu0 %v4464
    %8574 = vmatprep.subr.mxu0 0.0
    %8575 = vmatpush1.msra.mxu0 %v4463
    %8576 = vmatprep.subr.mxu0 0.0
    %8577 = vmatpush1.msra.mxu0 %v4462
    %8578 = vmatprep.subr.mxu0 0.0
    %8579 = vmatpush1.msra.mxu0 %v4461
    %8580 = vmatprep.subr.mxu0 0.0
    %8581 = vmatpush1.msra.mxu0 %v4460
    %8582 = vmatprep.subr.mxu0 0.0
    %8583 = vmatpush1.msra.mxu0 %v4459
    %8584 = vmatprep.subr.mxu0 0.0
    %8585 = vmatpush1.msra.mxu0 %v4458
    %8586 = vmatprep.subr.mxu0 0.0
    %8587 = vmatpush1.msra.mxu0 %v4457
    %8588 = vmatprep.subr.mxu0 0.0
    %8589 = vmatpush1.msra.mxu0 %v4456
    %8590 = vmatprep.subr.mxu0 0.0
    %8591 = vmatpush1.msra.mxu0 %v4455
    %8592 = vmatprep.subr.mxu0 0.0
    %8593 = vmatpush1.msra.mxu0 %v4454
    %8594 = vmatprep.subr.mxu0 0.0
    %8595 = vmatpush1.msra.mxu0 %v4453
    %8596 = vmatprep.subr.mxu0 0.0
    %8597 = vmatpush1.msra.mxu0 %v4452
    %8598 = vmatprep.subr.mxu0 0.0
    %8599 = vmatpush1.msra.mxu0 %v4451
    %8600 = vmatprep.subr.mxu0 0.0
    %8601 = vmatpush2.msra.mxu0 %v4482
    %8602 = vmatprep.subr.mxu0 0.0
    %8603 = vmatpush2.msra.mxu0 %v4481
    %8604 = vmatprep.subr.mxu0 0.0
    %8605 = vmatpush2.msra.mxu0 %v4480
    %8606 = vmatprep.subr.mxu0 0.0
    %8607 = vmatpush2.msra.mxu0 %v4479
    %8608 = vmatprep.subr.mxu0 0.0
    %8609 = vmatpush2.msra.mxu0 %v4478
    %8610 = vmatprep.subr.mxu0 0.0
    %8611 = vmatpush2.msra.mxu0 %v4477
    %8612 = vmatprep.subr.mxu0 0.0
    %8613 = vmatpush2.msra.mxu0 %v4476
    %8614 = vmatprep.subr.mxu0 0.0
    %8615 = vmatpush2.msra.mxu0 %v4475
    %8616 = vmatprep.subr.mxu0 0.0
    %8617 = vmatpush2.msra.mxu0 %v4474
    %8618 = vmatprep.subr.mxu0 0.0
    %8619 = vmatpush2.msra.mxu0 %v4473
    %8620 = vmatprep.subr.mxu0 0.0
    %8621 = vmatpush2.msra.mxu0 %v4472
    %8622 = vmatprep.subr.mxu0 0.0
    %8623 = vmatpush2.msra.mxu0 %v4471
    %8624 = vmatprep.subr.mxu0 0.0
    %8625 = vmatpush2.msra.mxu0 %v4470
    %8626 = vmatprep.subr.mxu0 0.0
    %8627 = vmatpush2.msra.mxu0 %v4469
    %8628 = vmatprep.subr.mxu0 0.0
    %8629 = vmatpush2.msra.mxu0 %v4468
    %8630 = vmatprep.subr.mxu0 0.0
    %8631 = vmatpush2.msra.mxu0 %v4467
    %8632 = vmatprep.mubr.f32.mxu0 %v8495
    %8633 = vmatmul.mubr.f32.gmra.mxu0 %v8494
    %v8634 = vpop.f32.mrf.mxu0
    %v8635 = vadd.f32 %v8565, %v8634
    %v8636 = vpop.f32.mrf.mxu0
    %8637 = vdwg.mxu0
    %8638 = vmatprep.subr.mxu0 0.0
    %8639 = vmatpush1.msra.mxu0 %v4498
    %8640 = vmatprep.subr.mxu0 0.0
    %8641 = vmatpush1.msra.mxu0 %v4497
    %8642 = vmatprep.subr.mxu0 0.0
    %8643 = vmatpush1.msra.mxu0 %v4496
    %8644 = vmatprep.subr.mxu0 0.0
    %8645 = vmatpush1.msra.mxu0 %v4495
    %8646 = vmatprep.subr.mxu0 0.0
    %8647 = vmatpush1.msra.mxu0 %v4494
    %8648 = vmatprep.subr.mxu0 0.0
    %8649 = vmatpush1.msra.mxu0 %v4493
    %8650 = vmatprep.subr.mxu0 0.0
    %8651 = vmatpush1.msra.mxu0 %v4492
    %8652 = vmatprep.subr.mxu0 0.0
    %8653 = vmatpush1.msra.mxu0 %v4491
    %8654 = vmatprep.subr.mxu0 0.0
    %8655 = vmatpush1.msra.mxu0 %v4490
    %8656 = vmatprep.subr.mxu0 0.0
    %8657 = vmatpush1.msra.mxu0 %v4489
    %8658 = vmatprep.subr.mxu0 0.0
    %8659 = vmatpush1.msra.mxu0 %v4488
    %8660 = vmatprep.subr.mxu0 0.0
    %8661 = vmatpush1.msra.mxu0 %v4487
    %8662 = vmatprep.subr.mxu0 0.0
    %8663 = vmatpush1.msra.mxu0 %v4486
    %8664 = vmatprep.subr.mxu0 0.0
    %8665 = vmatpush1.msra.mxu0 %v4485
    %8666 = vmatprep.subr.mxu0 0.0
    %8667 = vmatpush1.msra.mxu0 %v4484
    %8668 = vmatprep.subr.mxu0 0.0
    %8669 = vmatpush1.msra.mxu0 %v4483
    %8670 = vmatprep.subr.mxu0 0.0
    %8671 = vmatpush2.msra.mxu0 %v4514
    %8672 = vmatprep.subr.mxu0 0.0
    %8673 = vmatpush2.msra.mxu0 %v4513
    %8674 = vmatprep.subr.mxu0 0.0
    %8675 = vmatpush2.msra.mxu0 %v4512
    %8676 = vmatprep.subr.mxu0 0.0
    %8677 = vmatpush2.msra.mxu0 %v4511
    %8678 = vmatprep.subr.mxu0 0.0
    %8679 = vmatpush2.msra.mxu0 %v4510
    %8680 = vmatprep.subr.mxu0 0.0
    %8681 = vmatpush2.msra.mxu0 %v4509
    %8682 = vmatprep.subr.mxu0 0.0
    %8683 = vmatpush2.msra.mxu0 %v4508
    %8684 = vmatprep.subr.mxu0 0.0
    %8685 = vmatpush2.msra.mxu0 %v4507
    %8686 = vmatprep.subr.mxu0 0.0
    %8687 = vmatpush2.msra.mxu0 %v4506
    %8688 = vmatprep.subr.mxu0 0.0
    %8689 = vmatpush2.msra.mxu0 %v4505
    %8690 = vmatprep.subr.mxu0 0.0
    %8691 = vmatpush2.msra.mxu0 %v4504
    %8692 = vmatprep.subr.mxu0 0.0
    %8693 = vmatpush2.msra.mxu0 %v4503
    %8694 = vmatprep.subr.mxu0 0.0
    %8695 = vmatpush2.msra.mxu0 %v4502
    %8696 = vmatprep.subr.mxu0 0.0
    %8697 = vmatpush2.msra.mxu0 %v4501
    %8698 = vmatprep.subr.mxu0 0.0
    %8699 = vmatpush2.msra.mxu0 %v4500
    %8700 = vmatprep.subr.mxu0 0.0
    %8701 = vmatpush2.msra.mxu0 %v4499
    %8702 = vmatprep.mubr.f32.mxu0 %v8497
    %8703 = vmatmul.mubr.f32.gmra.mxu0 %v8496
    %v8704 = vpop.f32.mrf.mxu0
    %v8705 = vadd.f32 %v8635, %v8704
    %v8706 = vpop.f32.mrf.mxu0
    %8707 = vdwg.mxu0
    %8708 = vmax.xlane.f32.xlu0 %v8705
    %v8709 = vpop.xlane.xlu0 %8708
    %v8710 = vsub.f32 %v8705, %v8709
    %v8711 = vmul.f32 %v8710, 1.442695
    %v8712 = vpow.pop %v8711
    %8713 = vadd.xlane.f32.xlu0 %v8712
    %v8714 = vpop.xlane.xlu0 %8713
    %v8715 = vrcp.pop %v8714
    %v8716 = vmul.f32 %v8712, %v8715
    %8717 = vst [vmem:[#allocation13 + $0x70] sm:$0xff] %v8716
    %s8718 = scalar_lea.vmem [#allocation2], 55
    %v8719 = vld [vmem:[%s8718] ss:$8 sm:$0xf]
    %v8720 = vld [vmem:[%s8718] ss:$8 sm:$0x30]
    %v8721 = vor.u32 %v8719, %v8720
    %v8723 = vlaneseq
    %v8724 = vshrl.u32 %v8723, 7
    %v8725 = vsub.s32 0, %v8724
    %v8726 = vrot.slane %v8721, %v8725
    %v8727 = vlaneseq
    %v8728 = vshrl.u32 %v8727, 7
    %v8729 = vsub.s32 1, %v8728
    %v8730 = vrot.slane %v8721, %v8729
    %v8731 = vlaneseq
    %v8732 = vshrl.u32 %v8731, 7
    %v8733 = vsub.s32 2, %v8732
    %v8734 = vrot.slane %v8721, %v8733
    %v8735 = vlaneseq
    %v8736 = vshrl.u32 %v8735, 7
    %v8737 = vsub.s32 3, %v8736
    %v8738 = vrot.slane %v8721, %v8737
    %v8739 = vlaneseq
    %v8740 = vshrl.u32 %v8739, 7
    %v8741 = vsub.s32 4, %v8740
    %v8742 = vrot.slane %v8721, %v8741
    %v8743 = vlaneseq
    %v8744 = vshrl.u32 %v8743, 7
    %v8745 = vsub.s32 5, %v8744
    %v8746 = vrot.slane %v8721, %v8745
    %v8753 = vadd.f32 %v8726, %v6759
    %v8754 = vadd.f32 %v8730, %v6760
    %v8755 = vadd.f32 %v8734, %v6761
    %v8756 = vadd.f32 %v8738, %v6762
    %v8757 = vadd.f32 %v8742, %v6763
    %v8758 = vadd.f32 %v8746, %v6764
    %vm8759 = vcmp.ge.f32.partialorder %v8753, 0.0
    %vm8760 = vcmp.ge.f32.partialorder %v8754, 0.0
    %vm8761 = vcmp.ge.f32.partialorder %v8755, 0.0
    %vm8762 = vcmp.ge.f32.partialorder %v8756, 0.0
    %vm8763 = vcmp.ge.f32.partialorder %v8757, 0.0
    %vm8764 = vcmp.ge.f32.partialorder %v8758, 0.0
    %v8765 = vmul.f32 %v8753, 0.01
    %v8766 = vmul.f32 %v8754, 0.01
    %v8767 = vmul.f32 %v8755, 0.01
    %v8768 = vmul.f32 %v8756, 0.01
    %v8769 = vmul.f32 %v8757, 0.01
    %v8770 = vmul.f32 %v8758, 0.01
    %v8771 = vsel %vm8759, %v8753, %v8765
    %v8772 = vsel %vm8760, %v8754, %v8766
    %v8773 = vsel %vm8761, %v8755, %v8767
    %v8774 = vsel %vm8762, %v8756, %v8768
    %v8775 = vsel %vm8763, %v8757, %v8769
    %v8776 = vsel %vm8764, %v8758, %v8770
    %8777 = vmatprep.subr.mxu0 0.0
    %8778 = vmatpush1.msra.mxu0 %v4434
    %8779 = vmatprep.subr.mxu0 0.0
    %8780 = vmatpush1.msra.mxu0 %v4433
    %8781 = vmatprep.subr.mxu0 0.0
    %8782 = vmatpush1.msra.mxu0 %v4432
    %8783 = vmatprep.subr.mxu0 0.0
    %8784 = vmatpush1.msra.mxu0 %v4431
    %8785 = vmatprep.subr.mxu0 0.0
    %8786 = vmatpush1.msra.mxu0 %v4430
    %8787 = vmatprep.subr.mxu0 0.0
    %8788 = vmatpush1.msra.mxu0 %v4429
    %8789 = vmatprep.subr.mxu0 0.0
    %8790 = vmatpush1.msra.mxu0 %v4428
    %8791 = vmatprep.subr.mxu0 0.0
    %8792 = vmatpush1.msra.mxu0 %v4427
    %8793 = vmatprep.subr.mxu0 0.0
    %8794 = vmatpush1.msra.mxu0 %v4426
    %8795 = vmatprep.subr.mxu0 0.0
    %8796 = vmatpush1.msra.mxu0 %v4425
    %8797 = vmatprep.subr.mxu0 0.0
    %8798 = vmatpush1.msra.mxu0 %v4424
    %8799 = vmatprep.subr.mxu0 0.0
    %8800 = vmatpush1.msra.mxu0 %v4423
    %8801 = vmatprep.subr.mxu0 0.0
    %8802 = vmatpush1.msra.mxu0 %v4422
    %8803 = vmatprep.subr.mxu0 0.0
    %8804 = vmatpush1.msra.mxu0 %v4421
    %8805 = vmatprep.subr.mxu0 0.0
    %8806 = vmatpush1.msra.mxu0 %v4420
    %8807 = vmatprep.subr.mxu0 0.0
    %8808 = vmatpush1.msra.mxu0 %v4419
    %8809 = vmatprep.subr.mxu0 0.0
    %8810 = vmatpush2.msra.mxu0 %v4450
    %8811 = vmatprep.subr.mxu0 0.0
    %8812 = vmatpush2.msra.mxu0 %v4449
    %8813 = vmatprep.subr.mxu0 0.0
    %8814 = vmatpush2.msra.mxu0 %v4448
    %8815 = vmatprep.subr.mxu0 0.0
    %8816 = vmatpush2.msra.mxu0 %v4447
    %8817 = vmatprep.subr.mxu0 0.0
    %8818 = vmatpush2.msra.mxu0 %v4446
    %8819 = vmatprep.subr.mxu0 0.0
    %8820 = vmatpush2.msra.mxu0 %v4445
    %8821 = vmatprep.subr.mxu0 0.0
    %8822 = vmatpush2.msra.mxu0 %v4444
    %8823 = vmatprep.subr.mxu0 0.0
    %8824 = vmatpush2.msra.mxu0 %v4443
    %8825 = vmatprep.subr.mxu0 0.0
    %8826 = vmatpush2.msra.mxu0 %v4442
    %8827 = vmatprep.subr.mxu0 0.0
    %8828 = vmatpush2.msra.mxu0 %v4441
    %8829 = vmatprep.subr.mxu0 0.0
    %8830 = vmatpush2.msra.mxu0 %v4440
    %8831 = vmatprep.subr.mxu0 0.0
    %8832 = vmatpush2.msra.mxu0 %v4439
    %8833 = vmatprep.subr.mxu0 0.0
    %8834 = vmatpush2.msra.mxu0 %v4438
    %8835 = vmatprep.subr.mxu0 0.0
    %8836 = vmatpush2.msra.mxu0 %v4437
    %8837 = vmatprep.subr.mxu0 0.0
    %8838 = vmatpush2.msra.mxu0 %v4436
    %8839 = vmatprep.subr.mxu0 0.0
    %8840 = vmatpush2.msra.mxu0 %v4435
    %8841 = vmatprep.mubr.f32.mxu0 %v8772
    %8842 = vmatmul.mubr.f32.gmra.mxu0 %v8771
    %v8843 = vpop.f32.mrf.mxu0
    %v8844 = vadd.f32 %v4584, %v8843
    %v8845 = vpop.f32.mrf.mxu0
    %8846 = vdwg.mxu0
    %8847 = vmatprep.subr.mxu0 0.0
    %8848 = vmatpush1.msra.mxu0 %v4466
    %8849 = vmatprep.subr.mxu0 0.0
    %8850 = vmatpush1.msra.mxu0 %v4465
    %8851 = vmatprep.subr.mxu0 0.0
    %8852 = vmatpush1.msra.mxu0 %v4464
    %8853 = vmatprep.subr.mxu0 0.0
    %8854 = vmatpush1.msra.mxu0 %v4463
    %8855 = vmatprep.subr.mxu0 0.0
    %8856 = vmatpush1.msra.mxu0 %v4462
    %8857 = vmatprep.subr.mxu0 0.0
    %8858 = vmatpush1.msra.mxu0 %v4461
    %8859 = vmatprep.subr.mxu0 0.0
    %8860 = vmatpush1.msra.mxu0 %v4460
    %8861 = vmatprep.subr.mxu0 0.0
    %8862 = vmatpush1.msra.mxu0 %v4459
    %8863 = vmatprep.subr.mxu0 0.0
    %8864 = vmatpush1.msra.mxu0 %v4458
    %8865 = vmatprep.subr.mxu0 0.0
    %8866 = vmatpush1.msra.mxu0 %v4457
    %8867 = vmatprep.subr.mxu0 0.0
    %8868 = vmatpush1.msra.mxu0 %v4456
    %8869 = vmatprep.subr.mxu0 0.0
    %8870 = vmatpush1.msra.mxu0 %v4455
    %8871 = vmatprep.subr.mxu0 0.0
    %8872 = vmatpush1.msra.mxu0 %v4454
    %8873 = vmatprep.subr.mxu0 0.0
    %8874 = vmatpush1.msra.mxu0 %v4453
    %8875 = vmatprep.subr.mxu0 0.0
    %8876 = vmatpush1.msra.mxu0 %v4452
    %8877 = vmatprep.subr.mxu0 0.0
    %8878 = vmatpush1.msra.mxu0 %v4451
    %8879 = vmatprep.subr.mxu0 0.0
    %8880 = vmatpush2.msra.mxu0 %v4482
    %8881 = vmatprep.subr.mxu0 0.0
    %8882 = vmatpush2.msra.mxu0 %v4481
    %8883 = vmatprep.subr.mxu0 0.0
    %8884 = vmatpush2.msra.mxu0 %v4480
    %8885 = vmatprep.subr.mxu0 0.0
    %8886 = vmatpush2.msra.mxu0 %v4479
    %8887 = vmatprep.subr.mxu0 0.0
    %8888 = vmatpush2.msra.mxu0 %v4478
    %8889 = vmatprep.subr.mxu0 0.0
    %8890 = vmatpush2.msra.mxu0 %v4477
    %8891 = vmatprep.subr.mxu0 0.0
    %8892 = vmatpush2.msra.mxu0 %v4476
    %8893 = vmatprep.subr.mxu0 0.0
    %8894 = vmatpush2.msra.mxu0 %v4475
    %8895 = vmatprep.subr.mxu0 0.0
    %8896 = vmatpush2.msra.mxu0 %v4474
    %8897 = vmatprep.subr.mxu0 0.0
    %8898 = vmatpush2.msra.mxu0 %v4473
    %8899 = vmatprep.subr.mxu0 0.0
    %8900 = vmatpush2.msra.mxu0 %v4472
    %8901 = vmatprep.subr.mxu0 0.0
    %8902 = vmatpush2.msra.mxu0 %v4471
    %8903 = vmatprep.subr.mxu0 0.0
    %8904 = vmatpush2.msra.mxu0 %v4470
    %8905 = vmatprep.subr.mxu0 0.0
    %8906 = vmatpush2.msra.mxu0 %v4469
    %8907 = vmatprep.subr.mxu0 0.0
    %8908 = vmatpush2.msra.mxu0 %v4468
    %8909 = vmatprep.subr.mxu0 0.0
    %8910 = vmatpush2.msra.mxu0 %v4467
    %8911 = vmatprep.mubr.f32.mxu0 %v8774
    %8912 = vmatmul.mubr.f32.gmra.mxu0 %v8773
    %v8913 = vpop.f32.mrf.mxu0
    %v8914 = vadd.f32 %v8844, %v8913
    %v8915 = vpop.f32.mrf.mxu0
    %8916 = vdwg.mxu0
    %8917 = vmatprep.subr.mxu0 0.0
    %8918 = vmatpush1.msra.mxu0 %v4498
    %8919 = vmatprep.subr.mxu0 0.0
    %8920 = vmatpush1.msra.mxu0 %v4497
    %8921 = vmatprep.subr.mxu0 0.0
    %8922 = vmatpush1.msra.mxu0 %v4496
    %8923 = vmatprep.subr.mxu0 0.0
    %8924 = vmatpush1.msra.mxu0 %v4495
    %8925 = vmatprep.subr.mxu0 0.0
    %8926 = vmatpush1.msra.mxu0 %v4494
    %8927 = vmatprep.subr.mxu0 0.0
    %8928 = vmatpush1.msra.mxu0 %v4493
    %8929 = vmatprep.subr.mxu0 0.0
    %8930 = vmatpush1.msra.mxu0 %v4492
    %8931 = vmatprep.subr.mxu0 0.0
    %8932 = vmatpush1.msra.mxu0 %v4491
    %8933 = vmatprep.subr.mxu0 0.0
    %8934 = vmatpush1.msra.mxu0 %v4490
    %8935 = vmatprep.subr.mxu0 0.0
    %8936 = vmatpush1.msra.mxu0 %v4489
    %8937 = vmatprep.subr.mxu0 0.0
    %8938 = vmatpush1.msra.mxu0 %v4488
    %8939 = vmatprep.subr.mxu0 0.0
    %8940 = vmatpush1.msra.mxu0 %v4487
    %8941 = vmatprep.subr.mxu0 0.0
    %8942 = vmatpush1.msra.mxu0 %v4486
    %8943 = vmatprep.subr.mxu0 0.0
    %8944 = vmatpush1.msra.mxu0 %v4485
    %8945 = vmatprep.subr.mxu0 0.0
    %8946 = vmatpush1.msra.mxu0 %v4484
    %8947 = vmatprep.subr.mxu0 0.0
    %8948 = vmatpush1.msra.mxu0 %v4483
    %8949 = vmatprep.subr.mxu0 0.0
    %8950 = vmatpush2.msra.mxu0 %v4514
    %8951 = vmatprep.subr.mxu0 0.0
    %8952 = vmatpush2.msra.mxu0 %v4513
    %8953 = vmatprep.subr.mxu0 0.0
    %8954 = vmatpush2.msra.mxu0 %v4512
    %8955 = vmatprep.subr.mxu0 0.0
    %8956 = vmatpush2.msra.mxu0 %v4511
    %8957 = vmatprep.subr.mxu0 0.0
    %8958 = vmatpush2.msra.mxu0 %v4510
    %8959 = vmatprep.subr.mxu0 0.0
    %8960 = vmatpush2.msra.mxu0 %v4509
    %8961 = vmatprep.subr.mxu0 0.0
    %8962 = vmatpush2.msra.mxu0 %v4508
    %8963 = vmatprep.subr.mxu0 0.0
    %8964 = vmatpush2.msra.mxu0 %v4507
    %8965 = vmatprep.subr.mxu0 0.0
    %8966 = vmatpush2.msra.mxu0 %v4506
    %8967 = vmatprep.subr.mxu0 0.0
    %8968 = vmatpush2.msra.mxu0 %v4505
    %8969 = vmatprep.subr.mxu0 0.0
    %8970 = vmatpush2.msra.mxu0 %v4504
    %8971 = vmatprep.subr.mxu0 0.0
    %8972 = vmatpush2.msra.mxu0 %v4503
    %8973 = vmatprep.subr.mxu0 0.0
    %8974 = vmatpush2.msra.mxu0 %v4502
    %8975 = vmatprep.subr.mxu0 0.0
    %8976 = vmatpush2.msra.mxu0 %v4501
    %8977 = vmatprep.subr.mxu0 0.0
    %8978 = vmatpush2.msra.mxu0 %v4500
    %8979 = vmatprep.subr.mxu0 0.0
    %8980 = vmatpush2.msra.mxu0 %v4499
    %8981 = vmatprep.mubr.f32.mxu0 %v8776
    %8982 = vmatmul.mubr.f32.gmra.mxu0 %v8775
    %v8983 = vpop.f32.mrf.mxu0
    %v8984 = vadd.f32 %v8914, %v8983
    %v8985 = vpop.f32.mrf.mxu0
    %8986 = vdwg.mxu0
    %8987 = vmax.xlane.f32.xlu0 %v8984
    %v8988 = vpop.xlane.xlu0 %8987
    %v8989 = vsub.f32 %v8984, %v8988
    %v8990 = vmul.f32 %v8989, 1.442695
    %v8991 = vpow.pop %v8990
    %8992 = vadd.xlane.f32.xlu0 %v8991
    %v8993 = vpop.xlane.xlu0 %8992
    %v8994 = vrcp.pop %v8993
    %v8995 = vmul.f32 %v8991, %v8994
    %8996 = vst [vmem:[#allocation13 + $0x78] sm:$0xff] %v8995
    // Predicated region
    $region42: #{tpu_custom_call.1} parent=1 // pred_check
      _
    $region43: #{tpu_custom_call.1} parent=1 // pred_check_branch
      %8998 = sbr.rel (0) target = $region45
    $region44: #{tpu_custom_call.1} parent=1 // pred_region
      %s9000 = ssub.s32 2048, 2048
      %9001 = vsyncadd [#allocation6], %s9000
      %s9002 = sshll.u32 [#allocation13], 4
      %s9003 = int_to_ptr.vmem [resolvable:$true] %s9002
      %9008 = dma.vmem_to_hbm [thread:$0]  %s9003, 2048, %s5, [#allocation6], 128, 128, 8
    $region45: #{tpu_custom_call.1} parent=1 // pred_fallthru
      _
    // Predicated region
    $region46: #{tpu_custom_call.1} parent=1 // pred_check
      _
    $region47: #{tpu_custom_call.1} parent=1 // pred_check_branch
      %9010 = sbr.rel (0) target = $region49
    $region48: #{tpu_custom_call.1} parent=1 // pred_region
      %9011 = dma.done [#allocation6], 2048
    $region49: #{tpu_custom_call.1} parent=1 // pred_fallthru
      _
    %9012 = vsyncpa [#allocation5], 1
    %9013 = vsyncpa [#allocation8], 1
    %9014 = vsyncpa [#allocation11], 1
    %9015 = vsyncpa [#allocation6], 1

</llo_original>
